<compile_context>
chip_gen: v6e
topology: v6e:2x2x1
jax: 0.10.0
libtpu: 0.0.40
codegen_flags: <defaults>
</compile_context>

<pallas_src>
import functools
import math

import jax
import jax.numpy as jnp
from jax.experimental import pallas as pl
from jax.experimental.pallas import tpu as pltpu


_VMEM_LIMIT = 32 * 1024 * 1024


def _gelu(x):
    # TODO(synk): tanh-approx GELU; PyTorch nn.GELU default is the exact erf form (tiny mismatch).
    c = math.sqrt(2.0 / math.pi)
    return 0.5 * x * (1.0 + jnp.tanh(c * (x + 0.044715 * x * x * x)))


def _layernorm(x, g, b, eps):
    mu = jnp.mean(x, axis=-1, keepdims=True)
    var = jnp.mean(jnp.square(x - mu), axis=-1, keepdims=True)
    return (x - mu) * jax.lax.rsqrt(var + eps) * g + b


# --------------------------- tiled matmul (conv hot path) ---------------------------

def _pick_tile(dim, cap):
    if dim <= cap:
        return dim
    for t in (512, 384, 256, 128):
        if t <= cap and dim % t == 0:
            return t
    # TODO(synk): pad ragged large dims to a tile multiple before scaling up further.
    return dim


def _matmul_bias_kernel(x_ref, w_ref, b_ref, o_ref, acc_ref, *, activation):
    @pl.when(pl.program_id(2) == 0)
    def _():
        acc_ref[...] = jnp.zeros_like(acc_ref)

    acc_ref[...] += jnp.dot(x_ref[...], w_ref[...], preferred_element_type=jnp.float32)

    @pl.when(pl.program_id(2) == pl.num_programs(2) - 1)
    def _():
        y = acc_ref[...] + b_ref[...]
        if activation == "relu":
            y = jnp.maximum(y, 0.0)
        elif activation == "gelu":
            y = _gelu(y)
        o_ref[...] = y.astype(o_ref.dtype)


def matmul_bias(x, w, b, activation=None):
    """y = act(x @ w + b). bf16 MXU operands, f32 VMEM accumulator, M/N parallel, K reduction."""
    M, K = x.shape
    K2, N = w.shape
    assert K == K2
    tm = _pick_tile(M, 256)
    tn = _pick_tile(N, 256)
    tk = _pick_tile(K, 512)
    grid = (M // tm, N // tn, K // tk)
    kernel = functools.partial(_matmul_bias_kernel, activation=activation)
    return pl.pallas_call(
        kernel,
        out_shape=jax.ShapeDtypeStruct((M, N), jnp.float32),
        grid=grid,
        in_specs=[
            pl.BlockSpec((tm, tk), lambda i, j, k: (i, k)),
            pl.BlockSpec((tk, tn), lambda i, j, k: (k, j)),
            pl.BlockSpec((1, tn), lambda i, j, k: (0, j)),
        ],
        out_specs=pl.BlockSpec((tm, tn), lambda i, j, k: (i, j)),
        scratch_shapes=[pltpu.VMEM((tm, tn), jnp.float32)],
        compiler_params=pltpu.CompilerParams(
            dimension_semantics=("parallel", "parallel", "arbitrary"),
            vmem_limit_bytes=_VMEM_LIMIT),
    )(x.astype(jnp.bfloat16), w.astype(jnp.bfloat16), b.reshape(1, N).astype(jnp.float32))


# ----------------------- conv via im2col + Pallas matmul -----------------------

def _im2col(x, kh, kw, stride, pad):
    # TODO(synk): patch extraction stays wrapper-side (bf16 to halve traffic); in-kernel im2col
    # for stride-2 convs has no clean strided-VMEM-slice path yet.
    N, H, W, C = x.shape
    if pad > 0:
        x = jnp.pad(x, ((0, 0), (pad, pad), (pad, pad), (0, 0)))
    Ho = (H + 2 * pad - kh) // stride + 1
    Wo = (W + 2 * pad - kw) // stride + 1
    cols = []
    for i in range(kh):
        for j in range(kw):
            cols.append(x[:, i:i + stride * Ho:stride, j:j + stride * Wo:stride, :])
    col = jnp.concatenate(cols, axis=-1)                       # (N, Ho, Wo, kh*kw*C)
    return col.reshape(N * Ho * Wo, kh * kw * C), (N, Ho, Wo)


def conv2d(x, w, b, stride=1, pad=None, activation=None):
    """x: NHWC, w: (kh,kw,Cin,Cout). im2col (glue, bf16) + fused Pallas matmul+bias+act."""
    kh, kw, cin, cout = w.shape
    if pad is None:
        pad = kh // 2
    col, (N, Ho, Wo) = _im2col(x.astype(jnp.bfloat16), kh, kw, stride, pad)
    y = matmul_bias(col, w.reshape(kh * kw * cin, cout), b, activation=activation)
    return y.reshape(N, Ho, Wo, cout)


# --------------------------- fused BERT transformer layer ---------------------------

def _bert_layer_kernel(x_ref, wq_ref, bq_ref, wk_ref, bk_ref, wv_ref, bv_ref,
                       wo_ref, bo_ref, g1_ref, be1_ref,
                       w1_ref, bf1_ref, w2_ref, bf2_ref, g2_ref, be2_ref,
                       o_ref, *, n_heads, eps):
    x = x_ref[0].astype(jnp.float32)                 # (S, D)
    S, D = x.shape
    dh = D // n_heads
    scale = 1.0 / math.sqrt(dh)

    xb = x.astype(jnp.bfloat16)
    q = jnp.dot(xb, wq_ref[...], preferred_element_type=jnp.float32) + bq_ref[...]
    k = jnp.dot(xb, wk_ref[...], preferred_element_type=jnp.float32) + bk_ref[...]
    v = jnp.dot(xb, wv_ref[...], preferred_element_type=jnp.float32) + bv_ref[...]

    # Multi-head attention without lane slicing / reshapes: mask the feature (lane) dim per head.
    #   scores_h = (q * m_h) @ k^T  (zeros in q kill other heads' contributions)
    #   out     += softmax(scores_h) @ (v * m_h)  -> head h's output lands in its own lanes.
    lane = jax.lax.broadcasted_iota(jnp.int32, (1, D), 1)
    k_b = k.astype(jnp.bfloat16)
    attn = jnp.zeros((S, D), jnp.float32)
    for h in range(n_heads):
        m = ((lane >= h * dh) & (lane < (h + 1) * dh)).astype(jnp.float32)   # (1, D)
        s = jax.lax.dot_general((q * m).astype(jnp.bfloat16), k_b,
                                (((1,), (1,)), ((), ())),
                                preferred_element_type=jnp.float32) * scale
        s = s - jnp.max(s, axis=-1, keepdims=True)
        p = jnp.exp(s)
        p = p * pl.reciprocal(jnp.sum(p, axis=-1, keepdims=True), approx=True)
        attn = attn + jnp.dot(p.astype(jnp.bfloat16), (v * m).astype(jnp.bfloat16),
                              preferred_element_type=jnp.float32)

    proj = jnp.dot(attn.astype(jnp.bfloat16), wo_ref[...],
                   preferred_element_type=jnp.float32) + bo_ref[...]
    h1 = _layernorm(x + proj, g1_ref[...], be1_ref[...], eps)

    ff = jnp.dot(h1.astype(jnp.bfloat16), w1_ref[...],
                 preferred_element_type=jnp.float32) + bf1_ref[...]
    ff = _gelu(ff)
    ff = jnp.dot(ff.astype(jnp.bfloat16), w2_ref[...],
                 preferred_element_type=jnp.float32) + bf2_ref[...]
    h2 = _layernorm(h1 + ff, g2_ref[...], be2_ref[...], eps)
    o_ref[0] = h2.astype(o_ref.dtype)


def bert_layer(h, layer, n_heads, eps=1e-12):
    B, S, D = h.shape
    wq, bq = layer["wq"]
    wk, bk = layer["wk"]
    wv, bv = layer["wv"]
    wo, bo = layer["wo"]
    g1, be1 = layer["ln1"]
    w1, bf1 = layer["ff1"]
    w2, bf2 = layer["ff2"]
    g2, be2 = layer["ln2"]

    def xmap(b):
        return (b, 0, 0)

    def wmap(b):
        return (0, 0)

    weights = [
        wq.astype(jnp.bfloat16), bq.reshape(1, D).astype(jnp.float32),
        wk.astype(jnp.bfloat16), bk.reshape(1, D).astype(jnp.float32),
        wv.astype(jnp.bfloat16), bv.reshape(1, D).astype(jnp.float32),
        wo.astype(jnp.bfloat16), bo.reshape(1, D).astype(jnp.float32),
        g1.reshape(1, D).astype(jnp.float32), be1.reshape(1, D).astype(jnp.float32),
        w1.astype(jnp.bfloat16), bf1.reshape(1, -1).astype(jnp.float32),
        w2.astype(jnp.bfloat16), bf2.reshape(1, D).astype(jnp.float32),
        g2.reshape(1, D).astype(jnp.float32), be2.reshape(1, D).astype(jnp.float32),
    ]
    kernel = functools.partial(_bert_layer_kernel, n_heads=n_heads, eps=eps)
    return pl.pallas_call(
        kernel,
        out_shape=jax.ShapeDtypeStruct((B, S, D), jnp.float32),
        grid=(B,),
        in_specs=[pl.BlockSpec((1, S, D), xmap)] + [pl.BlockSpec(a.shape, wmap) for a in weights],
        out_specs=pl.BlockSpec((1, S, D), xmap),
        compiler_params=pltpu.CompilerParams(
            dimension_semantics=("parallel",), vmem_limit_bytes=_VMEM_LIMIT),
    )(h.astype(jnp.float32), *weights)


# ------------------- fused classification head + masked cross-entropy -------------------

def _cls_ce_kernel(h_ref, w_ref, b_ref, lbl_ref, msk_ref, logits_ref, nll_ref):
    x = h_ref[0].astype(jnp.bfloat16)                           # (S, D)
    logits = jnp.dot(x, w_ref[...], preferred_element_type=jnp.float32) + b_ref[...]   # (S, V)
    logits_ref[0] = logits.astype(logits_ref.dtype)
    z = logits - jnp.max(logits, axis=-1, keepdims=True)
    logp = z - jnp.log(jnp.sum(jnp.exp(z), axis=-1, keepdims=True))
    ids = jax.lax.broadcasted_iota(jnp.int32, logits.shape, 1)
    onehot = (ids == lbl_ref[0]).astype(jnp.float32)            # labels: (S, 1)
    nll = -jnp.sum(onehot * logp, axis=-1, keepdims=True)       # (S, 1)
    nll_ref[0] = msk_ref[0] * nll


def cls_and_masked_ce(h, w, b, labels, mask):
    """Returns (loss, logits): loss = sum(mask * CE(h@w+b, labels)) / B  (N = batch size)."""
    B, S, D = h.shape
    V = w.shape[1]

    def xmap(bi):
        return (bi, 0, 0)

    def wmap(bi):
        return (0, 0)

    logits, nll = pl.pallas_call(
        _cls_ce_kernel,
        out_shape=(jax.ShapeDtypeStruct((B, S, V), jnp.float32),
                   jax.ShapeDtypeStruct((B, S, 1), jnp.float32)),
        grid=(B,),
        in_specs=[
            pl.BlockSpec((1, S, D), xmap),
            pl.BlockSpec((D, V), wmap),
            pl.BlockSpec((1, V), wmap),
            pl.BlockSpec((1, S, 1), xmap),
            pl.BlockSpec((1, S, 1), xmap),
        ],
        out_specs=(pl.BlockSpec((1, S, V), xmap),
                   pl.BlockSpec((1, S, 1), xmap)),
        compiler_params=pltpu.CompilerParams(
            dimension_semantics=("parallel",), vmem_limit_bytes=_VMEM_LIMIT),
    )(h.astype(jnp.float32), w.astype(jnp.bfloat16), b.reshape(1, V).astype(jnp.float32),
      labels.reshape(B, S, 1).astype(jnp.int32), mask.reshape(B, S, 1).astype(jnp.float32))
    loss = jnp.sum(nll) / B
    return loss, logits


# ----------------------------- model components -----------------------------

def backbone_forward(p, x):
    # TODO(synk): reduced conv stack stands in for torchvision ResNet50 (bottleneck blocks / BN omitted).
    h = conv2d(x, *p["stem"], stride=2, activation="relu")     # /2
    c2 = conv2d(h, *p["c2"], stride=2, activation="relu")      # /4
    c3 = conv2d(c2, *p["c3"], stride=2, activation="relu")     # /8
    c4 = conv2d(c3, *p["c4"], stride=2, activation="relu")     # /16
    c5 = conv2d(c4, *p["c5"], stride=2, activation="relu")     # /32
    return [c2, c3, c4, c5]


def fpn_forward(p, feats):
    lats = [conv2d(f, *p[f"lat{i}"], stride=1, pad=0) for i, f in enumerate(feats)]
    ps = [None] * len(lats)
    ps[-1] = lats[-1]
    for i in range(len(lats) - 2, -1, -1):
        up = jnp.repeat(jnp.repeat(ps[i + 1], 2, axis=1), 2, axis=2)
        ps[i] = lats[i] + up
    return [conv2d(pi, *p[f"fpn{i}"], stride=1) for i, pi in enumerate(ps)]


def multi_instance_align(feat, boxes, roi_size, step):
    # feat: (B, Hf, Wf, C); boxes: (B, num_inst, 4) as (x1, y1, x2, y2) in image coords.
    # TODO(synk): data-dependent bilinear gather kept in plain JAX (no clean Pallas TPU gather path).
    roi_h, roi_w = roi_size
    Hf, Wf = feat.shape[1], feat.shape[2]

    def sample_one(fm, box):
        x1, y1, x2, y2 = box / step
        ys = y1 + (jnp.arange(roi_h, dtype=jnp.float32) + 0.5) * (y2 - y1) / roi_h
        xs = x1 + (jnp.arange(roi_w, dtype=jnp.float32) + 0.5) * (x2 - x1) / roi_w
        ys = jnp.clip(ys, 0.0, Hf - 1.0)
        xs = jnp.clip(xs, 0.0, Wf - 1.0)
        y0 = jnp.floor(ys).astype(jnp.int32)
        x0 = jnp.floor(xs).astype(jnp.int32)
        y1i = jnp.minimum(y0 + 1, Hf - 1)
        x1i = jnp.minimum(x0 + 1, Wf - 1)
        wy = (ys - y0.astype(jnp.float32))[:, None, None]
        wx = (xs - x0.astype(jnp.float32))[None, :, None]
        f00 = fm[y0[:, None], x0[None, :], :]
        f01 = fm[y0[:, None], x1i[None, :], :]
        f10 = fm[y1i[:, None], x0[None, :], :]
        f11 = fm[y1i[:, None], x1i[None, :], :]
        return (f00 * (1 - wy) * (1 - wx) + f01 * (1 - wy) * wx
                + f10 * wy * (1 - wx) + f11 * wy * wx)         # (roi_h, roi_w, C)

    per_img = jax.vmap(lambda fm, bxs: jax.vmap(lambda b: sample_one(fm, b))(bxs))
    rois = per_img(feat, boxes)                                 # (B, ni, rh, rw, C)
    B, ni, rh, rw, C = rois.shape
    return jnp.transpose(rois, (0, 2, 3, 1, 4)).reshape(B, rh, rw, ni * C)


def cnn_encoder_forward(p, x):
    h = conv2d(x, *p["enc0"], stride=1, activation="relu")
    return conv2d(h, *p["enc1"], stride=1, activation="relu")


def bert_encode(p, x):
    h = x + p["pos_emb"][None, :, :]
    for layer in p["layers"]:
        h = bert_layer(h, layer, p["n_heads"])
    return h


def model_bert_forward(params, cfg, input_images, input_labels, input_boxes, input_masks):
    feats = backbone_forward(params["backbone"], input_images)
    fpn_outs = fpn_forward(params["fpn"], feats)
    rois = multi_instance_align(fpn_outs[0], input_boxes,
                                cfg["roi_size"], cfg["roi_feature_step"])
    enc = cnn_encoder_forward(params["encoder"], rois)          # (B, Hr, Wr, C)
    B, Hr, Wr, C = enc.shape
    # equivalent of NCHW .view(b, c, -1).permute(0, 2, 1): row-major spatial flatten -> (B, S, C)
    seq = enc.reshape(B, Hr * Wr, C)
    h = bert_encode(params["bert"], seq)                        # (B, S, D)
    w_cls, b_cls = params["bert"]["cls"]
    loss, prediction = cls_and_masked_ce(h, w_cls, b_cls, input_labels, input_masks)
    return loss, prediction


# ------------------------------ parameter init ------------------------------

def _init_conv(key, kh, kw, cin, cout):
    w = jax.random.normal(key, (kh, kw, cin, cout), jnp.float32) / math.sqrt(kh * kw * cin)
    return w, jnp.zeros((cout,), jnp.float32)


def _init_linear(key, din, dout):
    w = jax.random.normal(key, (din, dout), jnp.float32) / math.sqrt(din)
    return w, jnp.zeros((dout,), jnp.float32)


def init_params(cfg, key):
    keys = iter(jax.random.split(key, 64))
    fc = cfg["feature_channels"]
    fo = cfg["fpn_out_channels"]
    backbone = {
        "stem": _init_conv(next(keys), 3, 3, 3, fc[0]),
        "c2": _init_conv(next(keys), 3, 3, fc[0], fc[0]),
        "c3": _init_conv(next(keys), 3, 3, fc[0], fc[1]),
        "c4": _init_conv(next(keys), 3, 3, fc[1], fc[2]),
        "c5": _init_conv(next(keys), 3, 3, fc[2], fc[3]),
    }
    fpn = {}
    for i, c in enumerate(fc):
        fpn[f"lat{i}"] = _init_conv(next(keys), 1, 1, c, fo)
        fpn[f"fpn{i}"] = _init_conv(next(keys), 3, 3, fo, fo)
    enc_in = fo * cfg["num_instances"]
    ec = cfg["encoder_channels"]
    encoder = {
        "enc0": _init_conv(next(keys), 3, 3, enc_in, ec),
        "enc1": _init_conv(next(keys), 3, 3, ec, ec),
    }
    D, S, V = cfg["dim"], cfg["seq_len"], cfg["voc_len"]
    layers = []
    for _ in range(cfg["n_layers"]):
        layers.append({
            "wq": _init_linear(next(keys), D, D),
            "wk": _init_linear(next(keys), D, D),
            "wv": _init_linear(next(keys), D, D),
            "wo": _init_linear(next(keys), D, D),
            "ln1": (jnp.ones((D,), jnp.float32), jnp.zeros((D,), jnp.float32)),
            "ff1": _init_linear(next(keys), D, 4 * D),
            "ff2": _init_linear(next(keys), 4 * D, D),
            "ln2": (jnp.ones((D,), jnp.float32), jnp.zeros((D,), jnp.float32)),
        })
    bert = {
        "n_heads": cfg["n_heads"],
        "pos_emb": 0.02 * jax.random.normal(next(keys), (S, D), jnp.float32),
        "layers": layers,
        "cls": _init_linear(next(keys), D, V),
    }
    return {"backbone": backbone, "fpn": fpn, "encoder": encoder, "bert": bert}


# ------------------------------------ main -----------------------------------

if __name__ == "__main__":
    cfg = {
        "feature_channels": [8, 16, 32, 64],
        "fpn_out_channels": 16,
        "num_instances": 4,
        "roi_size": (4, 8),          # (roi_h, roi_w)
        "roi_feature_step": 4,       # stride of the FPN level used for ROI align
        "encoder_channels": 32,
        "dim": 32,
        "seq_len": 32,               # = roi_h * roi_w after the CNN encoder
        "voc_len": 16,
        "n_heads": 4,
        "n_layers": 2,
    }
    B = 2
    key = jax.random.PRNGKey(0)
    k_img, k_lbl, k_b1, k_b2, k_msk = jax.random.split(key, 5)
    # layout: input images are NHWC here (the PyTorch reference would be NCHW [2, 3, 32, 32]).
    input_images = jax.random.normal(k_img, (B, 32, 32, 3), jnp.float32)
    input_labels = jax.random.randint(k_lbl, (B, cfg["seq_len"]), 0, cfg["voc_len"])
    xy1 = jax.random.uniform(k_b1, (B, cfg["num_instances"], 2), minval=0.0, maxval=10.0)
    wh = jax.random.uniform(k_b2, (B, cfg["num_instances"], 2), minval=8.0, maxval=20.0)
    input_boxes = jnp.concatenate([xy1, jnp.clip(xy1 + wh, 0.0, 31.0)], axis=-1)  # (x1,y1,x2,y2)
    input_masks = (jax.random.uniform(k_msk, (B, cfg["seq_len"])) > 0.3).astype(jnp.float32)

    params = init_params(cfg, jax.random.PRNGKey(1))

    fwd = jax.jit(lambda imgs, lbls, boxes, masks:
                  model_bert_forward(params, cfg, imgs, lbls, boxes, masks))
    loss, prediction = fwd(input_images, input_labels, input_boxes, input_masks)
    jax.block_until_ready((loss, prediction))
    assert prediction.shape == (B, cfg["seq_len"], cfg["voc_len"])
    print("KERNEL_OK")
</pallas_src>

<mosaic_0001>
module attributes {stable_mosaic.version = 11 : i64} {
  func.func @_matmul_bias_kernel(%arg0: i32, %arg1: i32, %arg2: i32, %arg3: memref<256x27xbf16, #tpu.memory_space<vmem>>, %arg4: memref<27x8xbf16, #tpu.memory_space<vmem>>, %arg5: memref<1x8xf32, #tpu.memory_space<vmem>>, %arg6: memref<256x8xf32, #tpu.memory_space<vmem>>, %arg7: memref<256x8xf32, #tpu.memory_space<vmem>>) attributes {dimension_semantics = [#tpu.dimension_semantics<parallel>, #tpu.dimension_semantics<parallel>, #tpu.dimension_semantics<arbitrary>], iteration_bounds = array<i64: 2, 1, 1>, scalar_prefetch = 0 : i64, scratch_operands = 1 : i64, tpu.core_type = #tpu.core_type<tc>, window_params = [{transform_indices = @transform_0, window_bounds = array<i64: 256, 27>}, {transform_indices = @transform_1, window_bounds = array<i64: 27, 8>}, {transform_indices = @transform_2, window_bounds = array<i64: 1, 8>}, {transform_indices = @transform_3, window_bounds = array<i64: 256, 8>}]} {
    %c0_i32 = arith.constant 0 : i32
    %0 = arith.cmpi eq, %arg2, %c0_i32 : i32
    %1 = arith.extui %0 : i1 to i32
    %c0_i32_0 = arith.constant 0 : i32
    %2 = arith.cmpi ne, %1, %c0_i32_0 : i32
    scf.if %2 {
      %cst_10 = arith.constant 0.000000e+00 : f32
      %12 = vector.broadcast %cst_10 : f32 to vector<256x8xf32>
      %c0_11 = arith.constant 0 : index
      %c0_12 = arith.constant 0 : index
      %13 = vector.load %arg7[%c0_11, %c0_12] : memref<256x8xf32, #tpu.memory_space<vmem>>, vector<256x8xf32>
      tpu.vector_store %arg7[%c0_11, %c0_12], %12 {strides = array<i32>} : memref<256x8xf32, #tpu.memory_space<vmem>>, vector<256x8xf32>,
    } else {
    }
    %c0 = arith.constant 0 : index
    %c0_1 = arith.constant 0 : index
    %3 = vector.load %arg7[%c0, %c0_1] : memref<256x8xf32, #tpu.memory_space<vmem>>, vector<256x8xf32>
    %c0_2 = arith.constant 0 : index
    %c0_3 = arith.constant 0 : index
    %4 = vector.load %arg3[%c0_2, %c0_3] : memref<256x27xbf16, #tpu.memory_space<vmem>>, vector<256x27xbf16>
    %c0_4 = arith.constant 0 : index
    %c0_5 = arith.constant 0 : index
    %5 = vector.load %arg4[%c0_4, %c0_5] : memref<27x8xbf16, #tpu.memory_space<vmem>>, vector<27x8xbf16>
    %cst = arith.constant dense<0.000000e+00> : vector<256x8xf32>
    %6 = tpu.matmul %4, %5, %cst {dimension_numbers = #tpu.dot_dimension_numbers<[1], [0], [0], [1], [0, 0, 1, 1], [], []>} : vector<256x27xbf16>, vector<27x8xbf16>, vector<256x8xf32> -> vector<256x8xf32>
    %7 = arith.addf %3, %6 : vector<256x8xf32>
    %c0_6 = arith.constant 0 : index
    %c0_7 = arith.constant 0 : index
    %8 = vector.load %arg7[%c0_6, %c0_7] : memref<256x8xf32, #tpu.memory_space<vmem>>, vector<256x8xf32>
    tpu.vector_store %arg7[%c0_6, %c0_7], %7 {strides = array<i32>} : memref<256x8xf32, #tpu.memory_space<vmem>>, vector<256x8xf32>,
    %c0_i32_8 = arith.constant 0 : i32
    %9 = arith.cmpi eq, %arg2, %c0_i32_8 : i32
    %10 = arith.extui %9 : i1 to i32
    %c0_i32_9 = arith.constant 0 : i32
    %11 = arith.cmpi ne, %10, %c0_i32_9 : i32
    scf.if %11 {
      %c0_10 = arith.constant 0 : index
      %c0_11 = arith.constant 0 : index
      %12 = vector.load %arg7[%c0_10, %c0_11] : memref<256x8xf32, #tpu.memory_space<vmem>>, vector<256x8xf32>
      %c0_12 = arith.constant 0 : index
      %c0_13 = arith.constant 0 : index
      %13 = vector.load %arg5[%c0_12, %c0_13] : memref<1x8xf32, #tpu.memory_space<vmem>>, vector<1x8xf32>
      %14 = vector.broadcast %13 : vector<1x8xf32> to vector<256x8xf32>
      %15 = arith.addf %12, %14 : vector<256x8xf32>
      %cst_14 = arith.constant 0.000000e+00 : f32
      %16 = vector.broadcast %cst_14 : f32 to vector<256x8xf32>
      %17 = arith.maximumf %15, %16 : vector<256x8xf32>
      %c0_15 = arith.constant 0 : index
      %c0_16 = arith.constant 0 : index
      %18 = vector.load %arg6[%c0_15, %c0_16] : memref<256x8xf32, #tpu.memory_space<vmem>>, vector<256x8xf32>
      tpu.vector_store %arg6[%c0_15, %c0_16], %17 {strides = array<i32>} : memref<256x8xf32, #tpu.memory_space<vmem>>, vector<256x8xf32>,
    } else {
    }
    return
  }
  func.func @transform_0(%arg0: i32, %arg1: i32, %arg2: i32) -> (i32, i32) {
    %c0_i32 = arith.constant 0 : i32
    return %arg0, %arg2 : i32, i32
  }
  func.func @transform_1(%arg0: i32, %arg1: i32, %arg2: i32) -> (i32, i32) {
    %c0_i32 = arith.constant 0 : i32
    return %arg2, %arg1 : i32, i32
  }
  func.func @transform_2(%arg0: i32, %arg1: i32, %arg2: i32) -> (i32, i32) {
    %c0_i32 = arith.constant 0 : i32
    %c0_i32_0 = arith.constant 0 : i32
    return %c0_i32, %arg1 : i32, i32
  }
  func.func @transform_3(%arg0: i32, %arg1: i32, %arg2: i32) -> (i32, i32) {
    %c0_i32 = arith.constant 0 : i32
    return %arg0, %arg1 : i32, i32
  }
}

module attributes {stable_mosaic.version = 11 : i64} {
  func.func @_matmul_bias_kernel(%arg0: i32, %arg1: i32, %arg2: i32, %arg3: memref<128x72xbf16, #tpu.memory_space<vmem>>, %arg4: memref<72x8xbf16, #tpu.memory_space<vmem>>, %arg5: memref<1x8xf32, #tpu.memory_space<vmem>>, %arg6: memref<128x8xf32, #tpu.memory_space<vmem>>, %arg7: memref<128x8xf32, #tpu.memory_space<vmem>>) attributes {dimension_semantics = [#tpu.dimension_semantics<parallel>, #tpu.dimension_semantics<parallel>, #tpu.dimension_semantics<arbitrary>], iteration_bounds = array<i64: 1, 1, 1>, scalar_prefetch = 0 : i64, scratch_operands = 1 : i64, tpu.core_type = #tpu.core_type<tc>, window_params = [{transform_indices = @transform_0, window_bounds = array<i64: 128, 72>}, {transform_indices = @transform_1, window_bounds = array<i64: 72, 8>}, {transform_indices = @transform_2, window_bounds = array<i64: 1, 8>}, {transform_indices = @transform_3, window_bounds = array<i64: 128, 8>}]} {
    %c0_i32 = arith.constant 0 : i32
    %0 = arith.cmpi eq, %arg2, %c0_i32 : i32
    %1 = arith.extui %0 : i1 to i32
    %c0_i32_0 = arith.constant 0 : i32
    %2 = arith.cmpi ne, %1, %c0_i32_0 : i32
    scf.if %2 {
      %cst_10 = arith.constant 0.000000e+00 : f32
      %12 = vector.broadcast %cst_10 : f32 to vector<128x8xf32>
      %c0_11 = arith.constant 0 : index
      %c0_12 = arith.constant 0 : index
      %13 = vector.load %arg7[%c0_11, %c0_12] : memref<128x8xf32, #tpu.memory_space<vmem>>, vector<128x8xf32>
      tpu.vector_store %arg7[%c0_11, %c0_12], %12 {strides = array<i32>} : memref<128x8xf32, #tpu.memory_space<vmem>>, vector<128x8xf32>,
    } else {
    }
    %c0 = arith.constant 0 : index
    %c0_1 = arith.constant 0 : index
    %3 = vector.load %arg7[%c0, %c0_1] : memref<128x8xf32, #tpu.memory_space<vmem>>, vector<128x8xf32>
    %c0_2 = arith.constant 0 : index
    %c0_3 = arith.constant 0 : index
    %4 = vector.load %arg3[%c0_2, %c0_3] : memref<128x72xbf16, #tpu.memory_space<vmem>>, vector<128x72xbf16>
    %c0_4 = arith.constant 0 : index
    %c0_5 = arith.constant 0 : index
    %5 = vector.load %arg4[%c0_4, %c0_5] : memref<72x8xbf16, #tpu.memory_space<vmem>>, vector<72x8xbf16>
    %cst = arith.constant dense<0.000000e+00> : vector<128x8xf32>
    %6 = tpu.matmul %4, %5, %cst {dimension_numbers = #tpu.dot_dimension_numbers<[1], [0], [0], [1], [0, 0, 1, 1], [], []>} : vector<128x72xbf16>, vector<72x8xbf16>, vector<128x8xf32> -> vector<128x8xf32>
    %7 = arith.addf %3, %6 : vector<128x8xf32>
    %c0_6 = arith.constant 0 : index
    %c0_7 = arith.constant 0 : index
    %8 = vector.load %arg7[%c0_6, %c0_7] : memref<128x8xf32, #tpu.memory_space<vmem>>, vector<128x8xf32>
    tpu.vector_store %arg7[%c0_6, %c0_7], %7 {strides = array<i32>} : memref<128x8xf32, #tpu.memory_space<vmem>>, vector<128x8xf32>,
    %c0_i32_8 = arith.constant 0 : i32
    %9 = arith.cmpi eq, %arg2, %c0_i32_8 : i32
    %10 = arith.extui %9 : i1 to i32
    %c0_i32_9 = arith.constant 0 : i32
    %11 = arith.cmpi ne, %10, %c0_i32_9 : i32
    scf.if %11 {
      %c0_10 = arith.constant 0 : index
      %c0_11 = arith.constant 0 : index
      %12 = vector.load %arg7[%c0_10, %c0_11] : memref<128x8xf32, #tpu.memory_space<vmem>>, vector<128x8xf32>
      %c0_12 = arith.constant 0 : index
      %c0_13 = arith.constant 0 : index
      %13 = vector.load %arg5[%c0_12, %c0_13] : memref<1x8xf32, #tpu.memory_space<vmem>>, vector<1x8xf32>
      %14 = vector.broadcast %13 : vector<1x8xf32> to vector<128x8xf32>
      %15 = arith.addf %12, %14 : vector<128x8xf32>
      %cst_14 = arith.constant 0.000000e+00 : f32
      %16 = vector.broadcast %cst_14 : f32 to vector<128x8xf32>
      %17 = arith.maximumf %15, %16 : vector<128x8xf32>
      %c0_15 = arith.constant 0 : index
      %c0_16 = arith.constant 0 : index
      %18 = vector.load %arg6[%c0_15, %c0_16] : memref<128x8xf32, #tpu.memory_space<vmem>>, vector<128x8xf32>
      tpu.vector_store %arg6[%c0_15, %c0_16], %17 {strides = array<i32>} : memref<128x8xf32, #tpu.memory_space<vmem>>, vector<128x8xf32>,
    } else {
    }
    return
  }
  func.func @transform_0(%arg0: i32, %arg1: i32, %arg2: i32) -> (i32, i32) {
    %c0_i32 = arith.constant 0 : i32
    return %arg0, %arg2 : i32, i32
  }
  func.func @transform_1(%arg0: i32, %arg1: i32, %arg2: i32) -> (i32, i32) {
    %c0_i32 = arith.constant 0 : i32
    return %arg2, %arg1 : i32, i32
  }
  func.func @transform_2(%arg0: i32, %arg1: i32, %arg2: i32) -> (i32, i32) {
    %c0_i32 = arith.constant 0 : i32
    %c0_i32_0 = arith.constant 0 : i32
    return %c0_i32, %arg1 : i32, i32
  }
  func.func @transform_3(%arg0: i32, %arg1: i32, %arg2: i32) -> (i32, i32) {
    %c0_i32 = arith.constant 0 : i32
    return %arg0, %arg1 : i32, i32
  }
}

module attributes {stable_mosaic.version = 11 : i64} {
  func.func @_matmul_bias_kernel(%arg0: i32, %arg1: i32, %arg2: i32, %arg3: memref<32x72xbf16, #tpu.memory_space<vmem>>, %arg4: memref<72x16xbf16, #tpu.memory_space<vmem>>, %arg5: memref<1x16xf32, #tpu.memory_space<vmem>>, %arg6: memref<32x16xf32, #tpu.memory_space<vmem>>, %arg7: memref<32x16xf32, #tpu.memory_space<vmem>>) attributes {dimension_semantics = [#tpu.dimension_semantics<parallel>, #tpu.dimension_semantics<parallel>, #tpu.dimension_semantics<arbitrary>], iteration_bounds = array<i64: 1, 1, 1>, scalar_prefetch = 0 : i64, scratch_operands = 1 : i64, tpu.core_type = #tpu.core_type<tc>, window_params = [{transform_indices = @transform_0, window_bounds = array<i64: 32, 72>}, {transform_indices = @transform_1, window_bounds = array<i64: 72, 16>}, {transform_indices = @transform_2, window_bounds = array<i64: 1, 16>}, {transform_indices = @transform_3, window_bounds = array<i64: 32, 16>}]} {
    %c0_i32 = arith.constant 0 : i32
    %0 = arith.cmpi eq, %arg2, %c0_i32 : i32
    %1 = arith.extui %0 : i1 to i32
    %c0_i32_0 = arith.constant 0 : i32
    %2 = arith.cmpi ne, %1, %c0_i32_0 : i32
    scf.if %2 {
      %cst_10 = arith.constant 0.000000e+00 : f32
      %12 = vector.broadcast %cst_10 : f32 to vector<32x16xf32>
      %c0_11 = arith.constant 0 : index
      %c0_12 = arith.constant 0 : index
      %13 = vector.load %arg7[%c0_11, %c0_12] : memref<32x16xf32, #tpu.memory_space<vmem>>, vector<32x16xf32>
      tpu.vector_store %arg7[%c0_11, %c0_12], %12 {strides = array<i32>} : memref<32x16xf32, #tpu.memory_space<vmem>>, vector<32x16xf32>,
    } else {
    }
    %c0 = arith.constant 0 : index
    %c0_1 = arith.constant 0 : index
    %3 = vector.load %arg7[%c0, %c0_1] : memref<32x16xf32, #tpu.memory_space<vmem>>, vector<32x16xf32>
    %c0_2 = arith.constant 0 : index
    %c0_3 = arith.constant 0 : index
    %4 = vector.load %arg3[%c0_2, %c0_3] : memref<32x72xbf16, #tpu.memory_space<vmem>>, vector<32x72xbf16>
    %c0_4 = arith.constant 0 : index
    %c0_5 = arith.constant 0 : index
    %5 = vector.load %arg4[%c0_4, %c0_5] : memref<72x16xbf16, #tpu.memory_space<vmem>>, vector<72x16xbf16>
    %cst = arith.constant dense<0.000000e+00> : vector<32x16xf32>
    %6 = tpu.matmul %4, %5, %cst {dimension_numbers = #tpu.dot_dimension_numbers<[1], [0], [0], [1], [0, 0, 1, 1], [], []>} : vector<32x72xbf16>, vector<72x16xbf16>, vector<32x16xf32> -> vector<32x16xf32>
    %7 = arith.addf %3, %6 : vector<32x16xf32>
    %c0_6 = arith.constant 0 : index
    %c0_7 = arith.constant 0 : index
    %8 = vector.load %arg7[%c0_6, %c0_7] : memref<32x16xf32, #tpu.memory_space<vmem>>, vector<32x16xf32>
    tpu.vector_store %arg7[%c0_6, %c0_7], %7 {strides = array<i32>} : memref<32x16xf32, #tpu.memory_space<vmem>>, vector<32x16xf32>,
    %c0_i32_8 = arith.constant 0 : i32
    %9 = arith.cmpi eq, %arg2, %c0_i32_8 : i32
    %10 = arith.extui %9 : i1 to i32
    %c0_i32_9 = arith.constant 0 : i32
    %11 = arith.cmpi ne, %10, %c0_i32_9 : i32
    scf.if %11 {
      %c0_10 = arith.constant 0 : index
      %c0_11 = arith.constant 0 : index
      %12 = vector.load %arg7[%c0_10, %c0_11] : memref<32x16xf32, #tpu.memory_space<vmem>>, vector<32x16xf32>
      %c0_12 = arith.constant 0 : index
      %c0_13 = arith.constant 0 : index
      %13 = vector.load %arg5[%c0_12, %c0_13] : memref<1x16xf32, #tpu.memory_space<vmem>>, vector<1x16xf32>
      %14 = vector.broadcast %13 : vector<1x16xf32> to vector<32x16xf32>
      %15 = arith.addf %12, %14 : vector<32x16xf32>
      %cst_14 = arith.constant 0.000000e+00 : f32
      %16 = vector.broadcast %cst_14 : f32 to vector<32x16xf32>
      %17 = arith.maximumf %15, %16 : vector<32x16xf32>
      %c0_15 = arith.constant 0 : index
      %c0_16 = arith.constant 0 : index
      %18 = vector.load %arg6[%c0_15, %c0_16] : memref<32x16xf32, #tpu.memory_space<vmem>>, vector<32x16xf32>
      tpu.vector_store %arg6[%c0_15, %c0_16], %17 {strides = array<i32>} : memref<32x16xf32, #tpu.memory_space<vmem>>, vector<32x16xf32>,
    } else {
    }
    return
  }
  func.func @transform_0(%arg0: i32, %arg1: i32, %arg2: i32) -> (i32, i32) {
    %c0_i32 = arith.constant 0 : i32
    return %arg0, %arg2 : i32, i32
  }
  func.func @transform_1(%arg0: i32, %arg1: i32, %arg2: i32) -> (i32, i32) {
    %c0_i32 = arith.constant 0 : i32
    return %arg2, %arg1 : i32, i32
  }
  func.func @transform_2(%arg0: i32, %arg1: i32, %arg2: i32) -> (i32, i32) {
    %c0_i32 = arith.constant 0 : i32
    %c0_i32_0 = arith.constant 0 : i32
    return %c0_i32, %arg1 : i32, i32
  }
  func.func @transform_3(%arg0: i32, %arg1: i32, %arg2: i32) -> (i32, i32) {
    %c0_i32 = arith.constant 0 : i32
    return %arg0, %arg1 : i32, i32
  }
}

module attributes {stable_mosaic.version = 11 : i64} {
  func.func @_matmul_bias_kernel(%arg0: i32, %arg1: i32, %arg2: i32, %arg3: memref<8x144xbf16, #tpu.memory_space<vmem>>, %arg4: memref<144x32xbf16, #tpu.memory_space<vmem>>, %arg5: memref<1x32xf32, #tpu.memory_space<vmem>>, %arg6: memref<8x32xf32, #tpu.memory_space<vmem>>, %arg7: memref<8x32xf32, #tpu.memory_space<vmem>>) attributes {dimension_semantics = [#tpu.dimension_semantics<parallel>, #tpu.dimension_semantics<parallel>, #tpu.dimension_semantics<arbitrary>], iteration_bounds = array<i64: 1, 1, 1>, scalar_prefetch = 0 : i64, scratch_operands = 1 : i64, tpu.core_type = #tpu.core_type<tc>, window_params = [{transform_indices = @transform_0, window_bounds = array<i64: 8, 144>}, {transform_indices = @transform_1, window_bounds = array<i64: 144, 32>}, {transform_indices = @transform_2, window_bounds = array<i64: 1, 32>}, {transform_indices = @transform_3, window_bounds = array<i64: 8, 32>}]} {
    %c0_i32 = arith.constant 0 : i32
    %0 = arith.cmpi eq, %arg2, %c0_i32 : i32
    %1 = arith.extui %0 : i1 to i32
    %c0_i32_0 = arith.constant 0 : i32
    %2 = arith.cmpi ne, %1, %c0_i32_0 : i32
    scf.if %2 {
      %cst_10 = arith.constant 0.000000e+00 : f32
      %12 = vector.broadcast %cst_10 : f32 to vector<8x32xf32>
      %c0_11 = arith.constant 0 : index
      %c0_12 = arith.constant 0 : index
      %13 = vector.load %arg7[%c0_11, %c0_12] : memref<8x32xf32, #tpu.memory_space<vmem>>, vector<8x32xf32>
      tpu.vector_store %arg7[%c0_11, %c0_12], %12 {strides = array<i32>} : memref<8x32xf32, #tpu.memory_space<vmem>>, vector<8x32xf32>,
    } else {
    }
    %c0 = arith.constant 0 : index
    %c0_1 = arith.constant 0 : index
    %3 = vector.load %arg7[%c0, %c0_1] : memref<8x32xf32, #tpu.memory_space<vmem>>, vector<8x32xf32>
    %c0_2 = arith.constant 0 : index
    %c0_3 = arith.constant 0 : index
    %4 = vector.load %arg3[%c0_2, %c0_3] : memref<8x144xbf16, #tpu.memory_space<vmem>>, vector<8x144xbf16>
    %c0_4 = arith.constant 0 : index
    %c0_5 = arith.constant 0 : index
    %5 = vector.load %arg4[%c0_4, %c0_5] : memref<144x32xbf16, #tpu.memory_space<vmem>>, vector<144x32xbf16>
    %cst = arith.constant dense<0.000000e+00> : vector<8x32xf32>
    %6 = tpu.matmul %4, %5, %cst {dimension_numbers = #tpu.dot_dimension_numbers<[1], [0], [0], [1], [0, 0, 1, 1], [], []>} : vector<8x144xbf16>, vector<144x32xbf16>, vector<8x32xf32> -> vector<8x32xf32>
    %7 = arith.addf %3, %6 : vector<8x32xf32>
    %c0_6 = arith.constant 0 : index
    %c0_7 = arith.constant 0 : index
    %8 = vector.load %arg7[%c0_6, %c0_7] : memref<8x32xf32, #tpu.memory_space<vmem>>, vector<8x32xf32>
    tpu.vector_store %arg7[%c0_6, %c0_7], %7 {strides = array<i32>} : memref<8x32xf32, #tpu.memory_space<vmem>>, vector<8x32xf32>,
    %c0_i32_8 = arith.constant 0 : i32
    %9 = arith.cmpi eq, %arg2, %c0_i32_8 : i32
    %10 = arith.extui %9 : i1 to i32
    %c0_i32_9 = arith.constant 0 : i32
    %11 = arith.cmpi ne, %10, %c0_i32_9 : i32
    scf.if %11 {
      %c0_10 = arith.constant 0 : index
      %c0_11 = arith.constant 0 : index
      %12 = vector.load %arg7[%c0_10, %c0_11] : memref<8x32xf32, #tpu.memory_space<vmem>>, vector<8x32xf32>
      %c0_12 = arith.constant 0 : index
      %c0_13 = arith.constant 0 : index
      %13 = vector.load %arg5[%c0_12, %c0_13] : memref<1x32xf32, #tpu.memory_space<vmem>>, vector<1x32xf32>
      %14 = vector.broadcast %13 : vector<1x32xf32> to vector<8x32xf32>
      %15 = arith.addf %12, %14 : vector<8x32xf32>
      %cst_14 = arith.constant 0.000000e+00 : f32
      %16 = vector.broadcast %cst_14 : f32 to vector<8x32xf32>
      %17 = arith.maximumf %15, %16 : vector<8x32xf32>
      %c0_15 = arith.constant 0 : index
      %c0_16 = arith.constant 0 : index
      %18 = vector.load %arg6[%c0_15, %c0_16] : memref<8x32xf32, #tpu.memory_space<vmem>>, vector<8x32xf32>
      tpu.vector_store %arg6[%c0_15, %c0_16], %17 {strides = array<i32>} : memref<8x32xf32, #tpu.memory_space<vmem>>, vector<8x32xf32>,
    } else {
    }
    return
  }
  func.func @transform_0(%arg0: i32, %arg1: i32, %arg2: i32) -> (i32, i32) {
    %c0_i32 = arith.constant 0 : i32
    return %arg0, %arg2 : i32, i32
  }
  func.func @transform_1(%arg0: i32, %arg1: i32, %arg2: i32) -> (i32, i32) {
    %c0_i32 = arith.constant 0 : i32
    return %arg2, %arg1 : i32, i32
  }
  func.func @transform_2(%arg0: i32, %arg1: i32, %arg2: i32) -> (i32, i32) {
    %c0_i32 = arith.constant 0 : i32
    %c0_i32_0 = arith.constant 0 : i32
    return %c0_i32, %arg1 : i32, i32
  }
  func.func @transform_3(%arg0: i32, %arg1: i32, %arg2: i32) -> (i32, i32) {
    %c0_i32 = arith.constant 0 : i32
    return %arg0, %arg1 : i32, i32
  }
}

module attributes {stable_mosaic.version = 11 : i64} {
  func.func @_matmul_bias_kernel(%arg0: i32, %arg1: i32, %arg2: i32, %arg3: memref<2x288xbf16, #tpu.memory_space<vmem>>, %arg4: memref<288x64xbf16, #tpu.memory_space<vmem>>, %arg5: memref<1x64xf32, #tpu.memory_space<vmem>>, %arg6: memref<2x64xf32, #tpu.memory_space<vmem>>, %arg7: memref<2x64xf32, #tpu.memory_space<vmem>>) attributes {dimension_semantics = [#tpu.dimension_semantics<parallel>, #tpu.dimension_semantics<parallel>, #tpu.dimension_semantics<arbitrary>], iteration_bounds = array<i64: 1, 1, 1>, scalar_prefetch = 0 : i64, scratch_operands = 1 : i64, tpu.core_type = #tpu.core_type<tc>, window_params = [{transform_indices = @transform_0, window_bounds = array<i64: 2, 288>}, {transform_indices = @transform_1, window_bounds = array<i64: 288, 64>}, {transform_indices = @transform_2, window_bounds = array<i64: 1, 64>}, {transform_indices = @transform_3, window_bounds = array<i64: 2, 64>}]} {
    %c0_i32 = arith.constant 0 : i32
    %0 = arith.cmpi eq, %arg2, %c0_i32 : i32
    %1 = arith.extui %0 : i1 to i32
    %c0_i32_0 = arith.constant 0 : i32
    %2 = arith.cmpi ne, %1, %c0_i32_0 : i32
    scf.if %2 {
      %cst_10 = arith.constant 0.000000e+00 : f32
      %12 = vector.broadcast %cst_10 : f32 to vector<2x64xf32>
      %c0_11 = arith.constant 0 : index
      %c0_12 = arith.constant 0 : index
      %13 = vector.load %arg7[%c0_11, %c0_12] : memref<2x64xf32, #tpu.memory_space<vmem>>, vector<2x64xf32>
      tpu.vector_store %arg7[%c0_11, %c0_12], %12 {strides = array<i32>} : memref<2x64xf32, #tpu.memory_space<vmem>>, vector<2x64xf32>,
    } else {
    }
    %c0 = arith.constant 0 : index
    %c0_1 = arith.constant 0 : index
    %3 = vector.load %arg7[%c0, %c0_1] : memref<2x64xf32, #tpu.memory_space<vmem>>, vector<2x64xf32>
    %c0_2 = arith.constant 0 : index
    %c0_3 = arith.constant 0 : index
    %4 = vector.load %arg3[%c0_2, %c0_3] : memref<2x288xbf16, #tpu.memory_space<vmem>>, vector<2x288xbf16>
    %c0_4 = arith.constant 0 : index
    %c0_5 = arith.constant 0 : index
    %5 = vector.load %arg4[%c0_4, %c0_5] : memref<288x64xbf16, #tpu.memory_space<vmem>>, vector<288x64xbf16>
    %cst = arith.constant dense<0.000000e+00> : vector<2x64xf32>
    %6 = tpu.matmul %4, %5, %cst {dimension_numbers = #tpu.dot_dimension_numbers<[1], [0], [0], [1], [0, 0, 1, 1], [], []>} : vector<2x288xbf16>, vector<288x64xbf16>, vector<2x64xf32> -> vector<2x64xf32>
    %7 = arith.addf %3, %6 : vector<2x64xf32>
    %c0_6 = arith.constant 0 : index
    %c0_7 = arith.constant 0 : index
    %8 = vector.load %arg7[%c0_6, %c0_7] : memref<2x64xf32, #tpu.memory_space<vmem>>, vector<2x64xf32>
    tpu.vector_store %arg7[%c0_6, %c0_7], %7 {strides = array<i32>} : memref<2x64xf32, #tpu.memory_space<vmem>>, vector<2x64xf32>,
    %c0_i32_8 = arith.constant 0 : i32
    %9 = arith.cmpi eq, %arg2, %c0_i32_8 : i32
    %10 = arith.extui %9 : i1 to i32
    %c0_i32_9 = arith.constant 0 : i32
    %11 = arith.cmpi ne, %10, %c0_i32_9 : i32
    scf.if %11 {
      %c0_10 = arith.constant 0 : index
      %c0_11 = arith.constant 0 : index
      %12 = vector.load %arg7[%c0_10, %c0_11] : memref<2x64xf32, #tpu.memory_space<vmem>>, vector<2x64xf32>
      %c0_12 = arith.constant 0 : index
      %c0_13 = arith.constant 0 : index
      %13 = vector.load %arg5[%c0_12, %c0_13] : memref<1x64xf32, #tpu.memory_space<vmem>>, vector<1x64xf32>
      %14 = vector.broadcast %13 : vector<1x64xf32> to vector<2x64xf32>
      %15 = arith.addf %12, %14 : vector<2x64xf32>
      %cst_14 = arith.constant 0.000000e+00 : f32
      %16 = vector.broadcast %cst_14 : f32 to vector<2x64xf32>
      %17 = arith.maximumf %15, %16 : vector<2x64xf32>
      %c0_15 = arith.constant 0 : index
      %c0_16 = arith.constant 0 : index
      %18 = vector.load %arg6[%c0_15, %c0_16] : memref<2x64xf32, #tpu.memory_space<vmem>>, vector<2x64xf32>
      tpu.vector_store %arg6[%c0_15, %c0_16], %17 {strides = array<i32>} : memref<2x64xf32, #tpu.memory_space<vmem>>, vector<2x64xf32>,
    } else {
    }
    return
  }
  func.func @transform_0(%arg0: i32, %arg1: i32, %arg2: i32) -> (i32, i32) {
    %c0_i32 = arith.constant 0 : i32
    return %arg0, %arg2 : i32, i32
  }
  func.func @transform_1(%arg0: i32, %arg1: i32, %arg2: i32) -> (i32, i32) {
    %c0_i32 = arith.constant 0 : i32
    return %arg2, %arg1 : i32, i32
  }
  func.func @transform_2(%arg0: i32, %arg1: i32, %arg2: i32) -> (i32, i32) {
    %c0_i32 = arith.constant 0 : i32
    %c0_i32_0 = arith.constant 0 : i32
    return %c0_i32, %arg1 : i32, i32
  }
  func.func @transform_3(%arg0: i32, %arg1: i32, %arg2: i32) -> (i32, i32) {
    %c0_i32 = arith.constant 0 : i32
    return %arg0, %arg1 : i32, i32
  }
}

module attributes {stable_mosaic.version = 11 : i64} {
  func.func @_matmul_bias_kernel(%arg0: i32, %arg1: i32, %arg2: i32, %arg3: memref<2x64xbf16, #tpu.memory_space<vmem>>, %arg4: memref<64x16xbf16, #tpu.memory_space<vmem>>, %arg5: memref<1x16xf32, #tpu.memory_space<vmem>>, %arg6: memref<2x16xf32, #tpu.memory_space<vmem>>, %arg7: memref<2x16xf32, #tpu.memory_space<vmem>>) attributes {dimension_semantics = [#tpu.dimension_semantics<parallel>, #tpu.dimension_semantics<parallel>, #tpu.dimension_semantics<arbitrary>], iteration_bounds = array<i64: 1, 1, 1>, scalar_prefetch = 0 : i64, scratch_operands = 1 : i64, tpu.core_type = #tpu.core_type<tc>, window_params = [{transform_indices = @transform_0, window_bounds = array<i64: 2, 64>}, {transform_indices = @transform_1, window_bounds = array<i64: 64, 16>}, {transform_indices = @transform_2, window_bounds = array<i64: 1, 16>}, {transform_indices = @transform_3, window_bounds = array<i64: 2, 16>}]} {
    %c0_i32 = arith.constant 0 : i32
    %0 = arith.cmpi eq, %arg2, %c0_i32 : i32
    %1 = arith.extui %0 : i1 to i32
    %c0_i32_0 = arith.constant 0 : i32
    %2 = arith.cmpi ne, %1, %c0_i32_0 : i32
    scf.if %2 {
      %cst_10 = arith.constant 0.000000e+00 : f32
      %12 = vector.broadcast %cst_10 : f32 to vector<2x16xf32>
      %c0_11 = arith.constant 0 : index
      %c0_12 = arith.constant 0 : index
      %13 = vector.load %arg7[%c0_11, %c0_12] : memref<2x16xf32, #tpu.memory_space<vmem>>, vector<2x16xf32>
      tpu.vector_store %arg7[%c0_11, %c0_12], %12 {strides = array<i32>} : memref<2x16xf32, #tpu.memory_space<vmem>>, vector<2x16xf32>,
    } else {
    }
    %c0 = arith.constant 0 : index
    %c0_1 = arith.constant 0 : index
    %3 = vector.load %arg7[%c0, %c0_1] : memref<2x16xf32, #tpu.memory_space<vmem>>, vector<2x16xf32>
    %c0_2 = arith.constant 0 : index
    %c0_3 = arith.constant 0 : index
    %4 = vector.load %arg3[%c0_2, %c0_3] : memref<2x64xbf16, #tpu.memory_space<vmem>>, vector<2x64xbf16>
    %c0_4 = arith.constant 0 : index
    %c0_5 = arith.constant 0 : index
    %5 = vector.load %arg4[%c0_4, %c0_5] : memref<64x16xbf16, #tpu.memory_space<vmem>>, vector<64x16xbf16>
    %cst = arith.constant dense<0.000000e+00> : vector<2x16xf32>
    %6 = tpu.matmul %4, %5, %cst {dimension_numbers = #tpu.dot_dimension_numbers<[1], [0], [0], [1], [0, 0, 1, 1], [], []>} : vector<2x64xbf16>, vector<64x16xbf16>, vector<2x16xf32> -> vector<2x16xf32>
    %7 = arith.addf %3, %6 : vector<2x16xf32>
    %c0_6 = arith.constant 0 : index
    %c0_7 = arith.constant 0 : index
    %8 = vector.load %arg7[%c0_6, %c0_7] : memref<2x16xf32, #tpu.memory_space<vmem>>, vector<2x16xf32>
    tpu.vector_store %arg7[%c0_6, %c0_7], %7 {strides = array<i32>} : memref<2x16xf32, #tpu.memory_space<vmem>>, vector<2x16xf32>,
    %c0_i32_8 = arith.constant 0 : i32
    %9 = arith.cmpi eq, %arg2, %c0_i32_8 : i32
    %10 = arith.extui %9 : i1 to i32
    %c0_i32_9 = arith.constant 0 : i32
    %11 = arith.cmpi ne, %10, %c0_i32_9 : i32
    scf.if %11 {
      %c0_10 = arith.constant 0 : index
      %c0_11 = arith.constant 0 : index
      %12 = vector.load %arg7[%c0_10, %c0_11] : memref<2x16xf32, #tpu.memory_space<vmem>>, vector<2x16xf32>
      %c0_12 = arith.constant 0 : index
      %c0_13 = arith.constant 0 : index
      %13 = vector.load %arg5[%c0_12, %c0_13] : memref<1x16xf32, #tpu.memory_space<vmem>>, vector<1x16xf32>
      %14 = vector.broadcast %13 : vector<1x16xf32> to vector<2x16xf32>
      %15 = arith.addf %12, %14 : vector<2x16xf32>
      %c0_14 = arith.constant 0 : index
      %c0_15 = arith.constant 0 : index
      %16 = vector.load %arg6[%c0_14, %c0_15] : memref<2x16xf32, #tpu.memory_space<vmem>>, vector<2x16xf32>
      tpu.vector_store %arg6[%c0_14, %c0_15], %15 {strides = array<i32>} : memref<2x16xf32, #tpu.memory_space<vmem>>, vector<2x16xf32>,
    } else {
    }
    return
  }
  func.func @transform_0(%arg0: i32, %arg1: i32, %arg2: i32) -> (i32, i32) {
    %c0_i32 = arith.constant 0 : i32
    return %arg0, %arg2 : i32, i32
  }
  func.func @transform_1(%arg0: i32, %arg1: i32, %arg2: i32) -> (i32, i32) {
    %c0_i32 = arith.constant 0 : i32
    return %arg2, %arg1 : i32, i32
  }
  func.func @transform_2(%arg0: i32, %arg1: i32, %arg2: i32) -> (i32, i32) {
    %c0_i32 = arith.constant 0 : i32
    %c0_i32_0 = arith.constant 0 : i32
    return %c0_i32, %arg1 : i32, i32
  }
  func.func @transform_3(%arg0: i32, %arg1: i32, %arg2: i32) -> (i32, i32) {
    %c0_i32 = arith.constant 0 : i32
    return %arg0, %arg1 : i32, i32
  }
}

module attributes {stable_mosaic.version = 11 : i64} {
  func.func @_matmul_bias_kernel(%arg0: i32, %arg1: i32, %arg2: i32, %arg3: memref<8x32xbf16, #tpu.memory_space<vmem>>, %arg4: memref<32x16xbf16, #tpu.memory_space<vmem>>, %arg5: memref<1x16xf32, #tpu.memory_space<vmem>>, %arg6: memref<8x16xf32, #tpu.memory_space<vmem>>, %arg7: memref<8x16xf32, #tpu.memory_space<vmem>>) attributes {dimension_semantics = [#tpu.dimension_semantics<parallel>, #tpu.dimension_semantics<parallel>, #tpu.dimension_semantics<arbitrary>], iteration_bounds = array<i64: 1, 1, 1>, scalar_prefetch = 0 : i64, scratch_operands = 1 : i64, tpu.core_type = #tpu.core_type<tc>, window_params = [{transform_indices = @transform_0, window_bounds = array<i64: 8, 32>}, {transform_indices = @transform_1, window_bounds = array<i64: 32, 16>}, {transform_indices = @transform_2, window_bounds = array<i64: 1, 16>}, {transform_indices = @transform_3, window_bounds = array<i64: 8, 16>}]} {
    %c0_i32 = arith.constant 0 : i32
    %0 = arith.cmpi eq, %arg2, %c0_i32 : i32
    %1 = arith.extui %0 : i1 to i32
    %c0_i32_0 = arith.constant 0 : i32
    %2 = arith.cmpi ne, %1, %c0_i32_0 : i32
    scf.if %2 {
      %cst_10 = arith.constant 0.000000e+00 : f32
      %12 = vector.broadcast %cst_10 : f32 to vector<8x16xf32>
      %c0_11 = arith.constant 0 : index
      %c0_12 = arith.constant 0 : index
      %13 = vector.load %arg7[%c0_11, %c0_12] : memref<8x16xf32, #tpu.memory_space<vmem>>, vector<8x16xf32>
      tpu.vector_store %arg7[%c0_11, %c0_12], %12 {strides = array<i32>} : memref<8x16xf32, #tpu.memory_space<vmem>>, vector<8x16xf32>,
    } else {
    }
    %c0 = arith.constant 0 : index
    %c0_1 = arith.constant 0 : index
    %3 = vector.load %arg7[%c0, %c0_1] : memref<8x16xf32, #tpu.memory_space<vmem>>, vector<8x16xf32>
    %c0_2 = arith.constant 0 : index
    %c0_3 = arith.constant 0 : index
    %4 = vector.load %arg3[%c0_2, %c0_3] : memref<8x32xbf16, #tpu.memory_space<vmem>>, vector<8x32xbf16>
    %c0_4 = arith.constant 0 : index
    %c0_5 = arith.constant 0 : index
    %5 = vector.load %arg4[%c0_4, %c0_5] : memref<32x16xbf16, #tpu.memory_space<vmem>>, vector<32x16xbf16>
    %cst = arith.constant dense<0.000000e+00> : vector<8x16xf32>
    %6 = tpu.matmul %4, %5, %cst {dimension_numbers = #tpu.dot_dimension_numbers<[1], [0], [0], [1], [0, 0, 1, 1], [], []>} : vector<8x32xbf16>, vector<32x16xbf16>, vector<8x16xf32> -> vector<8x16xf32>
    %7 = arith.addf %3, %6 : vector<8x16xf32>
    %c0_6 = arith.constant 0 : index
    %c0_7 = arith.constant 0 : index
    %8 = vector.load %arg7[%c0_6, %c0_7] : memref<8x16xf32, #tpu.memory_space<vmem>>, vector<8x16xf32>
    tpu.vector_store %arg7[%c0_6, %c0_7], %7 {strides = array<i32>} : memref<8x16xf32, #tpu.memory_space<vmem>>, vector<8x16xf32>,
    %c0_i32_8 = arith.constant 0 : i32
    %9 = arith.cmpi eq, %arg2, %c0_i32_8 : i32
    %10 = arith.extui %9 : i1 to i32
    %c0_i32_9 = arith.constant 0 : i32
    %11 = arith.cmpi ne, %10, %c0_i32_9 : i32
    scf.if %11 {
      %c0_10 = arith.constant 0 : index
      %c0_11 = arith.constant 0 : index
      %12 = vector.load %arg7[%c0_10, %c0_11] : memref<8x16xf32, #tpu.memory_space<vmem>>, vector<8x16xf32>
      %c0_12 = arith.constant 0 : index
      %c0_13 = arith.constant 0 : index
      %13 = vector.load %arg5[%c0_12, %c0_13] : memref<1x16xf32, #tpu.memory_space<vmem>>, vector<1x16xf32>
      %14 = vector.broadcast %13 : vector<1x16xf32> to vector<8x16xf32>
      %15 = arith.addf %12, %14 : vector<8x16xf32>
      %c0_14 = arith.constant 0 : index
      %c0_15 = arith.constant 0 : index
      %16 = vector.load %arg6[%c0_14, %c0_15] : memref<8x16xf32, #tpu.memory_space<vmem>>, vector<8x16xf32>
      tpu.vector_store %arg6[%c0_14, %c0_15], %15 {strides = array<i32>} : memref<8x16xf32, #tpu.memory_space<vmem>>, vector<8x16xf32>,
    } else {
    }
    return
  }
  func.func @transform_0(%arg0: i32, %arg1: i32, %arg2: i32) -> (i32, i32) {
    %c0_i32 = arith.constant 0 : i32
    return %arg0, %arg2 : i32, i32
  }
  func.func @transform_1(%arg0: i32, %arg1: i32, %arg2: i32) -> (i32, i32) {
    %c0_i32 = arith.constant 0 : i32
    return %arg2, %arg1 : i32, i32
  }
  func.func @transform_2(%arg0: i32, %arg1: i32, %arg2: i32) -> (i32, i32) {
    %c0_i32 = arith.constant 0 : i32
    %c0_i32_0 = arith.constant 0 : i32
    return %c0_i32, %arg1 : i32, i32
  }
  func.func @transform_3(%arg0: i32, %arg1: i32, %arg2: i32) -> (i32, i32) {
    %c0_i32 = arith.constant 0 : i32
    return %arg0, %arg1 : i32, i32
  }
}

module attributes {stable_mosaic.version = 11 : i64} {
  func.func @_matmul_bias_kernel(%arg0: i32, %arg1: i32, %arg2: i32, %arg3: memref<32x16xbf16, #tpu.memory_space<vmem>>, %arg4: memref<16x16xbf16, #tpu.memory_space<vmem>>, %arg5: memref<1x16xf32, #tpu.memory_space<vmem>>, %arg6: memref<32x16xf32, #tpu.memory_space<vmem>>, %arg7: memref<32x16xf32, #tpu.memory_space<vmem>>) attributes {dimension_semantics = [#tpu.dimension_semantics<parallel>, #tpu.dimension_semantics<parallel>, #tpu.dimension_semantics<arbitrary>], iteration_bounds = array<i64: 1, 1, 1>, scalar_prefetch = 0 : i64, scratch_operands = 1 : i64, tpu.core_type = #tpu.core_type<tc>, window_params = [{transform_indices = @transform_0, window_bounds = array<i64: 32, 16>}, {transform_indices = @transform_1, window_bounds = array<i64: 16, 16>}, {transform_indices = @transform_2, window_bounds = array<i64: 1, 16>}, {transform_indices = @transform_3, window_bounds = array<i64: 32, 16>}]} {
    %c0_i32 = arith.constant 0 : i32
    %0 = arith.cmpi eq, %arg2, %c0_i32 : i32
    %1 = arith.extui %0 : i1 to i32
    %c0_i32_0 = arith.constant 0 : i32
    %2 = arith.cmpi ne, %1, %c0_i32_0 : i32
    scf.if %2 {
      %cst_10 = arith.constant 0.000000e+00 : f32
      %12 = vector.broadcast %cst_10 : f32 to vector<32x16xf32>
      %c0_11 = arith.constant 0 : index
      %c0_12 = arith.constant 0 : index
      %13 = vector.load %arg7[%c0_11, %c0_12] : memref<32x16xf32, #tpu.memory_space<vmem>>, vector<32x16xf32>
      tpu.vector_store %arg7[%c0_11, %c0_12], %12 {strides = array<i32>} : memref<32x16xf32, #tpu.memory_space<vmem>>, vector<32x16xf32>,
    } else {
    }
    %c0 = arith.constant 0 : index
    %c0_1 = arith.constant 0 : index
    %3 = vector.load %arg7[%c0, %c0_1] : memref<32x16xf32, #tpu.memory_space<vmem>>, vector<32x16xf32>
    %c0_2 = arith.constant 0 : index
    %c0_3 = arith.constant 0 : index
    %4 = vector.load %arg3[%c0_2, %c0_3] : memref<32x16xbf16, #tpu.memory_space<vmem>>, vector<32x16xbf16>
    %c0_4 = arith.constant 0 : index
    %c0_5 = arith.constant 0 : index
    %5 = vector.load %arg4[%c0_4, %c0_5] : memref<16x16xbf16, #tpu.memory_space<vmem>>, vector<16x16xbf16>
    %cst = arith.constant dense<0.000000e+00> : vector<32x16xf32>
    %6 = tpu.matmul %4, %5, %cst {dimension_numbers = #tpu.dot_dimension_numbers<[1], [0], [0], [1], [0, 0, 1, 1], [], []>} : vector<32x16xbf16>, vector<16x16xbf16>, vector<32x16xf32> -> vector<32x16xf32>
    %7 = arith.addf %3, %6 : vector<32x16xf32>
    %c0_6 = arith.constant 0 : index
    %c0_7 = arith.constant 0 : index
    %8 = vector.load %arg7[%c0_6, %c0_7] : memref<32x16xf32, #tpu.memory_space<vmem>>, vector<32x16xf32>
    tpu.vector_store %arg7[%c0_6, %c0_7], %7 {strides = array<i32>} : memref<32x16xf32, #tpu.memory_space<vmem>>, vector<32x16xf32>,
    %c0_i32_8 = arith.constant 0 : i32
    %9 = arith.cmpi eq, %arg2, %c0_i32_8 : i32
    %10 = arith.extui %9 : i1 to i32
    %c0_i32_9 = arith.constant 0 : i32
    %11 = arith.cmpi ne, %10, %c0_i32_9 : i32
    scf.if %11 {
      %c0_10 = arith.constant 0 : index
      %c0_11 = arith.constant 0 : index
      %12 = vector.load %arg7[%c0_10, %c0_11] : memref<32x16xf32, #tpu.memory_space<vmem>>, vector<32x16xf32>
      %c0_12 = arith.constant 0 : index
      %c0_13 = arith.constant 0 : index
      %13 = vector.load %arg5[%c0_12, %c0_13] : memref<1x16xf32, #tpu.memory_space<vmem>>, vector<1x16xf32>
      %14 = vector.broadcast %13 : vector<1x16xf32> to vector<32x16xf32>
      %15 = arith.addf %12, %14 : vector<32x16xf32>
      %c0_14 = arith.constant 0 : index
      %c0_15 = arith.constant 0 : index
      %16 = vector.load %arg6[%c0_14, %c0_15] : memref<32x16xf32, #tpu.memory_space<vmem>>, vector<32x16xf32>
      tpu.vector_store %arg6[%c0_14, %c0_15], %15 {strides = array<i32>} : memref<32x16xf32, #tpu.memory_space<vmem>>, vector<32x16xf32>,
    } else {
    }
    return
  }
  func.func @transform_0(%arg0: i32, %arg1: i32, %arg2: i32) -> (i32, i32) {
    %c0_i32 = arith.constant 0 : i32
    return %arg0, %arg2 : i32, i32
  }
  func.func @transform_1(%arg0: i32, %arg1: i32, %arg2: i32) -> (i32, i32) {
    %c0_i32 = arith.constant 0 : i32
    return %arg2, %arg1 : i32, i32
  }
  func.func @transform_2(%arg0: i32, %arg1: i32, %arg2: i32) -> (i32, i32) {
    %c0_i32 = arith.constant 0 : i32
    %c0_i32_0 = arith.constant 0 : i32
    return %c0_i32, %arg1 : i32, i32
  }
  func.func @transform_3(%arg0: i32, %arg1: i32, %arg2: i32) -> (i32, i32) {
    %c0_i32 = arith.constant 0 : i32
    return %arg0, %arg1 : i32, i32
  }
}

module attributes {stable_mosaic.version = 11 : i64} {
  func.func @_matmul_bias_kernel(%arg0: i32, %arg1: i32, %arg2: i32, %arg3: memref<128x8xbf16, #tpu.memory_space<vmem>>, %arg4: memref<8x16xbf16, #tpu.memory_space<vmem>>, %arg5: memref<1x16xf32, #tpu.memory_space<vmem>>, %arg6: memref<128x16xf32, #tpu.memory_space<vmem>>, %arg7: memref<128x16xf32, #tpu.memory_space<vmem>>) attributes {dimension_semantics = [#tpu.dimension_semantics<parallel>, #tpu.dimension_semantics<parallel>, #tpu.dimension_semantics<arbitrary>], iteration_bounds = array<i64: 1, 1, 1>, scalar_prefetch = 0 : i64, scratch_operands = 1 : i64, tpu.core_type = #tpu.core_type<tc>, window_params = [{transform_indices = @transform_0, window_bounds = array<i64: 128, 8>}, {transform_indices = @transform_1, window_bounds = array<i64: 8, 16>}, {transform_indices = @transform_2, window_bounds = array<i64: 1, 16>}, {transform_indices = @transform_3, window_bounds = array<i64: 128, 16>}]} {
    %c0_i32 = arith.constant 0 : i32
    %0 = arith.cmpi eq, %arg2, %c0_i32 : i32
    %1 = arith.extui %0 : i1 to i32
    %c0_i32_0 = arith.constant 0 : i32
    %2 = arith.cmpi ne, %1, %c0_i32_0 : i32
    scf.if %2 {
      %cst_10 = arith.constant 0.000000e+00 : f32
      %12 = vector.broadcast %cst_10 : f32 to vector<128x16xf32>
      %c0_11 = arith.constant 0 : index
      %c0_12 = arith.constant 0 : index
      %13 = vector.load %arg7[%c0_11, %c0_12] : memref<128x16xf32, #tpu.memory_space<vmem>>, vector<128x16xf32>
      tpu.vector_store %arg7[%c0_11, %c0_12], %12 {strides = array<i32>} : memref<128x16xf32, #tpu.memory_space<vmem>>, vector<128x16xf32>,
    } else {
    }
    %c0 = arith.constant 0 : index
    %c0_1 = arith.constant 0 : index
    %3 = vector.load %arg7[%c0, %c0_1] : memref<128x16xf32, #tpu.memory_space<vmem>>, vector<128x16xf32>
    %c0_2 = arith.constant 0 : index
    %c0_3 = arith.constant 0 : index
    %4 = vector.load %arg3[%c0_2, %c0_3] : memref<128x8xbf16, #tpu.memory_space<vmem>>, vector<128x8xbf16>
    %c0_4 = arith.constant 0 : index
    %c0_5 = arith.constant 0 : index
    %5 = vector.load %arg4[%c0_4, %c0_5] : memref<8x16xbf16, #tpu.memory_space<vmem>>, vector<8x16xbf16>
    %cst = arith.constant dense<0.000000e+00> : vector<128x16xf32>
    %6 = tpu.matmul %4, %5, %cst {dimension_numbers = #tpu.dot_dimension_numbers<[1], [0], [0], [1], [0, 0, 1, 1], [], []>} : vector<128x8xbf16>, vector<8x16xbf16>, vector<128x16xf32> -> vector<128x16xf32>
    %7 = arith.addf %3, %6 : vector<128x16xf32>
    %c0_6 = arith.constant 0 : index
    %c0_7 = arith.constant 0 : index
    %8 = vector.load %arg7[%c0_6, %c0_7] : memref<128x16xf32, #tpu.memory_space<vmem>>, vector<128x16xf32>
    tpu.vector_store %arg7[%c0_6, %c0_7], %7 {strides = array<i32>} : memref<128x16xf32, #tpu.memory_space<vmem>>, vector<128x16xf32>,
    %c0_i32_8 = arith.constant 0 : i32
    %9 = arith.cmpi eq, %arg2, %c0_i32_8 : i32
    %10 = arith.extui %9 : i1 to i32
    %c0_i32_9 = arith.constant 0 : i32
    %11 = arith.cmpi ne, %10, %c0_i32_9 : i32
    scf.if %11 {
      %c0_10 = arith.constant 0 : index
      %c0_11 = arith.constant 0 : index
      %12 = vector.load %arg7[%c0_10, %c0_11] : memref<128x16xf32, #tpu.memory_space<vmem>>, vector<128x16xf32>
      %c0_12 = arith.constant 0 : index
      %c0_13 = arith.constant 0 : index
      %13 = vector.load %arg5[%c0_12, %c0_13] : memref<1x16xf32, #tpu.memory_space<vmem>>, vector<1x16xf32>
      %14 = vector.broadcast %13 : vector<1x16xf32> to vector<128x16xf32>
      %15 = arith.addf %12, %14 : vector<128x16xf32>
      %c0_14 = arith.constant 0 : index
      %c0_15 = arith.constant 0 : index
      %16 = vector.load %arg6[%c0_14, %c0_15] : memref<128x16xf32, #tpu.memory_space<vmem>>, vector<128x16xf32>
      tpu.vector_store %arg6[%c0_14, %c0_15], %15 {strides = array<i32>} : memref<128x16xf32, #tpu.memory_space<vmem>>, vector<128x16xf32>,
    } else {
    }
    return
  }
  func.func @transform_0(%arg0: i32, %arg1: i32, %arg2: i32) -> (i32, i32) {
    %c0_i32 = arith.constant 0 : i32
    return %arg0, %arg2 : i32, i32
  }
  func.func @transform_1(%arg0: i32, %arg1: i32, %arg2: i32) -> (i32, i32) {
    %c0_i32 = arith.constant 0 : i32
    return %arg2, %arg1 : i32, i32
  }
  func.func @transform_2(%arg0: i32, %arg1: i32, %arg2: i32) -> (i32, i32) {
    %c0_i32 = arith.constant 0 : i32
    %c0_i32_0 = arith.constant 0 : i32
    return %c0_i32, %arg1 : i32, i32
  }
  func.func @transform_3(%arg0: i32, %arg1: i32, %arg2: i32) -> (i32, i32) {
    %c0_i32 = arith.constant 0 : i32
    return %arg0, %arg1 : i32, i32
  }
}

module attributes {stable_mosaic.version = 11 : i64} {
  func.func @_matmul_bias_kernel(%arg0: i32, %arg1: i32, %arg2: i32, %arg3: memref<128x144xbf16, #tpu.memory_space<vmem>>, %arg4: memref<144x16xbf16, #tpu.memory_space<vmem>>, %arg5: memref<1x16xf32, #tpu.memory_space<vmem>>, %arg6: memref<128x16xf32, #tpu.memory_space<vmem>>, %arg7: memref<128x16xf32, #tpu.memory_space<vmem>>) attributes {dimension_semantics = [#tpu.dimension_semantics<parallel>, #tpu.dimension_semantics<parallel>, #tpu.dimension_semantics<arbitrary>], iteration_bounds = array<i64: 1, 1, 1>, scalar_prefetch = 0 : i64, scratch_operands = 1 : i64, tpu.core_type = #tpu.core_type<tc>, window_params = [{transform_indices = @transform_0, window_bounds = array<i64: 128, 144>}, {transform_indices = @transform_1, window_bounds = array<i64: 144, 16>}, {transform_indices = @transform_2, window_bounds = array<i64: 1, 16>}, {transform_indices = @transform_3, window_bounds = array<i64: 128, 16>}]} {
    %c0_i32 = arith.constant 0 : i32
    %0 = arith.cmpi eq, %arg2, %c0_i32 : i32
    %1 = arith.extui %0 : i1 to i32
    %c0_i32_0 = arith.constant 0 : i32
    %2 = arith.cmpi ne, %1, %c0_i32_0 : i32
    scf.if %2 {
      %cst_10 = arith.constant 0.000000e+00 : f32
      %12 = vector.broadcast %cst_10 : f32 to vector<128x16xf32>
      %c0_11 = arith.constant 0 : index
      %c0_12 = arith.constant 0 : index
      %13 = vector.load %arg7[%c0_11, %c0_12] : memref<128x16xf32, #tpu.memory_space<vmem>>, vector<128x16xf32>
      tpu.vector_store %arg7[%c0_11, %c0_12], %12 {strides = array<i32>} : memref<128x16xf32, #tpu.memory_space<vmem>>, vector<128x16xf32>,
    } else {
    }
    %c0 = arith.constant 0 : index
    %c0_1 = arith.constant 0 : index
    %3 = vector.load %arg7[%c0, %c0_1] : memref<128x16xf32, #tpu.memory_space<vmem>>, vector<128x16xf32>
    %c0_2 = arith.constant 0 : index
    %c0_3 = arith.constant 0 : index
    %4 = vector.load %arg3[%c0_2, %c0_3] : memref<128x144xbf16, #tpu.memory_space<vmem>>, vector<128x144xbf16>
    %c0_4 = arith.constant 0 : index
    %c0_5 = arith.constant 0 : index
    %5 = vector.load %arg4[%c0_4, %c0_5] : memref<144x16xbf16, #tpu.memory_space<vmem>>, vector<144x16xbf16>
    %cst = arith.constant dense<0.000000e+00> : vector<128x16xf32>
    %6 = tpu.matmul %4, %5, %cst {dimension_numbers = #tpu.dot_dimension_numbers<[1], [0], [0], [1], [0, 0, 1, 1], [], []>} : vector<128x144xbf16>, vector<144x16xbf16>, vector<128x16xf32> -> vector<128x16xf32>
    %7 = arith.addf %3, %6 : vector<128x16xf32>
    %c0_6 = arith.constant 0 : index
    %c0_7 = arith.constant 0 : index
    %8 = vector.load %arg7[%c0_6, %c0_7] : memref<128x16xf32, #tpu.memory_space<vmem>>, vector<128x16xf32>
    tpu.vector_store %arg7[%c0_6, %c0_7], %7 {strides = array<i32>} : memref<128x16xf32, #tpu.memory_space<vmem>>, vector<128x16xf32>,
    %c0_i32_8 = arith.constant 0 : i32
    %9 = arith.cmpi eq, %arg2, %c0_i32_8 : i32
    %10 = arith.extui %9 : i1 to i32
    %c0_i32_9 = arith.constant 0 : i32
    %11 = arith.cmpi ne, %10, %c0_i32_9 : i32
    scf.if %11 {
      %c0_10 = arith.constant 0 : index
      %c0_11 = arith.constant 0 : index
      %12 = vector.load %arg7[%c0_10, %c0_11] : memref<128x16xf32, #tpu.memory_space<vmem>>, vector<128x16xf32>
      %c0_12 = arith.constant 0 : index
      %c0_13 = arith.constant 0 : index
      %13 = vector.load %arg5[%c0_12, %c0_13] : memref<1x16xf32, #tpu.memory_space<vmem>>, vector<1x16xf32>
      %14 = vector.broadcast %13 : vector<1x16xf32> to vector<128x16xf32>
      %15 = arith.addf %12, %14 : vector<128x16xf32>
      %c0_14 = arith.constant 0 : index
      %c0_15 = arith.constant 0 : index
      %16 = vector.load %arg6[%c0_14, %c0_15] : memref<128x16xf32, #tpu.memory_space<vmem>>, vector<128x16xf32>
      tpu.vector_store %arg6[%c0_14, %c0_15], %15 {strides = array<i32>} : memref<128x16xf32, #tpu.memory_space<vmem>>, vector<128x16xf32>,
    } else {
    }
    return
  }
  func.func @transform_0(%arg0: i32, %arg1: i32, %arg2: i32) -> (i32, i32) {
    %c0_i32 = arith.constant 0 : i32
    return %arg0, %arg2 : i32, i32
  }
  func.func @transform_1(%arg0: i32, %arg1: i32, %arg2: i32) -> (i32, i32) {
    %c0_i32 = arith.constant 0 : i32
    return %arg2, %arg1 : i32, i32
  }
  func.func @transform_2(%arg0: i32, %arg1: i32, %arg2: i32) -> (i32, i32) {
    %c0_i32 = arith.constant 0 : i32
    %c0_i32_0 = arith.constant 0 : i32
    return %c0_i32, %arg1 : i32, i32
  }
  func.func @transform_3(%arg0: i32, %arg1: i32, %arg2: i32) -> (i32, i32) {
    %c0_i32 = arith.constant 0 : i32
    return %arg0, %arg1 : i32, i32
  }
}

module attributes {stable_mosaic.version = 11 : i64} {
  func.func @_matmul_bias_kernel(%arg0: i32, %arg1: i32, %arg2: i32, %arg3: memref<64x576xbf16, #tpu.memory_space<vmem>>, %arg4: memref<576x32xbf16, #tpu.memory_space<vmem>>, %arg5: memref<1x32xf32, #tpu.memory_space<vmem>>, %arg6: memref<64x32xf32, #tpu.memory_space<vmem>>, %arg7: memref<64x32xf32, #tpu.memory_space<vmem>>) attributes {dimension_semantics = [#tpu.dimension_semantics<parallel>, #tpu.dimension_semantics<parallel>, #tpu.dimension_semantics<arbitrary>], iteration_bounds = array<i64: 1, 1, 1>, scalar_prefetch = 0 : i64, scratch_operands = 1 : i64, tpu.core_type = #tpu.core_type<tc>, window_params = [{transform_indices = @transform_0, window_bounds = array<i64: 64, 576>}, {transform_indices = @transform_1, window_bounds = array<i64: 576, 32>}, {transform_indices = @transform_2, window_bounds = array<i64: 1, 32>}, {transform_indices = @transform_3, window_bounds = array<i64: 64, 32>}]} {
    %c0_i32 = arith.constant 0 : i32
    %0 = arith.cmpi eq, %arg2, %c0_i32 : i32
    %1 = arith.extui %0 : i1 to i32
    %c0_i32_0 = arith.constant 0 : i32
    %2 = arith.cmpi ne, %1, %c0_i32_0 : i32
    scf.if %2 {
      %cst_10 = arith.constant 0.000000e+00 : f32
      %12 = vector.broadcast %cst_10 : f32 to vector<64x32xf32>
      %c0_11 = arith.constant 0 : index
      %c0_12 = arith.constant 0 : index
      %13 = vector.load %arg7[%c0_11, %c0_12] : memref<64x32xf32, #tpu.memory_space<vmem>>, vector<64x32xf32>
      tpu.vector_store %arg7[%c0_11, %c0_12], %12 {strides = array<i32>} : memref<64x32xf32, #tpu.memory_space<vmem>>, vector<64x32xf32>,
    } else {
    }
    %c0 = arith.constant 0 : index
    %c0_1 = arith.constant 0 : index
    %3 = vector.load %arg7[%c0, %c0_1] : memref<64x32xf32, #tpu.memory_space<vmem>>, vector<64x32xf32>
    %c0_2 = arith.constant 0 : index
    %c0_3 = arith.constant 0 : index
    %4 = vector.load %arg3[%c0_2, %c0_3] : memref<64x576xbf16, #tpu.memory_space<vmem>>, vector<64x576xbf16>
    %c0_4 = arith.constant 0 : index
    %c0_5 = arith.constant 0 : index
    %5 = vector.load %arg4[%c0_4, %c0_5] : memref<576x32xbf16, #tpu.memory_space<vmem>>, vector<576x32xbf16>
    %cst = arith.constant dense<0.000000e+00> : vector<64x32xf32>
    %6 = tpu.matmul %4, %5, %cst {dimension_numbers = #tpu.dot_dimension_numbers<[1], [0], [0], [1], [0, 0, 1, 1], [], []>} : vector<64x576xbf16>, vector<576x32xbf16>, vector<64x32xf32> -> vector<64x32xf32>
    %7 = arith.addf %3, %6 : vector<64x32xf32>
    %c0_6 = arith.constant 0 : index
    %c0_7 = arith.constant 0 : index
    %8 = vector.load %arg7[%c0_6, %c0_7] : memref<64x32xf32, #tpu.memory_space<vmem>>, vector<64x32xf32>
    tpu.vector_store %arg7[%c0_6, %c0_7], %7 {strides = array<i32>} : memref<64x32xf32, #tpu.memory_space<vmem>>, vector<64x32xf32>,
    %c0_i32_8 = arith.constant 0 : i32
    %9 = arith.cmpi eq, %arg2, %c0_i32_8 : i32
    %10 = arith.extui %9 : i1 to i32
    %c0_i32_9 = arith.constant 0 : i32
    %11 = arith.cmpi ne, %10, %c0_i32_9 : i32
    scf.if %11 {
      %c0_10 = arith.constant 0 : index
      %c0_11 = arith.constant 0 : index
      %12 = vector.load %arg7[%c0_10, %c0_11] : memref<64x32xf32, #tpu.memory_space<vmem>>, vector<64x32xf32>
      %c0_12 = arith.constant 0 : index
      %c0_13 = arith.constant 0 : index
      %13 = vector.load %arg5[%c0_12, %c0_13] : memref<1x32xf32, #tpu.memory_space<vmem>>, vector<1x32xf32>
      %14 = vector.broadcast %13 : vector<1x32xf32> to vector<64x32xf32>
      %15 = arith.addf %12, %14 : vector<64x32xf32>
      %cst_14 = arith.constant 0.000000e+00 : f32
      %16 = vector.broadcast %cst_14 : f32 to vector<64x32xf32>
      %17 = arith.maximumf %15, %16 : vector<64x32xf32>
      %c0_15 = arith.constant 0 : index
      %c0_16 = arith.constant 0 : index
      %18 = vector.load %arg6[%c0_15, %c0_16] : memref<64x32xf32, #tpu.memory_space<vmem>>, vector<64x32xf32>
      tpu.vector_store %arg6[%c0_15, %c0_16], %17 {strides = array<i32>} : memref<64x32xf32, #tpu.memory_space<vmem>>, vector<64x32xf32>,
    } else {
    }
    return
  }
  func.func @transform_0(%arg0: i32, %arg1: i32, %arg2: i32) -> (i32, i32) {
    %c0_i32 = arith.constant 0 : i32
    return %arg0, %arg2 : i32, i32
  }
  func.func @transform_1(%arg0: i32, %arg1: i32, %arg2: i32) -> (i32, i32) {
    %c0_i32 = arith.constant 0 : i32
    return %arg2, %arg1 : i32, i32
  }
  func.func @transform_2(%arg0: i32, %arg1: i32, %arg2: i32) -> (i32, i32) {
    %c0_i32 = arith.constant 0 : i32
    %c0_i32_0 = arith.constant 0 : i32
    return %c0_i32, %arg1 : i32, i32
  }
  func.func @transform_3(%arg0: i32, %arg1: i32, %arg2: i32) -> (i32, i32) {
    %c0_i32 = arith.constant 0 : i32
    return %arg0, %arg1 : i32, i32
  }
}

module attributes {stable_mosaic.version = 11 : i64} {
  func.func @_matmul_bias_kernel(%arg0: i32, %arg1: i32, %arg2: i32, %arg3: memref<64x288xbf16, #tpu.memory_space<vmem>>, %arg4: memref<288x32xbf16, #tpu.memory_space<vmem>>, %arg5: memref<1x32xf32, #tpu.memory_space<vmem>>, %arg6: memref<64x32xf32, #tpu.memory_space<vmem>>, %arg7: memref<64x32xf32, #tpu.memory_space<vmem>>) attributes {dimension_semantics = [#tpu.dimension_semantics<parallel>, #tpu.dimension_semantics<parallel>, #tpu.dimension_semantics<arbitrary>], iteration_bounds = array<i64: 1, 1, 1>, scalar_prefetch = 0 : i64, scratch_operands = 1 : i64, tpu.core_type = #tpu.core_type<tc>, window_params = [{transform_indices = @transform_0, window_bounds = array<i64: 64, 288>}, {transform_indices = @transform_1, window_bounds = array<i64: 288, 32>}, {transform_indices = @transform_2, window_bounds = array<i64: 1, 32>}, {transform_indices = @transform_3, window_bounds = array<i64: 64, 32>}]} {
    %c0_i32 = arith.constant 0 : i32
    %0 = arith.cmpi eq, %arg2, %c0_i32 : i32
    %1 = arith.extui %0 : i1 to i32
    %c0_i32_0 = arith.constant 0 : i32
    %2 = arith.cmpi ne, %1, %c0_i32_0 : i32
    scf.if %2 {
      %cst_10 = arith.constant 0.000000e+00 : f32
      %12 = vector.broadcast %cst_10 : f32 to vector<64x32xf32>
      %c0_11 = arith.constant 0 : index
      %c0_12 = arith.constant 0 : index
      %13 = vector.load %arg7[%c0_11, %c0_12] : memref<64x32xf32, #tpu.memory_space<vmem>>, vector<64x32xf32>
      tpu.vector_store %arg7[%c0_11, %c0_12], %12 {strides = array<i32>} : memref<64x32xf32, #tpu.memory_space<vmem>>, vector<64x32xf32>,
    } else {
    }
    %c0 = arith.constant 0 : index
    %c0_1 = arith.constant 0 : index
    %3 = vector.load %arg7[%c0, %c0_1] : memref<64x32xf32, #tpu.memory_space<vmem>>, vector<64x32xf32>
    %c0_2 = arith.constant 0 : index
    %c0_3 = arith.constant 0 : index
    %4 = vector.load %arg3[%c0_2, %c0_3] : memref<64x288xbf16, #tpu.memory_space<vmem>>, vector<64x288xbf16>
    %c0_4 = arith.constant 0 : index
    %c0_5 = arith.constant 0 : index
    %5 = vector.load %arg4[%c0_4, %c0_5] : memref<288x32xbf16, #tpu.memory_space<vmem>>, vector<288x32xbf16>
    %cst = arith.constant dense<0.000000e+00> : vector<64x32xf32>
    %6 = tpu.matmul %4, %5, %cst {dimension_numbers = #tpu.dot_dimension_numbers<[1], [0], [0], [1], [0, 0, 1, 1], [], []>} : vector<64x288xbf16>, vector<288x32xbf16>, vector<64x32xf32> -> vector<64x32xf32>
    %7 = arith.addf %3, %6 : vector<64x32xf32>
    %c0_6 = arith.constant 0 : index
    %c0_7 = arith.constant 0 : index
    %8 = vector.load %arg7[%c0_6, %c0_7] : memref<64x32xf32, #tpu.memory_space<vmem>>, vector<64x32xf32>
    tpu.vector_store %arg7[%c0_6, %c0_7], %7 {strides = array<i32>} : memref<64x32xf32, #tpu.memory_space<vmem>>, vector<64x32xf32>,
    %c0_i32_8 = arith.constant 0 : i32
    %9 = arith.cmpi eq, %arg2, %c0_i32_8 : i32
    %10 = arith.extui %9 : i1 to i32
    %c0_i32_9 = arith.constant 0 : i32
    %11 = arith.cmpi ne, %10, %c0_i32_9 : i32
    scf.if %11 {
      %c0_10 = arith.constant 0 : index
      %c0_11 = arith.constant 0 : index
      %12 = vector.load %arg7[%c0_10, %c0_11] : memref<64x32xf32, #tpu.memory_space<vmem>>, vector<64x32xf32>
      %c0_12 = arith.constant 0 : index
      %c0_13 = arith.constant 0 : index
      %13 = vector.load %arg5[%c0_12, %c0_13] : memref<1x32xf32, #tpu.memory_space<vmem>>, vector<1x32xf32>
      %14 = vector.broadcast %13 : vector<1x32xf32> to vector<64x32xf32>
      %15 = arith.addf %12, %14 : vector<64x32xf32>
      %cst_14 = arith.constant 0.000000e+00 : f32
      %16 = vector.broadcast %cst_14 : f32 to vector<64x32xf32>
      %17 = arith.maximumf %15, %16 : vector<64x32xf32>
      %c0_15 = arith.constant 0 : index
      %c0_16 = arith.constant 0 : index
      %18 = vector.load %arg6[%c0_15, %c0_16] : memref<64x32xf32, #tpu.memory_space<vmem>>, vector<64x32xf32>
      tpu.vector_store %arg6[%c0_15, %c0_16], %17 {strides = array<i32>} : memref<64x32xf32, #tpu.memory_space<vmem>>, vector<64x32xf32>,
    } else {
    }
    return
  }
  func.func @transform_0(%arg0: i32, %arg1: i32, %arg2: i32) -> (i32, i32) {
    %c0_i32 = arith.constant 0 : i32
    return %arg0, %arg2 : i32, i32
  }
  func.func @transform_1(%arg0: i32, %arg1: i32, %arg2: i32) -> (i32, i32) {
    %c0_i32 = arith.constant 0 : i32
    return %arg2, %arg1 : i32, i32
  }
  func.func @transform_2(%arg0: i32, %arg1: i32, %arg2: i32) -> (i32, i32) {
    %c0_i32 = arith.constant 0 : i32
    %c0_i32_0 = arith.constant 0 : i32
    return %c0_i32, %arg1 : i32, i32
  }
  func.func @transform_3(%arg0: i32, %arg1: i32, %arg2: i32) -> (i32, i32) {
    %c0_i32 = arith.constant 0 : i32
    return %arg0, %arg1 : i32, i32
  }
}

module attributes {stable_mosaic.version = 11 : i64} {
  func.func @_bert_layer_kernel(%arg0: i32, %arg1: memref<1x32x32xf32, #tpu.memory_space<vmem>>, %arg2: memref<32x32xbf16, #tpu.memory_space<vmem>>, %arg3: memref<1x32xf32, #tpu.memory_space<vmem>>, %arg4: memref<32x32xbf16, #tpu.memory_space<vmem>>, %arg5: memref<1x32xf32, #tpu.memory_space<vmem>>, %arg6: memref<32x32xbf16, #tpu.memory_space<vmem>>, %arg7: memref<1x32xf32, #tpu.memory_space<vmem>>, %arg8: memref<32x32xbf16, #tpu.memory_space<vmem>>, %arg9: memref<1x32xf32, #tpu.memory_space<vmem>>, %arg10: memref<1x32xf32, #tpu.memory_space<vmem>>, %arg11: memref<1x32xf32, #tpu.memory_space<vmem>>, %arg12: memref<32x128xbf16, #tpu.memory_space<vmem>>, %arg13: memref<1x128xf32, #tpu.memory_space<vmem>>, %arg14: memref<128x32xbf16, #tpu.memory_space<vmem>>, %arg15: memref<1x32xf32, #tpu.memory_space<vmem>>, %arg16: memref<1x32xf32, #tpu.memory_space<vmem>>, %arg17: memref<1x32xf32, #tpu.memory_space<vmem>>, %arg18: memref<1x32x32xf32, #tpu.memory_space<vmem>>) attributes {dimension_semantics = [#tpu.dimension_semantics<parallel>], iteration_bounds = array<i64: 2>, scalar_prefetch = 0 : i64, scratch_operands = 0 : i64, tpu.core_type = #tpu.core_type<tc>, window_params = [{transform_indices = @transform_0, window_bounds = array<i64: 1, 32, 32>}, {pipeline_mode = #tpu.pipeline_mode<synchronous>, transform_indices = @transform_1, window_bounds = array<i64: 32, 32>}, {pipeline_mode = #tpu.pipeline_mode<synchronous>, transform_indices = @transform_2, window_bounds = array<i64: 1, 32>}, {pipeline_mode = #tpu.pipeline_mode<synchronous>, transform_indices = @transform_3, window_bounds = array<i64: 32, 32>}, {pipeline_mode = #tpu.pipeline_mode<synchronous>, transform_indices = @transform_4, window_bounds = array<i64: 1, 32>}, {pipeline_mode = #tpu.pipeline_mode<synchronous>, transform_indices = @transform_5, window_bounds = array<i64: 32, 32>}, {pipeline_mode = #tpu.pipeline_mode<synchronous>, transform_indices = @transform_6, window_bounds = array<i64: 1, 32>}, {pipeline_mode = #tpu.pipeline_mode<synchronous>, transform_indices = @transform_7, window_bounds = array<i64: 32, 32>}, {pipeline_mode = #tpu.pipeline_mode<synchronous>, transform_indices = @transform_8, window_bounds = array<i64: 1, 32>}, {pipeline_mode = #tpu.pipeline_mode<synchronous>, transform_indices = @transform_9, window_bounds = array<i64: 1, 32>}, {pipeline_mode = #tpu.pipeline_mode<synchronous>, transform_indices = @transform_10, window_bounds = array<i64: 1, 32>}, {pipeline_mode = #tpu.pipeline_mode<synchronous>, transform_indices = @transform_11, window_bounds = array<i64: 32, 128>}, {pipeline_mode = #tpu.pipeline_mode<synchronous>, transform_indices = @transform_12, window_bounds = array<i64: 1, 128>}, {pipeline_mode = #tpu.pipeline_mode<synchronous>, transform_indices = @transform_13, window_bounds = array<i64: 128, 32>}, {pipeline_mode = #tpu.pipeline_mode<synchronous>, transform_indices = @transform_14, window_bounds = array<i64: 1, 32>}, {pipeline_mode = #tpu.pipeline_mode<synchronous>, transform_indices = @transform_15, window_bounds = array<i64: 1, 32>}, {pipeline_mode = #tpu.pipeline_mode<synchronous>, transform_indices = @transform_16, window_bounds = array<i64: 1, 32>}, {transform_indices = @transform_17, window_bounds = array<i64: 1, 32, 32>}]} {
    %c0 = arith.constant 0 : index
    %c0_0 = arith.constant 0 : index
    %c0_1 = arith.constant 0 : index
    %0 = vector.load %arg1[%c0, %c0_0, %c0_1] : memref<1x32x32xf32, #tpu.memory_space<vmem>>, vector<1x32x32xf32>
    %1 = vector.shape_cast %0 : vector<1x32x32xf32> to vector<32x32xf32>
    %2 = arith.truncf %1 : vector<32x32xf32> to vector<32x32xbf16>
    %c0_2 = arith.constant 0 : index
    %c0_3 = arith.constant 0 : index
    %3 = vector.load %arg2[%c0_2, %c0_3] : memref<32x32xbf16, #tpu.memory_space<vmem>>, vector<32x32xbf16>
    %cst = arith.constant dense<0.000000e+00> : vector<32x32xf32>
    %4 = tpu.matmul %2, %3, %cst {dimension_numbers = #tpu.dot_dimension_numbers<[1], [0], [0], [1], [0, 0, 1, 1], [], []>} : vector<32x32xbf16>, vector<32x32xbf16>, vector<32x32xf32> -> vector<32x32xf32>
    %c0_4 = arith.constant 0 : index
    %c0_5 = arith.constant 0 : index
    %5 = vector.load %arg3[%c0_4, %c0_5] : memref<1x32xf32, #tpu.memory_space<vmem>>, vector<1x32xf32>
    %6 = vector.broadcast %5 : vector<1x32xf32> to vector<32x32xf32>
    %7 = arith.addf %4, %6 : vector<32x32xf32>
    %c0_6 = arith.constant 0 : index
    %c0_7 = arith.constant 0 : index
    %8 = vector.load %arg4[%c0_6, %c0_7] : memref<32x32xbf16, #tpu.memory_space<vmem>>, vector<32x32xbf16>
    %cst_8 = arith.constant dense<0.000000e+00> : vector<32x32xf32>
    %9 = tpu.matmul %2, %8, %cst_8 {dimension_numbers = #tpu.dot_dimension_numbers<[1], [0], [0], [1], [0, 0, 1, 1], [], []>} : vector<32x32xbf16>, vector<32x32xbf16>, vector<32x32xf32> -> vector<32x32xf32>
    %c0_9 = arith.constant 0 : index
    %c0_10 = arith.constant 0 : index
    %10 = vector.load %arg5[%c0_9, %c0_10] : memref<1x32xf32, #tpu.memory_space<vmem>>, vector<1x32xf32>
    %11 = vector.broadcast %10 : vector<1x32xf32> to vector<32x32xf32>
    %12 = arith.addf %9, %11 : vector<32x32xf32>
    %c0_11 = arith.constant 0 : index
    %c0_12 = arith.constant 0 : index
    %13 = vector.load %arg6[%c0_11, %c0_12] : memref<32x32xbf16, #tpu.memory_space<vmem>>, vector<32x32xbf16>
    %cst_13 = arith.constant dense<0.000000e+00> : vector<32x32xf32>
    %14 = tpu.matmul %2, %13, %cst_13 {dimension_numbers = #tpu.dot_dimension_numbers<[1], [0], [0], [1], [0, 0, 1, 1], [], []>} : vector<32x32xbf16>, vector<32x32xbf16>, vector<32x32xf32> -> vector<32x32xf32>
    %c0_14 = arith.constant 0 : index
    %c0_15 = arith.constant 0 : index
    %15 = vector.load %arg7[%c0_14, %c0_15] : memref<1x32xf32, #tpu.memory_space<vmem>>, vector<1x32xf32>
    %16 = vector.broadcast %15 : vector<1x32xf32> to vector<32x32xf32>
    %17 = arith.addf %14, %16 : vector<32x32xf32>
    %18 = tpu.iota {dimensions = array<i32: 1>} : vector<1x32xi32>
    %19 = arith.truncf %12 : vector<32x32xf32> to vector<32x32xbf16>
    %cst_16 = arith.constant 0.000000e+00 : f32
    %20 = vector.broadcast %cst_16 : f32 to vector<32x32xf32>
    %c0_i32 = arith.constant 0 : i32
    %21 = vector.broadcast %c0_i32 : i32 to vector<1x32xi32>
    %22 = arith.cmpi sge, %18, %21 : vector<1x32xi32>
    %c8_i32 = arith.constant 8 : i32
    %23 = vector.broadcast %c8_i32 : i32 to vector<1x32xi32>
    %24 = arith.cmpi slt, %18, %23 : vector<1x32xi32>
    %25 = arith.andi %22, %24 : vector<1x32xi1>
    %26 = arith.extui %25 : vector<1x32xi1> to vector<1x32xi32>
    %27 = arith.sitofp %26 : vector<1x32xi32> to vector<1x32xf32>
    %28 = vector.broadcast %27 : vector<1x32xf32> to vector<32x32xf32>
    %29 = arith.mulf %7, %28 : vector<32x32xf32>
    %30 = arith.truncf %29 : vector<32x32xf32> to vector<32x32xbf16>
    %cst_17 = arith.constant dense<0.000000e+00> : vector<32x32xf32>
    %31 = tpu.matmul %30, %19, %cst_17 {dimension_numbers = #tpu.dot_dimension_numbers<[1], [1], [0], [0], [0, 0, 1, 0], [], []>} : vector<32x32xbf16>, vector<32x32xbf16>, vector<32x32xf32> -> vector<32x32xf32>
    %cst_18 = arith.constant 0.353553385 : f32
    %32 = vector.broadcast %cst_18 : f32 to vector<32x32xf32>
    %33 = arith.mulf %31, %32 : vector<32x32xf32>
    %cst_19 = arith.constant dense<0xFF800000> : vector<32xf32>
    %34 = vector.multi_reduction <maximumf>, %33, %cst_19 [1] : vector<32x32xf32> to vector<32xf32>
    %35 = vector.shape_cast %34 : vector<32xf32> to vector<32x1xf32>
    %36 = vector.broadcast %35 : vector<32x1xf32> to vector<32x32xf32>
    %37 = arith.subf %33, %36 : vector<32x32xf32>
    %38 = math.exp %37 : vector<32x32xf32>
    %cst_20 = arith.constant dense<0.000000e+00> : vector<32xf32>
    %39 = vector.multi_reduction <add>, %38, %cst_20 [1] : vector<32x32xf32> to vector<32xf32>
    %40 = vector.shape_cast %39 : vector<32xf32> to vector<32x1xf32>
    %41 = tpu.reciprocal %40 {approx = true} : vector<32x1xf32> -> vector<32x1xf32>
    %42 = vector.broadcast %41 : vector<32x1xf32> to vector<32x32xf32>
    %43 = arith.mulf %38, %42 : vector<32x32xf32>
    %44 = arith.truncf %43 : vector<32x32xf32> to vector<32x32xbf16>
    %45 = vector.broadcast %27 : vector<1x32xf32> to vector<32x32xf32>
    %46 = arith.mulf %17, %45 : vector<32x32xf32>
    %47 = arith.truncf %46 : vector<32x32xf32> to vector<32x32xbf16>
    %cst_21 = arith.constant dense<0.000000e+00> : vector<32x32xf32>
    %48 = tpu.matmul %44, %47, %cst_21 {dimension_numbers = #tpu.dot_dimension_numbers<[1], [0], [0], [1], [0, 0, 1, 1], [], []>} : vector<32x32xbf16>, vector<32x32xbf16>, vector<32x32xf32> -> vector<32x32xf32>
    %49 = arith.addf %20, %48 : vector<32x32xf32>
    %c8_i32_22 = arith.constant 8 : i32
    %50 = vector.broadcast %c8_i32_22 : i32 to vector<1x32xi32>
    %51 = arith.cmpi sge, %18, %50 : vector<1x32xi32>
    %c16_i32 = arith.constant 16 : i32
    %52 = vector.broadcast %c16_i32 : i32 to vector<1x32xi32>
    %53 = arith.cmpi slt, %18, %52 : vector<1x32xi32>
    %54 = arith.andi %51, %53 : vector<1x32xi1>
    %55 = arith.extui %54 : vector<1x32xi1> to vector<1x32xi32>
    %56 = arith.sitofp %55 : vector<1x32xi32> to vector<1x32xf32>
    %57 = vector.broadcast %56 : vector<1x32xf32> to vector<32x32xf32>
    %58 = arith.mulf %7, %57 : vector<32x32xf32>
    %59 = arith.truncf %58 : vector<32x32xf32> to vector<32x32xbf16>
    %cst_23 = arith.constant dense<0.000000e+00> : vector<32x32xf32>
    %60 = tpu.matmul %59, %19, %cst_23 {dimension_numbers = #tpu.dot_dimension_numbers<[1], [1], [0], [0], [0, 0, 1, 0], [], []>} : vector<32x32xbf16>, vector<32x32xbf16>, vector<32x32xf32> -> vector<32x32xf32>
    %cst_24 = arith.constant 0.353553385 : f32
    %61 = vector.broadcast %cst_24 : f32 to vector<32x32xf32>
    %62 = arith.mulf %60, %61 : vector<32x32xf32>
    %cst_25 = arith.constant dense<0xFF800000> : vector<32xf32>
    %63 = vector.multi_reduction <maximumf>, %62, %cst_25 [1] : vector<32x32xf32> to vector<32xf32>
    %64 = vector.shape_cast %63 : vector<32xf32> to vector<32x1xf32>
    %65 = vector.broadcast %64 : vector<32x1xf32> to vector<32x32xf32>
    %66 = arith.subf %62, %65 : vector<32x32xf32>
    %67 = math.exp %66 : vector<32x32xf32>
    %cst_26 = arith.constant dense<0.000000e+00> : vector<32xf32>
    %68 = vector.multi_reduction <add>, %67, %cst_26 [1] : vector<32x32xf32> to vector<32xf32>
    %69 = vector.shape_cast %68 : vector<32xf32> to vector<32x1xf32>
    %70 = tpu.reciprocal %69 {approx = true} : vector<32x1xf32> -> vector<32x1xf32>
    %71 = vector.broadcast %70 : vector<32x1xf32> to vector<32x32xf32>
    %72 = arith.mulf %67, %71 : vector<32x32xf32>
    %73 = arith.truncf %72 : vector<32x32xf32> to vector<32x32xbf16>
    %74 = vector.broadcast %56 : vector<1x32xf32> to vector<32x32xf32>
    %75 = arith.mulf %17, %74 : vector<32x32xf32>
    %76 = arith.truncf %75 : vector<32x32xf32> to vector<32x32xbf16>
    %cst_27 = arith.constant dense<0.000000e+00> : vector<32x32xf32>
    %77 = tpu.matmul %73, %76, %cst_27 {dimension_numbers = #tpu.dot_dimension_numbers<[1], [0], [0], [1], [0, 0, 1, 1], [], []>} : vector<32x32xbf16>, vector<32x32xbf16>, vector<32x32xf32> -> vector<32x32xf32>
    %78 = arith.addf %49, %77 : vector<32x32xf32>
    %c16_i32_28 = arith.constant 16 : i32
    %79 = vector.broadcast %c16_i32_28 : i32 to vector<1x32xi32>
    %80 = arith.cmpi sge, %18, %79 : vector<1x32xi32>
    %c24_i32 = arith.constant 24 : i32
    %81 = vector.broadcast %c24_i32 : i32 to vector<1x32xi32>
    %82 = arith.cmpi slt, %18, %81 : vector<1x32xi32>
    %83 = arith.andi %80, %82 : vector<1x32xi1>
    %84 = arith.extui %83 : vector<1x32xi1> to vector<1x32xi32>
    %85 = arith.sitofp %84 : vector<1x32xi32> to vector<1x32xf32>
    %86 = vector.broadcast %85 : vector<1x32xf32> to vector<32x32xf32>
    %87 = arith.mulf %7, %86 : vector<32x32xf32>
    %88 = arith.truncf %87 : vector<32x32xf32> to vector<32x32xbf16>
    %cst_29 = arith.constant dense<0.000000e+00> : vector<32x32xf32>
    %89 = tpu.matmul %88, %19, %cst_29 {dimension_numbers = #tpu.dot_dimension_numbers<[1], [1], [0], [0], [0, 0, 1, 0], [], []>} : vector<32x32xbf16>, vector<32x32xbf16>, vector<32x32xf32> -> vector<32x32xf32>
    %cst_30 = arith.constant 0.353553385 : f32
    %90 = vector.broadcast %cst_30 : f32 to vector<32x32xf32>
    %91 = arith.mulf %89, %90 : vector<32x32xf32>
    %cst_31 = arith.constant dense<0xFF800000> : vector<32xf32>
    %92 = vector.multi_reduction <maximumf>, %91, %cst_31 [1] : vector<32x32xf32> to vector<32xf32>
    %93 = vector.shape_cast %92 : vector<32xf32> to vector<32x1xf32>
    %94 = vector.broadcast %93 : vector<32x1xf32> to vector<32x32xf32>
    %95 = arith.subf %91, %94 : vector<32x32xf32>
    %96 = math.exp %95 : vector<32x32xf32>
    %cst_32 = arith.constant dense<0.000000e+00> : vector<32xf32>
    %97 = vector.multi_reduction <add>, %96, %cst_32 [1] : vector<32x32xf32> to vector<32xf32>
    %98 = vector.shape_cast %97 : vector<32xf32> to vector<32x1xf32>
    %99 = tpu.reciprocal %98 {approx = true} : vector<32x1xf32> -> vector<32x1xf32>
    %100 = vector.broadcast %99 : vector<32x1xf32> to vector<32x32xf32>
    %101 = arith.mulf %96, %100 : vector<32x32xf32>
    %102 = arith.truncf %101 : vector<32x32xf32> to vector<32x32xbf16>
    %103 = vector.broadcast %85 : vector<1x32xf32> to vector<32x32xf32>
    %104 = arith.mulf %17, %103 : vector<32x32xf32>
    %105 = arith.truncf %104 : vector<32x32xf32> to vector<32x32xbf16>
    %cst_33 = arith.constant dense<0.000000e+00> : vector<32x32xf32>
    %106 = tpu.matmul %102, %105, %cst_33 {dimension_numbers = #tpu.dot_dimension_numbers<[1], [0], [0], [1], [0, 0, 1, 1], [], []>} : vector<32x32xbf16>, vector<32x32xbf16>, vector<32x32xf32> -> vector<32x32xf32>
    %107 = arith.addf %78, %106 : vector<32x32xf32>
    %c24_i32_34 = arith.constant 24 : i32
    %108 = vector.broadcast %c24_i32_34 : i32 to vector<1x32xi32>
    %109 = arith.cmpi sge, %18, %108 : vector<1x32xi32>
    %c32_i32 = arith.constant 32 : i32
    %110 = vector.broadcast %c32_i32 : i32 to vector<1x32xi32>
    %111 = arith.cmpi slt, %18, %110 : vector<1x32xi32>
    %112 = arith.andi %109, %111 : vector<1x32xi1>
    %113 = arith.extui %112 : vector<1x32xi1> to vector<1x32xi32>
    %114 = arith.sitofp %113 : vector<1x32xi32> to vector<1x32xf32>
    %115 = vector.broadcast %114 : vector<1x32xf32> to vector<32x32xf32>
    %116 = arith.mulf %7, %115 : vector<32x32xf32>
    %117 = arith.truncf %116 : vector<32x32xf32> to vector<32x32xbf16>
    %cst_35 = arith.constant dense<0.000000e+00> : vector<32x32xf32>
    %118 = tpu.matmul %117, %19, %cst_35 {dimension_numbers = #tpu.dot_dimension_numbers<[1], [1], [0], [0], [0, 0, 1, 0], [], []>} : vector<32x32xbf16>, vector<32x32xbf16>, vector<32x32xf32> -> vector<32x32xf32>
    %cst_36 = arith.constant 0.353553385 : f32
    %119 = vector.broadcast %cst_36 : f32 to vector<32x32xf32>
    %120 = arith.mulf %118, %119 : vector<32x32xf32>
    %cst_37 = arith.constant dense<0xFF800000> : vector<32xf32>
    %121 = vector.multi_reduction <maximumf>, %120, %cst_37 [1] : vector<32x32xf32> to vector<32xf32>
    %122 = vector.shape_cast %121 : vector<32xf32> to vector<32x1xf32>
    %123 = vector.broadcast %122 : vector<32x1xf32> to vector<32x32xf32>
    %124 = arith.subf %120, %123 : vector<32x32xf32>
    %125 = math.exp %124 : vector<32x32xf32>
    %cst_38 = arith.constant dense<0.000000e+00> : vector<32xf32>
    %126 = vector.multi_reduction <add>, %125, %cst_38 [1] : vector<32x32xf32> to vector<32xf32>
    %127 = vector.shape_cast %126 : vector<32xf32> to vector<32x1xf32>
    %128 = tpu.reciprocal %127 {approx = true} : vector<32x1xf32> -> vector<32x1xf32>
    %129 = vector.broadcast %128 : vector<32x1xf32> to vector<32x32xf32>
    %130 = arith.mulf %125, %129 : vector<32x32xf32>
    %131 = arith.truncf %130 : vector<32x32xf32> to vector<32x32xbf16>
    %132 = vector.broadcast %114 : vector<1x32xf32> to vector<32x32xf32>
    %133 = arith.mulf %17, %132 : vector<32x32xf32>
    %134 = arith.truncf %133 : vector<32x32xf32> to vector<32x32xbf16>
    %cst_39 = arith.constant dense<0.000000e+00> : vector<32x32xf32>
    %135 = tpu.matmul %131, %134, %cst_39 {dimension_numbers = #tpu.dot_dimension_numbers<[1], [0], [0], [1], [0, 0, 1, 1], [], []>} : vector<32x32xbf16>, vector<32x32xbf16>, vector<32x32xf32> -> vector<32x32xf32>
    %136 = arith.addf %107, %135 : vector<32x32xf32>
    %137 = arith.truncf %136 : vector<32x32xf32> to vector<32x32xbf16>
    %c0_40 = arith.constant 0 : index
    %c0_41 = arith.constant 0 : index
    %138 = vector.load %arg8[%c0_40, %c0_41] : memref<32x32xbf16, #tpu.memory_space<vmem>>, vector<32x32xbf16>
    %cst_42 = arith.constant dense<0.000000e+00> : vector<32x32xf32>
    %139 = tpu.matmul %137, %138, %cst_42 {dimension_numbers = #tpu.dot_dimension_numbers<[1], [0], [0], [1], [0, 0, 1, 1], [], []>} : vector<32x32xbf16>, vector<32x32xbf16>, vector<32x32xf32> -> vector<32x32xf32>
    %c0_43 = arith.constant 0 : index
    %c0_44 = arith.constant 0 : index
    %140 = vector.load %arg9[%c0_43, %c0_44] : memref<1x32xf32, #tpu.memory_space<vmem>>, vector<1x32xf32>
    %141 = vector.broadcast %140 : vector<1x32xf32> to vector<32x32xf32>
    %142 = arith.addf %139, %141 : vector<32x32xf32>
    %143 = arith.addf %1, %142 : vector<32x32xf32>
    %c0_45 = arith.constant 0 : index
    %c0_46 = arith.constant 0 : index
    %144 = vector.load %arg10[%c0_45, %c0_46] : memref<1x32xf32, #tpu.memory_space<vmem>>, vector<1x32xf32>
    %c0_47 = arith.constant 0 : index
    %c0_48 = arith.constant 0 : index
    %145 = vector.load %arg11[%c0_47, %c0_48] : memref<1x32xf32, #tpu.memory_space<vmem>>, vector<1x32xf32>
    %cst_49 = arith.constant dense<0.000000e+00> : vector<32xf32>
    %146 = vector.multi_reduction <add>, %143, %cst_49 [1] : vector<32x32xf32> to vector<32xf32>
    %147 = vector.shape_cast %146 : vector<32xf32> to vector<32x1xf32>
    %cst_50 = arith.constant 3.200000e+01 : f32
    %148 = vector.broadcast %cst_50 : f32 to vector<32x1xf32>
    %149 = arith.divf %147, %148 : vector<32x1xf32>
    %150 = vector.broadcast %149 : vector<32x1xf32> to vector<32x32xf32>
    %151 = arith.subf %143, %150 : vector<32x32xf32>
    %152 = arith.mulf %151, %151 : vector<32x32xf32>
    %cst_51 = arith.constant dense<0.000000e+00> : vector<32xf32>
    %153 = vector.multi_reduction <add>, %152, %cst_51 [1] : vector<32x32xf32> to vector<32xf32>
    %154 = vector.shape_cast %153 : vector<32xf32> to vector<32x1xf32>
    %cst_52 = arith.constant 3.200000e+01 : f32
    %155 = vector.broadcast %cst_52 : f32 to vector<32x1xf32>
    %156 = arith.divf %154, %155 : vector<32x1xf32>
    %157 = vector.broadcast %149 : vector<32x1xf32> to vector<32x32xf32>
    %158 = arith.subf %143, %157 : vector<32x32xf32>
    %cst_53 = arith.constant 9.99999996E-13 : f32
    %159 = vector.broadcast %cst_53 : f32 to vector<32x1xf32>
    %160 = arith.addf %156, %159 : vector<32x1xf32>
    %161 = math.rsqrt %160 : vector<32x1xf32>
    %162 = vector.broadcast %161 : vector<32x1xf32> to vector<32x32xf32>
    %163 = arith.mulf %158, %162 : vector<32x32xf32>
    %164 = vector.broadcast %144 : vector<1x32xf32> to vector<32x32xf32>
    %165 = arith.mulf %163, %164 : vector<32x32xf32>
    %166 = vector.broadcast %145 : vector<1x32xf32> to vector<32x32xf32>
    %167 = arith.addf %165, %166 : vector<32x32xf32>
    %168 = arith.truncf %167 : vector<32x32xf32> to vector<32x32xbf16>
    %c0_54 = arith.constant 0 : index
    %c0_55 = arith.constant 0 : index
    %169 = vector.load %arg12[%c0_54, %c0_55] : memref<32x128xbf16, #tpu.memory_space<vmem>>, vector<32x128xbf16>
    %cst_56 = arith.constant dense<0.000000e+00> : vector<32x128xf32>
    %170 = tpu.matmul %168, %169, %cst_56 {dimension_numbers = #tpu.dot_dimension_numbers<[1], [0], [0], [1], [0, 0, 1, 1], [], []>} : vector<32x32xbf16>, vector<32x128xbf16>, vector<32x128xf32> -> vector<32x128xf32>
    %c0_57 = arith.constant 0 : index
    %c0_58 = arith.constant 0 : index
    %171 = vector.load %arg13[%c0_57, %c0_58] : memref<1x128xf32, #tpu.memory_space<vmem>>, vector<1x128xf32>
    %172 = vector.broadcast %171 : vector<1x128xf32> to vector<32x128xf32>
    %173 = arith.addf %170, %172 : vector<32x128xf32>
    %cst_59 = arith.constant 5.000000e-01 : f32
    %174 = vector.broadcast %cst_59 : f32 to vector<32x128xf32>
    %175 = arith.mulf %174, %173 : vector<32x128xf32>
    %cst_60 = arith.constant 4.471500e-02 : f32
    %176 = vector.broadcast %cst_60 : f32 to vector<32x128xf32>
    %177 = arith.mulf %176, %173 : vector<32x128xf32>
    %178 = arith.mulf %177, %173 : vector<32x128xf32>
    %179 = arith.mulf %178, %173 : vector<32x128xf32>
    %180 = arith.addf %173, %179 : vector<32x128xf32>
    %cst_61 = arith.constant 0.797884583 : f32
    %181 = vector.broadcast %cst_61 : f32 to vector<32x128xf32>
    %182 = arith.mulf %181, %180 : vector<32x128xf32>
    %183 = math.tanh %182 : vector<32x128xf32>
    %cst_62 = arith.constant 1.000000e+00 : f32
    %184 = vector.broadcast %cst_62 : f32 to vector<32x128xf32>
    %185 = arith.addf %184, %183 : vector<32x128xf32>
    %186 = arith.mulf %175, %185 : vector<32x128xf32>
    %187 = arith.truncf %186 : vector<32x128xf32> to vector<32x128xbf16>
    %c0_63 = arith.constant 0 : index
    %c0_64 = arith.constant 0 : index
    %188 = vector.load %arg14[%c0_63, %c0_64] : memref<128x32xbf16, #tpu.memory_space<vmem>>, vector<128x32xbf16>
    %cst_65 = arith.constant dense<0.000000e+00> : vector<32x32xf32>
    %189 = tpu.matmul %187, %188, %cst_65 {dimension_numbers = #tpu.dot_dimension_numbers<[1], [0], [0], [1], [0, 0, 1, 1], [], []>} : vector<32x128xbf16>, vector<128x32xbf16>, vector<32x32xf32> -> vector<32x32xf32>
    %c0_66 = arith.constant 0 : index
    %c0_67 = arith.constant 0 : index
    %190 = vector.load %arg15[%c0_66, %c0_67] : memref<1x32xf32, #tpu.memory_space<vmem>>, vector<1x32xf32>
    %191 = vector.broadcast %190 : vector<1x32xf32> to vector<32x32xf32>
    %192 = arith.addf %189, %191 : vector<32x32xf32>
    %193 = arith.addf %167, %192 : vector<32x32xf32>
    %c0_68 = arith.constant 0 : index
    %c0_69 = arith.constant 0 : index
    %194 = vector.load %arg16[%c0_68, %c0_69] : memref<1x32xf32, #tpu.memory_space<vmem>>, vector<1x32xf32>
    %c0_70 = arith.constant 0 : index
    %c0_71 = arith.constant 0 : index
    %195 = vector.load %arg17[%c0_70, %c0_71] : memref<1x32xf32, #tpu.memory_space<vmem>>, vector<1x32xf32>
    %cst_72 = arith.constant dense<0.000000e+00> : vector<32xf32>
    %196 = vector.multi_reduction <add>, %193, %cst_72 [1] : vector<32x32xf32> to vector<32xf32>
    %197 = vector.shape_cast %196 : vector<32xf32> to vector<32x1xf32>
    %cst_73 = arith.constant 3.200000e+01 : f32
    %198 = vector.broadcast %cst_73 : f32 to vector<32x1xf32>
    %199 = arith.divf %197, %198 : vector<32x1xf32>
    %200 = vector.broadcast %199 : vector<32x1xf32> to vector<32x32xf32>
    %201 = arith.subf %193, %200 : vector<32x32xf32>
    %202 = arith.mulf %201, %201 : vector<32x32xf32>
    %cst_74 = arith.constant dense<0.000000e+00> : vector<32xf32>
    %203 = vector.multi_reduction <add>, %202, %cst_74 [1] : vector<32x32xf32> to vector<32xf32>
    %204 = vector.shape_cast %203 : vector<32xf32> to vector<32x1xf32>
    %cst_75 = arith.constant 3.200000e+01 : f32
    %205 = vector.broadcast %cst_75 : f32 to vector<32x1xf32>
    %206 = arith.divf %204, %205 : vector<32x1xf32>
    %207 = vector.broadcast %199 : vector<32x1xf32> to vector<32x32xf32>
    %208 = arith.subf %193, %207 : vector<32x32xf32>
    %cst_76 = arith.constant 9.99999996E-13 : f32
    %209 = vector.broadcast %cst_76 : f32 to vector<32x1xf32>
    %210 = arith.addf %206, %209 : vector<32x1xf32>
    %211 = math.rsqrt %210 : vector<32x1xf32>
    %212 = vector.broadcast %211 : vector<32x1xf32> to vector<32x32xf32>
    %213 = arith.mulf %208, %212 : vector<32x32xf32>
    %214 = vector.broadcast %194 : vector<1x32xf32> to vector<32x32xf32>
    %215 = arith.mulf %213, %214 : vector<32x32xf32>
    %216 = vector.broadcast %195 : vector<1x32xf32> to vector<32x32xf32>
    %217 = arith.addf %215, %216 : vector<32x32xf32>
    %c0_77 = arith.constant 0 : index
    %c0_78 = arith.constant 0 : index
    %c0_79 = arith.constant 0 : index
    %218 = vector.load %arg18[%c0_77, %c0_78, %c0_79] : memref<1x32x32xf32, #tpu.memory_space<vmem>>, vector<1x32x32xf32>
    %219 = vector.shape_cast %218 : vector<1x32x32xf32> to vector<32x32xf32>
    %220 = vector.shape_cast %217 : vector<32x32xf32> to vector<1x32x32xf32>
    tpu.vector_store %arg18[%c0_77, %c0_78, %c0_79], %220 {strides = array<i32>} : memref<1x32x32xf32, #tpu.memory_space<vmem>>, vector<1x32x32xf32>,
    return
  }
  func.func @transform_0(%arg0: i32) -> (i32, i32, i32) {
    %c0_i32 = arith.constant 0 : i32
    %c0_i32_0 = arith.constant 0 : i32
    %c0_i32_1 = arith.constant 0 : i32
    return %arg0, %c0_i32, %c0_i32_0 : i32, i32, i32
  }
  func.func @transform_1(%arg0: i32) -> (i32, i32) {
    %c0_i32 = arith.constant 0 : i32
    %c0_i32_0 = arith.constant 0 : i32
    %c0_i32_1 = arith.constant 0 : i32
    return %c0_i32, %c0_i32_0 : i32, i32
  }
  func.func @transform_2(%arg0: i32) -> (i32, i32) {
    %c0_i32 = arith.constant 0 : i32
    %c0_i32_0 = arith.constant 0 : i32
    %c0_i32_1 = arith.constant 0 : i32
    return %c0_i32, %c0_i32_0 : i32, i32
  }
  func.func @transform_3(%arg0: i32) -> (i32, i32) {
    %c0_i32 = arith.constant 0 : i32
    %c0_i32_0 = arith.constant 0 : i32
    %c0_i32_1 = arith.constant 0 : i32
    return %c0_i32, %c0_i32_0 : i32, i32
  }
  func.func @transform_4(%arg0: i32) -> (i32, i32) {
    %c0_i32 = arith.constant 0 : i32
    %c0_i32_0 = arith.constant 0 : i32
    %c0_i32_1 = arith.constant 0 : i32
    return %c0_i32, %c0_i32_0 : i32, i32
  }
  func.func @transform_5(%arg0: i32) -> (i32, i32) {
    %c0_i32 = arith.constant 0 : i32
    %c0_i32_0 = arith.constant 0 : i32
    %c0_i32_1 = arith.constant 0 : i32
    return %c0_i32, %c0_i32_0 : i32, i32
  }
  func.func @transform_6(%arg0: i32) -> (i32, i32) {
    %c0_i32 = arith.constant 0 : i32
    %c0_i32_0 = arith.constant 0 : i32
    %c0_i32_1 = arith.constant 0 : i32
    return %c0_i32, %c0_i32_0 : i32, i32
  }
  func.func @transform_7(%arg0: i32) -> (i32, i32) {
    %c0_i32 = arith.constant 0 : i32
    %c0_i32_0 = arith.constant 0 : i32
    %c0_i32_1 = arith.constant 0 : i32
    return %c0_i32, %c0_i32_0 : i32, i32
  }
  func.func @transform_8(%arg0: i32) -> (i32, i32) {
    %c0_i32 = arith.constant 0 : i32
    %c0_i32_0 = arith.constant 0 : i32
    %c0_i32_1 = arith.constant 0 : i32
    return %c0_i32, %c0_i32_0 : i32, i32
  }
  func.func @transform_9(%arg0: i32) -> (i32, i32) {
    %c0_i32 = arith.constant 0 : i32
    %c0_i32_0 = arith.constant 0 : i32
    %c0_i32_1 = arith.constant 0 : i32
    return %c0_i32, %c0_i32_0 : i32, i32
  }
  func.func @transform_10(%arg0: i32) -> (i32, i32) {
    %c0_i32 = arith.constant 0 : i32
    %c0_i32_0 = arith.constant 0 : i32
    %c0_i32_1 = arith.constant 0 : i32
    return %c0_i32, %c0_i32_0 : i32, i32
  }
  func.func @transform_11(%arg0: i32) -> (i32, i32) {
    %c0_i32 = arith.constant 0 : i32
    %c0_i32_0 = arith.constant 0 : i32
    %c0_i32_1 = arith.constant 0 : i32
    return %c0_i32, %c0_i32_0 : i32, i32
  }
  func.func @transform_12(%arg0: i32) -> (i32, i32) {
    %c0_i32 = arith.constant 0 : i32
    %c0_i32_0 = arith.constant 0 : i32
    %c0_i32_1 = arith.constant 0 : i32
    return %c0_i32, %c0_i32_0 : i32, i32
  }
  func.func @transform_13(%arg0: i32) -> (i32, i32) {
    %c0_i32 = arith.constant 0 : i32
    %c0_i32_0 = arith.constant 0 : i32
    %c0_i32_1 = arith.constant 0 : i32
    return %c0_i32, %c0_i32_0 : i32, i32
  }
  func.func @transform_14(%arg0: i32) -> (i32, i32) {
    %c0_i32 = arith.constant 0 : i32
    %c0_i32_0 = arith.constant 0 : i32
    %c0_i32_1 = arith.constant 0 : i32
    return %c0_i32, %c0_i32_0 : i32, i32
  }
  func.func @transform_15(%arg0: i32) -> (i32, i32) {
    %c0_i32 = arith.constant 0 : i32
    %c0_i32_0 = arith.constant 0 : i32
    %c0_i32_1 = arith.constant 0 : i32
    return %c0_i32, %c0_i32_0 : i32, i32
  }
  func.func @transform_16(%arg0: i32) -> (i32, i32) {
    %c0_i32 = arith.constant 0 : i32
    %c0_i32_0 = arith.constant 0 : i32
    %c0_i32_1 = arith.constant 0 : i32
    return %c0_i32, %c0_i32_0 : i32, i32
  }
  func.func @transform_17(%arg0: i32) -> (i32, i32, i32) {
    %c0_i32 = arith.constant 0 : i32
    %c0_i32_0 = arith.constant 0 : i32
    %c0_i32_1 = arith.constant 0 : i32
    return %arg0, %c0_i32, %c0_i32_0 : i32, i32, i32
  }
}

module attributes {stable_mosaic.version = 11 : i64} {
  func.func @_cls_ce_kernel(%arg0: i32, %arg1: memref<1x32x32xf32, #tpu.memory_space<vmem>>, %arg2: memref<32x16xbf16, #tpu.memory_space<vmem>>, %arg3: memref<1x16xf32, #tpu.memory_space<vmem>>, %arg4: memref<1x32x1xi32, #tpu.memory_space<vmem>>, %arg5: memref<1x32x1xf32, #tpu.memory_space<vmem>>, %arg6: memref<1x32x16xf32, #tpu.memory_space<vmem>>, %arg7: memref<1x32x1xf32, #tpu.memory_space<vmem>>) attributes {dimension_semantics = [#tpu.dimension_semantics<parallel>], iteration_bounds = array<i64: 2>, scalar_prefetch = 0 : i64, scratch_operands = 0 : i64, tpu.core_type = #tpu.core_type<tc>, window_params = [{transform_indices = @transform_0, window_bounds = array<i64: 1, 32, 32>}, {pipeline_mode = #tpu.pipeline_mode<synchronous>, transform_indices = @transform_1, window_bounds = array<i64: 32, 16>}, {pipeline_mode = #tpu.pipeline_mode<synchronous>, transform_indices = @transform_2, window_bounds = array<i64: 1, 16>}, {transform_indices = @transform_3, window_bounds = array<i64: 1, 32, 1>}, {transform_indices = @transform_4, window_bounds = array<i64: 1, 32, 1>}, {transform_indices = @transform_5, window_bounds = array<i64: 1, 32, 16>}, {transform_indices = @transform_6, window_bounds = array<i64: 1, 32, 1>}]} {
    %c0 = arith.constant 0 : index
    %c0_0 = arith.constant 0 : index
    %c0_1 = arith.constant 0 : index
    %0 = vector.load %arg1[%c0, %c0_0, %c0_1] : memref<1x32x32xf32, #tpu.memory_space<vmem>>, vector<1x32x32xf32>
    %1 = vector.shape_cast %0 : vector<1x32x32xf32> to vector<32x32xf32>
    %2 = arith.truncf %1 : vector<32x32xf32> to vector<32x32xbf16>
    %c0_2 = arith.constant 0 : index
    %c0_3 = arith.constant 0 : index
    %3 = vector.load %arg2[%c0_2, %c0_3] : memref<32x16xbf16, #tpu.memory_space<vmem>>, vector<32x16xbf16>
    %cst = arith.constant dense<0.000000e+00> : vector<32x16xf32>
    %4 = tpu.matmul %2, %3, %cst {dimension_numbers = #tpu.dot_dimension_numbers<[1], [0], [0], [1], [0, 0, 1, 1], [], []>} : vector<32x32xbf16>, vector<32x16xbf16>, vector<32x16xf32> -> vector<32x16xf32>
    %c0_4 = arith.constant 0 : index
    %c0_5 = arith.constant 0 : index
    %5 = vector.load %arg3[%c0_4, %c0_5] : memref<1x16xf32, #tpu.memory_space<vmem>>, vector<1x16xf32>
    %6 = vector.broadcast %5 : vector<1x16xf32> to vector<32x16xf32>
    %7 = arith.addf %4, %6 : vector<32x16xf32>
    %c0_6 = arith.constant 0 : index
    %c0_7 = arith.constant 0 : index
    %c0_8 = arith.constant 0 : index
    %8 = vector.load %arg6[%c0_6, %c0_7, %c0_8] : memref<1x32x16xf32, #tpu.memory_space<vmem>>, vector<1x32x16xf32>
    %9 = vector.shape_cast %8 : vector<1x32x16xf32> to vector<32x16xf32>
    %10 = vector.shape_cast %7 : vector<32x16xf32> to vector<1x32x16xf32>
    tpu.vector_store %arg6[%c0_6, %c0_7, %c0_8], %10 {strides = array<i32>} : memref<1x32x16xf32, #tpu.memory_space<vmem>>, vector<1x32x16xf32>,
    %cst_9 = arith.constant dense<0xFF800000> : vector<32xf32>
    %11 = vector.multi_reduction <maximumf>, %7, %cst_9 [1] : vector<32x16xf32> to vector<32xf32>
    %12 = vector.shape_cast %11 : vector<32xf32> to vector<32x1xf32>
    %13 = vector.broadcast %12 : vector<32x1xf32> to vector<32x16xf32>
    %14 = arith.subf %7, %13 : vector<32x16xf32>
    %15 = math.exp %14 : vector<32x16xf32>
    %cst_10 = arith.constant dense<0.000000e+00> : vector<32xf32>
    %16 = vector.multi_reduction <add>, %15, %cst_10 [1] : vector<32x16xf32> to vector<32xf32>
    %17 = vector.shape_cast %16 : vector<32xf32> to vector<32x1xf32>
    %18 = math.log %17 : vector<32x1xf32>
    %19 = vector.broadcast %18 : vector<32x1xf32> to vector<32x16xf32>
    %20 = arith.subf %14, %19 : vector<32x16xf32>
    %21 = tpu.iota {dimensions = array<i32: 1>} : vector<32x16xi32>
    %c0_11 = arith.constant 0 : index
    %c0_12 = arith.constant 0 : index
    %c0_13 = arith.constant 0 : index
    %22 = vector.load %arg4[%c0_11, %c0_12, %c0_13] : memref<1x32x1xi32, #tpu.memory_space<vmem>>, vector<1x32x1xi32>
    %23 = vector.shape_cast %22 : vector<1x32x1xi32> to vector<32x1xi32>
    %24 = vector.broadcast %23 : vector<32x1xi32> to vector<32x16xi32>
    %25 = arith.cmpi eq, %21, %24 : vector<32x16xi32>
    %26 = arith.extui %25 : vector<32x16xi1> to vector<32x16xi32>
    %27 = arith.sitofp %26 : vector<32x16xi32> to vector<32x16xf32>
    %28 = arith.mulf %27, %20 : vector<32x16xf32>
    %cst_14 = arith.constant dense<0.000000e+00> : vector<32xf32>
    %29 = vector.multi_reduction <add>, %28, %cst_14 [1] : vector<32x16xf32> to vector<32xf32>
    %30 = vector.shape_cast %29 : vector<32xf32> to vector<32x1xf32>
    %cst_15 = arith.constant 0.000000e+00 : f32
    %31 = vector.broadcast %cst_15 : f32 to vector<32x1xf32>
    %32 = arith.subf %31, %30 : vector<32x1xf32>
    %c0_16 = arith.constant 0 : index
    %c0_17 = arith.constant 0 : index
    %c0_18 = arith.constant 0 : index
    %33 = vector.load %arg5[%c0_16, %c0_17, %c0_18] : memref<1x32x1xf32, #tpu.memory_space<vmem>>, vector<1x32x1xf32>
    %34 = vector.shape_cast %33 : vector<1x32x1xf32> to vector<32x1xf32>
    %35 = arith.mulf %34, %32 : vector<32x1xf32>
    %c0_19 = arith.constant 0 : index
    %c0_20 = arith.constant 0 : index
    %c0_21 = arith.constant 0 : index
    %36 = vector.load %arg7[%c0_19, %c0_20, %c0_21] : memref<1x32x1xf32, #tpu.memory_space<vmem>>, vector<1x32x1xf32>
    %37 = vector.shape_cast %36 : vector<1x32x1xf32> to vector<32x1xf32>
    %38 = vector.shape_cast %35 : vector<32x1xf32> to vector<1x32x1xf32>
    tpu.vector_store %arg7[%c0_19, %c0_20, %c0_21], %38 {strides = array<i32>} : memref<1x32x1xf32, #tpu.memory_space<vmem>>, vector<1x32x1xf32>,
    return
  }
  func.func @transform_0(%arg0: i32) -> (i32, i32, i32) {
    %c0_i32 = arith.constant 0 : i32
    %c0_i32_0 = arith.constant 0 : i32
    %c0_i32_1 = arith.constant 0 : i32
    return %arg0, %c0_i32, %c0_i32_0 : i32, i32, i32
  }
  func.func @transform_1(%arg0: i32) -> (i32, i32) {
    %c0_i32 = arith.constant 0 : i32
    %c0_i32_0 = arith.constant 0 : i32
    %c0_i32_1 = arith.constant 0 : i32
    return %c0_i32, %c0_i32_0 : i32, i32
  }
  func.func @transform_2(%arg0: i32) -> (i32, i32) {
    %c0_i32 = arith.constant 0 : i32
    %c0_i32_0 = arith.constant 0 : i32
    %c0_i32_1 = arith.constant 0 : i32
    return %c0_i32, %c0_i32_0 : i32, i32
  }
  func.func @transform_3(%arg0: i32) -> (i32, i32, i32) {
    %c0_i32 = arith.constant 0 : i32
    %c0_i32_0 = arith.constant 0 : i32
    %c0_i32_1 = arith.constant 0 : i32
    return %arg0, %c0_i32, %c0_i32_0 : i32, i32, i32
  }
  func.func @transform_4(%arg0: i32) -> (i32, i32, i32) {
    %c0_i32 = arith.constant 0 : i32
    %c0_i32_0 = arith.constant 0 : i32
    %c0_i32_1 = arith.constant 0 : i32
    return %arg0, %c0_i32, %c0_i32_0 : i32, i32, i32
  }
  func.func @transform_5(%arg0: i32) -> (i32, i32, i32) {
    %c0_i32 = arith.constant 0 : i32
    %c0_i32_0 = arith.constant 0 : i32
    %c0_i32_1 = arith.constant 0 : i32
    return %arg0, %c0_i32, %c0_i32_0 : i32, i32, i32
  }
  func.func @transform_6(%arg0: i32) -> (i32, i32, i32) {
    %c0_i32 = arith.constant 0 : i32
    %c0_i32_0 = arith.constant 0 : i32
    %c0_i32_1 = arith.constant 0 : i32
    return %arg0, %c0_i32, %c0_i32_0 : i32, i32, i32
  }
}

</mosaic_0001>

<llo_original>
// kernel: _lambda_.15
$region0: #{_lambda_.15}
  #allocation0 [shape = 'u32[]', space=smem, size = 0x4, offset = 0x4, fixed_abs, tag = 'smem constant byte address 0x4 - core index']
  #allocation1 [shape = 'u32[144,128]{1,0:T(1,128)}', space=vmem, size = 0x12000, scoped, tag = 'internal scratch']
  #allocation2 [shape = 'f32[256,8]{1,0:T(8,128)}', space=vmem, size = 0x20000, scoped, tag = 'scratch operand']
  %s0 = inlined_call_operand.vmem [shape: bf16[512,27], index: 0, kind: input, shape index: {}]
  %s1 = inlined_call_operand.vmem [shape: bf16[27,8], index: 1, kind: input, shape index: {}]
  %s2 = inlined_call_operand.vmem [shape: f32[1,8], index: 2, kind: input, shape index: {}]
  %s3 = inlined_call_operand.vmem [shape: f32[512,8], index: 3, kind: output, shape index: {}]
  %s4 = sld [smem:[#allocation0]]
  $region53: #{_lambda_.15} parent=0
    _
  %s6 = ssub.s32 1, %s4
  %s7 = scalar_select 0, %s6, %s4
  loop: start=0, step=1, limit=4
  $region2: #{_lambda_.15} parent=0 // loop_pre_header
    _
  $region3: #{_lambda_.15} parent=0 // loop_header
    %s9 = sphi 0, %s13
    %p10 = scmp.ge.s32.totalorder %s9, 4
    %s16 = sphi 0, %s35
    %s17 = sphi 0, %s31
    %s18 = sphi 0, %s27
    %s19 = sphi 0, %s16
    %s20 = sphi 0, %s17
    %s21 = sphi 0, %s18
    %s22 = sphi 0, %s19
    %s23 = sphi 0, %s20
    %s24 = sphi 0, %s21
    %s40 = sphi 0, %s42
    %s43 = sphi 0, %s40
    %s44 = sphi 0, %s43
    %s60 = sphi 0, %s44
    %s68 = sphi 0, %s70
    %s71 = sphi 0, %s68
    %s72 = sphi 0, %s71
    %s88 = sphi 0, %s72
    %s94 = sphi 0, %s96
    %s97 = sphi 0, %s94
    %s98 = sphi 0, %s97
    %s114 = sphi 0, %s98
    %s122 = sphi 0, %s124
    %s125 = sphi 0, %s122
    %s126 = sphi 0, %s125
    %s142 = sphi 0, %s126
  $region4: #{_lambda_.15} parent=0 // loop_header_branch
    %12 = sbr.rel (%p10) target = $region8
  $region5: #{_lambda_.15} parent=0 // loop_body
    %s14 = ssub.s32 %s9, 1
    %s15 = ssub.s32 %s9, 2
    %s25 = sadd.s32 1, %s18
    %p26 = scmp.ge.s32.totalorder %s25, 1
    %s27 = scalar_select %p26, 0, %s25
    %s28 = sadd.s32 1, %s17
    %s29 = scalar_select %p26, %s28, %s17
    %p30 = scmp.ge.s32.totalorder %s29, 1
    %s31 = scalar_select %p30, 0, %s29
    %s32 = sadd.s32 1, %s16
    %s33 = scalar_select %p30, %s32, %s16
    %p34 = scmp.ge.s32.totalorder %s33, 2
    %s35 = scalar_select %p34, 0, %s33
    %s36 = ssub.s32 %s16, %s35
    %s37 = ssub.s32 %s18, %s27
    %s38 = sor.u32 %s36, %s37
    %p39 = scmp.eq.s32.totalorder %s38, 0
    %s41 = sadd.s32 %s40, 1
    %s42 = scalar_select %p39, %s40, %s41
    %p45 = pneg %p39
    %p46 = scmp.eq.s32.totalorder %s9, 1
    %p47 = por %p45, %p46
    %p48 = scmp.ne.s32.totalorder %s40, %s43
    %p49 = scmp.eq.s32.totalorder %s9, 0
    %p50 = por %p48, %p49
    %p51 = scmp.ne.s32.totalorder %s40, %s43
    %p52 = scmp.eq.s32.totalorder %s14, 1
    %p53 = por %p51, %p52
    %p54 = scmp.ne.s32.totalorder %s43, %s44
    %p55 = scmp.eq.s32.totalorder %s14, 0
    %p56 = por %p54, %p55
    %p57 = scmp.ne.s32.totalorder %s43, %s44
    %p58 = scmp.eq.s32.totalorder %s15, 1
    %p59 = por %p57, %p58
    %p61 = scmp.ne.s32.totalorder %s44, %s60
    %p62 = scmp.eq.s32.totalorder %s15, 0
    %p63 = por %p61, %p62
    %s64 = ssub.s32 %s18, %s27
    %s65 = ssub.s32 %s17, %s31
    %s66 = sor.u32 %s64, %s65
    %p67 = scmp.eq.s32.totalorder %s66, 0
    %s69 = sadd.s32 %s68, 1
    %s70 = scalar_select %p67, %s68, %s69
    %p73 = pneg %p67
    %p74 = scmp.eq.s32.totalorder %s9, 1
    %p75 = por %p73, %p74
    %p76 = scmp.ne.s32.totalorder %s68, %s71
    %p77 = scmp.eq.s32.totalorder %s9, 0
    %p78 = por %p76, %p77
    %p79 = scmp.ne.s32.totalorder %s68, %s71
    %p80 = scmp.eq.s32.totalorder %s14, 1
    %p81 = por %p79, %p80
    %p82 = scmp.ne.s32.totalorder %s71, %s72
    %p83 = scmp.eq.s32.totalorder %s14, 0
    %p84 = por %p82, %p83
    %p85 = scmp.ne.s32.totalorder %s71, %s72
    %p86 = scmp.eq.s32.totalorder %s15, 1
    %p87 = por %p85, %p86
    %p89 = scmp.ne.s32.totalorder %s72, %s88
    %p90 = scmp.eq.s32.totalorder %s15, 0
    %p91 = por %p89, %p90
    %s92 = ssub.s32 %s17, %s31
    %p93 = scmp.eq.s32.totalorder %s92, 0
    %s95 = sadd.s32 %s94, 1
    %s96 = scalar_select %p93, %s94, %s95
    %p99 = pneg %p93
    %p100 = scmp.eq.s32.totalorder %s9, 1
    %p101 = por %p99, %p100
    %p102 = scmp.ne.s32.totalorder %s94, %s97
    %p103 = scmp.eq.s32.totalorder %s9, 0
    %p104 = por %p102, %p103
    %p105 = scmp.ne.s32.totalorder %s94, %s97
    %p106 = scmp.eq.s32.totalorder %s14, 1
    %p107 = por %p105, %p106
    %p108 = scmp.ne.s32.totalorder %s97, %s98
    %p109 = scmp.eq.s32.totalorder %s14, 0
    %p110 = por %p108, %p109
    %p111 = scmp.ne.s32.totalorder %s97, %s98
    %p112 = scmp.eq.s32.totalorder %s15, 1
    %p113 = por %p111, %p112
    %p115 = scmp.ne.s32.totalorder %s98, %s114
    %p116 = scmp.eq.s32.totalorder %s15, 0
    %p117 = por %p115, %p116
    %s118 = ssub.s32 %s16, %s35
    %s119 = ssub.s32 %s17, %s31
    %s120 = sor.u32 %s118, %s119
    %p121 = scmp.eq.s32.totalorder %s120, 0
    %s123 = sadd.s32 %s122, 1
    %s124 = scalar_select %p121, %s122, %s123
    %p127 = pneg %p121
    %p128 = scmp.eq.s32.totalorder %s9, 1
    %p129 = por %p127, %p128
    %p130 = scmp.ne.s32.totalorder %s122, %s125
    %p131 = scmp.eq.s32.totalorder %s9, 0
    %p132 = por %p130, %p131
    %p133 = scmp.ne.s32.totalorder %s122, %s125
    %p134 = scmp.eq.s32.totalorder %s14, 1
    %p135 = por %p133, %p134
    %p136 = scmp.ne.s32.totalorder %s125, %s126
    %p137 = scmp.eq.s32.totalorder %s14, 0
    %p138 = por %p136, %p137
    %p139 = scmp.ne.s32.totalorder %s125, %s126
    %p140 = scmp.eq.s32.totalorder %s15, 1
    %p141 = por %p139, %p140
    %p143 = scmp.ne.s32.totalorder %s126, %s142
    %p144 = scmp.eq.s32.totalorder %s15, 0
    %p145 = por %p143, %p144
    %p146 = scmp.le.s32.totalorder 1, %s9
    %p147 = scmp.lt.s32.totalorder %s9, 3
    %p148 = pnand %p146, %p147
    %p149 = pneg %p148
    // Predicated region
    $region9: #{_lambda_.15} parent=5 // pred_check
      _
    $region10: #{_lambda_.15} parent=5 // pred_check_branch
      %151 = sbr.rel (%p148) target = $region12
    $region11: #{_lambda_.15} parent=5 // pred_region
      %s152 = ssub.s32 %s9, 1
      // Predicated region
      $region13: #{_lambda_.15} parent=11 // pred_check
        %p153 = pneg %p84
      $region14: #{_lambda_.15} parent=11 // pred_check_branch
        %155 = sbr.rel (%p153) target = $region16
      $region15: #{_lambda_.15} parent=11 // pred_region
        %s156 = smul.u32 4, %s21
        %p157 = scmp.lt.s32.totalorder %s156, 3
        %s158 = scalar_select %p157, %s156, 3
        %p159 = scmp.lt.s32.totalorder %s20, 0
        %s160 = scalar_select %p159, %s20, 0
        %s161 = sadd.s32 %s160, %s158
        %s162 = smul.addr %s161, 4
        %s163 = scalar_lea.vmem %s1, %s162
        %s164 = smul.u32 4, %s21
      $region16: #{_lambda_.15} parent=11 // pred_fallthru
        _
      // Predicated region
      $region17: #{_lambda_.15} parent=11 // pred_check
        %p165 = pneg %p110
      $region18: #{_lambda_.15} parent=11 // pred_check_branch
        %167 = sbr.rel (%p165) target = $region20
      $region19: #{_lambda_.15} parent=11 // pred_region
        %p168 = scmp.lt.s32.totalorder %s20, 0
        %s169 = scalar_select %p168, %s20, 0
        %s170 = scalar_lea.vmem %s2, %s169
      $region20: #{_lambda_.15} parent=11 // pred_fallthru
        _
    $region12: #{_lambda_.15} parent=5 // pred_fallthru
      _
    %p171 = scmp.lt.s32.totalorder %s9, 2
    // Predicated region
    $region21: #{_lambda_.15} parent=5 // pred_check
      %p172 = pneg %p171
    $region22: #{_lambda_.15} parent=5 // pred_check_branch
      %174 = sbr.rel (%p172) target = $region24
    $region23: #{_lambda_.15} parent=5 // pred_region
      // Predicated region
      $region25: #{_lambda_.15} parent=23 // pred_check
        %p175 = pneg %p50
      $region26: #{_lambda_.15} parent=23 // pred_check_branch
        %177 = sbr.rel (%p175) target = $region28
      $region27: #{_lambda_.15} parent=23 // pred_region
        %s178 = smul.u32 32, %s16
        %p179 = scmp.lt.s32.totalorder %s178, 63
        %s180 = scalar_select %p179, %s178, 63
        %p181 = scmp.lt.s32.totalorder %s18, 0
        %s182 = scalar_select %p181, %s18, 0
        %s183 = sadd.s32 %s182, %s180
        %s184 = smul.addr %s183, 4
        %s185 = scalar_lea.vmem %s0, %s184
        %s186 = smul.u32 32, %s16
      $region28: #{_lambda_.15} parent=23 // pred_fallthru
        _
    $region24: #{_lambda_.15} parent=5 // pred_fallthru
      _
    %p187 = scmp.le.s32.totalorder 1, %s9
    %p188 = scmp.lt.s32.totalorder %s9, 3
    %p189 = pnand %p187, %p188
    %p190 = pneg %p189
    // Predicated region
    $region29: #{_lambda_.15} parent=5 // pred_check
      _
    $region30: #{_lambda_.15} parent=5 // pred_check_branch
      %192 = sbr.rel (%p189) target = $region32
    $region31: #{_lambda_.15} parent=5 // pred_region
      %s193 = ssub.s32 %s9, 1
      %s194 = smul.u32 32, %s19
      %p195 = scmp.lt.s32.totalorder %s194, 63
      %s196 = scalar_select %p195, %s194, 63
      %p197 = scmp.lt.s32.totalorder %s21, 0
      %s198 = scalar_select %p197, %s21, 0
      %s199 = sadd.s32 %s198, %s196
      %s200 = smul.addr %s199, 4
      %s201 = scalar_lea.vmem %s0, %s200
      %p202 = pneg %p56
      %p203 = pneg %p53
      %s204 = smul.u32 4, %s21
      %p205 = scmp.lt.s32.totalorder %s204, 3
      %s206 = scalar_select %p205, %s204, 3
      %p207 = scmp.lt.s32.totalorder %s20, 0
      %s208 = scalar_select %p207, %s20, 0
      %s209 = sadd.s32 %s208, %s206
      %s210 = smul.addr %s209, 4
      %s211 = scalar_lea.vmem %s1, %s210
      %p212 = pneg %p84
      %p213 = pneg %p81
      %p214 = scmp.lt.s32.totalorder %s20, 0
      %s215 = scalar_select %p214, %s20, 0
      %s216 = scalar_lea.vmem %s2, %s215
      %p217 = pneg %p110
      %p218 = pneg %p107
      %p219 = pneg %p138
      %p220 = pneg %p135
      %s221 = smul.u32 32, %s19
      %p222 = scmp.lt.s32.totalorder %s221, 63
      %s223 = scalar_select %p222, %s221, 63
      %p224 = scmp.lt.s32.totalorder %s20, 0
      %s225 = scalar_select %p224, %s20, 0
      %s226 = sadd.s32 %s225, %s223
      %s227 = smul.addr %s226, 8
      %s228 = scalar_lea.vmem %s3, %s227
      %s229 = smul.u32 32, %s19
      %p230 = scmp.lt.s32.totalorder %s229, 63
      %s231 = scalar_select %p230, %s229, 63
      %p232 = scmp.lt.s32.totalorder %s21, 0
      %s233 = scalar_select %p232, %s21, 0
      %s234 = sadd.s32 %s233, %s231
      %s235 = smul.addr %s234, 4
      %s236 = scalar_lea.vmem %s0, %s235
      %s237 = smul.u32 32, %s19
      %s238 = smul.u32 4, %s21
      %p239 = scmp.lt.s32.totalorder %s238, 3
      %s240 = scalar_select %p239, %s238, 3
      %p241 = scmp.lt.s32.totalorder %s20, 0
      %s242 = scalar_select %p241, %s20, 0
      %s243 = sadd.s32 %s242, %s240
      %s244 = smul.addr %s243, 4
      %s245 = scalar_lea.vmem %s1, %s244
      %s246 = smul.u32 4, %s21
      %p247 = scmp.lt.s32.totalorder %s20, 0
      %s248 = scalar_select %p247, %s20, 0
      %s249 = scalar_lea.vmem %s2, %s248
      %s250 = smul.u32 32, %s19
      %p251 = scmp.lt.s32.totalorder %s250, 63
      %s252 = scalar_select %p251, %s250, 63
      %p253 = scmp.lt.s32.totalorder %s20, 0
      %s254 = scalar_select %p253, %s20, 0
      %s255 = sadd.s32 %s254, %s252
      %s256 = smul.addr %s255, 8
      %s257 = scalar_lea.vmem %s3, %s256
      %s258 = smul.u32 32, %s19
      %p260 = scmp.eq.s32.totalorder %s21, 0
      // Predicated region
      $region33: #{_lambda_.15} parent=31 // pred_check
        %p261 = pneg %p260
      $region34: #{_lambda_.15} parent=31 // pred_check_branch
        %263 = sbr.rel (%p261) target = $region36
      $region35: #{_lambda_.15} parent=31 // pred_region
        %vm264 = vcmask 64512
        %265 = vst.msk [vmem:[#allocation2] sm:$0xff] %vm264, 0.0
        %266 = vst.msk [vmem:[#allocation2 + $0x8] sm:$0xff] %vm264, 0.0
        %267 = vst.msk [vmem:[#allocation2 + $0x10] sm:$0xff] %vm264, 0.0
        %268 = vst.msk [vmem:[#allocation2 + $0x18] sm:$0xff] %vm264, 0.0
        %269 = vst.msk [vmem:[#allocation2 + $0x20] sm:$0xff] %vm264, 0.0
        %270 = vst.msk [vmem:[#allocation2 + $0x28] sm:$0xff] %vm264, 0.0
        %271 = vst.msk [vmem:[#allocation2 + $0x30] sm:$0xff] %vm264, 0.0
        %272 = vst.msk [vmem:[#allocation2 + $0x38] sm:$0xff] %vm264, 0.0
        %273 = vst.msk [vmem:[#allocation2 + $0x40] sm:$0xff] %vm264, 0.0
        %274 = vst.msk [vmem:[#allocation2 + $0x48] sm:$0xff] %vm264, 0.0
        %275 = vst.msk [vmem:[#allocation2 + $0x50] sm:$0xff] %vm264, 0.0
        %276 = vst.msk [vmem:[#allocation2 + $0x58] sm:$0xff] %vm264, 0.0
        %277 = vst.msk [vmem:[#allocation2 + $0x60] sm:$0xff] %vm264, 0.0
        %278 = vst.msk [vmem:[#allocation2 + $0x68] sm:$0xff] %vm264, 0.0
        %279 = vst.msk [vmem:[#allocation2 + $0x70] sm:$0xff] %vm264, 0.0
        %280 = vst.msk [vmem:[#allocation2 + $0x78] sm:$0xff] %vm264, 0.0
        %281 = vst.msk [vmem:[#allocation2 + $0x80] sm:$0xff] %vm264, 0.0
        %282 = vst.msk [vmem:[#allocation2 + $0x88] sm:$0xff] %vm264, 0.0
        %283 = vst.msk [vmem:[#allocation2 + $0x90] sm:$0xff] %vm264, 0.0
        %284 = vst.msk [vmem:[#allocation2 + $0x98] sm:$0xff] %vm264, 0.0
        %285 = vst.msk [vmem:[#allocation2 + $0xa0] sm:$0xff] %vm264, 0.0
        %286 = vst.msk [vmem:[#allocation2 + $0xa8] sm:$0xff] %vm264, 0.0
        %287 = vst.msk [vmem:[#allocation2 + $0xb0] sm:$0xff] %vm264, 0.0
        %288 = vst.msk [vmem:[#allocation2 + $0xb8] sm:$0xff] %vm264, 0.0
        %289 = vst.msk [vmem:[#allocation2 + $0xc0] sm:$0xff] %vm264, 0.0
        %290 = vst.msk [vmem:[#allocation2 + $0xc8] sm:$0xff] %vm264, 0.0
        %291 = vst.msk [vmem:[#allocation2 + $0xd0] sm:$0xff] %vm264, 0.0
        %292 = vst.msk [vmem:[#allocation2 + $0xd8] sm:$0xff] %vm264, 0.0
        %293 = vst.msk [vmem:[#allocation2 + $0xe0] sm:$0xff] %vm264, 0.0
        %294 = vst.msk [vmem:[#allocation2 + $0xe8] sm:$0xff] %vm264, 0.0
        %295 = vst.msk [vmem:[#allocation2 + $0xf0] sm:$0xff] %vm264, 0.0
        %296 = vst.msk [vmem:[#allocation2 + $0xf8] sm:$0xff] %vm264, 0.0
      $region36: #{_lambda_.15} parent=31 // pred_fallthru
        _
      %v297 = vld [vmem:[#allocation2] sm:$0xff]
      %v298 = vld [vmem:[#allocation2 + $0x8] sm:$0xff]
      %v299 = vld [vmem:[#allocation2 + $0x10] sm:$0xff]
      %v300 = vld [vmem:[#allocation2 + $0x18] sm:$0xff]
      %v301 = vld [vmem:[#allocation2 + $0x20] sm:$0xff]
      %v302 = vld [vmem:[#allocation2 + $0x28] sm:$0xff]
      %v303 = vld [vmem:[#allocation2 + $0x30] sm:$0xff]
      %v304 = vld [vmem:[#allocation2 + $0x38] sm:$0xff]
      %v305 = vld [vmem:[#allocation2 + $0x40] sm:$0xff]
      %v306 = vld [vmem:[#allocation2 + $0x48] sm:$0xff]
      %v307 = vld [vmem:[#allocation2 + $0x50] sm:$0xff]
      %v308 = vld [vmem:[#allocation2 + $0x58] sm:$0xff]
      %v309 = vld [vmem:[#allocation2 + $0x60] sm:$0xff]
      %v310 = vld [vmem:[#allocation2 + $0x68] sm:$0xff]
      %v311 = vld [vmem:[#allocation2 + $0x70] sm:$0xff]
      %v312 = vld [vmem:[#allocation2 + $0x78] sm:$0xff]
      %v313 = vld [vmem:[#allocation2 + $0x80] sm:$0xff]
      %v314 = vld [vmem:[#allocation2 + $0x88] sm:$0xff]
      %v315 = vld [vmem:[#allocation2 + $0x90] sm:$0xff]
      %v316 = vld [vmem:[#allocation2 + $0x98] sm:$0xff]
      %v317 = vld [vmem:[#allocation2 + $0xa0] sm:$0xff]
      %v318 = vld [vmem:[#allocation2 + $0xa8] sm:$0xff]
      %v319 = vld [vmem:[#allocation2 + $0xb0] sm:$0xff]
      %v320 = vld [vmem:[#allocation2 + $0xb8] sm:$0xff]
      %v321 = vld [vmem:[#allocation2 + $0xc0] sm:$0xff]
      %v322 = vld [vmem:[#allocation2 + $0xc8] sm:$0xff]
      %v323 = vld [vmem:[#allocation2 + $0xd0] sm:$0xff]
      %v324 = vld [vmem:[#allocation2 + $0xd8] sm:$0xff]
      %v325 = vld [vmem:[#allocation2 + $0xe0] sm:$0xff]
      %v326 = vld [vmem:[#allocation2 + $0xe8] sm:$0xff]
      %v327 = vld [vmem:[#allocation2 + $0xf0] sm:$0xff]
      %v328 = vld [vmem:[#allocation2 + $0xf8] sm:$0xff]
      %v329 = vld [vmem:[%s236] sm:$0xf]
      %v330 = vld [vmem:[%s236 + $0x4] sm:$0xf]
      %v331 = vld [vmem:[%s236 + $0x8] sm:$0xf]
      %v332 = vld [vmem:[%s236 + $0xc] sm:$0xf]
      %v333 = vld [vmem:[%s236 + $0x10] sm:$0xf]
      %v334 = vld [vmem:[%s236 + $0x14] sm:$0xf]
      %v335 = vld [vmem:[%s236 + $0x18] sm:$0xf]
      %v336 = vld [vmem:[%s236 + $0x1c] sm:$0xf]
      %v337 = vld [vmem:[%s236 + $0x20] sm:$0xf]
      %v338 = vld [vmem:[%s236 + $0x24] sm:$0xf]
      %v339 = vld [vmem:[%s236 + $0x28] sm:$0xf]
      %v340 = vld [vmem:[%s236 + $0x2c] sm:$0xf]
      %v341 = vld [vmem:[%s236 + $0x30] sm:$0xf]
      %v342 = vld [vmem:[%s236 + $0x34] sm:$0xf]
      %v343 = vld [vmem:[%s236 + $0x38] sm:$0xf]
      %v344 = vld [vmem:[%s236 + $0x3c] sm:$0xf]
      %v345 = vld [vmem:[%s236 + $0x40] sm:$0xf]
      %v346 = vld [vmem:[%s236 + $0x44] sm:$0xf]
      %v347 = vld [vmem:[%s236 + $0x48] sm:$0xf]
      %v348 = vld [vmem:[%s236 + $0x4c] sm:$0xf]
      %v349 = vld [vmem:[%s236 + $0x50] sm:$0xf]
      %v350 = vld [vmem:[%s236 + $0x54] sm:$0xf]
      %v351 = vld [vmem:[%s236 + $0x58] sm:$0xf]
      %v352 = vld [vmem:[%s236 + $0x5c] sm:$0xf]
      %v353 = vld [vmem:[%s236 + $0x60] sm:$0xf]
      %v354 = vld [vmem:[%s236 + $0x64] sm:$0xf]
      %v355 = vld [vmem:[%s236 + $0x68] sm:$0xf]
      %v356 = vld [vmem:[%s236 + $0x6c] sm:$0xf]
      %v357 = vld [vmem:[%s236 + $0x70] sm:$0xf]
      %v358 = vld [vmem:[%s236 + $0x74] sm:$0xf]
      %v359 = vld [vmem:[%s236 + $0x78] sm:$0xf]
      %v360 = vld [vmem:[%s236 + $0x7c] sm:$0xf]
      %v361 = vld [vmem:[%s245] sm:$0xf]
      %v362 = vld [vmem:[%s245 + $0x4] sm:$0xf]
      %v363 = vld [vmem:[%s245 + $0x8] sm:$0xf]
      %v364 = vld [vmem:[%s245 + $0xc] sm:$0x3]
      %v397 = vunpack.c.l.b16 %v329
      %v398 = vunpack.c.l.b16 %v330
      %v399 = vunpack.c.l.b16 %v331
      %v400 = vunpack.c.l.b16 %v332
      %v401 = vunpack.c.l.b16 %v333
      %v402 = vunpack.c.l.b16 %v334
      %v403 = vunpack.c.l.b16 %v335
      %v404 = vunpack.c.l.b16 %v336
      %v405 = vunpack.c.l.b16 %v337
      %v406 = vunpack.c.l.b16 %v338
      %v407 = vunpack.c.l.b16 %v339
      %v408 = vunpack.c.l.b16 %v340
      %v409 = vunpack.c.l.b16 %v341
      %v410 = vunpack.c.l.b16 %v342
      %v411 = vunpack.c.l.b16 %v343
      %v412 = vunpack.c.l.b16 %v344
      %v413 = vunpack.c.l.b16 %v345
      %v414 = vunpack.c.l.b16 %v346
      %v415 = vunpack.c.l.b16 %v347
      %v416 = vunpack.c.l.b16 %v348
      %v417 = vunpack.c.l.b16 %v349
      %v418 = vunpack.c.l.b16 %v350
      %v419 = vunpack.c.l.b16 %v351
      %v420 = vunpack.c.l.b16 %v352
      %v421 = vunpack.c.l.b16 %v353
      %v422 = vunpack.c.l.b16 %v354
      %v423 = vunpack.c.l.b16 %v355
      %v424 = vunpack.c.l.b16 %v356
      %v425 = vunpack.c.l.b16 %v357
      %v426 = vunpack.c.l.b16 %v358
      %v427 = vunpack.c.l.b16 %v359
      %v428 = vunpack.c.l.b16 %v360
      %v429 = vpack.c.b16 %v398, %v397
      %v430 = vpack.c.b16 %v400, %v399
      %v431 = vpack.c.b16 %v402, %v401
      %v432 = vpack.c.b16 %v404, %v403
      %v433 = vpack.c.b16 %v406, %v405
      %v434 = vpack.c.b16 %v408, %v407
      %v435 = vpack.c.b16 %v410, %v409
      %v436 = vpack.c.b16 %v412, %v411
      %v437 = vpack.c.b16 %v414, %v413
      %v438 = vpack.c.b16 %v416, %v415
      %v439 = vpack.c.b16 %v418, %v417
      %v440 = vpack.c.b16 %v420, %v419
      %v441 = vpack.c.b16 %v422, %v421
      %v442 = vpack.c.b16 %v424, %v423
      %v443 = vpack.c.b16 %v426, %v425
      %v444 = vpack.c.b16 %v428, %v427
      %v449 = vunpack.c.l.b16 %v361
      %v450 = vunpack.c.l.b16 %v362
      %v451 = vunpack.c.l.b16 %v363
      %v452 = vunpack.c.l.b16 %v364
      %v453 = vpack.c.b16 %v450, %v449
      %v454 = vpack.c.b16 %v452, %v451
      %vm456 = vcmask 220160
      %v458 = vsel %vm456, %v429, 0
      %v461 = vsel %vm456, %v430, 0
      %v464 = vsel %vm456, %v431, 0
      %v467 = vsel %vm456, %v432, 0
      %v470 = vsel %vm456, %v433, 0
      %v473 = vsel %vm456, %v434, 0
      %v476 = vsel %vm456, %v435, 0
      %v479 = vsel %vm456, %v436, 0
      %v482 = vsel %vm456, %v437, 0
      %v485 = vsel %vm456, %v438, 0
      %v488 = vsel %vm456, %v439, 0
      %v491 = vsel %vm456, %v440, 0
      %v494 = vsel %vm456, %v441, 0
      %v497 = vsel %vm456, %v442, 0
      %v500 = vsel %vm456, %v443, 0
      %v503 = vsel %vm456, %v444, 0
      %vm505 = vcmask 1044480
      %vm506 = vcmask 1045504
      %v507 = vsel %vm505, 4294967295, 65535
      %v508 = vsel %vm506, %v507, 0
      %v510 = vand.u32 %v454, %v508
      %512 = vmatprep.subr.bf16.mxu0 0
      %513 = vmatpush1.bf16.msra.mxu0 0
      %514 = vmatprep.subr.bf16.mxu0 0
      %515 = vmatpush1.bf16.msra.mxu0 0
      %516 = vmatprep.subr.bf16.mxu0 0
      %517 = vmatpush1.bf16.msra.mxu0 0
      %518 = vmatprep.subr.bf16.mxu0 0
      %519 = vmatpush1.bf16.msra.mxu0 0
      %520 = vmatprep.subr.bf16.mxu0 0
      %521 = vmatpush1.bf16.msra.mxu0 0
      %522 = vmatprep.subr.bf16.mxu0 0
      %523 = vmatpush1.bf16.msra.mxu0 0
      %524 = vmatprep.subr.bf16.mxu0 0
      %525 = vmatpush1.bf16.msra.mxu0 %v510
      %526 = vmatprep.subr.bf16.mxu0 0
      %527 = vmatpush1.bf16.msra.mxu0 %v453
      %528 = vmatprep.subr.bf16.mxu0 0
      %529 = vmatpush2.bf16.msra.mxu0 0
      %530 = vmatprep.subr.bf16.mxu0 0
      %531 = vmatpush2.bf16.msra.mxu0 0
      %532 = vmatprep.subr.bf16.mxu0 0
      %533 = vmatpush2.bf16.msra.mxu0 0
      %534 = vmatprep.subr.bf16.mxu0 0
      %535 = vmatpush2.bf16.msra.mxu0 0
      %536 = vmatprep.subr.bf16.mxu0 0
      %537 = vmatpush2.bf16.msra.mxu0 0
      %538 = vmatprep.subr.bf16.mxu0 0
      %539 = vmatpush2.bf16.msra.mxu0 0
      %540 = vmatprep.subr.bf16.mxu0 0
      %541 = vmatpush2.bf16.msra.mxu0 0
      %542 = vmatprep.subr.bf16.mxu0 0
      %543 = vmatpush2.bf16.msra.mxu0 0
      %544 = vmatprep.mubr.bf16.mxu0 0
      %545 = vmatmul.mubr.bf16.gmra.mxu0 %v458
      %v546 = vpop.f32.mrf.mxu0
      %v547 = vadd.f32 0.0, %v546
      %v548 = vpop.f32.mrf.mxu0
      %v549 = vpop.f32.mrf.mxu0
      %v550 = vadd.f32 0.0, %v549
      %v551 = vpop.f32.mrf.mxu0
      %552 = vmatprep.mubr.bf16.mxu0 0
      %553 = vmatmul.mubr.bf16.gmra.mxu0 %v461
      %v554 = vpop.f32.mrf.mxu0
      %v555 = vadd.f32 0.0, %v554
      %v556 = vpop.f32.mrf.mxu0
      %v557 = vpop.f32.mrf.mxu0
      %v558 = vadd.f32 0.0, %v557
      %v559 = vpop.f32.mrf.mxu0
      %560 = vmatprep.mubr.bf16.mxu0 0
      %561 = vmatmul.mubr.bf16.gmra.mxu0 %v464
      %v562 = vpop.f32.mrf.mxu0
      %v563 = vadd.f32 0.0, %v562
      %v564 = vpop.f32.mrf.mxu0
      %v565 = vpop.f32.mrf.mxu0
      %v566 = vadd.f32 0.0, %v565
      %v567 = vpop.f32.mrf.mxu0
      %568 = vmatprep.mubr.bf16.mxu0 0
      %569 = vmatmul.mubr.bf16.gmra.mxu0 %v467
      %v570 = vpop.f32.mrf.mxu0
      %v571 = vadd.f32 0.0, %v570
      %v572 = vpop.f32.mrf.mxu0
      %v573 = vpop.f32.mrf.mxu0
      %v574 = vadd.f32 0.0, %v573
      %v575 = vpop.f32.mrf.mxu0
      %576 = vmatprep.mubr.bf16.mxu0 0
      %577 = vmatmul.mubr.bf16.gmra.mxu0 %v470
      %v578 = vpop.f32.mrf.mxu0
      %v579 = vadd.f32 0.0, %v578
      %v580 = vpop.f32.mrf.mxu0
      %v581 = vpop.f32.mrf.mxu0
      %v582 = vadd.f32 0.0, %v581
      %v583 = vpop.f32.mrf.mxu0
      %584 = vmatprep.mubr.bf16.mxu0 0
      %585 = vmatmul.mubr.bf16.gmra.mxu0 %v473
      %v586 = vpop.f32.mrf.mxu0
      %v587 = vadd.f32 0.0, %v586
      %v588 = vpop.f32.mrf.mxu0
      %v589 = vpop.f32.mrf.mxu0
      %v590 = vadd.f32 0.0, %v589
      %v591 = vpop.f32.mrf.mxu0
      %592 = vmatprep.mubr.bf16.mxu0 0
      %593 = vmatmul.mubr.bf16.gmra.mxu0 %v476
      %v594 = vpop.f32.mrf.mxu0
      %v595 = vadd.f32 0.0, %v594
      %v596 = vpop.f32.mrf.mxu0
      %v597 = vpop.f32.mrf.mxu0
      %v598 = vadd.f32 0.0, %v597
      %v599 = vpop.f32.mrf.mxu0
      %600 = vmatprep.mubr.bf16.mxu0 0
      %601 = vmatmul.mubr.bf16.gmra.mxu0 %v479
      %v602 = vpop.f32.mrf.mxu0
      %v603 = vadd.f32 0.0, %v602
      %v604 = vpop.f32.mrf.mxu0
      %v605 = vpop.f32.mrf.mxu0
      %v606 = vadd.f32 0.0, %v605
      %v607 = vpop.f32.mrf.mxu0
      %608 = vmatprep.mubr.bf16.mxu0 0
      %609 = vmatmul.mubr.bf16.gmra.mxu0 %v482
      %v610 = vpop.f32.mrf.mxu0
      %v611 = vadd.f32 0.0, %v610
      %v612 = vpop.f32.mrf.mxu0
      %v613 = vpop.f32.mrf.mxu0
      %v614 = vadd.f32 0.0, %v613
      %v615 = vpop.f32.mrf.mxu0
      %616 = vmatprep.mubr.bf16.mxu0 0
      %617 = vmatmul.mubr.bf16.gmra.mxu0 %v485
      %v618 = vpop.f32.mrf.mxu0
      %v619 = vadd.f32 0.0, %v618
      %v620 = vpop.f32.mrf.mxu0
      %v621 = vpop.f32.mrf.mxu0
      %v622 = vadd.f32 0.0, %v621
      %v623 = vpop.f32.mrf.mxu0
      %624 = vmatprep.mubr.bf16.mxu0 0
      %625 = vmatmul.mubr.bf16.gmra.mxu0 %v488
      %v626 = vpop.f32.mrf.mxu0
      %v627 = vadd.f32 0.0, %v626
      %v628 = vpop.f32.mrf.mxu0
      %v629 = vpop.f32.mrf.mxu0
      %v630 = vadd.f32 0.0, %v629
      %v631 = vpop.f32.mrf.mxu0
      %632 = vmatprep.mubr.bf16.mxu0 0
      %633 = vmatmul.mubr.bf16.gmra.mxu0 %v491
      %v634 = vpop.f32.mrf.mxu0
      %v635 = vadd.f32 0.0, %v634
      %v636 = vpop.f32.mrf.mxu0
      %v637 = vpop.f32.mrf.mxu0
      %v638 = vadd.f32 0.0, %v637
      %v639 = vpop.f32.mrf.mxu0
      %640 = vmatprep.mubr.bf16.mxu0 0
      %641 = vmatmul.mubr.bf16.gmra.mxu0 %v494
      %v642 = vpop.f32.mrf.mxu0
      %v643 = vadd.f32 0.0, %v642
      %v644 = vpop.f32.mrf.mxu0
      %v645 = vpop.f32.mrf.mxu0
      %v646 = vadd.f32 0.0, %v645
      %v647 = vpop.f32.mrf.mxu0
      %648 = vmatprep.mubr.bf16.mxu0 0
      %649 = vmatmul.mubr.bf16.gmra.mxu0 %v497
      %v650 = vpop.f32.mrf.mxu0
      %v651 = vadd.f32 0.0, %v650
      %v652 = vpop.f32.mrf.mxu0
      %v653 = vpop.f32.mrf.mxu0
      %v654 = vadd.f32 0.0, %v653
      %v655 = vpop.f32.mrf.mxu0
      %656 = vmatprep.mubr.bf16.mxu0 0
      %657 = vmatmul.mubr.bf16.gmra.mxu0 %v500
      %v658 = vpop.f32.mrf.mxu0
      %v659 = vadd.f32 0.0, %v658
      %v660 = vpop.f32.mrf.mxu0
      %v661 = vpop.f32.mrf.mxu0
      %v662 = vadd.f32 0.0, %v661
      %v663 = vpop.f32.mrf.mxu0
      %664 = vmatprep.mubr.bf16.mxu0 0
      %665 = vmatmul.mubr.bf16.gmra.mxu0 %v503
      %v666 = vpop.f32.mrf.mxu0
      %v667 = vadd.f32 0.0, %v666
      %v668 = vpop.f32.mrf.mxu0
      %v669 = vpop.f32.mrf.mxu0
      %v670 = vadd.f32 0.0, %v669
      %v671 = vpop.f32.mrf.mxu0
      %672 = vdwg.mxu0
      %v673 = vadd.f32 %v297, %v547
      %v674 = vadd.f32 %v298, %v550
      %v675 = vadd.f32 %v299, %v555
      %v676 = vadd.f32 %v300, %v558
      %v677 = vadd.f32 %v301, %v563
      %v678 = vadd.f32 %v302, %v566
      %v679 = vadd.f32 %v303, %v571
      %v680 = vadd.f32 %v304, %v574
      %v681 = vadd.f32 %v305, %v579
      %v682 = vadd.f32 %v306, %v582
      %v683 = vadd.f32 %v307, %v587
      %v684 = vadd.f32 %v308, %v590
      %v685 = vadd.f32 %v309, %v595
      %v686 = vadd.f32 %v310, %v598
      %v687 = vadd.f32 %v311, %v603
      %v688 = vadd.f32 %v312, %v606
      %v689 = vadd.f32 %v313, %v611
      %v690 = vadd.f32 %v314, %v614
      %v691 = vadd.f32 %v315, %v619
      %v692 = vadd.f32 %v316, %v622
      %v693 = vadd.f32 %v317, %v627
      %v694 = vadd.f32 %v318, %v630
      %v695 = vadd.f32 %v319, %v635
      %v696 = vadd.f32 %v320, %v638
      %v697 = vadd.f32 %v321, %v643
      %v698 = vadd.f32 %v322, %v646
      %v699 = vadd.f32 %v323, %v651
      %v700 = vadd.f32 %v324, %v654
      %v701 = vadd.f32 %v325, %v659
      %v702 = vadd.f32 %v326, %v662
      %v703 = vadd.f32 %v327, %v667
      %v704 = vadd.f32 %v328, %v670
      %vm705 = vcmask 64512
      %706 = vst.msk [vmem:[#allocation2] sm:$0xff] %vm705, %v673
      %707 = vst.msk [vmem:[#allocation2 + $0x8] sm:$0xff] %vm705, %v674
      %708 = vst.msk [vmem:[#allocation2 + $0x10] sm:$0xff] %vm705, %v675
      %709 = vst.msk [vmem:[#allocation2 + $0x18] sm:$0xff] %vm705, %v676
      %710 = vst.msk [vmem:[#allocation2 + $0x20] sm:$0xff] %vm705, %v677
      %711 = vst.msk [vmem:[#allocation2 + $0x28] sm:$0xff] %vm705, %v678
      %712 = vst.msk [vmem:[#allocation2 + $0x30] sm:$0xff] %vm705, %v679
      %713 = vst.msk [vmem:[#allocation2 + $0x38] sm:$0xff] %vm705, %v680
      %714 = vst.msk [vmem:[#allocation2 + $0x40] sm:$0xff] %vm705, %v681
      %715 = vst.msk [vmem:[#allocation2 + $0x48] sm:$0xff] %vm705, %v682
      %716 = vst.msk [vmem:[#allocation2 + $0x50] sm:$0xff] %vm705, %v683
      %717 = vst.msk [vmem:[#allocation2 + $0x58] sm:$0xff] %vm705, %v684
      %718 = vst.msk [vmem:[#allocation2 + $0x60] sm:$0xff] %vm705, %v685
      %719 = vst.msk [vmem:[#allocation2 + $0x68] sm:$0xff] %vm705, %v686
      %720 = vst.msk [vmem:[#allocation2 + $0x70] sm:$0xff] %vm705, %v687
      %721 = vst.msk [vmem:[#allocation2 + $0x78] sm:$0xff] %vm705, %v688
      %722 = vst.msk [vmem:[#allocation2 + $0x80] sm:$0xff] %vm705, %v689
      %723 = vst.msk [vmem:[#allocation2 + $0x88] sm:$0xff] %vm705, %v690
      %724 = vst.msk [vmem:[#allocation2 + $0x90] sm:$0xff] %vm705, %v691
      %725 = vst.msk [vmem:[#allocation2 + $0x98] sm:$0xff] %vm705, %v692
      %726 = vst.msk [vmem:[#allocation2 + $0xa0] sm:$0xff] %vm705, %v693
      %727 = vst.msk [vmem:[#allocation2 + $0xa8] sm:$0xff] %vm705, %v694
      %728 = vst.msk [vmem:[#allocation2 + $0xb0] sm:$0xff] %vm705, %v695
      %729 = vst.msk [vmem:[#allocation2 + $0xb8] sm:$0xff] %vm705, %v696
      %730 = vst.msk [vmem:[#allocation2 + $0xc0] sm:$0xff] %vm705, %v697
      %731 = vst.msk [vmem:[#allocation2 + $0xc8] sm:$0xff] %vm705, %v698
      %732 = vst.msk [vmem:[#allocation2 + $0xd0] sm:$0xff] %vm705, %v699
      %733 = vst.msk [vmem:[#allocation2 + $0xd8] sm:$0xff] %vm705, %v700
      %734 = vst.msk [vmem:[#allocation2 + $0xe0] sm:$0xff] %vm705, %v701
      %735 = vst.msk [vmem:[#allocation2 + $0xe8] sm:$0xff] %vm705, %v702
      %736 = vst.msk [vmem:[#allocation2 + $0xf0] sm:$0xff] %vm705, %v703
      %737 = vst.msk [vmem:[#allocation2 + $0xf8] sm:$0xff] %vm705, %v704
      // Predicated region
      $region37: #{_lambda_.15} parent=31 // pred_check
        %p738 = pneg %p260
      $region38: #{_lambda_.15} parent=31 // pred_check_branch
        %740 = sbr.rel (%p738) target = $region40
      $region39: #{_lambda_.15} parent=31 // pred_region
        %v741 = vld [vmem:[#allocation2] sm:$0xff]
        %v742 = vld [vmem:[#allocation2 + $0x8] sm:$0xff]
        %v743 = vld [vmem:[#allocation2 + $0x10] sm:$0xff]
        %v744 = vld [vmem:[#allocation2 + $0x18] sm:$0xff]
        %v745 = vld [vmem:[#allocation2 + $0x20] sm:$0xff]
        %v746 = vld [vmem:[#allocation2 + $0x28] sm:$0xff]
        %v747 = vld [vmem:[#allocation2 + $0x30] sm:$0xff]
        %v748 = vld [vmem:[#allocation2 + $0x38] sm:$0xff]
        %v749 = vld [vmem:[#allocation2 + $0x40] sm:$0xff]
        %v750 = vld [vmem:[#allocation2 + $0x48] sm:$0xff]
        %v751 = vld [vmem:[#allocation2 + $0x50] sm:$0xff]
        %v752 = vld [vmem:[#allocation2 + $0x58] sm:$0xff]
        %v753 = vld [vmem:[#allocation2 + $0x60] sm:$0xff]
        %v754 = vld [vmem:[#allocation2 + $0x68] sm:$0xff]
        %v755 = vld [vmem:[#allocation2 + $0x70] sm:$0xff]
        %v756 = vld [vmem:[#allocation2 + $0x78] sm:$0xff]
        %v757 = vld [vmem:[#allocation2 + $0x80] sm:$0xff]
        %v758 = vld [vmem:[#allocation2 + $0x88] sm:$0xff]
        %v759 = vld [vmem:[#allocation2 + $0x90] sm:$0xff]
        %v760 = vld [vmem:[#allocation2 + $0x98] sm:$0xff]
        %v761 = vld [vmem:[#allocation2 + $0xa0] sm:$0xff]
        %v762 = vld [vmem:[#allocation2 + $0xa8] sm:$0xff]
        %v763 = vld [vmem:[#allocation2 + $0xb0] sm:$0xff]
        %v764 = vld [vmem:[#allocation2 + $0xb8] sm:$0xff]
        %v765 = vld [vmem:[#allocation2 + $0xc0] sm:$0xff]
        %v766 = vld [vmem:[#allocation2 + $0xc8] sm:$0xff]
        %v767 = vld [vmem:[#allocation2 + $0xd0] sm:$0xff]
        %v768 = vld [vmem:[#allocation2 + $0xd8] sm:$0xff]
        %v769 = vld [vmem:[#allocation2 + $0xe0] sm:$0xff]
        %v770 = vld [vmem:[#allocation2 + $0xe8] sm:$0xff]
        %v771 = vld [vmem:[#allocation2 + $0xf0] sm:$0xff]
        %v772 = vld [vmem:[#allocation2 + $0xf8] sm:$0xff]
        %v773 = vld [vmem:[%s249] sm:$0x1]
        %v775 = vlaneseq
        %v776 = vshrl.u32 %v775, 7
        %v777 = vsub.s32 0, %v776
        %v778 = vrot.slane %v773, %v777
        %v780 = vadd.f32 %v741, %v778
        %v781 = vadd.f32 %v742, %v778
        %v782 = vadd.f32 %v743, %v778
        %v783 = vadd.f32 %v744, %v778
        %v784 = vadd.f32 %v745, %v778
        %v785 = vadd.f32 %v746, %v778
        %v786 = vadd.f32 %v747, %v778
        %v787 = vadd.f32 %v748, %v778
        %v788 = vadd.f32 %v749, %v778
        %v789 = vadd.f32 %v750, %v778
        %v790 = vadd.f32 %v751, %v778
        %v791 = vadd.f32 %v752, %v778
        %v792 = vadd.f32 %v753, %v778
        %v793 = vadd.f32 %v754, %v778
        %v794 = vadd.f32 %v755, %v778
        %v795 = vadd.f32 %v756, %v778
        %v796 = vadd.f32 %v757, %v778
        %v797 = vadd.f32 %v758, %v778
        %v798 = vadd.f32 %v759, %v778
        %v799 = vadd.f32 %v760, %v778
        %v800 = vadd.f32 %v761, %v778
        %v801 = vadd.f32 %v762, %v778
        %v802 = vadd.f32 %v763, %v778
        %v803 = vadd.f32 %v764, %v778
        %v804 = vadd.f32 %v765, %v778
        %v805 = vadd.f32 %v766, %v778
        %v806 = vadd.f32 %v767, %v778
        %v807 = vadd.f32 %v768, %v778
        %v808 = vadd.f32 %v769, %v778
        %v809 = vadd.f32 %v770, %v778
        %v810 = vadd.f32 %v771, %v778
        %v811 = vadd.f32 %v772, %v778
        %v812 = vmax.f32 %v780, 0.0
        %v813 = vmax.f32 %v781, 0.0
        %v814 = vmax.f32 %v782, 0.0
        %v815 = vmax.f32 %v783, 0.0
        %v816 = vmax.f32 %v784, 0.0
        %v817 = vmax.f32 %v785, 0.0
        %v818 = vmax.f32 %v786, 0.0
        %v819 = vmax.f32 %v787, 0.0
        %v820 = vmax.f32 %v788, 0.0
        %v821 = vmax.f32 %v789, 0.0
        %v822 = vmax.f32 %v790, 0.0
        %v823 = vmax.f32 %v791, 0.0
        %v824 = vmax.f32 %v792, 0.0
        %v825 = vmax.f32 %v793, 0.0
        %v826 = vmax.f32 %v794, 0.0
        %v827 = vmax.f32 %v795, 0.0
        %v828 = vmax.f32 %v796, 0.0
        %v829 = vmax.f32 %v797, 0.0
        %v830 = vmax.f32 %v798, 0.0
        %v831 = vmax.f32 %v799, 0.0
        %v832 = vmax.f32 %v800, 0.0
        %v833 = vmax.f32 %v801, 0.0
        %v834 = vmax.f32 %v802, 0.0
        %v835 = vmax.f32 %v803, 0.0
        %v836 = vmax.f32 %v804, 0.0
        %v837 = vmax.f32 %v805, 0.0
        %v838 = vmax.f32 %v806, 0.0
        %v839 = vmax.f32 %v807, 0.0
        %v840 = vmax.f32 %v808, 0.0
        %v841 = vmax.f32 %v809, 0.0
        %v842 = vmax.f32 %v810, 0.0
        %v843 = vmax.f32 %v811, 0.0
        %844 = vst.msk [vmem:[%s257] sm:$0xff] %vm705, %v812
        %845 = vst.msk [vmem:[%s257 + $0x8] sm:$0xff] %vm705, %v813
        %846 = vst.msk [vmem:[%s257 + $0x10] sm:$0xff] %vm705, %v814
        %847 = vst.msk [vmem:[%s257 + $0x18] sm:$0xff] %vm705, %v815
        %848 = vst.msk [vmem:[%s257 + $0x20] sm:$0xff] %vm705, %v816
        %849 = vst.msk [vmem:[%s257 + $0x28] sm:$0xff] %vm705, %v817
        %850 = vst.msk [vmem:[%s257 + $0x30] sm:$0xff] %vm705, %v818
        %851 = vst.msk [vmem:[%s257 + $0x38] sm:$0xff] %vm705, %v819
        %852 = vst.msk [vmem:[%s257 + $0x40] sm:$0xff] %vm705, %v820
        %853 = vst.msk [vmem:[%s257 + $0x48] sm:$0xff] %vm705, %v821
        %854 = vst.msk [vmem:[%s257 + $0x50] sm:$0xff] %vm705, %v822
        %855 = vst.msk [vmem:[%s257 + $0x58] sm:$0xff] %vm705, %v823
        %856 = vst.msk [vmem:[%s257 + $0x60] sm:$0xff] %vm705, %v824
        %857 = vst.msk [vmem:[%s257 + $0x68] sm:$0xff] %vm705, %v825
        %858 = vst.msk [vmem:[%s257 + $0x70] sm:$0xff] %vm705, %v826
        %859 = vst.msk [vmem:[%s257 + $0x78] sm:$0xff] %vm705, %v827
        %860 = vst.msk [vmem:[%s257 + $0x80] sm:$0xff] %vm705, %v828
        %861 = vst.msk [vmem:[%s257 + $0x88] sm:$0xff] %vm705, %v829
        %862 = vst.msk [vmem:[%s257 + $0x90] sm:$0xff] %vm705, %v830
        %863 = vst.msk [vmem:[%s257 + $0x98] sm:$0xff] %vm705, %v831
        %864 = vst.msk [vmem:[%s257 + $0xa0] sm:$0xff] %vm705, %v832
        %865 = vst.msk [vmem:[%s257 + $0xa8] sm:$0xff] %vm705, %v833
        %866 = vst.msk [vmem:[%s257 + $0xb0] sm:$0xff] %vm705, %v834
        %867 = vst.msk [vmem:[%s257 + $0xb8] sm:$0xff] %vm705, %v835
        %868 = vst.msk [vmem:[%s257 + $0xc0] sm:$0xff] %vm705, %v836
        %869 = vst.msk [vmem:[%s257 + $0xc8] sm:$0xff] %vm705, %v837
        %870 = vst.msk [vmem:[%s257 + $0xd0] sm:$0xff] %vm705, %v838
        %871 = vst.msk [vmem:[%s257 + $0xd8] sm:$0xff] %vm705, %v839
        %872 = vst.msk [vmem:[%s257 + $0xe0] sm:$0xff] %vm705, %v840
        %873 = vst.msk [vmem:[%s257 + $0xe8] sm:$0xff] %vm705, %v841
        %874 = vst.msk [vmem:[%s257 + $0xf0] sm:$0xff] %vm705, %v842
        %875 = vst.msk [vmem:[%s257 + $0xf8] sm:$0xff] %vm705, %v843
      $region40: #{_lambda_.15} parent=31 // pred_fallthru
        _
      %s876 = smul.u32 32, %s19
      %p877 = scmp.lt.s32.totalorder %s876, 63
      %s878 = scalar_select %p877, %s876, 63
      %p879 = scmp.lt.s32.totalorder %s20, 0
      %s880 = scalar_select %p879, %s20, 0
      %s881 = sadd.s32 %s880, %s878
      %s882 = smul.addr %s881, 8
      %s883 = scalar_lea.vmem %s3, %s882
      // Predicated region
      $region41: #{_lambda_.15} parent=31 // pred_check
        %p884 = pneg %p135
      $region42: #{_lambda_.15} parent=31 // pred_check_branch
        %886 = sbr.rel (%p884) target = $region44
      $region43: #{_lambda_.15} parent=31 // pred_region
        %s887 = smul.u32 32, %s19
      $region44: #{_lambda_.15} parent=31 // pred_fallthru
        _
    $region32: #{_lambda_.15} parent=5 // pred_fallthru
      _
    %p888 = scmp.le.s32.totalorder 2, %s9
    // Predicated region
    $region45: #{_lambda_.15} parent=5 // pred_check
      %p889 = pneg %p888
    $region46: #{_lambda_.15} parent=5 // pred_check_branch
      %891 = sbr.rel (%p889) target = $region48
    $region47: #{_lambda_.15} parent=5 // pred_region
      %s892 = ssub.s32 %s9, 2
      // Predicated region
      $region49: #{_lambda_.15} parent=47 // pred_check
        %p893 = pneg %p141
      $region50: #{_lambda_.15} parent=47 // pred_check_branch
        %895 = sbr.rel (%p893) target = $region52
      $region51: #{_lambda_.15} parent=47 // pred_region
        %s896 = smul.u32 32, %s22
        %p897 = scmp.lt.s32.totalorder %s896, 63
        %s898 = scalar_select %p897, %s896, 63
        %p899 = scmp.lt.s32.totalorder %s23, 0
        %s900 = scalar_select %p899, %s23, 0
        %s901 = sadd.s32 %s900, %s898
        %s902 = smul.addr %s901, 8
        %s903 = scalar_lea.vmem %s3, %s902
      $region52: #{_lambda_.15} parent=47 // pred_fallthru
        _
    $region48: #{_lambda_.15} parent=5 // pred_fallthru
      _
  $region6: #{_lambda_.15} parent=0 // loop_footer
    %s13 = sadd.s32 1, %s9
  $region7: #{_lambda_.15} parent=0 // loop_footer_branch
    %8 = sbr.rel target = $region3
  $region8: #{_lambda_.15} parent=0 // loop_exit
    _

// kernel: _lambda_.16
$region0: #{_lambda_.16}
  #allocation0 [shape = 'u32[]', space=smem, size = 0x4, offset = 0x4, fixed_abs, tag = 'smem constant byte address 0x4 - core index']
  #allocation1 [shape = 'u32[144,128]{1,0:T(1,128)}', space=vmem, size = 0x12000, scoped, tag = 'internal scratch']
  #allocation2 [shape = 'f32[128,8]{1,0:T(8,128)}', space=vmem, size = 0x10000, scoped, tag = 'scratch operand']
  %s0 = inlined_call_operand.vmem [shape: bf16[128,72], index: 0, kind: input, shape index: {}]
  %s1 = inlined_call_operand.vmem [shape: bf16[72,8], index: 1, kind: input, shape index: {}]
  %s2 = inlined_call_operand.vmem [shape: f32[1,8], index: 2, kind: input, shape index: {}]
  %s3 = inlined_call_operand.vmem [shape: f32[128,8], index: 3, kind: output, shape index: {}]
  %s4 = sld [smem:[#allocation0]]
  $region30: #{_lambda_.16} parent=0
    _
  %s6 = ssub.s32 1, %s4
  %s7 = scalar_select 0, %s6, %s4
  // Predicated region
  $region2: #{_lambda_.16} parent=0 // pred_check
    _
  $region3: #{_lambda_.16} parent=0 // pred_check_branch
    %9 = sbr.rel (0) target = $region5
  $region4: #{_lambda_.16} parent=0 // pred_region
    _
  $region5: #{_lambda_.16} parent=0 // pred_fallthru
    _
  // Predicated region
  $region6: #{_lambda_.16} parent=0 // pred_check
    _
  $region7: #{_lambda_.16} parent=0 // pred_check_branch
    %11 = sbr.rel (0) target = $region9
  $region8: #{_lambda_.16} parent=0 // pred_region
    _
  $region9: #{_lambda_.16} parent=0 // pred_fallthru
    _
  // Predicated region
  $region10: #{_lambda_.16} parent=0 // pred_check
    _
  $region11: #{_lambda_.16} parent=0 // pred_check_branch
    %13 = sbr.rel (0) target = $region13
  $region12: #{_lambda_.16} parent=0 // pred_region
    _
  $region13: #{_lambda_.16} parent=0 // pred_fallthru
    _
  %p15 = scmp.eq.s32.totalorder 0, 0
  // Predicated region
  $region14: #{_lambda_.16} parent=0 // pred_check
    %p16 = pneg %p15
  $region15: #{_lambda_.16} parent=0 // pred_check_branch
    %18 = sbr.rel (%p16) target = $region17
  $region16: #{_lambda_.16} parent=0 // pred_region
    %vm19 = vcmask 64512
    %20 = vst.msk [vmem:[#allocation2] sm:$0xff] %vm19, 0.0
    %21 = vst.msk [vmem:[#allocation2 + $0x8] sm:$0xff] %vm19, 0.0
    %22 = vst.msk [vmem:[#allocation2 + $0x10] sm:$0xff] %vm19, 0.0
    %23 = vst.msk [vmem:[#allocation2 + $0x18] sm:$0xff] %vm19, 0.0
    %24 = vst.msk [vmem:[#allocation2 + $0x20] sm:$0xff] %vm19, 0.0
    %25 = vst.msk [vmem:[#allocation2 + $0x28] sm:$0xff] %vm19, 0.0
    %26 = vst.msk [vmem:[#allocation2 + $0x30] sm:$0xff] %vm19, 0.0
    %27 = vst.msk [vmem:[#allocation2 + $0x38] sm:$0xff] %vm19, 0.0
    %28 = vst.msk [vmem:[#allocation2 + $0x40] sm:$0xff] %vm19, 0.0
    %29 = vst.msk [vmem:[#allocation2 + $0x48] sm:$0xff] %vm19, 0.0
    %30 = vst.msk [vmem:[#allocation2 + $0x50] sm:$0xff] %vm19, 0.0
    %31 = vst.msk [vmem:[#allocation2 + $0x58] sm:$0xff] %vm19, 0.0
    %32 = vst.msk [vmem:[#allocation2 + $0x60] sm:$0xff] %vm19, 0.0
    %33 = vst.msk [vmem:[#allocation2 + $0x68] sm:$0xff] %vm19, 0.0
    %34 = vst.msk [vmem:[#allocation2 + $0x70] sm:$0xff] %vm19, 0.0
    %35 = vst.msk [vmem:[#allocation2 + $0x78] sm:$0xff] %vm19, 0.0
  $region17: #{_lambda_.16} parent=0 // pred_fallthru
    _
  %v36 = vld [vmem:[#allocation2] sm:$0xff]
  %v37 = vld [vmem:[#allocation2 + $0x8] sm:$0xff]
  %v38 = vld [vmem:[#allocation2 + $0x10] sm:$0xff]
  %v39 = vld [vmem:[#allocation2 + $0x18] sm:$0xff]
  %v40 = vld [vmem:[#allocation2 + $0x20] sm:$0xff]
  %v41 = vld [vmem:[#allocation2 + $0x28] sm:$0xff]
  %v42 = vld [vmem:[#allocation2 + $0x30] sm:$0xff]
  %v43 = vld [vmem:[#allocation2 + $0x38] sm:$0xff]
  %v44 = vld [vmem:[#allocation2 + $0x40] sm:$0xff]
  %v45 = vld [vmem:[#allocation2 + $0x48] sm:$0xff]
  %v46 = vld [vmem:[#allocation2 + $0x50] sm:$0xff]
  %v47 = vld [vmem:[#allocation2 + $0x58] sm:$0xff]
  %v48 = vld [vmem:[#allocation2 + $0x60] sm:$0xff]
  %v49 = vld [vmem:[#allocation2 + $0x68] sm:$0xff]
  %v50 = vld [vmem:[#allocation2 + $0x70] sm:$0xff]
  %v51 = vld [vmem:[#allocation2 + $0x78] sm:$0xff]
  %v52 = vld [vmem:[%s0] sm:$0xf]
  %v53 = vld [vmem:[%s0 + $0x4] sm:$0xf]
  %v54 = vld [vmem:[%s0 + $0x8] sm:$0xf]
  %v55 = vld [vmem:[%s0 + $0xc] sm:$0xf]
  %v56 = vld [vmem:[%s0 + $0x10] sm:$0xf]
  %v57 = vld [vmem:[%s0 + $0x14] sm:$0xf]
  %v58 = vld [vmem:[%s0 + $0x18] sm:$0xf]
  %v59 = vld [vmem:[%s0 + $0x1c] sm:$0xf]
  %v60 = vld [vmem:[%s0 + $0x20] sm:$0xf]
  %v61 = vld [vmem:[%s0 + $0x24] sm:$0xf]
  %v62 = vld [vmem:[%s0 + $0x28] sm:$0xf]
  %v63 = vld [vmem:[%s0 + $0x2c] sm:$0xf]
  %v64 = vld [vmem:[%s0 + $0x30] sm:$0xf]
  %v65 = vld [vmem:[%s0 + $0x34] sm:$0xf]
  %v66 = vld [vmem:[%s0 + $0x38] sm:$0xf]
  %v67 = vld [vmem:[%s0 + $0x3c] sm:$0xf]
  %v68 = vld [vmem:[%s1] sm:$0xf]
  %v69 = vld [vmem:[%s1 + $0x4] sm:$0xf]
  %v70 = vld [vmem:[%s1 + $0x8] sm:$0xf]
  %v71 = vld [vmem:[%s1 + $0xc] sm:$0xf]
  %v72 = vld [vmem:[%s1 + $0x10] sm:$0xf]
  %v73 = vld [vmem:[%s1 + $0x14] sm:$0xf]
  %v74 = vld [vmem:[%s1 + $0x18] sm:$0xf]
  %v75 = vld [vmem:[%s1 + $0x1c] sm:$0xf]
  %v76 = vld [vmem:[%s1 + $0x20] sm:$0xf]
  %v93 = vunpack.c.l.b16 %v52
  %v94 = vunpack.c.l.b16 %v53
  %v95 = vunpack.c.l.b16 %v54
  %v96 = vunpack.c.l.b16 %v55
  %v97 = vunpack.c.l.b16 %v56
  %v98 = vunpack.c.l.b16 %v57
  %v99 = vunpack.c.l.b16 %v58
  %v100 = vunpack.c.l.b16 %v59
  %v101 = vunpack.c.l.b16 %v60
  %v102 = vunpack.c.l.b16 %v61
  %v103 = vunpack.c.l.b16 %v62
  %v104 = vunpack.c.l.b16 %v63
  %v105 = vunpack.c.l.b16 %v64
  %v106 = vunpack.c.l.b16 %v65
  %v107 = vunpack.c.l.b16 %v66
  %v108 = vunpack.c.l.b16 %v67
  %v109 = vpack.c.b16 %v94, %v93
  %v110 = vpack.c.b16 %v96, %v95
  %v111 = vpack.c.b16 %v98, %v97
  %v112 = vpack.c.b16 %v100, %v99
  %v113 = vpack.c.b16 %v102, %v101
  %v114 = vpack.c.b16 %v104, %v103
  %v115 = vpack.c.b16 %v106, %v105
  %v116 = vpack.c.b16 %v108, %v107
  %v126 = vunpack.c.l.b16 %v68
  %v127 = vunpack.c.l.b16 %v69
  %v128 = vunpack.c.l.b16 %v70
  %v129 = vunpack.c.l.b16 %v71
  %v130 = vunpack.c.l.b16 %v72
  %v131 = vunpack.c.l.b16 %v73
  %v132 = vunpack.c.l.b16 %v74
  %v133 = vunpack.c.l.b16 %v75
  %v134 = vunpack.c.l.b16 %v76
  %v135 = vpack.c.b16 %v127, %v126
  %v136 = vpack.c.b16 %v129, %v128
  %v137 = vpack.c.b16 %v131, %v130
  %v138 = vpack.c.b16 %v133, %v132
  %v139 = vpack.c.b16 %v134, %v134
  %vm144 = vcmask 588800
  %v146 = vsel %vm144, %v109, 0
  %v149 = vsel %vm144, %v110, 0
  %v152 = vsel %vm144, %v111, 0
  %v155 = vsel %vm144, %v112, 0
  %v158 = vsel %vm144, %v113, 0
  %v161 = vsel %vm144, %v114, 0
  %v164 = vsel %vm144, %v115, 0
  %v167 = vsel %vm144, %v116, 0
  %vm169 = vcmask 1043456
  %v171 = vsel %vm169, %v139, 0
  %173 = vmatprep.subr.bf16.mxu0 0
  %174 = vmatpush1.bf16.msra.mxu0 0
  %175 = vmatprep.subr.bf16.mxu0 0
  %176 = vmatpush1.bf16.msra.mxu0 0
  %177 = vmatprep.subr.bf16.mxu0 0
  %178 = vmatpush1.bf16.msra.mxu0 0
  %179 = vmatprep.subr.bf16.mxu0 0
  %180 = vmatpush1.bf16.msra.mxu0 %v171
  %181 = vmatprep.subr.bf16.mxu0 0
  %182 = vmatpush1.bf16.msra.mxu0 %v138
  %183 = vmatprep.subr.bf16.mxu0 0
  %184 = vmatpush1.bf16.msra.mxu0 %v137
  %185 = vmatprep.subr.bf16.mxu0 0
  %186 = vmatpush1.bf16.msra.mxu0 %v136
  %187 = vmatprep.subr.bf16.mxu0 0
  %188 = vmatpush1.bf16.msra.mxu0 %v135
  %189 = vmatprep.subr.bf16.mxu0 0
  %190 = vmatpush2.bf16.msra.mxu0 0
  %191 = vmatprep.subr.bf16.mxu0 0
  %192 = vmatpush2.bf16.msra.mxu0 0
  %193 = vmatprep.subr.bf16.mxu0 0
  %194 = vmatpush2.bf16.msra.mxu0 0
  %195 = vmatprep.subr.bf16.mxu0 0
  %196 = vmatpush2.bf16.msra.mxu0 0
  %197 = vmatprep.subr.bf16.mxu0 0
  %198 = vmatpush2.bf16.msra.mxu0 0
  %199 = vmatprep.subr.bf16.mxu0 0
  %200 = vmatpush2.bf16.msra.mxu0 0
  %201 = vmatprep.subr.bf16.mxu0 0
  %202 = vmatpush2.bf16.msra.mxu0 0
  %203 = vmatprep.subr.bf16.mxu0 0
  %204 = vmatpush2.bf16.msra.mxu0 0
  %205 = vmatprep.mubr.bf16.mxu0 0
  %206 = vmatmul.mubr.bf16.gmra.mxu0 %v146
  %v207 = vpop.f32.mrf.mxu0
  %v208 = vadd.f32 0.0, %v207
  %v209 = vpop.f32.mrf.mxu0
  %v210 = vpop.f32.mrf.mxu0
  %v211 = vadd.f32 0.0, %v210
  %v212 = vpop.f32.mrf.mxu0
  %213 = vmatprep.mubr.bf16.mxu0 0
  %214 = vmatmul.mubr.bf16.gmra.mxu0 %v149
  %v215 = vpop.f32.mrf.mxu0
  %v216 = vadd.f32 0.0, %v215
  %v217 = vpop.f32.mrf.mxu0
  %v218 = vpop.f32.mrf.mxu0
  %v219 = vadd.f32 0.0, %v218
  %v220 = vpop.f32.mrf.mxu0
  %221 = vmatprep.mubr.bf16.mxu0 0
  %222 = vmatmul.mubr.bf16.gmra.mxu0 %v152
  %v223 = vpop.f32.mrf.mxu0
  %v224 = vadd.f32 0.0, %v223
  %v225 = vpop.f32.mrf.mxu0
  %v226 = vpop.f32.mrf.mxu0
  %v227 = vadd.f32 0.0, %v226
  %v228 = vpop.f32.mrf.mxu0
  %229 = vmatprep.mubr.bf16.mxu0 0
  %230 = vmatmul.mubr.bf16.gmra.mxu0 %v155
  %v231 = vpop.f32.mrf.mxu0
  %v232 = vadd.f32 0.0, %v231
  %v233 = vpop.f32.mrf.mxu0
  %v234 = vpop.f32.mrf.mxu0
  %v235 = vadd.f32 0.0, %v234
  %v236 = vpop.f32.mrf.mxu0
  %237 = vmatprep.mubr.bf16.mxu0 0
  %238 = vmatmul.mubr.bf16.gmra.mxu0 %v158
  %v239 = vpop.f32.mrf.mxu0
  %v240 = vadd.f32 0.0, %v239
  %v241 = vpop.f32.mrf.mxu0
  %v242 = vpop.f32.mrf.mxu0
  %v243 = vadd.f32 0.0, %v242
  %v244 = vpop.f32.mrf.mxu0
  %245 = vmatprep.mubr.bf16.mxu0 0
  %246 = vmatmul.mubr.bf16.gmra.mxu0 %v161
  %v247 = vpop.f32.mrf.mxu0
  %v248 = vadd.f32 0.0, %v247
  %v249 = vpop.f32.mrf.mxu0
  %v250 = vpop.f32.mrf.mxu0
  %v251 = vadd.f32 0.0, %v250
  %v252 = vpop.f32.mrf.mxu0
  %253 = vmatprep.mubr.bf16.mxu0 0
  %254 = vmatmul.mubr.bf16.gmra.mxu0 %v164
  %v255 = vpop.f32.mrf.mxu0
  %v256 = vadd.f32 0.0, %v255
  %v257 = vpop.f32.mrf.mxu0
  %v258 = vpop.f32.mrf.mxu0
  %v259 = vadd.f32 0.0, %v258
  %v260 = vpop.f32.mrf.mxu0
  %261 = vmatprep.mubr.bf16.mxu0 0
  %262 = vmatmul.mubr.bf16.gmra.mxu0 %v167
  %v263 = vpop.f32.mrf.mxu0
  %v264 = vadd.f32 0.0, %v263
  %v265 = vpop.f32.mrf.mxu0
  %v266 = vpop.f32.mrf.mxu0
  %v267 = vadd.f32 0.0, %v266
  %v268 = vpop.f32.mrf.mxu0
  %269 = vdwg.mxu0
  %v270 = vadd.f32 %v36, %v208
  %v271 = vadd.f32 %v37, %v211
  %v272 = vadd.f32 %v38, %v216
  %v273 = vadd.f32 %v39, %v219
  %v274 = vadd.f32 %v40, %v224
  %v275 = vadd.f32 %v41, %v227
  %v276 = vadd.f32 %v42, %v232
  %v277 = vadd.f32 %v43, %v235
  %v278 = vadd.f32 %v44, %v240
  %v279 = vadd.f32 %v45, %v243
  %v280 = vadd.f32 %v46, %v248
  %v281 = vadd.f32 %v47, %v251
  %v282 = vadd.f32 %v48, %v256
  %v283 = vadd.f32 %v49, %v259
  %v284 = vadd.f32 %v50, %v264
  %v285 = vadd.f32 %v51, %v267
  %vm286 = vcmask 64512
  %287 = vst.msk [vmem:[#allocation2] sm:$0xff] %vm286, %v270
  %288 = vst.msk [vmem:[#allocation2 + $0x8] sm:$0xff] %vm286, %v271
  %289 = vst.msk [vmem:[#allocation2 + $0x10] sm:$0xff] %vm286, %v272
  %290 = vst.msk [vmem:[#allocation2 + $0x18] sm:$0xff] %vm286, %v273
  %291 = vst.msk [vmem:[#allocation2 + $0x20] sm:$0xff] %vm286, %v274
  %292 = vst.msk [vmem:[#allocation2 + $0x28] sm:$0xff] %vm286, %v275
  %293 = vst.msk [vmem:[#allocation2 + $0x30] sm:$0xff] %vm286, %v276
  %294 = vst.msk [vmem:[#allocation2 + $0x38] sm:$0xff] %vm286, %v277
  %295 = vst.msk [vmem:[#allocation2 + $0x40] sm:$0xff] %vm286, %v278
  %296 = vst.msk [vmem:[#allocation2 + $0x48] sm:$0xff] %vm286, %v279
  %297 = vst.msk [vmem:[#allocation2 + $0x50] sm:$0xff] %vm286, %v280
  %298 = vst.msk [vmem:[#allocation2 + $0x58] sm:$0xff] %vm286, %v281
  %299 = vst.msk [vmem:[#allocation2 + $0x60] sm:$0xff] %vm286, %v282
  %300 = vst.msk [vmem:[#allocation2 + $0x68] sm:$0xff] %vm286, %v283
  %301 = vst.msk [vmem:[#allocation2 + $0x70] sm:$0xff] %vm286, %v284
  %302 = vst.msk [vmem:[#allocation2 + $0x78] sm:$0xff] %vm286, %v285
  // Predicated region
  $region18: #{_lambda_.16} parent=0 // pred_check
    %p303 = pneg %p15
  $region19: #{_lambda_.16} parent=0 // pred_check_branch
    %305 = sbr.rel (%p303) target = $region21
  $region20: #{_lambda_.16} parent=0 // pred_region
    %v306 = vld [vmem:[#allocation2] sm:$0xff]
    %v307 = vld [vmem:[#allocation2 + $0x8] sm:$0xff]
    %v308 = vld [vmem:[#allocation2 + $0x10] sm:$0xff]
    %v309 = vld [vmem:[#allocation2 + $0x18] sm:$0xff]
    %v310 = vld [vmem:[#allocation2 + $0x20] sm:$0xff]
    %v311 = vld [vmem:[#allocation2 + $0x28] sm:$0xff]
    %v312 = vld [vmem:[#allocation2 + $0x30] sm:$0xff]
    %v313 = vld [vmem:[#allocation2 + $0x38] sm:$0xff]
    %v314 = vld [vmem:[#allocation2 + $0x40] sm:$0xff]
    %v315 = vld [vmem:[#allocation2 + $0x48] sm:$0xff]
    %v316 = vld [vmem:[#allocation2 + $0x50] sm:$0xff]
    %v317 = vld [vmem:[#allocation2 + $0x58] sm:$0xff]
    %v318 = vld [vmem:[#allocation2 + $0x60] sm:$0xff]
    %v319 = vld [vmem:[#allocation2 + $0x68] sm:$0xff]
    %v320 = vld [vmem:[#allocation2 + $0x70] sm:$0xff]
    %v321 = vld [vmem:[#allocation2 + $0x78] sm:$0xff]
    %v322 = vld [vmem:[%s2] sm:$0x1]
    %v324 = vlaneseq
    %v325 = vshrl.u32 %v324, 7
    %v326 = vsub.s32 0, %v325
    %v327 = vrot.slane %v322, %v326
    %v329 = vadd.f32 %v306, %v327
    %v330 = vadd.f32 %v307, %v327
    %v331 = vadd.f32 %v308, %v327
    %v332 = vadd.f32 %v309, %v327
    %v333 = vadd.f32 %v310, %v327
    %v334 = vadd.f32 %v311, %v327
    %v335 = vadd.f32 %v312, %v327
    %v336 = vadd.f32 %v313, %v327
    %v337 = vadd.f32 %v314, %v327
    %v338 = vadd.f32 %v315, %v327
    %v339 = vadd.f32 %v316, %v327
    %v340 = vadd.f32 %v317, %v327
    %v341 = vadd.f32 %v318, %v327
    %v342 = vadd.f32 %v319, %v327
    %v343 = vadd.f32 %v320, %v327
    %v344 = vadd.f32 %v321, %v327
    %v345 = vmax.f32 %v329, 0.0
    %v346 = vmax.f32 %v330, 0.0
    %v347 = vmax.f32 %v331, 0.0
    %v348 = vmax.f32 %v332, 0.0
    %v349 = vmax.f32 %v333, 0.0
    %v350 = vmax.f32 %v334, 0.0
    %v351 = vmax.f32 %v335, 0.0
    %v352 = vmax.f32 %v336, 0.0
    %v353 = vmax.f32 %v337, 0.0
    %v354 = vmax.f32 %v338, 0.0
    %v355 = vmax.f32 %v339, 0.0
    %v356 = vmax.f32 %v340, 0.0
    %v357 = vmax.f32 %v341, 0.0
    %v358 = vmax.f32 %v342, 0.0
    %v359 = vmax.f32 %v343, 0.0
    %v360 = vmax.f32 %v344, 0.0
    %361 = vst.msk [vmem:[%s3] sm:$0xff] %vm286, %v345
    %362 = vst.msk [vmem:[%s3 + $0x8] sm:$0xff] %vm286, %v346
    %363 = vst.msk [vmem:[%s3 + $0x10] sm:$0xff] %vm286, %v347
    %364 = vst.msk [vmem:[%s3 + $0x18] sm:$0xff] %vm286, %v348
    %365 = vst.msk [vmem:[%s3 + $0x20] sm:$0xff] %vm286, %v349
    %366 = vst.msk [vmem:[%s3 + $0x28] sm:$0xff] %vm286, %v350
    %367 = vst.msk [vmem:[%s3 + $0x30] sm:$0xff] %vm286, %v351
    %368 = vst.msk [vmem:[%s3 + $0x38] sm:$0xff] %vm286, %v352
    %369 = vst.msk [vmem:[%s3 + $0x40] sm:$0xff] %vm286, %v353
    %370 = vst.msk [vmem:[%s3 + $0x48] sm:$0xff] %vm286, %v354
    %371 = vst.msk [vmem:[%s3 + $0x50] sm:$0xff] %vm286, %v355
    %372 = vst.msk [vmem:[%s3 + $0x58] sm:$0xff] %vm286, %v356
    %373 = vst.msk [vmem:[%s3 + $0x60] sm:$0xff] %vm286, %v357
    %374 = vst.msk [vmem:[%s3 + $0x68] sm:$0xff] %vm286, %v358
    %375 = vst.msk [vmem:[%s3 + $0x70] sm:$0xff] %vm286, %v359
    %376 = vst.msk [vmem:[%s3 + $0x78] sm:$0xff] %vm286, %v360
  $region21: #{_lambda_.16} parent=0 // pred_fallthru
    _
  // Predicated region
  $region22: #{_lambda_.16} parent=0 // pred_check
    _
  $region23: #{_lambda_.16} parent=0 // pred_check_branch
    %378 = sbr.rel (0) target = $region25
  $region24: #{_lambda_.16} parent=0 // pred_region
    _
  $region25: #{_lambda_.16} parent=0 // pred_fallthru
    _
  // Predicated region
  $region26: #{_lambda_.16} parent=0 // pred_check
    _
  $region27: #{_lambda_.16} parent=0 // pred_check_branch
    %380 = sbr.rel (0) target = $region29
  $region28: #{_lambda_.16} parent=0 // pred_region
    _
  $region29: #{_lambda_.16} parent=0 // pred_fallthru
    _

// kernel: _lambda_.17
$region0: #{_lambda_.17}
  #allocation0 [shape = 'u32[]', space=smem, size = 0x4, offset = 0x4, fixed_abs, tag = 'smem constant byte address 0x4 - core index']
  #allocation1 [shape = 'u32[144,128]{1,0:T(1,128)}', space=vmem, size = 0x12000, scoped, tag = 'internal scratch']
  #allocation2 [shape = 'f32[32,16]{1,0:T(8,128)}', space=vmem, size = 0x4000, scoped, tag = 'scratch operand']
  %s0 = inlined_call_operand.vmem [shape: bf16[32,72], index: 0, kind: input, shape index: {}]
  %s1 = inlined_call_operand.vmem [shape: bf16[72,16], index: 1, kind: input, shape index: {}]
  %s2 = inlined_call_operand.vmem [shape: f32[1,16], index: 2, kind: input, shape index: {}]
  %s3 = inlined_call_operand.vmem [shape: f32[32,16], index: 3, kind: output, shape index: {}]
  %s4 = sld [smem:[#allocation0]]
  $region30: #{_lambda_.17} parent=0
    _
  %s6 = ssub.s32 1, %s4
  %s7 = scalar_select 0, %s6, %s4
  // Predicated region
  $region2: #{_lambda_.17} parent=0 // pred_check
    _
  $region3: #{_lambda_.17} parent=0 // pred_check_branch
    %9 = sbr.rel (0) target = $region5
  $region4: #{_lambda_.17} parent=0 // pred_region
    _
  $region5: #{_lambda_.17} parent=0 // pred_fallthru
    _
  // Predicated region
  $region6: #{_lambda_.17} parent=0 // pred_check
    _
  $region7: #{_lambda_.17} parent=0 // pred_check_branch
    %11 = sbr.rel (0) target = $region9
  $region8: #{_lambda_.17} parent=0 // pred_region
    _
  $region9: #{_lambda_.17} parent=0 // pred_fallthru
    _
  // Predicated region
  $region10: #{_lambda_.17} parent=0 // pred_check
    _
  $region11: #{_lambda_.17} parent=0 // pred_check_branch
    %13 = sbr.rel (0) target = $region13
  $region12: #{_lambda_.17} parent=0 // pred_region
    _
  $region13: #{_lambda_.17} parent=0 // pred_fallthru
    _
  %p15 = scmp.eq.s32.totalorder 0, 0
  // Predicated region
  $region14: #{_lambda_.17} parent=0 // pred_check
    %p16 = pneg %p15
  $region15: #{_lambda_.17} parent=0 // pred_check_branch
    %18 = sbr.rel (%p16) target = $region17
  $region16: #{_lambda_.17} parent=0 // pred_region
    %vm19 = vcmask 130048
    %20 = vst.msk [vmem:[#allocation2] sm:$0xff] %vm19, 0.0
    %21 = vst.msk [vmem:[#allocation2 + $0x8] sm:$0xff] %vm19, 0.0
    %22 = vst.msk [vmem:[#allocation2 + $0x10] sm:$0xff] %vm19, 0.0
    %23 = vst.msk [vmem:[#allocation2 + $0x18] sm:$0xff] %vm19, 0.0
  $region17: #{_lambda_.17} parent=0 // pred_fallthru
    _
  %v24 = vld [vmem:[#allocation2] sm:$0xff]
  %v25 = vld [vmem:[#allocation2 + $0x8] sm:$0xff]
  %v26 = vld [vmem:[#allocation2 + $0x10] sm:$0xff]
  %v27 = vld [vmem:[#allocation2 + $0x18] sm:$0xff]
  %v28 = vld [vmem:[%s0] sm:$0xf]
  %v29 = vld [vmem:[%s0 + $0x4] sm:$0xf]
  %v30 = vld [vmem:[%s0 + $0x8] sm:$0xf]
  %v31 = vld [vmem:[%s0 + $0xc] sm:$0xf]
  %v32 = vld [vmem:[%s1] sm:$0xf]
  %v33 = vld [vmem:[%s1 + $0x4] sm:$0xf]
  %v34 = vld [vmem:[%s1 + $0x8] sm:$0xf]
  %v35 = vld [vmem:[%s1 + $0xc] sm:$0xf]
  %v36 = vld [vmem:[%s1 + $0x10] sm:$0xf]
  %v37 = vld [vmem:[%s1 + $0x14] sm:$0xf]
  %v38 = vld [vmem:[%s1 + $0x18] sm:$0xf]
  %v39 = vld [vmem:[%s1 + $0x1c] sm:$0xf]
  %v40 = vld [vmem:[%s1 + $0x20] sm:$0xf]
  %v45 = vunpack.c.l.b16 %v28
  %v46 = vunpack.c.l.b16 %v29
  %v47 = vunpack.c.l.b16 %v30
  %v48 = vunpack.c.l.b16 %v31
  %v49 = vpack.c.b16 %v46, %v45
  %v50 = vpack.c.b16 %v48, %v47
  %v60 = vunpack.c.l.b16 %v32
  %v61 = vunpack.c.l.b16 %v33
  %v62 = vunpack.c.l.b16 %v34
  %v63 = vunpack.c.l.b16 %v35
  %v64 = vunpack.c.l.b16 %v36
  %v65 = vunpack.c.l.b16 %v37
  %v66 = vunpack.c.l.b16 %v38
  %v67 = vunpack.c.l.b16 %v39
  %v68 = vunpack.c.l.b16 %v40
  %v69 = vpack.c.b16 %v61, %v60
  %v70 = vpack.c.b16 %v63, %v62
  %v71 = vpack.c.b16 %v65, %v64
  %v72 = vpack.c.b16 %v67, %v66
  %v73 = vpack.c.b16 %v68, %v68
  %vm78 = vcmask 588800
  %v80 = vsel %vm78, %v49, 0
  %v83 = vsel %vm78, %v50, 0
  %vm85 = vcmask 1043456
  %v87 = vsel %vm85, %v73, 0
  %89 = vmatprep.subr.bf16.mxu0 0
  %90 = vmatpush1.bf16.msra.mxu0 0
  %91 = vmatprep.subr.bf16.mxu0 0
  %92 = vmatpush1.bf16.msra.mxu0 0
  %93 = vmatprep.subr.bf16.mxu0 0
  %94 = vmatpush1.bf16.msra.mxu0 0
  %95 = vmatprep.subr.bf16.mxu0 0
  %96 = vmatpush1.bf16.msra.mxu0 %v87
  %97 = vmatprep.subr.bf16.mxu0 0
  %98 = vmatpush1.bf16.msra.mxu0 %v72
  %99 = vmatprep.subr.bf16.mxu0 0
  %100 = vmatpush1.bf16.msra.mxu0 %v71
  %101 = vmatprep.subr.bf16.mxu0 0
  %102 = vmatpush1.bf16.msra.mxu0 %v70
  %103 = vmatprep.subr.bf16.mxu0 0
  %104 = vmatpush1.bf16.msra.mxu0 %v69
  %105 = vmatprep.subr.bf16.mxu0 0
  %106 = vmatpush2.bf16.msra.mxu0 0
  %107 = vmatprep.subr.bf16.mxu0 0
  %108 = vmatpush2.bf16.msra.mxu0 0
  %109 = vmatprep.subr.bf16.mxu0 0
  %110 = vmatpush2.bf16.msra.mxu0 0
  %111 = vmatprep.subr.bf16.mxu0 0
  %112 = vmatpush2.bf16.msra.mxu0 0
  %113 = vmatprep.subr.bf16.mxu0 0
  %114 = vmatpush2.bf16.msra.mxu0 0
  %115 = vmatprep.subr.bf16.mxu0 0
  %116 = vmatpush2.bf16.msra.mxu0 0
  %117 = vmatprep.subr.bf16.mxu0 0
  %118 = vmatpush2.bf16.msra.mxu0 0
  %119 = vmatprep.subr.bf16.mxu0 0
  %120 = vmatpush2.bf16.msra.mxu0 0
  %121 = vmatprep.mubr.bf16.mxu0 0
  %122 = vmatmul.mubr.bf16.gmra.mxu0 %v80
  %v123 = vpop.f32.mrf.mxu0
  %v124 = vadd.f32 0.0, %v123
  %v125 = vpop.f32.mrf.mxu0
  %v126 = vpop.f32.mrf.mxu0
  %v127 = vadd.f32 0.0, %v126
  %v128 = vpop.f32.mrf.mxu0
  %129 = vmatprep.mubr.bf16.mxu0 0
  %130 = vmatmul.mubr.bf16.gmra.mxu0 %v83
  %v131 = vpop.f32.mrf.mxu0
  %v132 = vadd.f32 0.0, %v131
  %v133 = vpop.f32.mrf.mxu0
  %v134 = vpop.f32.mrf.mxu0
  %v135 = vadd.f32 0.0, %v134
  %v136 = vpop.f32.mrf.mxu0
  %137 = vdwg.mxu0
  %v138 = vadd.f32 %v24, %v124
  %v139 = vadd.f32 %v25, %v127
  %v140 = vadd.f32 %v26, %v132
  %v141 = vadd.f32 %v27, %v135
  %vm142 = vcmask 130048
  %143 = vst.msk [vmem:[#allocation2] sm:$0xff] %vm142, %v138
  %144 = vst.msk [vmem:[#allocation2 + $0x8] sm:$0xff] %vm142, %v139
  %145 = vst.msk [vmem:[#allocation2 + $0x10] sm:$0xff] %vm142, %v140
  %146 = vst.msk [vmem:[#allocation2 + $0x18] sm:$0xff] %vm142, %v141
  // Predicated region
  $region18: #{_lambda_.17} parent=0 // pred_check
    %p147 = pneg %p15
  $region19: #{_lambda_.17} parent=0 // pred_check_branch
    %149 = sbr.rel (%p147) target = $region21
  $region20: #{_lambda_.17} parent=0 // pred_region
    %v150 = vld [vmem:[#allocation2] sm:$0xff]
    %v151 = vld [vmem:[#allocation2 + $0x8] sm:$0xff]
    %v152 = vld [vmem:[#allocation2 + $0x10] sm:$0xff]
    %v153 = vld [vmem:[#allocation2 + $0x18] sm:$0xff]
    %v154 = vld [vmem:[%s2] sm:$0x1]
    %v156 = vlaneseq
    %v157 = vshrl.u32 %v156, 7
    %v158 = vsub.s32 0, %v157
    %v159 = vrot.slane %v154, %v158
    %v161 = vadd.f32 %v150, %v159
    %v162 = vadd.f32 %v151, %v159
    %v163 = vadd.f32 %v152, %v159
    %v164 = vadd.f32 %v153, %v159
    %v165 = vmax.f32 %v161, 0.0
    %v166 = vmax.f32 %v162, 0.0
    %v167 = vmax.f32 %v163, 0.0
    %v168 = vmax.f32 %v164, 0.0
    %169 = vst.msk [vmem:[%s3] sm:$0xff] %vm142, %v165
    %170 = vst.msk [vmem:[%s3 + $0x8] sm:$0xff] %vm142, %v166
    %171 = vst.msk [vmem:[%s3 + $0x10] sm:$0xff] %vm142, %v167
    %172 = vst.msk [vmem:[%s3 + $0x18] sm:$0xff] %vm142, %v168
  $region21: #{_lambda_.17} parent=0 // pred_fallthru
    _
  // Predicated region
  $region22: #{_lambda_.17} parent=0 // pred_check
    _
  $region23: #{_lambda_.17} parent=0 // pred_check_branch
    %174 = sbr.rel (0) target = $region25
  $region24: #{_lambda_.17} parent=0 // pred_region
    _
  $region25: #{_lambda_.17} parent=0 // pred_fallthru
    _
  // Predicated region
  $region26: #{_lambda_.17} parent=0 // pred_check
    _
  $region27: #{_lambda_.17} parent=0 // pred_check_branch
    %176 = sbr.rel (0) target = $region29
  $region28: #{_lambda_.17} parent=0 // pred_region
    _
  $region29: #{_lambda_.17} parent=0 // pred_fallthru
    _

// kernel: _lambda_.18
$region0: #{_lambda_.18}
  #allocation0 [shape = 'u32[]', space=smem, size = 0x4, offset = 0x4, fixed_abs, tag = 'smem constant byte address 0x4 - core index']
  #allocation1 [shape = 'u32[144,128]{1,0:T(1,128)}', space=vmem, size = 0x12000, scoped, tag = 'internal scratch']
  #allocation2 [shape = 'f32[8,32]{1,0:T(8,128)}', space=vmem, size = 0x1000, scoped, tag = 'scratch operand']
  %s0 = inlined_call_operand.vmem [shape: bf16[8,144], index: 0, kind: input, shape index: {}]
  %s1 = inlined_call_operand.vmem [shape: bf16[144,32], index: 1, kind: input, shape index: {}]
  %s2 = inlined_call_operand.vmem [shape: f32[1,32], index: 2, kind: input, shape index: {}]
  %s3 = inlined_call_operand.vmem [shape: f32[8,32], index: 3, kind: output, shape index: {}]
  %s4 = sld [smem:[#allocation0]]
  $region30: #{_lambda_.18} parent=0
    _
  %s6 = ssub.s32 1, %s4
  %s7 = scalar_select 0, %s6, %s4
  // Predicated region
  $region2: #{_lambda_.18} parent=0 // pred_check
    _
  $region3: #{_lambda_.18} parent=0 // pred_check_branch
    %9 = sbr.rel (0) target = $region5
  $region4: #{_lambda_.18} parent=0 // pred_region
    _
  $region5: #{_lambda_.18} parent=0 // pred_fallthru
    _
  // Predicated region
  $region6: #{_lambda_.18} parent=0 // pred_check
    _
  $region7: #{_lambda_.18} parent=0 // pred_check_branch
    %11 = sbr.rel (0) target = $region9
  $region8: #{_lambda_.18} parent=0 // pred_region
    _
  $region9: #{_lambda_.18} parent=0 // pred_fallthru
    _
  // Predicated region
  $region10: #{_lambda_.18} parent=0 // pred_check
    _
  $region11: #{_lambda_.18} parent=0 // pred_check_branch
    %13 = sbr.rel (0) target = $region13
  $region12: #{_lambda_.18} parent=0 // pred_region
    _
  $region13: #{_lambda_.18} parent=0 // pred_fallthru
    _
  %p15 = scmp.eq.s32.totalorder 0, 0
  // Predicated region
  $region14: #{_lambda_.18} parent=0 // pred_check
    %p16 = pneg %p15
  $region15: #{_lambda_.18} parent=0 // pred_check_branch
    %18 = sbr.rel (%p16) target = $region17
  $region16: #{_lambda_.18} parent=0 // pred_region
    %vm19 = vcmask 261120
    %20 = vst.msk [vmem:[#allocation2] sm:$0xff] %vm19, 0.0
  $region17: #{_lambda_.18} parent=0 // pred_fallthru
    _
  %v21 = vld [vmem:[#allocation2] sm:$0xff]
  %v22 = vld [vmem:[%s0] sm:$0xff]
  %v23 = vld [vmem:[%s1] sm:$0xf]
  %v24 = vld [vmem:[%s1 + $0x4] sm:$0xf]
  %v25 = vld [vmem:[%s1 + $0x8] sm:$0xf]
  %v26 = vld [vmem:[%s1 + $0xc] sm:$0xf]
  %v27 = vld [vmem:[%s1 + $0x10] sm:$0xf]
  %v28 = vld [vmem:[%s1 + $0x14] sm:$0xf]
  %v29 = vld [vmem:[%s1 + $0x18] sm:$0xf]
  %v30 = vld [vmem:[%s1 + $0x1c] sm:$0xf]
  %v31 = vld [vmem:[%s1 + $0x20] sm:$0xf]
  %v32 = vld [vmem:[%s1 + $0x24] sm:$0xf]
  %v33 = vld [vmem:[%s1 + $0x28] sm:$0xf]
  %v34 = vld [vmem:[%s1 + $0x2c] sm:$0xf]
  %v35 = vld [vmem:[%s1 + $0x30] sm:$0xf]
  %v36 = vld [vmem:[%s1 + $0x34] sm:$0xf]
  %v37 = vld [vmem:[%s1 + $0x38] sm:$0xf]
  %v38 = vld [vmem:[%s1 + $0x3c] sm:$0xf]
  %v39 = vld [vmem:[%s1 + $0x40] sm:$0xf]
  %v40 = vld [vmem:[%s1 + $0x44] sm:$0xf]
  %v42 = vunpack.c.l.b16 %v22
  %v43 = vunpack.c.h.b16 %v22
  %v44 = vpack.c.b16 %v42, %v42
  %v45 = vpack.c.b16 %v43, %v43
  %v65 = vunpack.c.l.b16 %v23
  %v66 = vunpack.c.l.b16 %v24
  %v67 = vunpack.c.l.b16 %v25
  %v68 = vunpack.c.l.b16 %v26
  %v69 = vunpack.c.l.b16 %v27
  %v70 = vunpack.c.l.b16 %v28
  %v71 = vunpack.c.l.b16 %v29
  %v72 = vunpack.c.l.b16 %v30
  %v73 = vunpack.c.l.b16 %v31
  %v74 = vunpack.c.l.b16 %v32
  %v75 = vunpack.c.l.b16 %v33
  %v76 = vunpack.c.l.b16 %v34
  %v77 = vunpack.c.l.b16 %v35
  %v78 = vunpack.c.l.b16 %v36
  %v79 = vunpack.c.l.b16 %v37
  %v80 = vunpack.c.l.b16 %v38
  %v81 = vunpack.c.l.b16 %v39
  %v82 = vunpack.c.l.b16 %v40
  %v83 = vpack.c.b16 %v66, %v65
  %v84 = vpack.c.b16 %v68, %v67
  %v85 = vpack.c.b16 %v70, %v69
  %v86 = vpack.c.b16 %v72, %v71
  %v87 = vpack.c.b16 %v74, %v73
  %v88 = vpack.c.b16 %v76, %v75
  %v89 = vpack.c.b16 %v78, %v77
  %v90 = vpack.c.b16 %v80, %v79
  %v91 = vpack.c.b16 %v82, %v81
  %vm101 = vcmask 130048
  %v103 = vsel %vm101, %v45, 0
  %105 = vmatprep.subr.bf16.mxu0 0
  %106 = vmatpush1.bf16.msra.mxu0 %v90
  %107 = vmatprep.subr.bf16.mxu0 0
  %108 = vmatpush1.bf16.msra.mxu0 %v89
  %109 = vmatprep.subr.bf16.mxu0 0
  %110 = vmatpush1.bf16.msra.mxu0 %v88
  %111 = vmatprep.subr.bf16.mxu0 0
  %112 = vmatpush1.bf16.msra.mxu0 %v87
  %113 = vmatprep.subr.bf16.mxu0 0
  %114 = vmatpush1.bf16.msra.mxu0 %v86
  %115 = vmatprep.subr.bf16.mxu0 0
  %116 = vmatpush1.bf16.msra.mxu0 %v85
  %117 = vmatprep.subr.bf16.mxu0 0
  %118 = vmatpush1.bf16.msra.mxu0 %v84
  %119 = vmatprep.subr.bf16.mxu0 0
  %120 = vmatpush1.bf16.msra.mxu0 %v83
  %121 = vmatprep.subr.bf16.mxu0 0
  %122 = vmatpush2.bf16.msra.mxu0 0
  %123 = vmatprep.subr.bf16.mxu0 0
  %124 = vmatpush2.bf16.msra.mxu0 0
  %125 = vmatprep.subr.bf16.mxu0 0
  %126 = vmatpush2.bf16.msra.mxu0 0
  %127 = vmatprep.subr.bf16.mxu0 0
  %128 = vmatpush2.bf16.msra.mxu0 0
  %129 = vmatprep.subr.bf16.mxu0 0
  %130 = vmatpush2.bf16.msra.mxu0 0
  %131 = vmatprep.subr.bf16.mxu0 0
  %132 = vmatpush2.bf16.msra.mxu0 0
  %133 = vmatprep.subr.bf16.mxu0 0
  %134 = vmatpush2.bf16.msra.mxu0 0
  %135 = vmatprep.subr.bf16.mxu0 0
  %136 = vmatpush2.bf16.msra.mxu0 %v91
  %137 = vmatprep.mubr.bf16.mxu0 %v103
  %138 = vmatmul.mubr.bf16.gmra.mxu0 %v44
  %v139 = vpop.f32.mrf.mxu0
  %v140 = vadd.f32 0.0, %v139
  %v141 = vpop.f32.mrf.mxu0
  %v142 = vpop.f32.mrf.mxu0
  %v143 = vpop.f32.mrf.mxu0
  %144 = vdwg.mxu0
  %v145 = vadd.f32 %v21, %v140
  %vm146 = vcmask 261120
  %147 = vst.msk [vmem:[#allocation2] sm:$0xff] %vm146, %v145
  // Predicated region
  $region18: #{_lambda_.18} parent=0 // pred_check
    %p148 = pneg %p15
  $region19: #{_lambda_.18} parent=0 // pred_check_branch
    %150 = sbr.rel (%p148) target = $region21
  $region20: #{_lambda_.18} parent=0 // pred_region
    %v151 = vld [vmem:[#allocation2] sm:$0xff]
    %v152 = vld [vmem:[%s2] sm:$0x1]
    %v154 = vlaneseq
    %v155 = vshrl.u32 %v154, 7
    %v156 = vsub.s32 0, %v155
    %v157 = vrot.slane %v152, %v156
    %v159 = vadd.f32 %v151, %v157
    %v160 = vmax.f32 %v159, 0.0
    %161 = vst.msk [vmem:[%s3] sm:$0xff] %vm146, %v160
  $region21: #{_lambda_.18} parent=0 // pred_fallthru
    _
  // Predicated region
  $region22: #{_lambda_.18} parent=0 // pred_check
    _
  $region23: #{_lambda_.18} parent=0 // pred_check_branch
    %163 = sbr.rel (0) target = $region25
  $region24: #{_lambda_.18} parent=0 // pred_region
    _
  $region25: #{_lambda_.18} parent=0 // pred_fallthru
    _
  // Predicated region
  $region26: #{_lambda_.18} parent=0 // pred_check
    _
  $region27: #{_lambda_.18} parent=0 // pred_check_branch
    %165 = sbr.rel (0) target = $region29
  $region28: #{_lambda_.18} parent=0 // pred_region
    _
  $region29: #{_lambda_.18} parent=0 // pred_fallthru
    _

// kernel: _lambda_.23
$region0: #{_lambda_.23}
  #allocation0 [shape = 'u32[]', space=smem, size = 0x4, offset = 0x4, fixed_abs, tag = 'smem constant byte address 0x4 - core index']
  #allocation1 [shape = 'u32[144,128]{1,0:T(1,128)}', space=vmem, size = 0x12000, scoped, tag = 'internal scratch']
  #allocation2 [shape = 'f32[2,16]{1,0:T(2,128)}', space=vmem, size = 0x400, scoped, tag = 'scratch operand']
  %s0 = inlined_call_operand.vmem [shape: bf16[2,64], index: 0, kind: input, shape index: {}]
  %s1 = inlined_call_operand.vmem [shape: bf16[64,16], index: 1, kind: input, shape index: {}]
  %s2 = inlined_call_operand.vmem [shape: f32[1,16], index: 2, kind: input, shape index: {}]
  %s3 = inlined_call_operand.vmem [shape: f32[2,16], index: 3, kind: output, shape index: {}]
  %s4 = sld [smem:[#allocation0]]
  $region30: #{_lambda_.23} parent=0
    _
  %s6 = ssub.s32 1, %s4
  %s7 = scalar_select 0, %s6, %s4
  // Predicated region
  $region2: #{_lambda_.23} parent=0 // pred_check
    _
  $region3: #{_lambda_.23} parent=0 // pred_check_branch
    %9 = sbr.rel (0) target = $region5
  $region4: #{_lambda_.23} parent=0 // pred_region
    _
  $region5: #{_lambda_.23} parent=0 // pred_fallthru
    _
  // Predicated region
  $region6: #{_lambda_.23} parent=0 // pred_check
    _
  $region7: #{_lambda_.23} parent=0 // pred_check_branch
    %11 = sbr.rel (0) target = $region9
  $region8: #{_lambda_.23} parent=0 // pred_region
    _
  $region9: #{_lambda_.23} parent=0 // pred_fallthru
    _
  // Predicated region
  $region10: #{_lambda_.23} parent=0 // pred_check
    _
  $region11: #{_lambda_.23} parent=0 // pred_check_branch
    %13 = sbr.rel (0) target = $region13
  $region12: #{_lambda_.23} parent=0 // pred_region
    _
  $region13: #{_lambda_.23} parent=0 // pred_fallthru
    _
  %p15 = scmp.eq.s32.totalorder 0, 0
  // Predicated region
  $region14: #{_lambda_.23} parent=0 // pred_check
    %p16 = pneg %p15
  $region15: #{_lambda_.23} parent=0 // pred_check_branch
    %18 = sbr.rel (%p16) target = $region17
  $region16: #{_lambda_.23} parent=0 // pred_region
    %vm19 = vcmask 123904
    %20 = vst.msk [vmem:[#allocation2] sm:$0x3] %vm19, 0.0
  $region17: #{_lambda_.23} parent=0 // pred_fallthru
    _
  %v21 = vld [vmem:[#allocation2] sm:$0x3]
  %v22 = vld [vmem:[%s0] sm:$0x1]
  %v23 = vld [vmem:[%s1] sm:$0xf]
  %v24 = vld [vmem:[%s1 + $0x4] sm:$0xf]
  %v25 = vld [vmem:[%s1 + $0x8] sm:$0xf]
  %v26 = vld [vmem:[%s1 + $0xc] sm:$0xf]
  %v27 = vld [vmem:[%s1 + $0x10] sm:$0xf]
  %v28 = vld [vmem:[%s1 + $0x14] sm:$0xf]
  %v29 = vld [vmem:[%s1 + $0x18] sm:$0xf]
  %v30 = vld [vmem:[%s1 + $0x1c] sm:$0xf]
  %v39 = vunpack.c.l.b16 %v23
  %v40 = vunpack.c.l.b16 %v24
  %v41 = vunpack.c.l.b16 %v25
  %v42 = vunpack.c.l.b16 %v26
  %v43 = vunpack.c.l.b16 %v27
  %v44 = vunpack.c.l.b16 %v28
  %v45 = vunpack.c.l.b16 %v29
  %v46 = vunpack.c.l.b16 %v30
  %v47 = vpack.c.b16 %v40, %v39
  %v48 = vpack.c.b16 %v42, %v41
  %v49 = vpack.c.b16 %v44, %v43
  %v50 = vpack.c.b16 %v46, %v45
  %vm55 = vcmask 523264
  %v57 = vsel %vm55, %v22, 0
  %59 = vmatprep.subr.bf16.mxu0 0
  %60 = vmatpush1.bf16.msra.mxu0 0
  %61 = vmatprep.subr.bf16.mxu0 0
  %62 = vmatpush1.bf16.msra.mxu0 0
  %63 = vmatprep.subr.bf16.mxu0 0
  %64 = vmatpush1.bf16.msra.mxu0 0
  %65 = vmatprep.subr.bf16.mxu0 0
  %66 = vmatpush1.bf16.msra.mxu0 0
  %67 = vmatprep.subr.bf16.mxu0 0
  %68 = vmatpush1.bf16.msra.mxu0 %v50
  %69 = vmatprep.subr.bf16.mxu0 0
  %70 = vmatpush1.bf16.msra.mxu0 %v49
  %71 = vmatprep.subr.bf16.mxu0 0
  %72 = vmatpush1.bf16.msra.mxu0 %v48
  %73 = vmatprep.subr.bf16.mxu0 0
  %74 = vmatpush1.bf16.msra.mxu0 %v47
  %75 = vmatprep.subr.bf16.mxu0 0
  %76 = vmatpush2.bf16.msra.mxu0 0
  %77 = vmatprep.subr.bf16.mxu0 0
  %78 = vmatpush2.bf16.msra.mxu0 0
  %79 = vmatprep.subr.bf16.mxu0 0
  %80 = vmatpush2.bf16.msra.mxu0 0
  %81 = vmatprep.subr.bf16.mxu0 0
  %82 = vmatpush2.bf16.msra.mxu0 0
  %83 = vmatprep.subr.bf16.mxu0 0
  %84 = vmatpush2.bf16.msra.mxu0 0
  %85 = vmatprep.subr.bf16.mxu0 0
  %86 = vmatpush2.bf16.msra.mxu0 0
  %87 = vmatprep.subr.bf16.mxu0 0
  %88 = vmatpush2.bf16.msra.mxu0 0
  %89 = vmatprep.subr.bf16.mxu0 0
  %90 = vmatpush2.bf16.msra.mxu0 0
  %91 = vmatprep.mubr.bf16.mxu0 0
  %92 = vmatmul.mubr.bf16.gmra.mxu0 %v57
  %v93 = vpop.f32.mrf.mxu0
  %v94 = vadd.f32 0.0, %v93
  %v95 = vpop.f32.mrf.mxu0
  %v96 = vpop.f32.mrf.mxu0
  %v97 = vpop.f32.mrf.mxu0
  %98 = vdwg.mxu0
  %v99 = vadd.f32 %v21, %v94
  %vm100 = vcmask 123904
  %101 = vst.msk [vmem:[#allocation2] sm:$0x3] %vm100, %v99
  // Predicated region
  $region18: #{_lambda_.23} parent=0 // pred_check
    %p102 = pneg %p15
  $region19: #{_lambda_.23} parent=0 // pred_check_branch
    %104 = sbr.rel (%p102) target = $region21
  $region20: #{_lambda_.23} parent=0 // pred_region
    %v105 = vld [vmem:[#allocation2] sm:$0x3]
    %v106 = vld [vmem:[%s2] sm:$0x1]
    %v108 = vlaneseq
    %v109 = vshrl.u32 %v108, 7
    %v110 = vsub.s32 0, %v109
    %v111 = vrot.slane %v106, %v110
    %v113 = vadd.f32 %v105, %v111
    %114 = vst.msk [vmem:[%s3] sm:$0x3] %vm100, %v113
  $region21: #{_lambda_.23} parent=0 // pred_fallthru
    _
  // Predicated region
  $region22: #{_lambda_.23} parent=0 // pred_check
    _
  $region23: #{_lambda_.23} parent=0 // pred_check_branch
    %116 = sbr.rel (0) target = $region25
  $region24: #{_lambda_.23} parent=0 // pred_region
    _
  $region25: #{_lambda_.23} parent=0 // pred_fallthru
    _
  // Predicated region
  $region26: #{_lambda_.23} parent=0 // pred_check
    _
  $region27: #{_lambda_.23} parent=0 // pred_check_branch
    %118 = sbr.rel (0) target = $region29
  $region28: #{_lambda_.23} parent=0 // pred_region
    _
  $region29: #{_lambda_.23} parent=0 // pred_fallthru
    _

// kernel: _lambda_.19
$region0: #{_lambda_.19}
  #allocation0 [shape = 'u32[]', space=smem, size = 0x4, offset = 0x4, fixed_abs, tag = 'smem constant byte address 0x4 - core index']
  #allocation1 [shape = 'u32[144,128]{1,0:T(1,128)}', space=vmem, size = 0x12000, scoped, tag = 'internal scratch']
  #allocation2 [shape = 'f32[2,64]{1,0:T(2,128)}', space=vmem, size = 0x400, scoped, tag = 'scratch operand']
  %s0 = inlined_call_operand.vmem [shape: bf16[2,288], index: 0, kind: input, shape index: {}]
  %s1 = inlined_call_operand.vmem [shape: bf16[288,64], index: 1, kind: input, shape index: {}]
  %s2 = inlined_call_operand.vmem [shape: f32[1,64], index: 2, kind: input, shape index: {}]
  %s3 = inlined_call_operand.vmem [shape: f32[2,64], index: 3, kind: output, shape index: {}]
  %s4 = sld [smem:[#allocation0]]
  $region30: #{_lambda_.19} parent=0
    _
  %s6 = ssub.s32 1, %s4
  %s7 = scalar_select 0, %s6, %s4
  // Predicated region
  $region2: #{_lambda_.19} parent=0 // pred_check
    _
  $region3: #{_lambda_.19} parent=0 // pred_check_branch
    %9 = sbr.rel (0) target = $region5
  $region4: #{_lambda_.19} parent=0 // pred_region
    _
  $region5: #{_lambda_.19} parent=0 // pred_fallthru
    _
  // Predicated region
  $region6: #{_lambda_.19} parent=0 // pred_check
    _
  $region7: #{_lambda_.19} parent=0 // pred_check_branch
    %11 = sbr.rel (0) target = $region9
  $region8: #{_lambda_.19} parent=0 // pred_region
    _
  $region9: #{_lambda_.19} parent=0 // pred_fallthru
    _
  // Predicated region
  $region10: #{_lambda_.19} parent=0 // pred_check
    _
  $region11: #{_lambda_.19} parent=0 // pred_check_branch
    %13 = sbr.rel (0) target = $region13
  $region12: #{_lambda_.19} parent=0 // pred_region
    _
  $region13: #{_lambda_.19} parent=0 // pred_fallthru
    _
  %p15 = scmp.eq.s32.totalorder 0, 0
  // Predicated region
  $region14: #{_lambda_.19} parent=0 // pred_check
    %p16 = pneg %p15
  $region15: #{_lambda_.19} parent=0 // pred_check_branch
    %18 = sbr.rel (%p16) target = $region17
  $region16: #{_lambda_.19} parent=0 // pred_region
    %vm19 = vcmask 517120
    %20 = vst.msk [vmem:[#allocation2] sm:$0x3] %vm19, 0.0
  $region17: #{_lambda_.19} parent=0 // pred_fallthru
    _
  %v21 = vld [vmem:[#allocation2] sm:$0x3]
  %v22 = vld [vmem:[%s0] sm:$0x7]
  %v23 = vld [vmem:[%s1] sm:$0xf]
  %v24 = vld [vmem:[%s1 + $0x4] sm:$0xf]
  %v25 = vld [vmem:[%s1 + $0x8] sm:$0xf]
  %v26 = vld [vmem:[%s1 + $0xc] sm:$0xf]
  %v27 = vld [vmem:[%s1 + $0x10] sm:$0xf]
  %v28 = vld [vmem:[%s1 + $0x14] sm:$0xf]
  %v29 = vld [vmem:[%s1 + $0x18] sm:$0xf]
  %v30 = vld [vmem:[%s1 + $0x1c] sm:$0xf]
  %v31 = vld [vmem:[%s1 + $0x20] sm:$0xf]
  %v32 = vld [vmem:[%s1 + $0x24] sm:$0xf]
  %v33 = vld [vmem:[%s1 + $0x28] sm:$0xf]
  %v34 = vld [vmem:[%s1 + $0x2c] sm:$0xf]
  %v35 = vld [vmem:[%s1 + $0x30] sm:$0xf]
  %v36 = vld [vmem:[%s1 + $0x34] sm:$0xf]
  %v37 = vld [vmem:[%s1 + $0x38] sm:$0xf]
  %v38 = vld [vmem:[%s1 + $0x3c] sm:$0xf]
  %v39 = vld [vmem:[%s1 + $0x40] sm:$0xf]
  %v40 = vld [vmem:[%s1 + $0x44] sm:$0xf]
  %v41 = vld [vmem:[%s1 + $0x48] sm:$0xf]
  %v42 = vld [vmem:[%s1 + $0x4c] sm:$0xf]
  %v43 = vld [vmem:[%s1 + $0x50] sm:$0xf]
  %v44 = vld [vmem:[%s1 + $0x54] sm:$0xf]
  %v45 = vld [vmem:[%s1 + $0x58] sm:$0xf]
  %v46 = vld [vmem:[%s1 + $0x5c] sm:$0xf]
  %v47 = vld [vmem:[%s1 + $0x60] sm:$0xf]
  %v48 = vld [vmem:[%s1 + $0x64] sm:$0xf]
  %v49 = vld [vmem:[%s1 + $0x68] sm:$0xf]
  %v50 = vld [vmem:[%s1 + $0x6c] sm:$0xf]
  %v51 = vld [vmem:[%s1 + $0x70] sm:$0xf]
  %v52 = vld [vmem:[%s1 + $0x74] sm:$0xf]
  %v53 = vld [vmem:[%s1 + $0x78] sm:$0xf]
  %v54 = vld [vmem:[%s1 + $0x7c] sm:$0xf]
  %v55 = vld [vmem:[%s1 + $0x80] sm:$0xf]
  %v56 = vld [vmem:[%s1 + $0x84] sm:$0xf]
  %v57 = vld [vmem:[%s1 + $0x88] sm:$0xf]
  %v58 = vld [vmem:[%s1 + $0x8c] sm:$0xf]
  %v61 = vunpack.c.l.s4 1966171168
  %v62 = vunpack.c.0.s8 %v61
  %v63 = vlaneseq
  %v64 = vshrl.u32 %v63, 7
  %v65 = vsub.s32 %v62, %v64
  %v66 = vrot.slane %v22, %v65
  %v67 = vcombine.high %v66, %v66
  %v69 = vunpack.c.l.s4 1966171168
  %v70 = vunpack.c.0.s8 %v69
  %v71 = vlaneseq
  %v72 = vshrl.u32 %v71, 7
  %v73 = vsub.s32 %v70, %v72
  %v74 = vrot.slane %v66, %v73
  %v76 = vunpack.c.l.s4 1966171168
  %v77 = vunpack.c.0.s8 %v76
  %v78 = vlaneseq
  %v79 = vshrl.u32 %v78, 7
  %v80 = vsub.s32 %v77, %v79
  %v81 = vrot.slane %v67, %v80
  %v82 = vcombine.high %v74, %v74
  %v121 = vunpack.c.l.b16 %v23
  %v122 = vunpack.c.l.b16 %v24
  %v123 = vunpack.c.l.b16 %v25
  %v124 = vunpack.c.l.b16 %v26
  %v125 = vunpack.c.l.b16 %v27
  %v126 = vunpack.c.l.b16 %v28
  %v127 = vunpack.c.l.b16 %v29
  %v128 = vunpack.c.l.b16 %v30
  %v129 = vunpack.c.l.b16 %v31
  %v130 = vunpack.c.l.b16 %v32
  %v131 = vunpack.c.l.b16 %v33
  %v132 = vunpack.c.l.b16 %v34
  %v133 = vunpack.c.l.b16 %v35
  %v134 = vunpack.c.l.b16 %v36
  %v135 = vunpack.c.l.b16 %v37
  %v136 = vunpack.c.l.b16 %v38
  %v137 = vunpack.c.l.b16 %v39
  %v138 = vunpack.c.l.b16 %v40
  %v139 = vunpack.c.l.b16 %v41
  %v140 = vunpack.c.l.b16 %v42
  %v141 = vunpack.c.l.b16 %v43
  %v142 = vunpack.c.l.b16 %v44
  %v143 = vunpack.c.l.b16 %v45
  %v144 = vunpack.c.l.b16 %v46
  %v145 = vunpack.c.l.b16 %v47
  %v146 = vunpack.c.l.b16 %v48
  %v147 = vunpack.c.l.b16 %v49
  %v148 = vunpack.c.l.b16 %v50
  %v149 = vunpack.c.l.b16 %v51
  %v150 = vunpack.c.l.b16 %v52
  %v151 = vunpack.c.l.b16 %v53
  %v152 = vunpack.c.l.b16 %v54
  %v153 = vunpack.c.l.b16 %v55
  %v154 = vunpack.c.l.b16 %v56
  %v155 = vunpack.c.l.b16 %v57
  %v156 = vunpack.c.l.b16 %v58
  %v157 = vpack.c.b16 %v122, %v121
  %v158 = vpack.c.b16 %v124, %v123
  %v159 = vpack.c.b16 %v126, %v125
  %v160 = vpack.c.b16 %v128, %v127
  %v161 = vpack.c.b16 %v130, %v129
  %v162 = vpack.c.b16 %v132, %v131
  %v163 = vpack.c.b16 %v134, %v133
  %v164 = vpack.c.b16 %v136, %v135
  %v165 = vpack.c.b16 %v138, %v137
  %v166 = vpack.c.b16 %v140, %v139
  %v167 = vpack.c.b16 %v142, %v141
  %v168 = vpack.c.b16 %v144, %v143
  %v169 = vpack.c.b16 %v146, %v145
  %v170 = vpack.c.b16 %v148, %v147
  %v171 = vpack.c.b16 %v150, %v149
  %v172 = vpack.c.b16 %v152, %v151
  %v173 = vpack.c.b16 %v154, %v153
  %v174 = vpack.c.b16 %v156, %v155
  %vm193 = vcmask 261120
  %v195 = vsel %vm193, %v82, 0
  %197 = vmatprep.subr.bf16.mxu0 0
  %198 = vmatpush1.bf16.msra.mxu0 %v164
  %199 = vmatprep.subr.bf16.mxu0 0
  %200 = vmatpush1.bf16.msra.mxu0 %v163
  %201 = vmatprep.subr.bf16.mxu0 0
  %202 = vmatpush1.bf16.msra.mxu0 %v162
  %203 = vmatprep.subr.bf16.mxu0 0
  %204 = vmatpush1.bf16.msra.mxu0 %v161
  %205 = vmatprep.subr.bf16.mxu0 0
  %206 = vmatpush1.bf16.msra.mxu0 %v160
  %207 = vmatprep.subr.bf16.mxu0 0
  %208 = vmatpush1.bf16.msra.mxu0 %v159
  %209 = vmatprep.subr.bf16.mxu0 0
  %210 = vmatpush1.bf16.msra.mxu0 %v158
  %211 = vmatprep.subr.bf16.mxu0 0
  %212 = vmatpush1.bf16.msra.mxu0 %v157
  %213 = vmatprep.subr.bf16.mxu0 0
  %214 = vmatpush2.bf16.msra.mxu0 %v172
  %215 = vmatprep.subr.bf16.mxu0 0
  %216 = vmatpush2.bf16.msra.mxu0 %v171
  %217 = vmatprep.subr.bf16.mxu0 0
  %218 = vmatpush2.bf16.msra.mxu0 %v170
  %219 = vmatprep.subr.bf16.mxu0 0
  %220 = vmatpush2.bf16.msra.mxu0 %v169
  %221 = vmatprep.subr.bf16.mxu0 0
  %222 = vmatpush2.bf16.msra.mxu0 %v168
  %223 = vmatprep.subr.bf16.mxu0 0
  %224 = vmatpush2.bf16.msra.mxu0 %v167
  %225 = vmatprep.subr.bf16.mxu0 0
  %226 = vmatpush2.bf16.msra.mxu0 %v166
  %227 = vmatprep.subr.bf16.mxu0 0
  %228 = vmatpush2.bf16.msra.mxu0 %v165
  %229 = vmatprep.mubr.bf16.mxu0 %v81
  %230 = vmatmul.mubr.bf16.gmra.mxu0 %v74
  %v231 = vpop.f32.mrf.mxu0
  %v232 = vadd.f32 0.0, %v231
  %v233 = vpop.f32.mrf.mxu0
  %v234 = vpop.f32.mrf.mxu0
  %v235 = vpop.f32.mrf.mxu0
  %236 = vdwg.mxu0
  %237 = vmatprep.subr.bf16.mxu0 0
  %238 = vmatpush1.bf16.msra.mxu0 0
  %239 = vmatprep.subr.bf16.mxu0 0
  %240 = vmatpush1.bf16.msra.mxu0 0
  %241 = vmatprep.subr.bf16.mxu0 0
  %242 = vmatpush1.bf16.msra.mxu0 0
  %243 = vmatprep.subr.bf16.mxu0 0
  %244 = vmatpush1.bf16.msra.mxu0 0
  %245 = vmatprep.subr.bf16.mxu0 0
  %246 = vmatpush1.bf16.msra.mxu0 0
  %247 = vmatprep.subr.bf16.mxu0 0
  %248 = vmatpush1.bf16.msra.mxu0 0
  %249 = vmatprep.subr.bf16.mxu0 0
  %250 = vmatpush1.bf16.msra.mxu0 %v174
  %251 = vmatprep.subr.bf16.mxu0 0
  %252 = vmatpush1.bf16.msra.mxu0 %v173
  %253 = vmatprep.subr.bf16.mxu0 0
  %254 = vmatpush2.bf16.msra.mxu0 0
  %255 = vmatprep.subr.bf16.mxu0 0
  %256 = vmatpush2.bf16.msra.mxu0 0
  %257 = vmatprep.subr.bf16.mxu0 0
  %258 = vmatpush2.bf16.msra.mxu0 0
  %259 = vmatprep.subr.bf16.mxu0 0
  %260 = vmatpush2.bf16.msra.mxu0 0
  %261 = vmatprep.subr.bf16.mxu0 0
  %262 = vmatpush2.bf16.msra.mxu0 0
  %263 = vmatprep.subr.bf16.mxu0 0
  %264 = vmatpush2.bf16.msra.mxu0 0
  %265 = vmatprep.subr.bf16.mxu0 0
  %266 = vmatpush2.bf16.msra.mxu0 0
  %267 = vmatprep.subr.bf16.mxu0 0
  %268 = vmatpush2.bf16.msra.mxu0 0
  %269 = vmatprep.mubr.bf16.mxu0 0
  %270 = vmatmul.mubr.bf16.gmra.mxu0 %v195
  %v271 = vpop.f32.mrf.mxu0
  %v272 = vadd.f32 %v232, %v271
  %v273 = vpop.f32.mrf.mxu0
  %v274 = vpop.f32.mrf.mxu0
  %v275 = vpop.f32.mrf.mxu0
  %276 = vdwg.mxu0
  %v277 = vadd.f32 %v21, %v272
  %vm278 = vcmask 517120
  %279 = vst.msk [vmem:[#allocation2] sm:$0x3] %vm278, %v277
  // Predicated region
  $region18: #{_lambda_.19} parent=0 // pred_check
    %p280 = pneg %p15
  $region19: #{_lambda_.19} parent=0 // pred_check_branch
    %282 = sbr.rel (%p280) target = $region21
  $region20: #{_lambda_.19} parent=0 // pred_region
    %v283 = vld [vmem:[#allocation2] sm:$0x3]
    %v284 = vld [vmem:[%s2] sm:$0x1]
    %v286 = vlaneseq
    %v287 = vshrl.u32 %v286, 7
    %v288 = vsub.s32 0, %v287
    %v289 = vrot.slane %v284, %v288
    %v291 = vadd.f32 %v283, %v289
    %v292 = vmax.f32 %v291, 0.0
    %293 = vst.msk [vmem:[%s3] sm:$0x3] %vm278, %v292
  $region21: #{_lambda_.19} parent=0 // pred_fallthru
    _
  // Predicated region
  $region22: #{_lambda_.19} parent=0 // pred_check
    _
  $region23: #{_lambda_.19} parent=0 // pred_check_branch
    %295 = sbr.rel (0) target = $region25
  $region24: #{_lambda_.19} parent=0 // pred_region
    _
  $region25: #{_lambda_.19} parent=0 // pred_fallthru
    _
  // Predicated region
  $region26: #{_lambda_.19} parent=0 // pred_check
    _
  $region27: #{_lambda_.19} parent=0 // pred_check_branch
    %297 = sbr.rel (0) target = $region29
  $region28: #{_lambda_.19} parent=0 // pred_region
    _
  $region29: #{_lambda_.19} parent=0 // pred_fallthru
    _

// kernel: _lambda_.22
$region0: #{_lambda_.22}
  #allocation0 [shape = 'u32[]', space=smem, size = 0x4, offset = 0x4, fixed_abs, tag = 'smem constant byte address 0x4 - core index']
  #allocation1 [shape = 'u32[144,128]{1,0:T(1,128)}', space=vmem, size = 0x12000, scoped, tag = 'internal scratch']
  #allocation2 [shape = 'f32[8,16]{1,0:T(8,128)}', space=vmem, size = 0x1000, scoped, tag = 'scratch operand']
  %s0 = inlined_call_operand.vmem [shape: bf16[8,32], index: 0, kind: input, shape index: {}]
  %s1 = inlined_call_operand.vmem [shape: bf16[32,16], index: 1, kind: input, shape index: {}]
  %s2 = inlined_call_operand.vmem [shape: f32[1,16], index: 2, kind: input, shape index: {}]
  %s3 = inlined_call_operand.vmem [shape: f32[8,16], index: 3, kind: output, shape index: {}]
  %s4 = sld [smem:[#allocation0]]
  $region30: #{_lambda_.22} parent=0
    _
  %s6 = ssub.s32 1, %s4
  %s7 = scalar_select 0, %s6, %s4
  // Predicated region
  $region2: #{_lambda_.22} parent=0 // pred_check
    _
  $region3: #{_lambda_.22} parent=0 // pred_check_branch
    %9 = sbr.rel (0) target = $region5
  $region4: #{_lambda_.22} parent=0 // pred_region
    _
  $region5: #{_lambda_.22} parent=0 // pred_fallthru
    _
  // Predicated region
  $region6: #{_lambda_.22} parent=0 // pred_check
    _
  $region7: #{_lambda_.22} parent=0 // pred_check_branch
    %11 = sbr.rel (0) target = $region9
  $region8: #{_lambda_.22} parent=0 // pred_region
    _
  $region9: #{_lambda_.22} parent=0 // pred_fallthru
    _
  // Predicated region
  $region10: #{_lambda_.22} parent=0 // pred_check
    _
  $region11: #{_lambda_.22} parent=0 // pred_check_branch
    %13 = sbr.rel (0) target = $region13
  $region12: #{_lambda_.22} parent=0 // pred_region
    _
  $region13: #{_lambda_.22} parent=0 // pred_fallthru
    _
  %p15 = scmp.eq.s32.totalorder 0, 0
  // Predicated region
  $region14: #{_lambda_.22} parent=0 // pred_check
    %p16 = pneg %p15
  $region15: #{_lambda_.22} parent=0 // pred_check_branch
    %18 = sbr.rel (%p16) target = $region17
  $region16: #{_lambda_.22} parent=0 // pred_region
    %vm19 = vcmask 130048
    %20 = vst.msk [vmem:[#allocation2] sm:$0xff] %vm19, 0.0
  $region17: #{_lambda_.22} parent=0 // pred_fallthru
    _
  %v21 = vld [vmem:[#allocation2] sm:$0xff]
  %v22 = vld [vmem:[%s0] sm:$0xf]
  %v23 = vld [vmem:[%s1] sm:$0xf]
  %v24 = vld [vmem:[%s1 + $0x4] sm:$0xf]
  %v25 = vld [vmem:[%s1 + $0x8] sm:$0xf]
  %v26 = vld [vmem:[%s1 + $0xc] sm:$0xf]
  %v31 = vunpack.c.l.b16 %v23
  %v32 = vunpack.c.l.b16 %v24
  %v33 = vunpack.c.l.b16 %v25
  %v34 = vunpack.c.l.b16 %v26
  %v35 = vpack.c.b16 %v32, %v31
  %v36 = vpack.c.b16 %v34, %v33
  %vm39 = vcmask 261120
  %v41 = vsel %vm39, %v22, 0
  %43 = vmatprep.subr.bf16.mxu0 0
  %44 = vmatpush1.bf16.msra.mxu0 0
  %45 = vmatprep.subr.bf16.mxu0 0
  %46 = vmatpush1.bf16.msra.mxu0 0
  %47 = vmatprep.subr.bf16.mxu0 0
  %48 = vmatpush1.bf16.msra.mxu0 0
  %49 = vmatprep.subr.bf16.mxu0 0
  %50 = vmatpush1.bf16.msra.mxu0 0
  %51 = vmatprep.subr.bf16.mxu0 0
  %52 = vmatpush1.bf16.msra.mxu0 0
  %53 = vmatprep.subr.bf16.mxu0 0
  %54 = vmatpush1.bf16.msra.mxu0 0
  %55 = vmatprep.subr.bf16.mxu0 0
  %56 = vmatpush1.bf16.msra.mxu0 %v36
  %57 = vmatprep.subr.bf16.mxu0 0
  %58 = vmatpush1.bf16.msra.mxu0 %v35
  %59 = vmatprep.subr.bf16.mxu0 0
  %60 = vmatpush2.bf16.msra.mxu0 0
  %61 = vmatprep.subr.bf16.mxu0 0
  %62 = vmatpush2.bf16.msra.mxu0 0
  %63 = vmatprep.subr.bf16.mxu0 0
  %64 = vmatpush2.bf16.msra.mxu0 0
  %65 = vmatprep.subr.bf16.mxu0 0
  %66 = vmatpush2.bf16.msra.mxu0 0
  %67 = vmatprep.subr.bf16.mxu0 0
  %68 = vmatpush2.bf16.msra.mxu0 0
  %69 = vmatprep.subr.bf16.mxu0 0
  %70 = vmatpush2.bf16.msra.mxu0 0
  %71 = vmatprep.subr.bf16.mxu0 0
  %72 = vmatpush2.bf16.msra.mxu0 0
  %73 = vmatprep.subr.bf16.mxu0 0
  %74 = vmatpush2.bf16.msra.mxu0 0
  %75 = vmatprep.mubr.bf16.mxu0 0
  %76 = vmatmul.mubr.bf16.gmra.mxu0 %v41
  %v77 = vpop.f32.mrf.mxu0
  %v78 = vadd.f32 0.0, %v77
  %v79 = vpop.f32.mrf.mxu0
  %v80 = vpop.f32.mrf.mxu0
  %v81 = vpop.f32.mrf.mxu0
  %82 = vdwg.mxu0
  %v83 = vadd.f32 %v21, %v78
  %vm84 = vcmask 130048
  %85 = vst.msk [vmem:[#allocation2] sm:$0xff] %vm84, %v83
  // Predicated region
  $region18: #{_lambda_.22} parent=0 // pred_check
    %p86 = pneg %p15
  $region19: #{_lambda_.22} parent=0 // pred_check_branch
    %88 = sbr.rel (%p86) target = $region21
  $region20: #{_lambda_.22} parent=0 // pred_region
    %v89 = vld [vmem:[#allocation2] sm:$0xff]
    %v90 = vld [vmem:[%s2] sm:$0x1]
    %v92 = vlaneseq
    %v93 = vshrl.u32 %v92, 7
    %v94 = vsub.s32 0, %v93
    %v95 = vrot.slane %v90, %v94
    %v97 = vadd.f32 %v89, %v95
    %98 = vst.msk [vmem:[%s3] sm:$0xff] %vm84, %v97
  $region21: #{_lambda_.22} parent=0 // pred_fallthru
    _
  // Predicated region
  $region22: #{_lambda_.22} parent=0 // pred_check
    _
  $region23: #{_lambda_.22} parent=0 // pred_check_branch
    %100 = sbr.rel (0) target = $region25
  $region24: #{_lambda_.22} parent=0 // pred_region
    _
  $region25: #{_lambda_.22} parent=0 // pred_fallthru
    _
  // Predicated region
  $region26: #{_lambda_.22} parent=0 // pred_check
    _
  $region27: #{_lambda_.22} parent=0 // pred_check_branch
    %102 = sbr.rel (0) target = $region29
  $region28: #{_lambda_.22} parent=0 // pred_region
    _
  $region29: #{_lambda_.22} parent=0 // pred_fallthru
    _

// kernel: _lambda_.21
$region0: #{_lambda_.21}
  #allocation0 [shape = 'u32[]', space=smem, size = 0x4, offset = 0x4, fixed_abs, tag = 'smem constant byte address 0x4 - core index']
  #allocation1 [shape = 'u32[144,128]{1,0:T(1,128)}', space=vmem, size = 0x12000, scoped, tag = 'internal scratch']
  #allocation2 [shape = 'f32[32,16]{1,0:T(8,128)}', space=vmem, size = 0x4000, scoped, tag = 'scratch operand']
  %s0 = inlined_call_operand.vmem [shape: bf16[32,16], index: 0, kind: input, shape index: {}]
  %s1 = inlined_call_operand.vmem [shape: bf16[16,16], index: 1, kind: input, shape index: {}]
  %s2 = inlined_call_operand.vmem [shape: f32[1,16], index: 2, kind: input, shape index: {}]
  %s3 = inlined_call_operand.vmem [shape: f32[32,16], index: 3, kind: output, shape index: {}]
  %s4 = sld [smem:[#allocation0]]
  $region30: #{_lambda_.21} parent=0
    _
  %s6 = ssub.s32 1, %s4
  %s7 = scalar_select 0, %s6, %s4
  // Predicated region
  $region2: #{_lambda_.21} parent=0 // pred_check
    _
  $region3: #{_lambda_.21} parent=0 // pred_check_branch
    %9 = sbr.rel (0) target = $region5
  $region4: #{_lambda_.21} parent=0 // pred_region
    _
  $region5: #{_lambda_.21} parent=0 // pred_fallthru
    _
  // Predicated region
  $region6: #{_lambda_.21} parent=0 // pred_check
    _
  $region7: #{_lambda_.21} parent=0 // pred_check_branch
    %11 = sbr.rel (0) target = $region9
  $region8: #{_lambda_.21} parent=0 // pred_region
    _
  $region9: #{_lambda_.21} parent=0 // pred_fallthru
    _
  // Predicated region
  $region10: #{_lambda_.21} parent=0 // pred_check
    _
  $region11: #{_lambda_.21} parent=0 // pred_check_branch
    %13 = sbr.rel (0) target = $region13
  $region12: #{_lambda_.21} parent=0 // pred_region
    _
  $region13: #{_lambda_.21} parent=0 // pred_fallthru
    _
  %p15 = scmp.eq.s32.totalorder 0, 0
  // Predicated region
  $region14: #{_lambda_.21} parent=0 // pred_check
    %p16 = pneg %p15
  $region15: #{_lambda_.21} parent=0 // pred_check_branch
    %18 = sbr.rel (%p16) target = $region17
  $region16: #{_lambda_.21} parent=0 // pred_region
    %vm19 = vcmask 130048
    %20 = vst.msk [vmem:[#allocation2] sm:$0xff] %vm19, 0.0
    %21 = vst.msk [vmem:[#allocation2 + $0x8] sm:$0xff] %vm19, 0.0
    %22 = vst.msk [vmem:[#allocation2 + $0x10] sm:$0xff] %vm19, 0.0
    %23 = vst.msk [vmem:[#allocation2 + $0x18] sm:$0xff] %vm19, 0.0
  $region17: #{_lambda_.21} parent=0 // pred_fallthru
    _
  %v24 = vld [vmem:[#allocation2] sm:$0xff]
  %v25 = vld [vmem:[#allocation2 + $0x8] sm:$0xff]
  %v26 = vld [vmem:[#allocation2 + $0x10] sm:$0xff]
  %v27 = vld [vmem:[#allocation2 + $0x18] sm:$0xff]
  %v28 = vld [vmem:[%s0] sm:$0xf]
  %v29 = vld [vmem:[%s0 + $0x4] sm:$0xf]
  %v30 = vld [vmem:[%s0 + $0x8] sm:$0xf]
  %v31 = vld [vmem:[%s0 + $0xc] sm:$0xf]
  %v32 = vld [vmem:[%s1] sm:$0xf]
  %v33 = vld [vmem:[%s1 + $0x4] sm:$0xf]
  %v38 = vunpack.c.l.b16 %v28
  %v39 = vunpack.c.l.b16 %v29
  %v40 = vunpack.c.l.b16 %v30
  %v41 = vunpack.c.l.b16 %v31
  %v42 = vpack.c.b16 %v39, %v38
  %v43 = vpack.c.b16 %v41, %v40
  %v46 = vunpack.c.l.b16 %v32
  %v47 = vunpack.c.l.b16 %v33
  %v48 = vpack.c.b16 %v47, %v46
  %vm50 = vcmask 130048
  %v52 = vsel %vm50, %v42, 0
  %v55 = vsel %vm50, %v43, 0
  %57 = vmatprep.subr.bf16.mxu0 0
  %58 = vmatpush1.bf16.msra.mxu0 0
  %59 = vmatprep.subr.bf16.mxu0 0
  %60 = vmatpush1.bf16.msra.mxu0 0
  %61 = vmatprep.subr.bf16.mxu0 0
  %62 = vmatpush1.bf16.msra.mxu0 0
  %63 = vmatprep.subr.bf16.mxu0 0
  %64 = vmatpush1.bf16.msra.mxu0 0
  %65 = vmatprep.subr.bf16.mxu0 0
  %66 = vmatpush1.bf16.msra.mxu0 0
  %67 = vmatprep.subr.bf16.mxu0 0
  %68 = vmatpush1.bf16.msra.mxu0 0
  %69 = vmatprep.subr.bf16.mxu0 0
  %70 = vmatpush1.bf16.msra.mxu0 0
  %71 = vmatprep.subr.bf16.mxu0 0
  %72 = vmatpush1.bf16.msra.mxu0 %v48
  %73 = vmatprep.subr.bf16.mxu0 0
  %74 = vmatpush2.bf16.msra.mxu0 0
  %75 = vmatprep.subr.bf16.mxu0 0
  %76 = vmatpush2.bf16.msra.mxu0 0
  %77 = vmatprep.subr.bf16.mxu0 0
  %78 = vmatpush2.bf16.msra.mxu0 0
  %79 = vmatprep.subr.bf16.mxu0 0
  %80 = vmatpush2.bf16.msra.mxu0 0
  %81 = vmatprep.subr.bf16.mxu0 0
  %82 = vmatpush2.bf16.msra.mxu0 0
  %83 = vmatprep.subr.bf16.mxu0 0
  %84 = vmatpush2.bf16.msra.mxu0 0
  %85 = vmatprep.subr.bf16.mxu0 0
  %86 = vmatpush2.bf16.msra.mxu0 0
  %87 = vmatprep.subr.bf16.mxu0 0
  %88 = vmatpush2.bf16.msra.mxu0 0
  %89 = vmatprep.mubr.bf16.mxu0 0
  %90 = vmatmul.mubr.bf16.gmra.mxu0 %v52
  %v91 = vpop.f32.mrf.mxu0
  %v92 = vadd.f32 0.0, %v91
  %v93 = vpop.f32.mrf.mxu0
  %v94 = vpop.f32.mrf.mxu0
  %v95 = vadd.f32 0.0, %v94
  %v96 = vpop.f32.mrf.mxu0
  %97 = vmatprep.mubr.bf16.mxu0 0
  %98 = vmatmul.mubr.bf16.gmra.mxu0 %v55
  %v99 = vpop.f32.mrf.mxu0
  %v100 = vadd.f32 0.0, %v99
  %v101 = vpop.f32.mrf.mxu0
  %v102 = vpop.f32.mrf.mxu0
  %v103 = vadd.f32 0.0, %v102
  %v104 = vpop.f32.mrf.mxu0
  %105 = vdwg.mxu0
  %v106 = vadd.f32 %v24, %v92
  %v107 = vadd.f32 %v25, %v95
  %v108 = vadd.f32 %v26, %v100
  %v109 = vadd.f32 %v27, %v103
  %110 = vst.msk [vmem:[#allocation2] sm:$0xff] %vm50, %v106
  %111 = vst.msk [vmem:[#allocation2 + $0x8] sm:$0xff] %vm50, %v107
  %112 = vst.msk [vmem:[#allocation2 + $0x10] sm:$0xff] %vm50, %v108
  %113 = vst.msk [vmem:[#allocation2 + $0x18] sm:$0xff] %vm50, %v109
  // Predicated region
  $region18: #{_lambda_.21} parent=0 // pred_check
    %p114 = pneg %p15
  $region19: #{_lambda_.21} parent=0 // pred_check_branch
    %116 = sbr.rel (%p114) target = $region21
  $region20: #{_lambda_.21} parent=0 // pred_region
    %v117 = vld [vmem:[#allocation2] sm:$0xff]
    %v118 = vld [vmem:[#allocation2 + $0x8] sm:$0xff]
    %v119 = vld [vmem:[#allocation2 + $0x10] sm:$0xff]
    %v120 = vld [vmem:[#allocation2 + $0x18] sm:$0xff]
    %v121 = vld [vmem:[%s2] sm:$0x1]
    %v123 = vlaneseq
    %v124 = vshrl.u32 %v123, 7
    %v125 = vsub.s32 0, %v124
    %v126 = vrot.slane %v121, %v125
    %v128 = vadd.f32 %v117, %v126
    %v129 = vadd.f32 %v118, %v126
    %v130 = vadd.f32 %v119, %v126
    %v131 = vadd.f32 %v120, %v126
    %132 = vst.msk [vmem:[%s3] sm:$0xff] %vm50, %v128
    %133 = vst.msk [vmem:[%s3 + $0x8] sm:$0xff] %vm50, %v129
    %134 = vst.msk [vmem:[%s3 + $0x10] sm:$0xff] %vm50, %v130
    %135 = vst.msk [vmem:[%s3 + $0x18] sm:$0xff] %vm50, %v131
  $region21: #{_lambda_.21} parent=0 // pred_fallthru
    _
  // Predicated region
  $region22: #{_lambda_.21} parent=0 // pred_check
    _
  $region23: #{_lambda_.21} parent=0 // pred_check_branch
    %137 = sbr.rel (0) target = $region25
  $region24: #{_lambda_.21} parent=0 // pred_region
    _
  $region25: #{_lambda_.21} parent=0 // pred_fallthru
    _
  // Predicated region
  $region26: #{_lambda_.21} parent=0 // pred_check
    _
  $region27: #{_lambda_.21} parent=0 // pred_check_branch
    %139 = sbr.rel (0) target = $region29
  $region28: #{_lambda_.21} parent=0 // pred_region
    _
  $region29: #{_lambda_.21} parent=0 // pred_fallthru
    _

// kernel: _lambda_.20
$region0: #{_lambda_.20}
  #allocation0 [shape = 'u32[]', space=smem, size = 0x4, offset = 0x4, fixed_abs, tag = 'smem constant byte address 0x4 - core index']
  #allocation1 [shape = 'u32[144,128]{1,0:T(1,128)}', space=vmem, size = 0x12000, scoped, tag = 'internal scratch']
  #allocation2 [shape = 'f32[128,16]{1,0:T(8,128)}', space=vmem, size = 0x10000, scoped, tag = 'scratch operand']
  %s0 = inlined_call_operand.vmem [shape: bf16[128,8], index: 0, kind: input, shape index: {}]
  %s1 = inlined_call_operand.vmem [shape: bf16[8,16], index: 1, kind: input, shape index: {}]
  %s2 = inlined_call_operand.vmem [shape: f32[1,16], index: 2, kind: input, shape index: {}]
  %s3 = inlined_call_operand.vmem [shape: f32[128,16], index: 3, kind: output, shape index: {}]
  %s4 = sld [smem:[#allocation0]]
  $region30: #{_lambda_.20} parent=0
    _
  %s6 = ssub.s32 1, %s4
  %s7 = scalar_select 0, %s6, %s4
  // Predicated region
  $region2: #{_lambda_.20} parent=0 // pred_check
    _
  $region3: #{_lambda_.20} parent=0 // pred_check_branch
    %9 = sbr.rel (0) target = $region5
  $region4: #{_lambda_.20} parent=0 // pred_region
    _
  $region5: #{_lambda_.20} parent=0 // pred_fallthru
    _
  // Predicated region
  $region6: #{_lambda_.20} parent=0 // pred_check
    _
  $region7: #{_lambda_.20} parent=0 // pred_check_branch
    %11 = sbr.rel (0) target = $region9
  $region8: #{_lambda_.20} parent=0 // pred_region
    _
  $region9: #{_lambda_.20} parent=0 // pred_fallthru
    _
  // Predicated region
  $region10: #{_lambda_.20} parent=0 // pred_check
    _
  $region11: #{_lambda_.20} parent=0 // pred_check_branch
    %13 = sbr.rel (0) target = $region13
  $region12: #{_lambda_.20} parent=0 // pred_region
    _
  $region13: #{_lambda_.20} parent=0 // pred_fallthru
    _
  %p15 = scmp.eq.s32.totalorder 0, 0
  // Predicated region
  $region14: #{_lambda_.20} parent=0 // pred_check
    %p16 = pneg %p15
  $region15: #{_lambda_.20} parent=0 // pred_check_branch
    %18 = sbr.rel (%p16) target = $region17
  $region16: #{_lambda_.20} parent=0 // pred_region
    %vm19 = vcmask 130048
    %20 = vst.msk [vmem:[#allocation2] sm:$0xff] %vm19, 0.0
    %21 = vst.msk [vmem:[#allocation2 + $0x8] sm:$0xff] %vm19, 0.0
    %22 = vst.msk [vmem:[#allocation2 + $0x10] sm:$0xff] %vm19, 0.0
    %23 = vst.msk [vmem:[#allocation2 + $0x18] sm:$0xff] %vm19, 0.0
    %24 = vst.msk [vmem:[#allocation2 + $0x20] sm:$0xff] %vm19, 0.0
    %25 = vst.msk [vmem:[#allocation2 + $0x28] sm:$0xff] %vm19, 0.0
    %26 = vst.msk [vmem:[#allocation2 + $0x30] sm:$0xff] %vm19, 0.0
    %27 = vst.msk [vmem:[#allocation2 + $0x38] sm:$0xff] %vm19, 0.0
    %28 = vst.msk [vmem:[#allocation2 + $0x40] sm:$0xff] %vm19, 0.0
    %29 = vst.msk [vmem:[#allocation2 + $0x48] sm:$0xff] %vm19, 0.0
    %30 = vst.msk [vmem:[#allocation2 + $0x50] sm:$0xff] %vm19, 0.0
    %31 = vst.msk [vmem:[#allocation2 + $0x58] sm:$0xff] %vm19, 0.0
    %32 = vst.msk [vmem:[#allocation2 + $0x60] sm:$0xff] %vm19, 0.0
    %33 = vst.msk [vmem:[#allocation2 + $0x68] sm:$0xff] %vm19, 0.0
    %34 = vst.msk [vmem:[#allocation2 + $0x70] sm:$0xff] %vm19, 0.0
    %35 = vst.msk [vmem:[#allocation2 + $0x78] sm:$0xff] %vm19, 0.0
  $region17: #{_lambda_.20} parent=0 // pred_fallthru
    _
  %v36 = vld [vmem:[#allocation2] sm:$0xff]
  %v37 = vld [vmem:[#allocation2 + $0x8] sm:$0xff]
  %v38 = vld [vmem:[#allocation2 + $0x10] sm:$0xff]
  %v39 = vld [vmem:[#allocation2 + $0x18] sm:$0xff]
  %v40 = vld [vmem:[#allocation2 + $0x20] sm:$0xff]
  %v41 = vld [vmem:[#allocation2 + $0x28] sm:$0xff]
  %v42 = vld [vmem:[#allocation2 + $0x30] sm:$0xff]
  %v43 = vld [vmem:[#allocation2 + $0x38] sm:$0xff]
  %v44 = vld [vmem:[#allocation2 + $0x40] sm:$0xff]
  %v45 = vld [vmem:[#allocation2 + $0x48] sm:$0xff]
  %v46 = vld [vmem:[#allocation2 + $0x50] sm:$0xff]
  %v47 = vld [vmem:[#allocation2 + $0x58] sm:$0xff]
  %v48 = vld [vmem:[#allocation2 + $0x60] sm:$0xff]
  %v49 = vld [vmem:[#allocation2 + $0x68] sm:$0xff]
  %v50 = vld [vmem:[#allocation2 + $0x70] sm:$0xff]
  %v51 = vld [vmem:[#allocation2 + $0x78] sm:$0xff]
  %v52 = vld [vmem:[%s0] sm:$0xf]
  %v53 = vld [vmem:[%s0 + $0x4] sm:$0xf]
  %v54 = vld [vmem:[%s0 + $0x8] sm:$0xf]
  %v55 = vld [vmem:[%s0 + $0xc] sm:$0xf]
  %v56 = vld [vmem:[%s0 + $0x10] sm:$0xf]
  %v57 = vld [vmem:[%s0 + $0x14] sm:$0xf]
  %v58 = vld [vmem:[%s0 + $0x18] sm:$0xf]
  %v59 = vld [vmem:[%s0 + $0x1c] sm:$0xf]
  %v60 = vld [vmem:[%s0 + $0x20] sm:$0xf]
  %v61 = vld [vmem:[%s0 + $0x24] sm:$0xf]
  %v62 = vld [vmem:[%s0 + $0x28] sm:$0xf]
  %v63 = vld [vmem:[%s0 + $0x2c] sm:$0xf]
  %v64 = vld [vmem:[%s0 + $0x30] sm:$0xf]
  %v65 = vld [vmem:[%s0 + $0x34] sm:$0xf]
  %v66 = vld [vmem:[%s0 + $0x38] sm:$0xf]
  %v67 = vld [vmem:[%s0 + $0x3c] sm:$0xf]
  %v68 = vld [vmem:[%s1] sm:$0xf]
  %v85 = vunpack.c.l.b16 %v52
  %v86 = vunpack.c.l.b16 %v53
  %v87 = vunpack.c.l.b16 %v54
  %v88 = vunpack.c.l.b16 %v55
  %v89 = vunpack.c.l.b16 %v56
  %v90 = vunpack.c.l.b16 %v57
  %v91 = vunpack.c.l.b16 %v58
  %v92 = vunpack.c.l.b16 %v59
  %v93 = vunpack.c.l.b16 %v60
  %v94 = vunpack.c.l.b16 %v61
  %v95 = vunpack.c.l.b16 %v62
  %v96 = vunpack.c.l.b16 %v63
  %v97 = vunpack.c.l.b16 %v64
  %v98 = vunpack.c.l.b16 %v65
  %v99 = vunpack.c.l.b16 %v66
  %v100 = vunpack.c.l.b16 %v67
  %v101 = vpack.c.b16 %v86, %v85
  %v102 = vpack.c.b16 %v88, %v87
  %v103 = vpack.c.b16 %v90, %v89
  %v104 = vpack.c.b16 %v92, %v91
  %v105 = vpack.c.b16 %v94, %v93
  %v106 = vpack.c.b16 %v96, %v95
  %v107 = vpack.c.b16 %v98, %v97
  %v108 = vpack.c.b16 %v100, %v99
  %vm109 = vcmask 64512
  %v111 = vsel %vm109, %v101, 0
  %v114 = vsel %vm109, %v102, 0
  %v117 = vsel %vm109, %v103, 0
  %v120 = vsel %vm109, %v104, 0
  %v123 = vsel %vm109, %v105, 0
  %v126 = vsel %vm109, %v106, 0
  %v129 = vsel %vm109, %v107, 0
  %v132 = vsel %vm109, %v108, 0
  %vm134 = vcmask 1043456
  %v136 = vsel %vm134, %v68, 0
  %138 = vmatprep.subr.bf16.mxu0 0
  %139 = vmatpush1.bf16.msra.mxu0 0
  %140 = vmatprep.subr.bf16.mxu0 0
  %141 = vmatpush1.bf16.msra.mxu0 0
  %142 = vmatprep.subr.bf16.mxu0 0
  %143 = vmatpush1.bf16.msra.mxu0 0
  %144 = vmatprep.subr.bf16.mxu0 0
  %145 = vmatpush1.bf16.msra.mxu0 0
  %146 = vmatprep.subr.bf16.mxu0 0
  %147 = vmatpush1.bf16.msra.mxu0 0
  %148 = vmatprep.subr.bf16.mxu0 0
  %149 = vmatpush1.bf16.msra.mxu0 0
  %150 = vmatprep.subr.bf16.mxu0 0
  %151 = vmatpush1.bf16.msra.mxu0 0
  %152 = vmatprep.subr.bf16.mxu0 0
  %153 = vmatpush1.bf16.msra.mxu0 %v136
  %154 = vmatprep.subr.bf16.mxu0 0
  %155 = vmatpush2.bf16.msra.mxu0 0
  %156 = vmatprep.subr.bf16.mxu0 0
  %157 = vmatpush2.bf16.msra.mxu0 0
  %158 = vmatprep.subr.bf16.mxu0 0
  %159 = vmatpush2.bf16.msra.mxu0 0
  %160 = vmatprep.subr.bf16.mxu0 0
  %161 = vmatpush2.bf16.msra.mxu0 0
  %162 = vmatprep.subr.bf16.mxu0 0
  %163 = vmatpush2.bf16.msra.mxu0 0
  %164 = vmatprep.subr.bf16.mxu0 0
  %165 = vmatpush2.bf16.msra.mxu0 0
  %166 = vmatprep.subr.bf16.mxu0 0
  %167 = vmatpush2.bf16.msra.mxu0 0
  %168 = vmatprep.subr.bf16.mxu0 0
  %169 = vmatpush2.bf16.msra.mxu0 0
  %170 = vmatprep.mubr.bf16.mxu0 0
  %171 = vmatmul.mubr.bf16.gmra.mxu0 %v111
  %v172 = vpop.f32.mrf.mxu0
  %v173 = vadd.f32 0.0, %v172
  %v174 = vpop.f32.mrf.mxu0
  %v175 = vpop.f32.mrf.mxu0
  %v176 = vadd.f32 0.0, %v175
  %v177 = vpop.f32.mrf.mxu0
  %178 = vmatprep.mubr.bf16.mxu0 0
  %179 = vmatmul.mubr.bf16.gmra.mxu0 %v114
  %v180 = vpop.f32.mrf.mxu0
  %v181 = vadd.f32 0.0, %v180
  %v182 = vpop.f32.mrf.mxu0
  %v183 = vpop.f32.mrf.mxu0
  %v184 = vadd.f32 0.0, %v183
  %v185 = vpop.f32.mrf.mxu0
  %186 = vmatprep.mubr.bf16.mxu0 0
  %187 = vmatmul.mubr.bf16.gmra.mxu0 %v117
  %v188 = vpop.f32.mrf.mxu0
  %v189 = vadd.f32 0.0, %v188
  %v190 = vpop.f32.mrf.mxu0
  %v191 = vpop.f32.mrf.mxu0
  %v192 = vadd.f32 0.0, %v191
  %v193 = vpop.f32.mrf.mxu0
  %194 = vmatprep.mubr.bf16.mxu0 0
  %195 = vmatmul.mubr.bf16.gmra.mxu0 %v120
  %v196 = vpop.f32.mrf.mxu0
  %v197 = vadd.f32 0.0, %v196
  %v198 = vpop.f32.mrf.mxu0
  %v199 = vpop.f32.mrf.mxu0
  %v200 = vadd.f32 0.0, %v199
  %v201 = vpop.f32.mrf.mxu0
  %202 = vmatprep.mubr.bf16.mxu0 0
  %203 = vmatmul.mubr.bf16.gmra.mxu0 %v123
  %v204 = vpop.f32.mrf.mxu0
  %v205 = vadd.f32 0.0, %v204
  %v206 = vpop.f32.mrf.mxu0
  %v207 = vpop.f32.mrf.mxu0
  %v208 = vadd.f32 0.0, %v207
  %v209 = vpop.f32.mrf.mxu0
  %210 = vmatprep.mubr.bf16.mxu0 0
  %211 = vmatmul.mubr.bf16.gmra.mxu0 %v126
  %v212 = vpop.f32.mrf.mxu0
  %v213 = vadd.f32 0.0, %v212
  %v214 = vpop.f32.mrf.mxu0
  %v215 = vpop.f32.mrf.mxu0
  %v216 = vadd.f32 0.0, %v215
  %v217 = vpop.f32.mrf.mxu0
  %218 = vmatprep.mubr.bf16.mxu0 0
  %219 = vmatmul.mubr.bf16.gmra.mxu0 %v129
  %v220 = vpop.f32.mrf.mxu0
  %v221 = vadd.f32 0.0, %v220
  %v222 = vpop.f32.mrf.mxu0
  %v223 = vpop.f32.mrf.mxu0
  %v224 = vadd.f32 0.0, %v223
  %v225 = vpop.f32.mrf.mxu0
  %226 = vmatprep.mubr.bf16.mxu0 0
  %227 = vmatmul.mubr.bf16.gmra.mxu0 %v132
  %v228 = vpop.f32.mrf.mxu0
  %v229 = vadd.f32 0.0, %v228
  %v230 = vpop.f32.mrf.mxu0
  %v231 = vpop.f32.mrf.mxu0
  %v232 = vadd.f32 0.0, %v231
  %v233 = vpop.f32.mrf.mxu0
  %234 = vdwg.mxu0
  %v235 = vadd.f32 %v36, %v173
  %v236 = vadd.f32 %v37, %v176
  %v237 = vadd.f32 %v38, %v181
  %v238 = vadd.f32 %v39, %v184
  %v239 = vadd.f32 %v40, %v189
  %v240 = vadd.f32 %v41, %v192
  %v241 = vadd.f32 %v42, %v197
  %v242 = vadd.f32 %v43, %v200
  %v243 = vadd.f32 %v44, %v205
  %v244 = vadd.f32 %v45, %v208
  %v245 = vadd.f32 %v46, %v213
  %v246 = vadd.f32 %v47, %v216
  %v247 = vadd.f32 %v48, %v221
  %v248 = vadd.f32 %v49, %v224
  %v249 = vadd.f32 %v50, %v229
  %v250 = vadd.f32 %v51, %v232
  %vm251 = vcmask 130048
  %252 = vst.msk [vmem:[#allocation2] sm:$0xff] %vm251, %v235
  %253 = vst.msk [vmem:[#allocation2 + $0x8] sm:$0xff] %vm251, %v236
  %254 = vst.msk [vmem:[#allocation2 + $0x10] sm:$0xff] %vm251, %v237
  %255 = vst.msk [vmem:[#allocation2 + $0x18] sm:$0xff] %vm251, %v238
  %256 = vst.msk [vmem:[#allocation2 + $0x20] sm:$0xff] %vm251, %v239
  %257 = vst.msk [vmem:[#allocation2 + $0x28] sm:$0xff] %vm251, %v240
  %258 = vst.msk [vmem:[#allocation2 + $0x30] sm:$0xff] %vm251, %v241
  %259 = vst.msk [vmem:[#allocation2 + $0x38] sm:$0xff] %vm251, %v242
  %260 = vst.msk [vmem:[#allocation2 + $0x40] sm:$0xff] %vm251, %v243
  %261 = vst.msk [vmem:[#allocation2 + $0x48] sm:$0xff] %vm251, %v244
  %262 = vst.msk [vmem:[#allocation2 + $0x50] sm:$0xff] %vm251, %v245
  %263 = vst.msk [vmem:[#allocation2 + $0x58] sm:$0xff] %vm251, %v246
  %264 = vst.msk [vmem:[#allocation2 + $0x60] sm:$0xff] %vm251, %v247
  %265 = vst.msk [vmem:[#allocation2 + $0x68] sm:$0xff] %vm251, %v248
  %266 = vst.msk [vmem:[#allocation2 + $0x70] sm:$0xff] %vm251, %v249
  %267 = vst.msk [vmem:[#allocation2 + $0x78] sm:$0xff] %vm251, %v250
  // Predicated region
  $region18: #{_lambda_.20} parent=0 // pred_check
    %p268 = pneg %p15
  $region19: #{_lambda_.20} parent=0 // pred_check_branch
    %270 = sbr.rel (%p268) target = $region21
  $region20: #{_lambda_.20} parent=0 // pred_region
    %v271 = vld [vmem:[#allocation2] sm:$0xff]
    %v272 = vld [vmem:[#allocation2 + $0x8] sm:$0xff]
    %v273 = vld [vmem:[#allocation2 + $0x10] sm:$0xff]
    %v274 = vld [vmem:[#allocation2 + $0x18] sm:$0xff]
    %v275 = vld [vmem:[#allocation2 + $0x20] sm:$0xff]
    %v276 = vld [vmem:[#allocation2 + $0x28] sm:$0xff]
    %v277 = vld [vmem:[#allocation2 + $0x30] sm:$0xff]
    %v278 = vld [vmem:[#allocation2 + $0x38] sm:$0xff]
    %v279 = vld [vmem:[#allocation2 + $0x40] sm:$0xff]
    %v280 = vld [vmem:[#allocation2 + $0x48] sm:$0xff]
    %v281 = vld [vmem:[#allocation2 + $0x50] sm:$0xff]
    %v282 = vld [vmem:[#allocation2 + $0x58] sm:$0xff]
    %v283 = vld [vmem:[#allocation2 + $0x60] sm:$0xff]
    %v284 = vld [vmem:[#allocation2 + $0x68] sm:$0xff]
    %v285 = vld [vmem:[#allocation2 + $0x70] sm:$0xff]
    %v286 = vld [vmem:[#allocation2 + $0x78] sm:$0xff]
    %v287 = vld [vmem:[%s2] sm:$0x1]
    %v289 = vlaneseq
    %v290 = vshrl.u32 %v289, 7
    %v291 = vsub.s32 0, %v290
    %v292 = vrot.slane %v287, %v291
    %v294 = vadd.f32 %v271, %v292
    %v295 = vadd.f32 %v272, %v292
    %v296 = vadd.f32 %v273, %v292
    %v297 = vadd.f32 %v274, %v292
    %v298 = vadd.f32 %v275, %v292
    %v299 = vadd.f32 %v276, %v292
    %v300 = vadd.f32 %v277, %v292
    %v301 = vadd.f32 %v278, %v292
    %v302 = vadd.f32 %v279, %v292
    %v303 = vadd.f32 %v280, %v292
    %v304 = vadd.f32 %v281, %v292
    %v305 = vadd.f32 %v282, %v292
    %v306 = vadd.f32 %v283, %v292
    %v307 = vadd.f32 %v284, %v292
    %v308 = vadd.f32 %v285, %v292
    %v309 = vadd.f32 %v286, %v292
    %310 = vst.msk [vmem:[%s3] sm:$0xff] %vm251, %v294
    %311 = vst.msk [vmem:[%s3 + $0x8] sm:$0xff] %vm251, %v295
    %312 = vst.msk [vmem:[%s3 + $0x10] sm:$0xff] %vm251, %v296
    %313 = vst.msk [vmem:[%s3 + $0x18] sm:$0xff] %vm251, %v297
    %314 = vst.msk [vmem:[%s3 + $0x20] sm:$0xff] %vm251, %v298
    %315 = vst.msk [vmem:[%s3 + $0x28] sm:$0xff] %vm251, %v299
    %316 = vst.msk [vmem:[%s3 + $0x30] sm:$0xff] %vm251, %v300
    %317 = vst.msk [vmem:[%s3 + $0x38] sm:$0xff] %vm251, %v301
    %318 = vst.msk [vmem:[%s3 + $0x40] sm:$0xff] %vm251, %v302
    %319 = vst.msk [vmem:[%s3 + $0x48] sm:$0xff] %vm251, %v303
    %320 = vst.msk [vmem:[%s3 + $0x50] sm:$0xff] %vm251, %v304
    %321 = vst.msk [vmem:[%s3 + $0x58] sm:$0xff] %vm251, %v305
    %322 = vst.msk [vmem:[%s3 + $0x60] sm:$0xff] %vm251, %v306
    %323 = vst.msk [vmem:[%s3 + $0x68] sm:$0xff] %vm251, %v307
    %324 = vst.msk [vmem:[%s3 + $0x70] sm:$0xff] %vm251, %v308
    %325 = vst.msk [vmem:[%s3 + $0x78] sm:$0xff] %vm251, %v309
  $region21: #{_lambda_.20} parent=0 // pred_fallthru
    _
  // Predicated region
  $region22: #{_lambda_.20} parent=0 // pred_check
    _
  $region23: #{_lambda_.20} parent=0 // pred_check_branch
    %327 = sbr.rel (0) target = $region25
  $region24: #{_lambda_.20} parent=0 // pred_region
    _
  $region25: #{_lambda_.20} parent=0 // pred_fallthru
    _
  // Predicated region
  $region26: #{_lambda_.20} parent=0 // pred_check
    _
  $region27: #{_lambda_.20} parent=0 // pred_check_branch
    %329 = sbr.rel (0) target = $region29
  $region28: #{_lambda_.20} parent=0 // pred_region
    _
  $region29: #{_lambda_.20} parent=0 // pred_fallthru
    _

// kernel: _lambda_.24
$region0: #{_lambda_.24}
  #allocation0 [shape = 'u32[]', space=smem, size = 0x4, offset = 0x4, fixed_abs, tag = 'smem constant byte address 0x4 - core index']
  #allocation1 [shape = 'u32[144,128]{1,0:T(1,128)}', space=vmem, size = 0x12000, scoped, tag = 'internal scratch']
  #allocation2 [shape = 'f32[128,16]{1,0:T(8,128)}', space=vmem, size = 0x10000, scoped, tag = 'scratch operand']
  %s0 = inlined_call_operand.vmem [shape: bf16[128,144], index: 0, kind: input, shape index: {}]
  %s1 = inlined_call_operand.vmem [shape: bf16[144,16], index: 1, kind: input, shape index: {}]
  %s2 = inlined_call_operand.vmem [shape: f32[1,16], index: 2, kind: input, shape index: {}]
  %s3 = inlined_call_operand.vmem [shape: f32[128,16], index: 3, kind: output, shape index: {}]
  %s4 = sld [smem:[#allocation0]]
  $region30: #{_lambda_.24} parent=0
    _
  %s6 = ssub.s32 1, %s4
  %s7 = scalar_select 0, %s6, %s4
  // Predicated region
  $region2: #{_lambda_.24} parent=0 // pred_check
    _
  $region3: #{_lambda_.24} parent=0 // pred_check_branch
    %9 = sbr.rel (0) target = $region5
  $region4: #{_lambda_.24} parent=0 // pred_region
    _
  $region5: #{_lambda_.24} parent=0 // pred_fallthru
    _
  // Predicated region
  $region6: #{_lambda_.24} parent=0 // pred_check
    _
  $region7: #{_lambda_.24} parent=0 // pred_check_branch
    %11 = sbr.rel (0) target = $region9
  $region8: #{_lambda_.24} parent=0 // pred_region
    _
  $region9: #{_lambda_.24} parent=0 // pred_fallthru
    _
  // Predicated region
  $region10: #{_lambda_.24} parent=0 // pred_check
    _
  $region11: #{_lambda_.24} parent=0 // pred_check_branch
    %13 = sbr.rel (0) target = $region13
  $region12: #{_lambda_.24} parent=0 // pred_region
    _
  $region13: #{_lambda_.24} parent=0 // pred_fallthru
    _
  %p15 = scmp.eq.s32.totalorder 0, 0
  // Predicated region
  $region14: #{_lambda_.24} parent=0 // pred_check
    %p16 = pneg %p15
  $region15: #{_lambda_.24} parent=0 // pred_check_branch
    %18 = sbr.rel (%p16) target = $region17
  $region16: #{_lambda_.24} parent=0 // pred_region
    %vm19 = vcmask 130048
    %20 = vst.msk [vmem:[#allocation2] sm:$0xff] %vm19, 0.0
    %21 = vst.msk [vmem:[#allocation2 + $0x8] sm:$0xff] %vm19, 0.0
    %22 = vst.msk [vmem:[#allocation2 + $0x10] sm:$0xff] %vm19, 0.0
    %23 = vst.msk [vmem:[#allocation2 + $0x18] sm:$0xff] %vm19, 0.0
    %24 = vst.msk [vmem:[#allocation2 + $0x20] sm:$0xff] %vm19, 0.0
    %25 = vst.msk [vmem:[#allocation2 + $0x28] sm:$0xff] %vm19, 0.0
    %26 = vst.msk [vmem:[#allocation2 + $0x30] sm:$0xff] %vm19, 0.0
    %27 = vst.msk [vmem:[#allocation2 + $0x38] sm:$0xff] %vm19, 0.0
    %28 = vst.msk [vmem:[#allocation2 + $0x40] sm:$0xff] %vm19, 0.0
    %29 = vst.msk [vmem:[#allocation2 + $0x48] sm:$0xff] %vm19, 0.0
    %30 = vst.msk [vmem:[#allocation2 + $0x50] sm:$0xff] %vm19, 0.0
    %31 = vst.msk [vmem:[#allocation2 + $0x58] sm:$0xff] %vm19, 0.0
    %32 = vst.msk [vmem:[#allocation2 + $0x60] sm:$0xff] %vm19, 0.0
    %33 = vst.msk [vmem:[#allocation2 + $0x68] sm:$0xff] %vm19, 0.0
    %34 = vst.msk [vmem:[#allocation2 + $0x70] sm:$0xff] %vm19, 0.0
    %35 = vst.msk [vmem:[#allocation2 + $0x78] sm:$0xff] %vm19, 0.0
  $region17: #{_lambda_.24} parent=0 // pred_fallthru
    _
  %v36 = vld [vmem:[#allocation2] sm:$0xff]
  %v37 = vld [vmem:[#allocation2 + $0x8] sm:$0xff]
  %v38 = vld [vmem:[#allocation2 + $0x10] sm:$0xff]
  %v39 = vld [vmem:[#allocation2 + $0x18] sm:$0xff]
  %v40 = vld [vmem:[#allocation2 + $0x20] sm:$0xff]
  %v41 = vld [vmem:[#allocation2 + $0x28] sm:$0xff]
  %v42 = vld [vmem:[#allocation2 + $0x30] sm:$0xff]
  %v43 = vld [vmem:[#allocation2 + $0x38] sm:$0xff]
  %v44 = vld [vmem:[#allocation2 + $0x40] sm:$0xff]
  %v45 = vld [vmem:[#allocation2 + $0x48] sm:$0xff]
  %v46 = vld [vmem:[#allocation2 + $0x50] sm:$0xff]
  %v47 = vld [vmem:[#allocation2 + $0x58] sm:$0xff]
  %v48 = vld [vmem:[#allocation2 + $0x60] sm:$0xff]
  %v49 = vld [vmem:[#allocation2 + $0x68] sm:$0xff]
  %v50 = vld [vmem:[#allocation2 + $0x70] sm:$0xff]
  %v51 = vld [vmem:[#allocation2 + $0x78] sm:$0xff]
  %v52 = vld [vmem:[%s0] sm:$0xff]
  %v53 = vld [vmem:[%s0 + $0x8] sm:$0xff]
  %v54 = vld [vmem:[%s0 + $0x10] sm:$0xff]
  %v55 = vld [vmem:[%s0 + $0x18] sm:$0xff]
  %v56 = vld [vmem:[%s0 + $0x20] sm:$0xff]
  %v57 = vld [vmem:[%s0 + $0x28] sm:$0xff]
  %v58 = vld [vmem:[%s0 + $0x30] sm:$0xff]
  %v59 = vld [vmem:[%s0 + $0x38] sm:$0xff]
  %v60 = vld [vmem:[%s0 + $0x40] sm:$0xff]
  %v61 = vld [vmem:[%s0 + $0x48] sm:$0xff]
  %v62 = vld [vmem:[%s0 + $0x50] sm:$0xff]
  %v63 = vld [vmem:[%s0 + $0x58] sm:$0xff]
  %v64 = vld [vmem:[%s0 + $0x60] sm:$0xff]
  %v65 = vld [vmem:[%s0 + $0x68] sm:$0xff]
  %v66 = vld [vmem:[%s0 + $0x70] sm:$0xff]
  %v67 = vld [vmem:[%s0 + $0x78] sm:$0xff]
  %v68 = vld [vmem:[%s1] sm:$0xf]
  %v69 = vld [vmem:[%s1 + $0x4] sm:$0xf]
  %v70 = vld [vmem:[%s1 + $0x8] sm:$0xf]
  %v71 = vld [vmem:[%s1 + $0xc] sm:$0xf]
  %v72 = vld [vmem:[%s1 + $0x10] sm:$0xf]
  %v73 = vld [vmem:[%s1 + $0x14] sm:$0xf]
  %v74 = vld [vmem:[%s1 + $0x18] sm:$0xf]
  %v75 = vld [vmem:[%s1 + $0x1c] sm:$0xf]
  %v76 = vld [vmem:[%s1 + $0x20] sm:$0xf]
  %v77 = vld [vmem:[%s1 + $0x24] sm:$0xf]
  %v78 = vld [vmem:[%s1 + $0x28] sm:$0xf]
  %v79 = vld [vmem:[%s1 + $0x2c] sm:$0xf]
  %v80 = vld [vmem:[%s1 + $0x30] sm:$0xf]
  %v81 = vld [vmem:[%s1 + $0x34] sm:$0xf]
  %v82 = vld [vmem:[%s1 + $0x38] sm:$0xf]
  %v83 = vld [vmem:[%s1 + $0x3c] sm:$0xf]
  %v84 = vld [vmem:[%s1 + $0x40] sm:$0xf]
  %v85 = vld [vmem:[%s1 + $0x44] sm:$0xf]
  %v102 = vunpack.c.l.b16 %v52
  %v103 = vunpack.c.h.b16 %v52
  %v104 = vunpack.c.l.b16 %v53
  %v105 = vunpack.c.h.b16 %v53
  %v106 = vunpack.c.l.b16 %v54
  %v107 = vunpack.c.h.b16 %v54
  %v108 = vunpack.c.l.b16 %v55
  %v109 = vunpack.c.h.b16 %v55
  %v110 = vunpack.c.l.b16 %v56
  %v111 = vunpack.c.h.b16 %v56
  %v112 = vunpack.c.l.b16 %v57
  %v113 = vunpack.c.h.b16 %v57
  %v114 = vunpack.c.l.b16 %v58
  %v115 = vunpack.c.h.b16 %v58
  %v116 = vunpack.c.l.b16 %v59
  %v117 = vunpack.c.h.b16 %v59
  %v118 = vunpack.c.l.b16 %v60
  %v119 = vunpack.c.h.b16 %v60
  %v120 = vunpack.c.l.b16 %v61
  %v121 = vunpack.c.h.b16 %v61
  %v122 = vunpack.c.l.b16 %v62
  %v123 = vunpack.c.h.b16 %v62
  %v124 = vunpack.c.l.b16 %v63
  %v125 = vunpack.c.h.b16 %v63
  %v126 = vunpack.c.l.b16 %v64
  %v127 = vunpack.c.h.b16 %v64
  %v128 = vunpack.c.l.b16 %v65
  %v129 = vunpack.c.h.b16 %v65
  %v130 = vunpack.c.l.b16 %v66
  %v131 = vunpack.c.h.b16 %v66
  %v132 = vunpack.c.l.b16 %v67
  %v133 = vunpack.c.h.b16 %v67
  %v134 = vpack.c.b16 %v104, %v102
  %v135 = vpack.c.b16 %v105, %v103
  %v136 = vpack.c.b16 %v108, %v106
  %v137 = vpack.c.b16 %v109, %v107
  %v138 = vpack.c.b16 %v112, %v110
  %v139 = vpack.c.b16 %v113, %v111
  %v140 = vpack.c.b16 %v116, %v114
  %v141 = vpack.c.b16 %v117, %v115
  %v142 = vpack.c.b16 %v120, %v118
  %v143 = vpack.c.b16 %v121, %v119
  %v144 = vpack.c.b16 %v124, %v122
  %v145 = vpack.c.b16 %v125, %v123
  %v146 = vpack.c.b16 %v128, %v126
  %v147 = vpack.c.b16 %v129, %v127
  %v148 = vpack.c.b16 %v132, %v130
  %v149 = vpack.c.b16 %v133, %v131
  %v176 = vunpack.c.l.b16 %v68
  %v177 = vunpack.c.l.b16 %v69
  %v178 = vunpack.c.l.b16 %v70
  %v179 = vunpack.c.l.b16 %v71
  %v180 = vunpack.c.l.b16 %v72
  %v181 = vunpack.c.l.b16 %v73
  %v182 = vunpack.c.l.b16 %v74
  %v183 = vunpack.c.l.b16 %v75
  %v184 = vunpack.c.l.b16 %v76
  %v185 = vunpack.c.l.b16 %v77
  %v186 = vunpack.c.l.b16 %v78
  %v187 = vunpack.c.l.b16 %v79
  %v188 = vunpack.c.l.b16 %v80
  %v189 = vunpack.c.l.b16 %v81
  %v190 = vunpack.c.l.b16 %v82
  %v191 = vunpack.c.l.b16 %v83
  %v192 = vunpack.c.l.b16 %v84
  %v193 = vunpack.c.l.b16 %v85
  %v194 = vpack.c.b16 %v177, %v176
  %v195 = vpack.c.b16 %v179, %v178
  %v196 = vpack.c.b16 %v181, %v180
  %v197 = vpack.c.b16 %v183, %v182
  %v198 = vpack.c.b16 %v185, %v184
  %v199 = vpack.c.b16 %v187, %v186
  %v200 = vpack.c.b16 %v189, %v188
  %v201 = vpack.c.b16 %v191, %v190
  %v202 = vpack.c.b16 %v193, %v192
  %vm212 = vcmask 130048
  %v214 = vsel %vm212, %v135, 0
  %v217 = vsel %vm212, %v137, 0
  %v220 = vsel %vm212, %v139, 0
  %v223 = vsel %vm212, %v141, 0
  %v226 = vsel %vm212, %v143, 0
  %v229 = vsel %vm212, %v145, 0
  %v232 = vsel %vm212, %v147, 0
  %v235 = vsel %vm212, %v149, 0
  %237 = vmatprep.subr.bf16.mxu0 0
  %238 = vmatpush1.bf16.msra.mxu0 %v201
  %239 = vmatprep.subr.bf16.mxu0 0
  %240 = vmatpush1.bf16.msra.mxu0 %v200
  %241 = vmatprep.subr.bf16.mxu0 0
  %242 = vmatpush1.bf16.msra.mxu0 %v199
  %243 = vmatprep.subr.bf16.mxu0 0
  %244 = vmatpush1.bf16.msra.mxu0 %v198
  %245 = vmatprep.subr.bf16.mxu0 0
  %246 = vmatpush1.bf16.msra.mxu0 %v197
  %247 = vmatprep.subr.bf16.mxu0 0
  %248 = vmatpush1.bf16.msra.mxu0 %v196
  %249 = vmatprep.subr.bf16.mxu0 0
  %250 = vmatpush1.bf16.msra.mxu0 %v195
  %251 = vmatprep.subr.bf16.mxu0 0
  %252 = vmatpush1.bf16.msra.mxu0 %v194
  %253 = vmatprep.subr.bf16.mxu0 0
  %254 = vmatpush2.bf16.msra.mxu0 0
  %255 = vmatprep.subr.bf16.mxu0 0
  %256 = vmatpush2.bf16.msra.mxu0 0
  %257 = vmatprep.subr.bf16.mxu0 0
  %258 = vmatpush2.bf16.msra.mxu0 0
  %259 = vmatprep.subr.bf16.mxu0 0
  %260 = vmatpush2.bf16.msra.mxu0 0
  %261 = vmatprep.subr.bf16.mxu0 0
  %262 = vmatpush2.bf16.msra.mxu0 0
  %263 = vmatprep.subr.bf16.mxu0 0
  %264 = vmatpush2.bf16.msra.mxu0 0
  %265 = vmatprep.subr.bf16.mxu0 0
  %266 = vmatpush2.bf16.msra.mxu0 0
  %267 = vmatprep.subr.bf16.mxu0 0
  %268 = vmatpush2.bf16.msra.mxu0 %v202
  %269 = vmatprep.mubr.bf16.mxu0 %v214
  %270 = vmatmul.mubr.bf16.gmra.mxu0 %v134
  %v271 = vpop.f32.mrf.mxu0
  %v272 = vadd.f32 0.0, %v271
  %v273 = vpop.f32.mrf.mxu0
  %v274 = vpop.f32.mrf.mxu0
  %v275 = vadd.f32 0.0, %v274
  %v276 = vpop.f32.mrf.mxu0
  %277 = vmatprep.mubr.bf16.mxu0 %v217
  %278 = vmatmul.mubr.bf16.gmra.mxu0 %v136
  %v279 = vpop.f32.mrf.mxu0
  %v280 = vadd.f32 0.0, %v279
  %v281 = vpop.f32.mrf.mxu0
  %v282 = vpop.f32.mrf.mxu0
  %v283 = vadd.f32 0.0, %v282
  %v284 = vpop.f32.mrf.mxu0
  %285 = vmatprep.mubr.bf16.mxu0 %v220
  %286 = vmatmul.mubr.bf16.gmra.mxu0 %v138
  %v287 = vpop.f32.mrf.mxu0
  %v288 = vadd.f32 0.0, %v287
  %v289 = vpop.f32.mrf.mxu0
  %v290 = vpop.f32.mrf.mxu0
  %v291 = vadd.f32 0.0, %v290
  %v292 = vpop.f32.mrf.mxu0
  %293 = vmatprep.mubr.bf16.mxu0 %v223
  %294 = vmatmul.mubr.bf16.gmra.mxu0 %v140
  %v295 = vpop.f32.mrf.mxu0
  %v296 = vadd.f32 0.0, %v295
  %v297 = vpop.f32.mrf.mxu0
  %v298 = vpop.f32.mrf.mxu0
  %v299 = vadd.f32 0.0, %v298
  %v300 = vpop.f32.mrf.mxu0
  %301 = vmatprep.mubr.bf16.mxu0 %v226
  %302 = vmatmul.mubr.bf16.gmra.mxu0 %v142
  %v303 = vpop.f32.mrf.mxu0
  %v304 = vadd.f32 0.0, %v303
  %v305 = vpop.f32.mrf.mxu0
  %v306 = vpop.f32.mrf.mxu0
  %v307 = vadd.f32 0.0, %v306
  %v308 = vpop.f32.mrf.mxu0
  %309 = vmatprep.mubr.bf16.mxu0 %v229
  %310 = vmatmul.mubr.bf16.gmra.mxu0 %v144
  %v311 = vpop.f32.mrf.mxu0
  %v312 = vadd.f32 0.0, %v311
  %v313 = vpop.f32.mrf.mxu0
  %v314 = vpop.f32.mrf.mxu0
  %v315 = vadd.f32 0.0, %v314
  %v316 = vpop.f32.mrf.mxu0
  %317 = vmatprep.mubr.bf16.mxu0 %v232
  %318 = vmatmul.mubr.bf16.gmra.mxu0 %v146
  %v319 = vpop.f32.mrf.mxu0
  %v320 = vadd.f32 0.0, %v319
  %v321 = vpop.f32.mrf.mxu0
  %v322 = vpop.f32.mrf.mxu0
  %v323 = vadd.f32 0.0, %v322
  %v324 = vpop.f32.mrf.mxu0
  %325 = vmatprep.mubr.bf16.mxu0 %v235
  %326 = vmatmul.mubr.bf16.gmra.mxu0 %v148
  %v327 = vpop.f32.mrf.mxu0
  %v328 = vadd.f32 0.0, %v327
  %v329 = vpop.f32.mrf.mxu0
  %v330 = vpop.f32.mrf.mxu0
  %v331 = vadd.f32 0.0, %v330
  %v332 = vpop.f32.mrf.mxu0
  %333 = vdwg.mxu0
  %v334 = vadd.f32 %v36, %v272
  %v335 = vadd.f32 %v37, %v275
  %v336 = vadd.f32 %v38, %v280
  %v337 = vadd.f32 %v39, %v283
  %v338 = vadd.f32 %v40, %v288
  %v339 = vadd.f32 %v41, %v291
  %v340 = vadd.f32 %v42, %v296
  %v341 = vadd.f32 %v43, %v299
  %v342 = vadd.f32 %v44, %v304
  %v343 = vadd.f32 %v45, %v307
  %v344 = vadd.f32 %v46, %v312
  %v345 = vadd.f32 %v47, %v315
  %v346 = vadd.f32 %v48, %v320
  %v347 = vadd.f32 %v49, %v323
  %v348 = vadd.f32 %v50, %v328
  %v349 = vadd.f32 %v51, %v331
  %350 = vst.msk [vmem:[#allocation2] sm:$0xff] %vm212, %v334
  %351 = vst.msk [vmem:[#allocation2 + $0x8] sm:$0xff] %vm212, %v335
  %352 = vst.msk [vmem:[#allocation2 + $0x10] sm:$0xff] %vm212, %v336
  %353 = vst.msk [vmem:[#allocation2 + $0x18] sm:$0xff] %vm212, %v337
  %354 = vst.msk [vmem:[#allocation2 + $0x20] sm:$0xff] %vm212, %v338
  %355 = vst.msk [vmem:[#allocation2 + $0x28] sm:$0xff] %vm212, %v339
  %356 = vst.msk [vmem:[#allocation2 + $0x30] sm:$0xff] %vm212, %v340
  %357 = vst.msk [vmem:[#allocation2 + $0x38] sm:$0xff] %vm212, %v341
  %358 = vst.msk [vmem:[#allocation2 + $0x40] sm:$0xff] %vm212, %v342
  %359 = vst.msk [vmem:[#allocation2 + $0x48] sm:$0xff] %vm212, %v343
  %360 = vst.msk [vmem:[#allocation2 + $0x50] sm:$0xff] %vm212, %v344
  %361 = vst.msk [vmem:[#allocation2 + $0x58] sm:$0xff] %vm212, %v345
  %362 = vst.msk [vmem:[#allocation2 + $0x60] sm:$0xff] %vm212, %v346
  %363 = vst.msk [vmem:[#allocation2 + $0x68] sm:$0xff] %vm212, %v347
  %364 = vst.msk [vmem:[#allocation2 + $0x70] sm:$0xff] %vm212, %v348
  %365 = vst.msk [vmem:[#allocation2 + $0x78] sm:$0xff] %vm212, %v349
  // Predicated region
  $region18: #{_lambda_.24} parent=0 // pred_check
    %p366 = pneg %p15
  $region19: #{_lambda_.24} parent=0 // pred_check_branch
    %368 = sbr.rel (%p366) target = $region21
  $region20: #{_lambda_.24} parent=0 // pred_region
    %v369 = vld [vmem:[#allocation2] sm:$0xff]
    %v370 = vld [vmem:[#allocation2 + $0x8] sm:$0xff]
    %v371 = vld [vmem:[#allocation2 + $0x10] sm:$0xff]
    %v372 = vld [vmem:[#allocation2 + $0x18] sm:$0xff]
    %v373 = vld [vmem:[#allocation2 + $0x20] sm:$0xff]
    %v374 = vld [vmem:[#allocation2 + $0x28] sm:$0xff]
    %v375 = vld [vmem:[#allocation2 + $0x30] sm:$0xff]
    %v376 = vld [vmem:[#allocation2 + $0x38] sm:$0xff]
    %v377 = vld [vmem:[#allocation2 + $0x40] sm:$0xff]
    %v378 = vld [vmem:[#allocation2 + $0x48] sm:$0xff]
    %v379 = vld [vmem:[#allocation2 + $0x50] sm:$0xff]
    %v380 = vld [vmem:[#allocation2 + $0x58] sm:$0xff]
    %v381 = vld [vmem:[#allocation2 + $0x60] sm:$0xff]
    %v382 = vld [vmem:[#allocation2 + $0x68] sm:$0xff]
    %v383 = vld [vmem:[#allocation2 + $0x70] sm:$0xff]
    %v384 = vld [vmem:[#allocation2 + $0x78] sm:$0xff]
    %v385 = vld [vmem:[%s2] sm:$0x1]
    %v387 = vlaneseq
    %v388 = vshrl.u32 %v387, 7
    %v389 = vsub.s32 0, %v388
    %v390 = vrot.slane %v385, %v389
    %v392 = vadd.f32 %v369, %v390
    %v393 = vadd.f32 %v370, %v390
    %v394 = vadd.f32 %v371, %v390
    %v395 = vadd.f32 %v372, %v390
    %v396 = vadd.f32 %v373, %v390
    %v397 = vadd.f32 %v374, %v390
    %v398 = vadd.f32 %v375, %v390
    %v399 = vadd.f32 %v376, %v390
    %v400 = vadd.f32 %v377, %v390
    %v401 = vadd.f32 %v378, %v390
    %v402 = vadd.f32 %v379, %v390
    %v403 = vadd.f32 %v380, %v390
    %v404 = vadd.f32 %v381, %v390
    %v405 = vadd.f32 %v382, %v390
    %v406 = vadd.f32 %v383, %v390
    %v407 = vadd.f32 %v384, %v390
    %408 = vst.msk [vmem:[%s3] sm:$0xff] %vm212, %v392
    %409 = vst.msk [vmem:[%s3 + $0x8] sm:$0xff] %vm212, %v393
    %410 = vst.msk [vmem:[%s3 + $0x10] sm:$0xff] %vm212, %v394
    %411 = vst.msk [vmem:[%s3 + $0x18] sm:$0xff] %vm212, %v395
    %412 = vst.msk [vmem:[%s3 + $0x20] sm:$0xff] %vm212, %v396
    %413 = vst.msk [vmem:[%s3 + $0x28] sm:$0xff] %vm212, %v397
    %414 = vst.msk [vmem:[%s3 + $0x30] sm:$0xff] %vm212, %v398
    %415 = vst.msk [vmem:[%s3 + $0x38] sm:$0xff] %vm212, %v399
    %416 = vst.msk [vmem:[%s3 + $0x40] sm:$0xff] %vm212, %v400
    %417 = vst.msk [vmem:[%s3 + $0x48] sm:$0xff] %vm212, %v401
    %418 = vst.msk [vmem:[%s3 + $0x50] sm:$0xff] %vm212, %v402
    %419 = vst.msk [vmem:[%s3 + $0x58] sm:$0xff] %vm212, %v403
    %420 = vst.msk [vmem:[%s3 + $0x60] sm:$0xff] %vm212, %v404
    %421 = vst.msk [vmem:[%s3 + $0x68] sm:$0xff] %vm212, %v405
    %422 = vst.msk [vmem:[%s3 + $0x70] sm:$0xff] %vm212, %v406
    %423 = vst.msk [vmem:[%s3 + $0x78] sm:$0xff] %vm212, %v407
  $region21: #{_lambda_.24} parent=0 // pred_fallthru
    _
  // Predicated region
  $region22: #{_lambda_.24} parent=0 // pred_check
    _
  $region23: #{_lambda_.24} parent=0 // pred_check_branch
    %425 = sbr.rel (0) target = $region25
  $region24: #{_lambda_.24} parent=0 // pred_region
    _
  $region25: #{_lambda_.24} parent=0 // pred_fallthru
    _
  // Predicated region
  $region26: #{_lambda_.24} parent=0 // pred_check
    _
  $region27: #{_lambda_.24} parent=0 // pred_check_branch
    %427 = sbr.rel (0) target = $region29
  $region28: #{_lambda_.24} parent=0 // pred_region
    _
  $region29: #{_lambda_.24} parent=0 // pred_fallthru
    _

// kernel: _lambda_.26
$region0: #{_lambda_.26}
  #allocation0 [shape = 'u32[]', space=smem, size = 0x4, offset = 0x4, fixed_abs, tag = 'smem constant byte address 0x4 - core index']
  #allocation1 [shape = 'u32[144,128]{1,0:T(1,128)}', space=vmem, size = 0x12000, scoped, tag = 'internal scratch']
  #allocation2 [shape = 'f32[64,32]{1,0:T(8,128)}', space=vmem, size = 0x8000, scoped, tag = 'scratch operand']
  %s0 = inlined_call_operand.vmem [shape: bf16[64,288], index: 0, kind: input, shape index: {}]
  %s1 = inlined_call_operand.vmem [shape: bf16[288,32], index: 1, kind: input, shape index: {}]
  %s2 = inlined_call_operand.vmem [shape: f32[1,32], index: 2, kind: input, shape index: {}]
  %s3 = inlined_call_operand.vmem [shape: f32[64,32], index: 3, kind: output, shape index: {}]
  %s4 = sld [smem:[#allocation0]]
  $region30: #{_lambda_.26} parent=0
    _
  %s6 = ssub.s32 1, %s4
  %s7 = scalar_select 0, %s6, %s4
  // Predicated region
  $region2: #{_lambda_.26} parent=0 // pred_check
    _
  $region3: #{_lambda_.26} parent=0 // pred_check_branch
    %9 = sbr.rel (0) target = $region5
  $region4: #{_lambda_.26} parent=0 // pred_region
    _
  $region5: #{_lambda_.26} parent=0 // pred_fallthru
    _
  // Predicated region
  $region6: #{_lambda_.26} parent=0 // pred_check
    _
  $region7: #{_lambda_.26} parent=0 // pred_check_branch
    %11 = sbr.rel (0) target = $region9
  $region8: #{_lambda_.26} parent=0 // pred_region
    _
  $region9: #{_lambda_.26} parent=0 // pred_fallthru
    _
  // Predicated region
  $region10: #{_lambda_.26} parent=0 // pred_check
    _
  $region11: #{_lambda_.26} parent=0 // pred_check_branch
    %13 = sbr.rel (0) target = $region13
  $region12: #{_lambda_.26} parent=0 // pred_region
    _
  $region13: #{_lambda_.26} parent=0 // pred_fallthru
    _
  %p15 = scmp.eq.s32.totalorder 0, 0
  // Predicated region
  $region14: #{_lambda_.26} parent=0 // pred_check
    %p16 = pneg %p15
  $region15: #{_lambda_.26} parent=0 // pred_check_branch
    %18 = sbr.rel (%p16) target = $region17
  $region16: #{_lambda_.26} parent=0 // pred_region
    %vm19 = vcmask 261120
    %20 = vst.msk [vmem:[#allocation2] sm:$0xff] %vm19, 0.0
    %21 = vst.msk [vmem:[#allocation2 + $0x8] sm:$0xff] %vm19, 0.0
    %22 = vst.msk [vmem:[#allocation2 + $0x10] sm:$0xff] %vm19, 0.0
    %23 = vst.msk [vmem:[#allocation2 + $0x18] sm:$0xff] %vm19, 0.0
    %24 = vst.msk [vmem:[#allocation2 + $0x20] sm:$0xff] %vm19, 0.0
    %25 = vst.msk [vmem:[#allocation2 + $0x28] sm:$0xff] %vm19, 0.0
    %26 = vst.msk [vmem:[#allocation2 + $0x30] sm:$0xff] %vm19, 0.0
    %27 = vst.msk [vmem:[#allocation2 + $0x38] sm:$0xff] %vm19, 0.0
  $region17: #{_lambda_.26} parent=0 // pred_fallthru
    _
  %v28 = vld [vmem:[#allocation2] sm:$0xff]
  %v29 = vld [vmem:[#allocation2 + $0x8] sm:$0xff]
  %v30 = vld [vmem:[#allocation2 + $0x10] sm:$0xff]
  %v31 = vld [vmem:[#allocation2 + $0x18] sm:$0xff]
  %v32 = vld [vmem:[#allocation2 + $0x20] sm:$0xff]
  %v33 = vld [vmem:[#allocation2 + $0x28] sm:$0xff]
  %v34 = vld [vmem:[#allocation2 + $0x30] sm:$0xff]
  %v35 = vld [vmem:[#allocation2 + $0x38] sm:$0xff]
  %v36 = vld [vmem:[%s0] sm:$0xff]
  %v37 = vld [vmem:[%s0 + $0x8] sm:$0xf]
  %v38 = vld [vmem:[%s0 + $0xc] sm:$0xff]
  %v39 = vld [vmem:[%s0 + $0x14] sm:$0xf]
  %v40 = vld [vmem:[%s0 + $0x18] sm:$0xff]
  %v41 = vld [vmem:[%s0 + $0x20] sm:$0xf]
  %v42 = vld [vmem:[%s0 + $0x24] sm:$0xff]
  %v43 = vld [vmem:[%s0 + $0x2c] sm:$0xf]
  %v44 = vld [vmem:[%s0 + $0x30] sm:$0xff]
  %v45 = vld [vmem:[%s0 + $0x38] sm:$0xf]
  %v46 = vld [vmem:[%s0 + $0x3c] sm:$0xff]
  %v47 = vld [vmem:[%s0 + $0x44] sm:$0xf]
  %v48 = vld [vmem:[%s0 + $0x48] sm:$0xff]
  %v49 = vld [vmem:[%s0 + $0x50] sm:$0xf]
  %v50 = vld [vmem:[%s0 + $0x54] sm:$0xff]
  %v51 = vld [vmem:[%s0 + $0x5c] sm:$0xf]
  %v52 = vld [vmem:[%s1] sm:$0xf]
  %v53 = vld [vmem:[%s1 + $0x4] sm:$0xf]
  %v54 = vld [vmem:[%s1 + $0x8] sm:$0xf]
  %v55 = vld [vmem:[%s1 + $0xc] sm:$0xf]
  %v56 = vld [vmem:[%s1 + $0x10] sm:$0xf]
  %v57 = vld [vmem:[%s1 + $0x14] sm:$0xf]
  %v58 = vld [vmem:[%s1 + $0x18] sm:$0xf]
  %v59 = vld [vmem:[%s1 + $0x1c] sm:$0xf]
  %v60 = vld [vmem:[%s1 + $0x20] sm:$0xf]
  %v61 = vld [vmem:[%s1 + $0x24] sm:$0xf]
  %v62 = vld [vmem:[%s1 + $0x28] sm:$0xf]
  %v63 = vld [vmem:[%s1 + $0x2c] sm:$0xf]
  %v64 = vld [vmem:[%s1 + $0x30] sm:$0xf]
  %v65 = vld [vmem:[%s1 + $0x34] sm:$0xf]
  %v66 = vld [vmem:[%s1 + $0x38] sm:$0xf]
  %v67 = vld [vmem:[%s1 + $0x3c] sm:$0xf]
  %v68 = vld [vmem:[%s1 + $0x40] sm:$0xf]
  %v69 = vld [vmem:[%s1 + $0x44] sm:$0xf]
  %v70 = vld [vmem:[%s1 + $0x48] sm:$0xf]
  %v71 = vld [vmem:[%s1 + $0x4c] sm:$0xf]
  %v72 = vld [vmem:[%s1 + $0x50] sm:$0xf]
  %v73 = vld [vmem:[%s1 + $0x54] sm:$0xf]
  %v74 = vld [vmem:[%s1 + $0x58] sm:$0xf]
  %v75 = vld [vmem:[%s1 + $0x5c] sm:$0xf]
  %v76 = vld [vmem:[%s1 + $0x60] sm:$0xf]
  %v77 = vld [vmem:[%s1 + $0x64] sm:$0xf]
  %v78 = vld [vmem:[%s1 + $0x68] sm:$0xf]
  %v79 = vld [vmem:[%s1 + $0x6c] sm:$0xf]
  %v80 = vld [vmem:[%s1 + $0x70] sm:$0xf]
  %v81 = vld [vmem:[%s1 + $0x74] sm:$0xf]
  %v82 = vld [vmem:[%s1 + $0x78] sm:$0xf]
  %v83 = vld [vmem:[%s1 + $0x7c] sm:$0xf]
  %v84 = vld [vmem:[%s1 + $0x80] sm:$0xf]
  %v85 = vld [vmem:[%s1 + $0x84] sm:$0xf]
  %v86 = vld [vmem:[%s1 + $0x88] sm:$0xf]
  %v87 = vld [vmem:[%s1 + $0x8c] sm:$0xf]
  %v104 = vunpack.c.l.b16 %v36
  %v105 = vunpack.c.h.b16 %v36
  %v106 = vunpack.c.l.b16 %v37
  %v107 = vunpack.c.l.b16 %v38
  %v108 = vunpack.c.h.b16 %v38
  %v109 = vunpack.c.l.b16 %v39
  %v110 = vunpack.c.l.b16 %v40
  %v111 = vunpack.c.h.b16 %v40
  %v112 = vunpack.c.l.b16 %v41
  %v113 = vunpack.c.l.b16 %v42
  %v114 = vunpack.c.h.b16 %v42
  %v115 = vunpack.c.l.b16 %v43
  %v116 = vunpack.c.l.b16 %v44
  %v117 = vunpack.c.h.b16 %v44
  %v118 = vunpack.c.l.b16 %v45
  %v119 = vunpack.c.l.b16 %v46
  %v120 = vunpack.c.h.b16 %v46
  %v121 = vunpack.c.l.b16 %v47
  %v122 = vunpack.c.l.b16 %v48
  %v123 = vunpack.c.h.b16 %v48
  %v124 = vunpack.c.l.b16 %v49
  %v125 = vunpack.c.l.b16 %v50
  %v126 = vunpack.c.h.b16 %v50
  %v127 = vunpack.c.l.b16 %v51
  %v128 = vpack.c.b16 %v107, %v104
  %v129 = vpack.c.b16 %v108, %v105
  %v130 = vpack.c.b16 %v109, %v106
  %v131 = vpack.c.b16 %v113, %v110
  %v132 = vpack.c.b16 %v114, %v111
  %v133 = vpack.c.b16 %v115, %v112
  %v134 = vpack.c.b16 %v119, %v116
  %v135 = vpack.c.b16 %v120, %v117
  %v136 = vpack.c.b16 %v121, %v118
  %v137 = vpack.c.b16 %v125, %v122
  %v138 = vpack.c.b16 %v126, %v123
  %v139 = vpack.c.b16 %v127, %v124
  %v184 = vunpack.c.l.b16 %v52
  %v185 = vunpack.c.l.b16 %v53
  %v186 = vunpack.c.l.b16 %v54
  %v187 = vunpack.c.l.b16 %v55
  %v188 = vunpack.c.l.b16 %v56
  %v189 = vunpack.c.l.b16 %v57
  %v190 = vunpack.c.l.b16 %v58
  %v191 = vunpack.c.l.b16 %v59
  %v192 = vunpack.c.l.b16 %v60
  %v193 = vunpack.c.l.b16 %v61
  %v194 = vunpack.c.l.b16 %v62
  %v195 = vunpack.c.l.b16 %v63
  %v196 = vunpack.c.l.b16 %v64
  %v197 = vunpack.c.l.b16 %v65
  %v198 = vunpack.c.l.b16 %v66
  %v199 = vunpack.c.l.b16 %v67
  %v200 = vunpack.c.l.b16 %v68
  %v201 = vunpack.c.l.b16 %v69
  %v202 = vunpack.c.l.b16 %v70
  %v203 = vunpack.c.l.b16 %v71
  %v204 = vunpack.c.l.b16 %v72
  %v205 = vunpack.c.l.b16 %v73
  %v206 = vunpack.c.l.b16 %v74
  %v207 = vunpack.c.l.b16 %v75
  %v208 = vunpack.c.l.b16 %v76
  %v209 = vunpack.c.l.b16 %v77
  %v210 = vunpack.c.l.b16 %v78
  %v211 = vunpack.c.l.b16 %v79
  %v212 = vunpack.c.l.b16 %v80
  %v213 = vunpack.c.l.b16 %v81
  %v214 = vunpack.c.l.b16 %v82
  %v215 = vunpack.c.l.b16 %v83
  %v216 = vunpack.c.l.b16 %v84
  %v217 = vunpack.c.l.b16 %v85
  %v218 = vunpack.c.l.b16 %v86
  %v219 = vunpack.c.l.b16 %v87
  %v220 = vpack.c.b16 %v185, %v184
  %v221 = vpack.c.b16 %v187, %v186
  %v222 = vpack.c.b16 %v189, %v188
  %v223 = vpack.c.b16 %v191, %v190
  %v224 = vpack.c.b16 %v193, %v192
  %v225 = vpack.c.b16 %v195, %v194
  %v226 = vpack.c.b16 %v197, %v196
  %v227 = vpack.c.b16 %v199, %v198
  %v228 = vpack.c.b16 %v201, %v200
  %v229 = vpack.c.b16 %v203, %v202
  %v230 = vpack.c.b16 %v205, %v204
  %v231 = vpack.c.b16 %v207, %v206
  %v232 = vpack.c.b16 %v209, %v208
  %v233 = vpack.c.b16 %v211, %v210
  %v234 = vpack.c.b16 %v213, %v212
  %v235 = vpack.c.b16 %v215, %v214
  %v236 = vpack.c.b16 %v217, %v216
  %v237 = vpack.c.b16 %v219, %v218
  %vm256 = vcmask 261120
  %v258 = vsel %vm256, %v130, 0
  %v261 = vsel %vm256, %v133, 0
  %v264 = vsel %vm256, %v136, 0
  %v267 = vsel %vm256, %v139, 0
  %269 = vmatprep.subr.bf16.mxu0 0
  %270 = vmatpush1.bf16.msra.mxu0 %v227
  %271 = vmatprep.subr.bf16.mxu0 0
  %272 = vmatpush1.bf16.msra.mxu0 %v226
  %273 = vmatprep.subr.bf16.mxu0 0
  %274 = vmatpush1.bf16.msra.mxu0 %v225
  %275 = vmatprep.subr.bf16.mxu0 0
  %276 = vmatpush1.bf16.msra.mxu0 %v224
  %277 = vmatprep.subr.bf16.mxu0 0
  %278 = vmatpush1.bf16.msra.mxu0 %v223
  %279 = vmatprep.subr.bf16.mxu0 0
  %280 = vmatpush1.bf16.msra.mxu0 %v222
  %281 = vmatprep.subr.bf16.mxu0 0
  %282 = vmatpush1.bf16.msra.mxu0 %v221
  %283 = vmatprep.subr.bf16.mxu0 0
  %284 = vmatpush1.bf16.msra.mxu0 %v220
  %285 = vmatprep.subr.bf16.mxu0 0
  %286 = vmatpush2.bf16.msra.mxu0 %v235
  %287 = vmatprep.subr.bf16.mxu0 0
  %288 = vmatpush2.bf16.msra.mxu0 %v234
  %289 = vmatprep.subr.bf16.mxu0 0
  %290 = vmatpush2.bf16.msra.mxu0 %v233
  %291 = vmatprep.subr.bf16.mxu0 0
  %292 = vmatpush2.bf16.msra.mxu0 %v232
  %293 = vmatprep.subr.bf16.mxu0 0
  %294 = vmatpush2.bf16.msra.mxu0 %v231
  %295 = vmatprep.subr.bf16.mxu0 0
  %296 = vmatpush2.bf16.msra.mxu0 %v230
  %297 = vmatprep.subr.bf16.mxu0 0
  %298 = vmatpush2.bf16.msra.mxu0 %v229
  %299 = vmatprep.subr.bf16.mxu0 0
  %300 = vmatpush2.bf16.msra.mxu0 %v228
  %301 = vmatprep.mubr.bf16.mxu0 %v129
  %302 = vmatmul.mubr.bf16.gmra.mxu0 %v128
  %v303 = vpop.f32.mrf.mxu0
  %v304 = vadd.f32 0.0, %v303
  %v305 = vpop.f32.mrf.mxu0
  %v306 = vpop.f32.mrf.mxu0
  %v307 = vadd.f32 0.0, %v306
  %v308 = vpop.f32.mrf.mxu0
  %309 = vmatprep.mubr.bf16.mxu0 %v132
  %310 = vmatmul.mubr.bf16.gmra.mxu0 %v131
  %v311 = vpop.f32.mrf.mxu0
  %v312 = vadd.f32 0.0, %v311
  %v313 = vpop.f32.mrf.mxu0
  %v314 = vpop.f32.mrf.mxu0
  %v315 = vadd.f32 0.0, %v314
  %v316 = vpop.f32.mrf.mxu0
  %317 = vmatprep.mubr.bf16.mxu0 %v135
  %318 = vmatmul.mubr.bf16.gmra.mxu0 %v134
  %v319 = vpop.f32.mrf.mxu0
  %v320 = vadd.f32 0.0, %v319
  %v321 = vpop.f32.mrf.mxu0
  %v322 = vpop.f32.mrf.mxu0
  %v323 = vadd.f32 0.0, %v322
  %v324 = vpop.f32.mrf.mxu0
  %325 = vmatprep.mubr.bf16.mxu0 %v138
  %326 = vmatmul.mubr.bf16.gmra.mxu0 %v137
  %v327 = vpop.f32.mrf.mxu0
  %v328 = vadd.f32 0.0, %v327
  %v329 = vpop.f32.mrf.mxu0
  %v330 = vpop.f32.mrf.mxu0
  %v331 = vadd.f32 0.0, %v330
  %v332 = vpop.f32.mrf.mxu0
  %333 = vdwg.mxu0
  %334 = vmatprep.subr.bf16.mxu0 0
  %335 = vmatpush1.bf16.msra.mxu0 0
  %336 = vmatprep.subr.bf16.mxu0 0
  %337 = vmatpush1.bf16.msra.mxu0 0
  %338 = vmatprep.subr.bf16.mxu0 0
  %339 = vmatpush1.bf16.msra.mxu0 0
  %340 = vmatprep.subr.bf16.mxu0 0
  %341 = vmatpush1.bf16.msra.mxu0 0
  %342 = vmatprep.subr.bf16.mxu0 0
  %343 = vmatpush1.bf16.msra.mxu0 0
  %344 = vmatprep.subr.bf16.mxu0 0
  %345 = vmatpush1.bf16.msra.mxu0 0
  %346 = vmatprep.subr.bf16.mxu0 0
  %347 = vmatpush1.bf16.msra.mxu0 %v237
  %348 = vmatprep.subr.bf16.mxu0 0
  %349 = vmatpush1.bf16.msra.mxu0 %v236
  %350 = vmatprep.subr.bf16.mxu0 0
  %351 = vmatpush2.bf16.msra.mxu0 0
  %352 = vmatprep.subr.bf16.mxu0 0
  %353 = vmatpush2.bf16.msra.mxu0 0
  %354 = vmatprep.subr.bf16.mxu0 0
  %355 = vmatpush2.bf16.msra.mxu0 0
  %356 = vmatprep.subr.bf16.mxu0 0
  %357 = vmatpush2.bf16.msra.mxu0 0
  %358 = vmatprep.subr.bf16.mxu0 0
  %359 = vmatpush2.bf16.msra.mxu0 0
  %360 = vmatprep.subr.bf16.mxu0 0
  %361 = vmatpush2.bf16.msra.mxu0 0
  %362 = vmatprep.subr.bf16.mxu0 0
  %363 = vmatpush2.bf16.msra.mxu0 0
  %364 = vmatprep.subr.bf16.mxu0 0
  %365 = vmatpush2.bf16.msra.mxu0 0
  %366 = vmatprep.mubr.bf16.mxu0 0
  %367 = vmatmul.mubr.bf16.gmra.mxu0 %v258
  %v368 = vpop.f32.mrf.mxu0
  %v369 = vadd.f32 %v304, %v368
  %v370 = vpop.f32.mrf.mxu0
  %v371 = vpop.f32.mrf.mxu0
  %v372 = vadd.f32 %v307, %v371
  %v373 = vpop.f32.mrf.mxu0
  %374 = vmatprep.mubr.bf16.mxu0 0
  %375 = vmatmul.mubr.bf16.gmra.mxu0 %v261
  %v376 = vpop.f32.mrf.mxu0
  %v377 = vadd.f32 %v312, %v376
  %v378 = vpop.f32.mrf.mxu0
  %v379 = vpop.f32.mrf.mxu0
  %v380 = vadd.f32 %v315, %v379
  %v381 = vpop.f32.mrf.mxu0
  %382 = vmatprep.mubr.bf16.mxu0 0
  %383 = vmatmul.mubr.bf16.gmra.mxu0 %v264
  %v384 = vpop.f32.mrf.mxu0
  %v385 = vadd.f32 %v320, %v384
  %v386 = vpop.f32.mrf.mxu0
  %v387 = vpop.f32.mrf.mxu0
  %v388 = vadd.f32 %v323, %v387
  %v389 = vpop.f32.mrf.mxu0
  %390 = vmatprep.mubr.bf16.mxu0 0
  %391 = vmatmul.mubr.bf16.gmra.mxu0 %v267
  %v392 = vpop.f32.mrf.mxu0
  %v393 = vadd.f32 %v328, %v392
  %v394 = vpop.f32.mrf.mxu0
  %v395 = vpop.f32.mrf.mxu0
  %v396 = vadd.f32 %v331, %v395
  %v397 = vpop.f32.mrf.mxu0
  %398 = vdwg.mxu0
  %v399 = vadd.f32 %v28, %v369
  %v400 = vadd.f32 %v29, %v372
  %v401 = vadd.f32 %v30, %v377
  %v402 = vadd.f32 %v31, %v380
  %v403 = vadd.f32 %v32, %v385
  %v404 = vadd.f32 %v33, %v388
  %v405 = vadd.f32 %v34, %v393
  %v406 = vadd.f32 %v35, %v396
  %407 = vst.msk [vmem:[#allocation2] sm:$0xff] %vm256, %v399
  %408 = vst.msk [vmem:[#allocation2 + $0x8] sm:$0xff] %vm256, %v400
  %409 = vst.msk [vmem:[#allocation2 + $0x10] sm:$0xff] %vm256, %v401
  %410 = vst.msk [vmem:[#allocation2 + $0x18] sm:$0xff] %vm256, %v402
  %411 = vst.msk [vmem:[#allocation2 + $0x20] sm:$0xff] %vm256, %v403
  %412 = vst.msk [vmem:[#allocation2 + $0x28] sm:$0xff] %vm256, %v404
  %413 = vst.msk [vmem:[#allocation2 + $0x30] sm:$0xff] %vm256, %v405
  %414 = vst.msk [vmem:[#allocation2 + $0x38] sm:$0xff] %vm256, %v406
  // Predicated region
  $region18: #{_lambda_.26} parent=0 // pred_check
    %p415 = pneg %p15
  $region19: #{_lambda_.26} parent=0 // pred_check_branch
    %417 = sbr.rel (%p415) target = $region21
  $region20: #{_lambda_.26} parent=0 // pred_region
    %v418 = vld [vmem:[#allocation2] sm:$0xff]
    %v419 = vld [vmem:[#allocation2 + $0x8] sm:$0xff]
    %v420 = vld [vmem:[#allocation2 + $0x10] sm:$0xff]
    %v421 = vld [vmem:[#allocation2 + $0x18] sm:$0xff]
    %v422 = vld [vmem:[#allocation2 + $0x20] sm:$0xff]
    %v423 = vld [vmem:[#allocation2 + $0x28] sm:$0xff]
    %v424 = vld [vmem:[#allocation2 + $0x30] sm:$0xff]
    %v425 = vld [vmem:[#allocation2 + $0x38] sm:$0xff]
    %v426 = vld [vmem:[%s2] sm:$0x1]
    %v428 = vlaneseq
    %v429 = vshrl.u32 %v428, 7
    %v430 = vsub.s32 0, %v429
    %v431 = vrot.slane %v426, %v430
    %v433 = vadd.f32 %v418, %v431
    %v434 = vadd.f32 %v419, %v431
    %v435 = vadd.f32 %v420, %v431
    %v436 = vadd.f32 %v421, %v431
    %v437 = vadd.f32 %v422, %v431
    %v438 = vadd.f32 %v423, %v431
    %v439 = vadd.f32 %v424, %v431
    %v440 = vadd.f32 %v425, %v431
    %v441 = vmax.f32 %v433, 0.0
    %v442 = vmax.f32 %v434, 0.0
    %v443 = vmax.f32 %v435, 0.0
    %v444 = vmax.f32 %v436, 0.0
    %v445 = vmax.f32 %v437, 0.0
    %v446 = vmax.f32 %v438, 0.0
    %v447 = vmax.f32 %v439, 0.0
    %v448 = vmax.f32 %v440, 0.0
    %449 = vst.msk [vmem:[%s3] sm:$0xff] %vm256, %v441
    %450 = vst.msk [vmem:[%s3 + $0x8] sm:$0xff] %vm256, %v442
    %451 = vst.msk [vmem:[%s3 + $0x10] sm:$0xff] %vm256, %v443
    %452 = vst.msk [vmem:[%s3 + $0x18] sm:$0xff] %vm256, %v444
    %453 = vst.msk [vmem:[%s3 + $0x20] sm:$0xff] %vm256, %v445
    %454 = vst.msk [vmem:[%s3 + $0x28] sm:$0xff] %vm256, %v446
    %455 = vst.msk [vmem:[%s3 + $0x30] sm:$0xff] %vm256, %v447
    %456 = vst.msk [vmem:[%s3 + $0x38] sm:$0xff] %vm256, %v448
  $region21: #{_lambda_.26} parent=0 // pred_fallthru
    _
  // Predicated region
  $region22: #{_lambda_.26} parent=0 // pred_check
    _
  $region23: #{_lambda_.26} parent=0 // pred_check_branch
    %458 = sbr.rel (0) target = $region25
  $region24: #{_lambda_.26} parent=0 // pred_region
    _
  $region25: #{_lambda_.26} parent=0 // pred_fallthru
    _
  // Predicated region
  $region26: #{_lambda_.26} parent=0 // pred_check
    _
  $region27: #{_lambda_.26} parent=0 // pred_check_branch
    %460 = sbr.rel (0) target = $region29
  $region28: #{_lambda_.26} parent=0 // pred_region
    _
  $region29: #{_lambda_.26} parent=0 // pred_fallthru
    _

// kernel: _lambda_.25
$region0: #{_lambda_.25}
  #allocation0 [shape = 'u32[]', space=smem, size = 0x4, offset = 0x4, fixed_abs, tag = 'smem constant byte address 0x4 - core index']
  #allocation1 [shape = 'u32[144,128]{1,0:T(1,128)}', space=vmem, size = 0x12000, scoped, tag = 'internal scratch']
  #allocation2 [shape = 'f32[64,32]{1,0:T(8,128)}', space=vmem, size = 0x8000, scoped, tag = 'scratch operand']
  %s0 = inlined_call_operand.vmem [shape: bf16[64,576], index: 0, kind: input, shape index: {}]
  %s1 = inlined_call_operand.vmem [shape: bf16[576,32], index: 1, kind: input, shape index: {}]
  %s2 = inlined_call_operand.vmem [shape: f32[1,32], index: 2, kind: input, shape index: {}]
  %s3 = inlined_call_operand.vmem [shape: f32[64,32], index: 3, kind: output, shape index: {}]
  %s4 = sld [smem:[#allocation0]]
  $region30: #{_lambda_.25} parent=0
    _
  %s6 = ssub.s32 1, %s4
  %s7 = scalar_select 0, %s6, %s4
  // Predicated region
  $region2: #{_lambda_.25} parent=0 // pred_check
    _
  $region3: #{_lambda_.25} parent=0 // pred_check_branch
    %9 = sbr.rel (0) target = $region5
  $region4: #{_lambda_.25} parent=0 // pred_region
    _
  $region5: #{_lambda_.25} parent=0 // pred_fallthru
    _
  // Predicated region
  $region6: #{_lambda_.25} parent=0 // pred_check
    _
  $region7: #{_lambda_.25} parent=0 // pred_check_branch
    %11 = sbr.rel (0) target = $region9
  $region8: #{_lambda_.25} parent=0 // pred_region
    _
  $region9: #{_lambda_.25} parent=0 // pred_fallthru
    _
  // Predicated region
  $region10: #{_lambda_.25} parent=0 // pred_check
    _
  $region11: #{_lambda_.25} parent=0 // pred_check_branch
    %13 = sbr.rel (0) target = $region13
  $region12: #{_lambda_.25} parent=0 // pred_region
    _
  $region13: #{_lambda_.25} parent=0 // pred_fallthru
    _
  %p15 = scmp.eq.s32.totalorder 0, 0
  // Predicated region
  $region14: #{_lambda_.25} parent=0 // pred_check
    %p16 = pneg %p15
  $region15: #{_lambda_.25} parent=0 // pred_check_branch
    %18 = sbr.rel (%p16) target = $region17
  $region16: #{_lambda_.25} parent=0 // pred_region
    %vm19 = vcmask 261120
    %20 = vst.msk [vmem:[#allocation2] sm:$0xff] %vm19, 0.0
    %21 = vst.msk [vmem:[#allocation2 + $0x8] sm:$0xff] %vm19, 0.0
    %22 = vst.msk [vmem:[#allocation2 + $0x10] sm:$0xff] %vm19, 0.0
    %23 = vst.msk [vmem:[#allocation2 + $0x18] sm:$0xff] %vm19, 0.0
    %24 = vst.msk [vmem:[#allocation2 + $0x20] sm:$0xff] %vm19, 0.0
    %25 = vst.msk [vmem:[#allocation2 + $0x28] sm:$0xff] %vm19, 0.0
    %26 = vst.msk [vmem:[#allocation2 + $0x30] sm:$0xff] %vm19, 0.0
    %27 = vst.msk [vmem:[#allocation2 + $0x38] sm:$0xff] %vm19, 0.0
  $region17: #{_lambda_.25} parent=0 // pred_fallthru
    _
  %v28 = vld [vmem:[#allocation2] sm:$0xff]
  %v29 = vld [vmem:[#allocation2 + $0x8] sm:$0xff]
  %v30 = vld [vmem:[#allocation2 + $0x10] sm:$0xff]
  %v31 = vld [vmem:[#allocation2 + $0x18] sm:$0xff]
  %v32 = vld [vmem:[#allocation2 + $0x20] sm:$0xff]
  %v33 = vld [vmem:[#allocation2 + $0x28] sm:$0xff]
  %v34 = vld [vmem:[#allocation2 + $0x30] sm:$0xff]
  %v35 = vld [vmem:[#allocation2 + $0x38] sm:$0xff]
  %v36 = vld [vmem:[%s0] sm:$0xff]
  %v37 = vld [vmem:[%s0 + $0x8] sm:$0xff]
  %v38 = vld [vmem:[%s0 + $0x10] sm:$0xf]
  %v39 = vld [vmem:[%s0 + $0x14] sm:$0xff]
  %v40 = vld [vmem:[%s0 + $0x1c] sm:$0xff]
  %v41 = vld [vmem:[%s0 + $0x24] sm:$0xf]
  %v42 = vld [vmem:[%s0 + $0x28] sm:$0xff]
  %v43 = vld [vmem:[%s0 + $0x30] sm:$0xff]
  %v44 = vld [vmem:[%s0 + $0x38] sm:$0xf]
  %v45 = vld [vmem:[%s0 + $0x3c] sm:$0xff]
  %v46 = vld [vmem:[%s0 + $0x44] sm:$0xff]
  %v47 = vld [vmem:[%s0 + $0x4c] sm:$0xf]
  %v48 = vld [vmem:[%s0 + $0x50] sm:$0xff]
  %v49 = vld [vmem:[%s0 + $0x58] sm:$0xff]
  %v50 = vld [vmem:[%s0 + $0x60] sm:$0xf]
  %v51 = vld [vmem:[%s0 + $0x64] sm:$0xff]
  %v52 = vld [vmem:[%s0 + $0x6c] sm:$0xff]
  %v53 = vld [vmem:[%s0 + $0x74] sm:$0xf]
  %v54 = vld [vmem:[%s0 + $0x78] sm:$0xff]
  %v55 = vld [vmem:[%s0 + $0x80] sm:$0xff]
  %v56 = vld [vmem:[%s0 + $0x88] sm:$0xf]
  %v57 = vld [vmem:[%s0 + $0x8c] sm:$0xff]
  %v58 = vld [vmem:[%s0 + $0x94] sm:$0xff]
  %v59 = vld [vmem:[%s0 + $0x9c] sm:$0xf]
  %v60 = vld [vmem:[%s1] sm:$0xf]
  %v61 = vld [vmem:[%s1 + $0x4] sm:$0xf]
  %v62 = vld [vmem:[%s1 + $0x8] sm:$0xf]
  %v63 = vld [vmem:[%s1 + $0xc] sm:$0xf]
  %v64 = vld [vmem:[%s1 + $0x10] sm:$0xf]
  %v65 = vld [vmem:[%s1 + $0x14] sm:$0xf]
  %v66 = vld [vmem:[%s1 + $0x18] sm:$0xf]
  %v67 = vld [vmem:[%s1 + $0x1c] sm:$0xf]
  %v68 = vld [vmem:[%s1 + $0x20] sm:$0xf]
  %v69 = vld [vmem:[%s1 + $0x24] sm:$0xf]
  %v70 = vld [vmem:[%s1 + $0x28] sm:$0xf]
  %v71 = vld [vmem:[%s1 + $0x2c] sm:$0xf]
  %v72 = vld [vmem:[%s1 + $0x30] sm:$0xf]
  %v73 = vld [vmem:[%s1 + $0x34] sm:$0xf]
  %v74 = vld [vmem:[%s1 + $0x38] sm:$0xf]
  %v75 = vld [vmem:[%s1 + $0x3c] sm:$0xf]
  %v76 = vld [vmem:[%s1 + $0x40] sm:$0xf]
  %v77 = vld [vmem:[%s1 + $0x44] sm:$0xf]
  %v78 = vld [vmem:[%s1 + $0x48] sm:$0xf]
  %v79 = vld [vmem:[%s1 + $0x4c] sm:$0xf]
  %v80 = vld [vmem:[%s1 + $0x50] sm:$0xf]
  %v81 = vld [vmem:[%s1 + $0x54] sm:$0xf]
  %v82 = vld [vmem:[%s1 + $0x58] sm:$0xf]
  %v83 = vld [vmem:[%s1 + $0x5c] sm:$0xf]
  %v84 = vld [vmem:[%s1 + $0x60] sm:$0xf]
  %v85 = vld [vmem:[%s1 + $0x64] sm:$0xf]
  %v86 = vld [vmem:[%s1 + $0x68] sm:$0xf]
  %v87 = vld [vmem:[%s1 + $0x6c] sm:$0xf]
  %v88 = vld [vmem:[%s1 + $0x70] sm:$0xf]
  %v89 = vld [vmem:[%s1 + $0x74] sm:$0xf]
  %v90 = vld [vmem:[%s1 + $0x78] sm:$0xf]
  %v91 = vld [vmem:[%s1 + $0x7c] sm:$0xf]
  %v92 = vld [vmem:[%s1 + $0x80] sm:$0xf]
  %v93 = vld [vmem:[%s1 + $0x84] sm:$0xf]
  %v94 = vld [vmem:[%s1 + $0x88] sm:$0xf]
  %v95 = vld [vmem:[%s1 + $0x8c] sm:$0xf]
  %v96 = vld [vmem:[%s1 + $0x90] sm:$0xf]
  %v97 = vld [vmem:[%s1 + $0x94] sm:$0xf]
  %v98 = vld [vmem:[%s1 + $0x98] sm:$0xf]
  %v99 = vld [vmem:[%s1 + $0x9c] sm:$0xf]
  %v100 = vld [vmem:[%s1 + $0xa0] sm:$0xf]
  %v101 = vld [vmem:[%s1 + $0xa4] sm:$0xf]
  %v102 = vld [vmem:[%s1 + $0xa8] sm:$0xf]
  %v103 = vld [vmem:[%s1 + $0xac] sm:$0xf]
  %v104 = vld [vmem:[%s1 + $0xb0] sm:$0xf]
  %v105 = vld [vmem:[%s1 + $0xb4] sm:$0xf]
  %v106 = vld [vmem:[%s1 + $0xb8] sm:$0xf]
  %v107 = vld [vmem:[%s1 + $0xbc] sm:$0xf]
  %v108 = vld [vmem:[%s1 + $0xc0] sm:$0xf]
  %v109 = vld [vmem:[%s1 + $0xc4] sm:$0xf]
  %v110 = vld [vmem:[%s1 + $0xc8] sm:$0xf]
  %v111 = vld [vmem:[%s1 + $0xcc] sm:$0xf]
  %v112 = vld [vmem:[%s1 + $0xd0] sm:$0xf]
  %v113 = vld [vmem:[%s1 + $0xd4] sm:$0xf]
  %v114 = vld [vmem:[%s1 + $0xd8] sm:$0xf]
  %v115 = vld [vmem:[%s1 + $0xdc] sm:$0xf]
  %v116 = vld [vmem:[%s1 + $0xe0] sm:$0xf]
  %v117 = vld [vmem:[%s1 + $0xe4] sm:$0xf]
  %v118 = vld [vmem:[%s1 + $0xe8] sm:$0xf]
  %v119 = vld [vmem:[%s1 + $0xec] sm:$0xf]
  %v120 = vld [vmem:[%s1 + $0xf0] sm:$0xf]
  %v121 = vld [vmem:[%s1 + $0xf4] sm:$0xf]
  %v122 = vld [vmem:[%s1 + $0xf8] sm:$0xf]
  %v123 = vld [vmem:[%s1 + $0xfc] sm:$0xf]
  %v124 = vld [vmem:[%s1 + $0x100] sm:$0xf]
  %v125 = vld [vmem:[%s1 + $0x104] sm:$0xf]
  %v126 = vld [vmem:[%s1 + $0x108] sm:$0xf]
  %v127 = vld [vmem:[%s1 + $0x10c] sm:$0xf]
  %v128 = vld [vmem:[%s1 + $0x110] sm:$0xf]
  %v129 = vld [vmem:[%s1 + $0x114] sm:$0xf]
  %v130 = vld [vmem:[%s1 + $0x118] sm:$0xf]
  %v131 = vld [vmem:[%s1 + $0x11c] sm:$0xf]
  %v156 = vunpack.c.l.b16 %v36
  %v157 = vunpack.c.h.b16 %v36
  %v158 = vunpack.c.l.b16 %v37
  %v159 = vunpack.c.h.b16 %v37
  %v160 = vunpack.c.l.b16 %v38
  %v161 = vunpack.c.l.b16 %v39
  %v162 = vunpack.c.h.b16 %v39
  %v163 = vunpack.c.l.b16 %v40
  %v164 = vunpack.c.h.b16 %v40
  %v165 = vunpack.c.l.b16 %v41
  %v166 = vunpack.c.l.b16 %v42
  %v167 = vunpack.c.h.b16 %v42
  %v168 = vunpack.c.l.b16 %v43
  %v169 = vunpack.c.h.b16 %v43
  %v170 = vunpack.c.l.b16 %v44
  %v171 = vunpack.c.l.b16 %v45
  %v172 = vunpack.c.h.b16 %v45
  %v173 = vunpack.c.l.b16 %v46
  %v174 = vunpack.c.h.b16 %v46
  %v175 = vunpack.c.l.b16 %v47
  %v176 = vunpack.c.l.b16 %v48
  %v177 = vunpack.c.h.b16 %v48
  %v178 = vunpack.c.l.b16 %v49
  %v179 = vunpack.c.h.b16 %v49
  %v180 = vunpack.c.l.b16 %v50
  %v181 = vunpack.c.l.b16 %v51
  %v182 = vunpack.c.h.b16 %v51
  %v183 = vunpack.c.l.b16 %v52
  %v184 = vunpack.c.h.b16 %v52
  %v185 = vunpack.c.l.b16 %v53
  %v186 = vunpack.c.l.b16 %v54
  %v187 = vunpack.c.h.b16 %v54
  %v188 = vunpack.c.l.b16 %v55
  %v189 = vunpack.c.h.b16 %v55
  %v190 = vunpack.c.l.b16 %v56
  %v191 = vunpack.c.l.b16 %v57
  %v192 = vunpack.c.h.b16 %v57
  %v193 = vunpack.c.l.b16 %v58
  %v194 = vunpack.c.h.b16 %v58
  %v195 = vunpack.c.l.b16 %v59
  %v196 = vpack.c.b16 %v161, %v156
  %v197 = vpack.c.b16 %v162, %v157
  %v198 = vpack.c.b16 %v163, %v158
  %v199 = vpack.c.b16 %v164, %v159
  %v200 = vpack.c.b16 %v165, %v160
  %v201 = vpack.c.b16 %v171, %v166
  %v202 = vpack.c.b16 %v172, %v167
  %v203 = vpack.c.b16 %v173, %v168
  %v204 = vpack.c.b16 %v174, %v169
  %v205 = vpack.c.b16 %v175, %v170
  %v206 = vpack.c.b16 %v181, %v176
  %v207 = vpack.c.b16 %v182, %v177
  %v208 = vpack.c.b16 %v183, %v178
  %v209 = vpack.c.b16 %v184, %v179
  %v210 = vpack.c.b16 %v185, %v180
  %v211 = vpack.c.b16 %v191, %v186
  %v212 = vpack.c.b16 %v192, %v187
  %v213 = vpack.c.b16 %v193, %v188
  %v214 = vpack.c.b16 %v194, %v189
  %v215 = vpack.c.b16 %v195, %v190
  %v304 = vunpack.c.l.b16 %v60
  %v305 = vunpack.c.l.b16 %v61
  %v306 = vunpack.c.l.b16 %v62
  %v307 = vunpack.c.l.b16 %v63
  %v308 = vunpack.c.l.b16 %v64
  %v309 = vunpack.c.l.b16 %v65
  %v310 = vunpack.c.l.b16 %v66
  %v311 = vunpack.c.l.b16 %v67
  %v312 = vunpack.c.l.b16 %v68
  %v313 = vunpack.c.l.b16 %v69
  %v314 = vunpack.c.l.b16 %v70
  %v315 = vunpack.c.l.b16 %v71
  %v316 = vunpack.c.l.b16 %v72
  %v317 = vunpack.c.l.b16 %v73
  %v318 = vunpack.c.l.b16 %v74
  %v319 = vunpack.c.l.b16 %v75
  %v320 = vunpack.c.l.b16 %v76
  %v321 = vunpack.c.l.b16 %v77
  %v322 = vunpack.c.l.b16 %v78
  %v323 = vunpack.c.l.b16 %v79
  %v324 = vunpack.c.l.b16 %v80
  %v325 = vunpack.c.l.b16 %v81
  %v326 = vunpack.c.l.b16 %v82
  %v327 = vunpack.c.l.b16 %v83
  %v328 = vunpack.c.l.b16 %v84
  %v329 = vunpack.c.l.b16 %v85
  %v330 = vunpack.c.l.b16 %v86
  %v331 = vunpack.c.l.b16 %v87
  %v332 = vunpack.c.l.b16 %v88
  %v333 = vunpack.c.l.b16 %v89
  %v334 = vunpack.c.l.b16 %v90
  %v335 = vunpack.c.l.b16 %v91
  %v336 = vunpack.c.l.b16 %v92
  %v337 = vunpack.c.l.b16 %v93
  %v338 = vunpack.c.l.b16 %v94
  %v339 = vunpack.c.l.b16 %v95
  %v340 = vunpack.c.l.b16 %v96
  %v341 = vunpack.c.l.b16 %v97
  %v342 = vunpack.c.l.b16 %v98
  %v343 = vunpack.c.l.b16 %v99
  %v344 = vunpack.c.l.b16 %v100
  %v345 = vunpack.c.l.b16 %v101
  %v346 = vunpack.c.l.b16 %v102
  %v347 = vunpack.c.l.b16 %v103
  %v348 = vunpack.c.l.b16 %v104
  %v349 = vunpack.c.l.b16 %v105
  %v350 = vunpack.c.l.b16 %v106
  %v351 = vunpack.c.l.b16 %v107
  %v352 = vunpack.c.l.b16 %v108
  %v353 = vunpack.c.l.b16 %v109
  %v354 = vunpack.c.l.b16 %v110
  %v355 = vunpack.c.l.b16 %v111
  %v356 = vunpack.c.l.b16 %v112
  %v357 = vunpack.c.l.b16 %v113
  %v358 = vunpack.c.l.b16 %v114
  %v359 = vunpack.c.l.b16 %v115
  %v360 = vunpack.c.l.b16 %v116
  %v361 = vunpack.c.l.b16 %v117
  %v362 = vunpack.c.l.b16 %v118
  %v363 = vunpack.c.l.b16 %v119
  %v364 = vunpack.c.l.b16 %v120
  %v365 = vunpack.c.l.b16 %v121
  %v366 = vunpack.c.l.b16 %v122
  %v367 = vunpack.c.l.b16 %v123
  %v368 = vunpack.c.l.b16 %v124
  %v369 = vunpack.c.l.b16 %v125
  %v370 = vunpack.c.l.b16 %v126
  %v371 = vunpack.c.l.b16 %v127
  %v372 = vunpack.c.l.b16 %v128
  %v373 = vunpack.c.l.b16 %v129
  %v374 = vunpack.c.l.b16 %v130
  %v375 = vunpack.c.l.b16 %v131
  %v376 = vpack.c.b16 %v305, %v304
  %v377 = vpack.c.b16 %v307, %v306
  %v378 = vpack.c.b16 %v309, %v308
  %v379 = vpack.c.b16 %v311, %v310
  %v380 = vpack.c.b16 %v313, %v312
  %v381 = vpack.c.b16 %v315, %v314
  %v382 = vpack.c.b16 %v317, %v316
  %v383 = vpack.c.b16 %v319, %v318
  %v384 = vpack.c.b16 %v321, %v320
  %v385 = vpack.c.b16 %v323, %v322
  %v386 = vpack.c.b16 %v325, %v324
  %v387 = vpack.c.b16 %v327, %v326
  %v388 = vpack.c.b16 %v329, %v328
  %v389 = vpack.c.b16 %v331, %v330
  %v390 = vpack.c.b16 %v333, %v332
  %v391 = vpack.c.b16 %v335, %v334
  %v392 = vpack.c.b16 %v337, %v336
  %v393 = vpack.c.b16 %v339, %v338
  %v394 = vpack.c.b16 %v341, %v340
  %v395 = vpack.c.b16 %v343, %v342
  %v396 = vpack.c.b16 %v345, %v344
  %v397 = vpack.c.b16 %v347, %v346
  %v398 = vpack.c.b16 %v349, %v348
  %v399 = vpack.c.b16 %v351, %v350
  %v400 = vpack.c.b16 %v353, %v352
  %v401 = vpack.c.b16 %v355, %v354
  %v402 = vpack.c.b16 %v357, %v356
  %v403 = vpack.c.b16 %v359, %v358
  %v404 = vpack.c.b16 %v361, %v360
  %v405 = vpack.c.b16 %v363, %v362
  %v406 = vpack.c.b16 %v365, %v364
  %v407 = vpack.c.b16 %v367, %v366
  %v408 = vpack.c.b16 %v369, %v368
  %v409 = vpack.c.b16 %v371, %v370
  %v410 = vpack.c.b16 %v373, %v372
  %v411 = vpack.c.b16 %v375, %v374
  %vm448 = vcmask 523264
  %v450 = vsel %vm448, %v200, 0
  %v453 = vsel %vm448, %v205, 0
  %v456 = vsel %vm448, %v210, 0
  %v459 = vsel %vm448, %v215, 0
  %461 = vmatprep.subr.bf16.mxu0 0
  %462 = vmatpush1.bf16.msra.mxu0 %v383
  %463 = vmatprep.subr.bf16.mxu0 0
  %464 = vmatpush1.bf16.msra.mxu0 %v382
  %465 = vmatprep.subr.bf16.mxu0 0
  %466 = vmatpush1.bf16.msra.mxu0 %v381
  %467 = vmatprep.subr.bf16.mxu0 0
  %468 = vmatpush1.bf16.msra.mxu0 %v380
  %469 = vmatprep.subr.bf16.mxu0 0
  %470 = vmatpush1.bf16.msra.mxu0 %v379
  %471 = vmatprep.subr.bf16.mxu0 0
  %472 = vmatpush1.bf16.msra.mxu0 %v378
  %473 = vmatprep.subr.bf16.mxu0 0
  %474 = vmatpush1.bf16.msra.mxu0 %v377
  %475 = vmatprep.subr.bf16.mxu0 0
  %476 = vmatpush1.bf16.msra.mxu0 %v376
  %477 = vmatprep.subr.bf16.mxu0 0
  %478 = vmatpush2.bf16.msra.mxu0 %v391
  %479 = vmatprep.subr.bf16.mxu0 0
  %480 = vmatpush2.bf16.msra.mxu0 %v390
  %481 = vmatprep.subr.bf16.mxu0 0
  %482 = vmatpush2.bf16.msra.mxu0 %v389
  %483 = vmatprep.subr.bf16.mxu0 0
  %484 = vmatpush2.bf16.msra.mxu0 %v388
  %485 = vmatprep.subr.bf16.mxu0 0
  %486 = vmatpush2.bf16.msra.mxu0 %v387
  %487 = vmatprep.subr.bf16.mxu0 0
  %488 = vmatpush2.bf16.msra.mxu0 %v386
  %489 = vmatprep.subr.bf16.mxu0 0
  %490 = vmatpush2.bf16.msra.mxu0 %v385
  %491 = vmatprep.subr.bf16.mxu0 0
  %492 = vmatpush2.bf16.msra.mxu0 %v384
  %493 = vmatprep.mubr.bf16.mxu0 %v197
  %494 = vmatmul.mubr.bf16.gmra.mxu0 %v196
  %v495 = vpop.f32.mrf.mxu0
  %v496 = vadd.f32 0.0, %v495
  %v497 = vpop.f32.mrf.mxu0
  %v498 = vpop.f32.mrf.mxu0
  %v499 = vadd.f32 0.0, %v498
  %v500 = vpop.f32.mrf.mxu0
  %501 = vmatprep.mubr.bf16.mxu0 %v202
  %502 = vmatmul.mubr.bf16.gmra.mxu0 %v201
  %v503 = vpop.f32.mrf.mxu0
  %v504 = vadd.f32 0.0, %v503
  %v505 = vpop.f32.mrf.mxu0
  %v506 = vpop.f32.mrf.mxu0
  %v507 = vadd.f32 0.0, %v506
  %v508 = vpop.f32.mrf.mxu0
  %509 = vmatprep.mubr.bf16.mxu0 %v207
  %510 = vmatmul.mubr.bf16.gmra.mxu0 %v206
  %v511 = vpop.f32.mrf.mxu0
  %v512 = vadd.f32 0.0, %v511
  %v513 = vpop.f32.mrf.mxu0
  %v514 = vpop.f32.mrf.mxu0
  %v515 = vadd.f32 0.0, %v514
  %v516 = vpop.f32.mrf.mxu0
  %517 = vmatprep.mubr.bf16.mxu0 %v212
  %518 = vmatmul.mubr.bf16.gmra.mxu0 %v211
  %v519 = vpop.f32.mrf.mxu0
  %v520 = vadd.f32 0.0, %v519
  %v521 = vpop.f32.mrf.mxu0
  %v522 = vpop.f32.mrf.mxu0
  %v523 = vadd.f32 0.0, %v522
  %v524 = vpop.f32.mrf.mxu0
  %525 = vdwg.mxu0
  %526 = vmatprep.subr.bf16.mxu0 0
  %527 = vmatpush1.bf16.msra.mxu0 %v399
  %528 = vmatprep.subr.bf16.mxu0 0
  %529 = vmatpush1.bf16.msra.mxu0 %v398
  %530 = vmatprep.subr.bf16.mxu0 0
  %531 = vmatpush1.bf16.msra.mxu0 %v397
  %532 = vmatprep.subr.bf16.mxu0 0
  %533 = vmatpush1.bf16.msra.mxu0 %v396
  %534 = vmatprep.subr.bf16.mxu0 0
  %535 = vmatpush1.bf16.msra.mxu0 %v395
  %536 = vmatprep.subr.bf16.mxu0 0
  %537 = vmatpush1.bf16.msra.mxu0 %v394
  %538 = vmatprep.subr.bf16.mxu0 0
  %539 = vmatpush1.bf16.msra.mxu0 %v393
  %540 = vmatprep.subr.bf16.mxu0 0
  %541 = vmatpush1.bf16.msra.mxu0 %v392
  %542 = vmatprep.subr.bf16.mxu0 0
  %543 = vmatpush2.bf16.msra.mxu0 %v407
  %544 = vmatprep.subr.bf16.mxu0 0
  %545 = vmatpush2.bf16.msra.mxu0 %v406
  %546 = vmatprep.subr.bf16.mxu0 0
  %547 = vmatpush2.bf16.msra.mxu0 %v405
  %548 = vmatprep.subr.bf16.mxu0 0
  %549 = vmatpush2.bf16.msra.mxu0 %v404
  %550 = vmatprep.subr.bf16.mxu0 0
  %551 = vmatpush2.bf16.msra.mxu0 %v403
  %552 = vmatprep.subr.bf16.mxu0 0
  %553 = vmatpush2.bf16.msra.mxu0 %v402
  %554 = vmatprep.subr.bf16.mxu0 0
  %555 = vmatpush2.bf16.msra.mxu0 %v401
  %556 = vmatprep.subr.bf16.mxu0 0
  %557 = vmatpush2.bf16.msra.mxu0 %v400
  %558 = vmatprep.mubr.bf16.mxu0 %v199
  %559 = vmatmul.mubr.bf16.gmra.mxu0 %v198
  %v560 = vpop.f32.mrf.mxu0
  %v561 = vadd.f32 %v496, %v560
  %v562 = vpop.f32.mrf.mxu0
  %v563 = vpop.f32.mrf.mxu0
  %v564 = vadd.f32 %v499, %v563
  %v565 = vpop.f32.mrf.mxu0
  %566 = vmatprep.mubr.bf16.mxu0 %v204
  %567 = vmatmul.mubr.bf16.gmra.mxu0 %v203
  %v568 = vpop.f32.mrf.mxu0
  %v569 = vadd.f32 %v504, %v568
  %v570 = vpop.f32.mrf.mxu0
  %v571 = vpop.f32.mrf.mxu0
  %v572 = vadd.f32 %v507, %v571
  %v573 = vpop.f32.mrf.mxu0
  %574 = vmatprep.mubr.bf16.mxu0 %v209
  %575 = vmatmul.mubr.bf16.gmra.mxu0 %v208
  %v576 = vpop.f32.mrf.mxu0
  %v577 = vadd.f32 %v512, %v576
  %v578 = vpop.f32.mrf.mxu0
  %v579 = vpop.f32.mrf.mxu0
  %v580 = vadd.f32 %v515, %v579
  %v581 = vpop.f32.mrf.mxu0
  %582 = vmatprep.mubr.bf16.mxu0 %v214
  %583 = vmatmul.mubr.bf16.gmra.mxu0 %v213
  %v584 = vpop.f32.mrf.mxu0
  %v585 = vadd.f32 %v520, %v584
  %v586 = vpop.f32.mrf.mxu0
  %v587 = vpop.f32.mrf.mxu0
  %v588 = vadd.f32 %v523, %v587
  %v589 = vpop.f32.mrf.mxu0
  %590 = vdwg.mxu0
  %591 = vmatprep.subr.bf16.mxu0 0
  %592 = vmatpush1.bf16.msra.mxu0 0
  %593 = vmatprep.subr.bf16.mxu0 0
  %594 = vmatpush1.bf16.msra.mxu0 0
  %595 = vmatprep.subr.bf16.mxu0 0
  %596 = vmatpush1.bf16.msra.mxu0 0
  %597 = vmatprep.subr.bf16.mxu0 0
  %598 = vmatpush1.bf16.msra.mxu0 0
  %599 = vmatprep.subr.bf16.mxu0 0
  %600 = vmatpush1.bf16.msra.mxu0 %v411
  %601 = vmatprep.subr.bf16.mxu0 0
  %602 = vmatpush1.bf16.msra.mxu0 %v410
  %603 = vmatprep.subr.bf16.mxu0 0
  %604 = vmatpush1.bf16.msra.mxu0 %v409
  %605 = vmatprep.subr.bf16.mxu0 0
  %606 = vmatpush1.bf16.msra.mxu0 %v408
  %607 = vmatprep.subr.bf16.mxu0 0
  %608 = vmatpush2.bf16.msra.mxu0 0
  %609 = vmatprep.subr.bf16.mxu0 0
  %610 = vmatpush2.bf16.msra.mxu0 0
  %611 = vmatprep.subr.bf16.mxu0 0
  %612 = vmatpush2.bf16.msra.mxu0 0
  %613 = vmatprep.subr.bf16.mxu0 0
  %614 = vmatpush2.bf16.msra.mxu0 0
  %615 = vmatprep.subr.bf16.mxu0 0
  %616 = vmatpush2.bf16.msra.mxu0 0
  %617 = vmatprep.subr.bf16.mxu0 0
  %618 = vmatpush2.bf16.msra.mxu0 0
  %619 = vmatprep.subr.bf16.mxu0 0
  %620 = vmatpush2.bf16.msra.mxu0 0
  %621 = vmatprep.subr.bf16.mxu0 0
  %622 = vmatpush2.bf16.msra.mxu0 0
  %623 = vmatprep.mubr.bf16.mxu0 0
  %624 = vmatmul.mubr.bf16.gmra.mxu0 %v450
  %v625 = vpop.f32.mrf.mxu0
  %v626 = vadd.f32 %v561, %v625
  %v627 = vpop.f32.mrf.mxu0
  %v628 = vpop.f32.mrf.mxu0
  %v629 = vadd.f32 %v564, %v628
  %v630 = vpop.f32.mrf.mxu0
  %631 = vmatprep.mubr.bf16.mxu0 0
  %632 = vmatmul.mubr.bf16.gmra.mxu0 %v453
  %v633 = vpop.f32.mrf.mxu0
  %v634 = vadd.f32 %v569, %v633
  %v635 = vpop.f32.mrf.mxu0
  %v636 = vpop.f32.mrf.mxu0
  %v637 = vadd.f32 %v572, %v636
  %v638 = vpop.f32.mrf.mxu0
  %639 = vmatprep.mubr.bf16.mxu0 0
  %640 = vmatmul.mubr.bf16.gmra.mxu0 %v456
  %v641 = vpop.f32.mrf.mxu0
  %v642 = vadd.f32 %v577, %v641
  %v643 = vpop.f32.mrf.mxu0
  %v644 = vpop.f32.mrf.mxu0
  %v645 = vadd.f32 %v580, %v644
  %v646 = vpop.f32.mrf.mxu0
  %647 = vmatprep.mubr.bf16.mxu0 0
  %648 = vmatmul.mubr.bf16.gmra.mxu0 %v459
  %v649 = vpop.f32.mrf.mxu0
  %v650 = vadd.f32 %v585, %v649
  %v651 = vpop.f32.mrf.mxu0
  %v652 = vpop.f32.mrf.mxu0
  %v653 = vadd.f32 %v588, %v652
  %v654 = vpop.f32.mrf.mxu0
  %655 = vdwg.mxu0
  %v656 = vadd.f32 %v28, %v626
  %v657 = vadd.f32 %v29, %v629
  %v658 = vadd.f32 %v30, %v634
  %v659 = vadd.f32 %v31, %v637
  %v660 = vadd.f32 %v32, %v642
  %v661 = vadd.f32 %v33, %v645
  %v662 = vadd.f32 %v34, %v650
  %v663 = vadd.f32 %v35, %v653
  %vm664 = vcmask 261120
  %665 = vst.msk [vmem:[#allocation2] sm:$0xff] %vm664, %v656
  %666 = vst.msk [vmem:[#allocation2 + $0x8] sm:$0xff] %vm664, %v657
  %667 = vst.msk [vmem:[#allocation2 + $0x10] sm:$0xff] %vm664, %v658
  %668 = vst.msk [vmem:[#allocation2 + $0x18] sm:$0xff] %vm664, %v659
  %669 = vst.msk [vmem:[#allocation2 + $0x20] sm:$0xff] %vm664, %v660
  %670 = vst.msk [vmem:[#allocation2 + $0x28] sm:$0xff] %vm664, %v661
  %671 = vst.msk [vmem:[#allocation2 + $0x30] sm:$0xff] %vm664, %v662
  %672 = vst.msk [vmem:[#allocation2 + $0x38] sm:$0xff] %vm664, %v663
  // Predicated region
  $region18: #{_lambda_.25} parent=0 // pred_check
    %p673 = pneg %p15
  $region19: #{_lambda_.25} parent=0 // pred_check_branch
    %675 = sbr.rel (%p673) target = $region21
  $region20: #{_lambda_.25} parent=0 // pred_region
    %v676 = vld [vmem:[#allocation2] sm:$0xff]
    %v677 = vld [vmem:[#allocation2 + $0x8] sm:$0xff]
    %v678 = vld [vmem:[#allocation2 + $0x10] sm:$0xff]
    %v679 = vld [vmem:[#allocation2 + $0x18] sm:$0xff]
    %v680 = vld [vmem:[#allocation2 + $0x20] sm:$0xff]
    %v681 = vld [vmem:[#allocation2 + $0x28] sm:$0xff]
    %v682 = vld [vmem:[#allocation2 + $0x30] sm:$0xff]
    %v683 = vld [vmem:[#allocation2 + $0x38] sm:$0xff]
    %v684 = vld [vmem:[%s2] sm:$0x1]
    %v686 = vlaneseq
    %v687 = vshrl.u32 %v686, 7
    %v688 = vsub.s32 0, %v687
    %v689 = vrot.slane %v684, %v688
    %v691 = vadd.f32 %v676, %v689
    %v692 = vadd.f32 %v677, %v689
    %v693 = vadd.f32 %v678, %v689
    %v694 = vadd.f32 %v679, %v689
    %v695 = vadd.f32 %v680, %v689
    %v696 = vadd.f32 %v681, %v689
    %v697 = vadd.f32 %v682, %v689
    %v698 = vadd.f32 %v683, %v689
    %v699 = vmax.f32 %v691, 0.0
    %v700 = vmax.f32 %v692, 0.0
    %v701 = vmax.f32 %v693, 0.0
    %v702 = vmax.f32 %v694, 0.0
    %v703 = vmax.f32 %v695, 0.0
    %v704 = vmax.f32 %v696, 0.0
    %v705 = vmax.f32 %v697, 0.0
    %v706 = vmax.f32 %v698, 0.0
    %707 = vst.msk [vmem:[%s3] sm:$0xff] %vm664, %v699
    %708 = vst.msk [vmem:[%s3 + $0x8] sm:$0xff] %vm664, %v700
    %709 = vst.msk [vmem:[%s3 + $0x10] sm:$0xff] %vm664, %v701
    %710 = vst.msk [vmem:[%s3 + $0x18] sm:$0xff] %vm664, %v702
    %711 = vst.msk [vmem:[%s3 + $0x20] sm:$0xff] %vm664, %v703
    %712 = vst.msk [vmem:[%s3 + $0x28] sm:$0xff] %vm664, %v704
    %713 = vst.msk [vmem:[%s3 + $0x30] sm:$0xff] %vm664, %v705
    %714 = vst.msk [vmem:[%s3 + $0x38] sm:$0xff] %vm664, %v706
  $region21: #{_lambda_.25} parent=0 // pred_fallthru
    _
  // Predicated region
  $region22: #{_lambda_.25} parent=0 // pred_check
    _
  $region23: #{_lambda_.25} parent=0 // pred_check_branch
    %716 = sbr.rel (0) target = $region25
  $region24: #{_lambda_.25} parent=0 // pred_region
    _
  $region25: #{_lambda_.25} parent=0 // pred_fallthru
    _
  // Predicated region
  $region26: #{_lambda_.25} parent=0 // pred_check
    _
  $region27: #{_lambda_.25} parent=0 // pred_check_branch
    %718 = sbr.rel (0) target = $region29
  $region28: #{_lambda_.25} parent=0 // pred_region
    _
  $region29: #{_lambda_.25} parent=0 // pred_fallthru
    _

// kernel: _lambda_.27
$region0: #{_lambda_.27}
  #allocation0 [shape = 'u32[]', space=smem, size = 0x4, offset = 0x4, fixed_abs, tag = 'smem constant byte address 0x4 - core index']
  #allocation1 [shape = 'u32[144,128]{1,0:T(1,128)}', space=vmem, size = 0x12000, scoped, tag = 'internal scratch']
  %s0 = inlined_call_operand.vmem [shape: f32[2,32,32], index: 0, kind: input, shape index: {}]
  %s1 = inlined_call_operand.vmem [shape: bf16[32,32], index: 1, kind: input, shape index: {}]
  %s2 = inlined_call_operand.vmem [shape: f32[1,32], index: 2, kind: input, shape index: {}, may-alias: {2,4,6,8,10,14,16}]
  %s3 = inlined_call_operand.vmem [shape: bf16[32,32], index: 3, kind: input, shape index: {}]
  %s4 = inlined_call_operand.vmem [shape: f32[1,32], index: 4, kind: input, shape index: {}, may-alias: {2,4,6,8,10,14,16}]
  %s5 = inlined_call_operand.vmem [shape: bf16[32,32], index: 5, kind: input, shape index: {}]
  %s6 = inlined_call_operand.vmem [shape: f32[1,32], index: 6, kind: input, shape index: {}, may-alias: {2,4,6,8,10,14,16}]
  %s7 = inlined_call_operand.vmem [shape: bf16[32,32], index: 7, kind: input, shape index: {}]
  %s8 = inlined_call_operand.vmem [shape: f32[1,32], index: 8, kind: input, shape index: {}, may-alias: {2,4,6,8,10,14,16}]
  %s9 = inlined_call_operand.vmem [shape: f32[1,32], index: 9, kind: input, shape index: {}, may-alias: {9,15}]
  %s10 = inlined_call_operand.vmem [shape: f32[1,32], index: 10, kind: input, shape index: {}, may-alias: {2,4,6,8,10,14,16}]
  %s11 = inlined_call_operand.vmem [shape: bf16[32,128], index: 11, kind: input, shape index: {}]
  %s12 = inlined_call_operand.vmem [shape: f32[1,128], index: 12, kind: input, shape index: {}]
  %s13 = inlined_call_operand.vmem [shape: bf16[128,32], index: 13, kind: input, shape index: {}]
  %s14 = inlined_call_operand.vmem [shape: f32[1,32], index: 14, kind: input, shape index: {}, may-alias: {2,4,6,8,10,14,16}]
  %s15 = inlined_call_operand.vmem [shape: f32[1,32], index: 15, kind: input, shape index: {}, may-alias: {9,15}]
  %s16 = inlined_call_operand.vmem [shape: f32[1,32], index: 16, kind: input, shape index: {}, may-alias: {2,4,6,8,10,14,16}]
  %s17 = inlined_call_operand.vmem [shape: f32[2,32,32], index: 17, kind: output, shape index: {}]
  %s18 = sld [smem:[#allocation0]]
  $region101: #{_lambda_.27} parent=0
    _
  %s20 = ssub.s32 1, %s18
  %s21 = scalar_select 0, %s20, %s18
  loop: start=0, step=1, limit=4
  $region2: #{_lambda_.27} parent=0 // loop_pre_header
    _
  $region3: #{_lambda_.27} parent=0 // loop_header
    %s23 = sphi 0, %s27
    %p24 = scmp.ge.s32.totalorder %s23, 4
    %s33 = sphi 0, %s35
    %s36 = sphi 0, %s33
    %s37 = sphi 0, %s36
    %s53 = sphi 0, %s37
    %s57 = sphi 0, %s57
    %s59 = sphi 0, %s57
    %s60 = sphi 0, %s59
    %s74 = sphi 0, %s60
    %s78 = sphi 0, %s78
    %s80 = sphi 0, %s78
    %s81 = sphi 0, %s80
    %s95 = sphi 0, %s81
    %s99 = sphi 0, %s99
    %s101 = sphi 0, %s99
    %s102 = sphi 0, %s101
    %s116 = sphi 0, %s102
    %s120 = sphi 0, %s120
    %s122 = sphi 0, %s120
    %s123 = sphi 0, %s122
    %s137 = sphi 0, %s123
    %s141 = sphi 0, %s141
    %s143 = sphi 0, %s141
    %s144 = sphi 0, %s143
    %s158 = sphi 0, %s144
    %s162 = sphi 0, %s162
    %s164 = sphi 0, %s162
    %s165 = sphi 0, %s164
    %s179 = sphi 0, %s165
    %s183 = sphi 0, %s183
    %s185 = sphi 0, %s183
    %s186 = sphi 0, %s185
    %s200 = sphi 0, %s186
    %s204 = sphi 0, %s204
    %s206 = sphi 0, %s204
    %s207 = sphi 0, %s206
    %s221 = sphi 0, %s207
    %s225 = sphi 0, %s225
    %s227 = sphi 0, %s225
    %s228 = sphi 0, %s227
    %s242 = sphi 0, %s228
    %s246 = sphi 0, %s246
    %s248 = sphi 0, %s246
    %s249 = sphi 0, %s248
    %s263 = sphi 0, %s249
    %s267 = sphi 0, %s267
    %s269 = sphi 0, %s267
    %s270 = sphi 0, %s269
    %s284 = sphi 0, %s270
    %s288 = sphi 0, %s288
    %s290 = sphi 0, %s288
    %s291 = sphi 0, %s290
    %s305 = sphi 0, %s291
    %s309 = sphi 0, %s309
    %s311 = sphi 0, %s309
    %s312 = sphi 0, %s311
    %s326 = sphi 0, %s312
    %s330 = sphi 0, %s330
    %s332 = sphi 0, %s330
    %s333 = sphi 0, %s332
    %s347 = sphi 0, %s333
    %s351 = sphi 0, %s351
    %s353 = sphi 0, %s351
    %s354 = sphi 0, %s353
    %s368 = sphi 0, %s354
    %s372 = sphi 0, %s372
    %s374 = sphi 0, %s372
    %s375 = sphi 0, %s374
    %s389 = sphi 0, %s375
    %s395 = sphi 0, %s397
    %s398 = sphi 0, %s395
    %s399 = sphi 0, %s398
    %s415 = sphi 0, %s399
  $region4: #{_lambda_.27} parent=0 // loop_header_branch
    %26 = sbr.rel (%p24) target = $region8
  $region5: #{_lambda_.27} parent=0 // loop_body
    %s28 = ssub.s32 %s23, 1
    %s29 = ssub.s32 %s23, 2
    %s30 = sadd.s32 %s23, 1
    %s31 = ssub.s32 %s23, %s30
    %p32 = scmp.eq.s32.totalorder %s31, 0
    %s34 = sadd.s32 %s33, 1
    %s35 = scalar_select %p32, %s33, %s34
    %p38 = pneg %p32
    %p39 = scmp.eq.s32.totalorder %s23, 1
    %p40 = por %p38, %p39
    %p41 = scmp.ne.s32.totalorder %s33, %s36
    %p42 = scmp.eq.s32.totalorder %s23, 0
    %p43 = por %p41, %p42
    %p44 = scmp.ne.s32.totalorder %s33, %s36
    %p45 = scmp.eq.s32.totalorder %s28, 1
    %p46 = por %p44, %p45
    %p47 = scmp.ne.s32.totalorder %s36, %s37
    %p48 = scmp.eq.s32.totalorder %s28, 0
    %p49 = por %p47, %p48
    %p50 = scmp.ne.s32.totalorder %s36, %s37
    %p51 = scmp.eq.s32.totalorder %s29, 1
    %p52 = por %p50, %p51
    %p54 = scmp.ne.s32.totalorder %s37, %s53
    %p55 = scmp.eq.s32.totalorder %s29, 0
    %p56 = por %p54, %p55
    %s58 = sadd.s32 %s57, 1
    %p61 = scmp.eq.s32.totalorder %s23, 1
    %p62 = scmp.ne.s32.totalorder %s57, %s59
    %p63 = scmp.eq.s32.totalorder %s23, 0
    %p64 = por %p62, %p63
    %p65 = scmp.ne.s32.totalorder %s57, %s59
    %p66 = scmp.eq.s32.totalorder %s28, 1
    %p67 = por %p65, %p66
    %p68 = scmp.ne.s32.totalorder %s59, %s60
    %p69 = scmp.eq.s32.totalorder %s28, 0
    %p70 = por %p68, %p69
    %p71 = scmp.ne.s32.totalorder %s59, %s60
    %p72 = scmp.eq.s32.totalorder %s29, 1
    %p73 = por %p71, %p72
    %p75 = scmp.ne.s32.totalorder %s60, %s74
    %p76 = scmp.eq.s32.totalorder %s29, 0
    %p77 = por %p75, %p76
    %s79 = sadd.s32 %s78, 1
    %p82 = scmp.eq.s32.totalorder %s23, 1
    %p83 = scmp.ne.s32.totalorder %s78, %s80
    %p84 = scmp.eq.s32.totalorder %s23, 0
    %p85 = por %p83, %p84
    %p86 = scmp.ne.s32.totalorder %s78, %s80
    %p87 = scmp.eq.s32.totalorder %s28, 1
    %p88 = por %p86, %p87
    %p89 = scmp.ne.s32.totalorder %s80, %s81
    %p90 = scmp.eq.s32.totalorder %s28, 0
    %p91 = por %p89, %p90
    %p92 = scmp.ne.s32.totalorder %s80, %s81
    %p93 = scmp.eq.s32.totalorder %s29, 1
    %p94 = por %p92, %p93
    %p96 = scmp.ne.s32.totalorder %s81, %s95
    %p97 = scmp.eq.s32.totalorder %s29, 0
    %p98 = por %p96, %p97
    %s100 = sadd.s32 %s99, 1
    %p103 = scmp.eq.s32.totalorder %s23, 1
    %p104 = scmp.ne.s32.totalorder %s99, %s101
    %p105 = scmp.eq.s32.totalorder %s23, 0
    %p106 = por %p104, %p105
    %p107 = scmp.ne.s32.totalorder %s99, %s101
    %p108 = scmp.eq.s32.totalorder %s28, 1
    %p109 = por %p107, %p108
    %p110 = scmp.ne.s32.totalorder %s101, %s102
    %p111 = scmp.eq.s32.totalorder %s28, 0
    %p112 = por %p110, %p111
    %p113 = scmp.ne.s32.totalorder %s101, %s102
    %p114 = scmp.eq.s32.totalorder %s29, 1
    %p115 = por %p113, %p114
    %p117 = scmp.ne.s32.totalorder %s102, %s116
    %p118 = scmp.eq.s32.totalorder %s29, 0
    %p119 = por %p117, %p118
    %s121 = sadd.s32 %s120, 1
    %p124 = scmp.eq.s32.totalorder %s23, 1
    %p125 = scmp.ne.s32.totalorder %s120, %s122
    %p126 = scmp.eq.s32.totalorder %s23, 0
    %p127 = por %p125, %p126
    %p128 = scmp.ne.s32.totalorder %s120, %s122
    %p129 = scmp.eq.s32.totalorder %s28, 1
    %p130 = por %p128, %p129
    %p131 = scmp.ne.s32.totalorder %s122, %s123
    %p132 = scmp.eq.s32.totalorder %s28, 0
    %p133 = por %p131, %p132
    %p134 = scmp.ne.s32.totalorder %s122, %s123
    %p135 = scmp.eq.s32.totalorder %s29, 1
    %p136 = por %p134, %p135
    %p138 = scmp.ne.s32.totalorder %s123, %s137
    %p139 = scmp.eq.s32.totalorder %s29, 0
    %p140 = por %p138, %p139
    %s142 = sadd.s32 %s141, 1
    %p145 = scmp.eq.s32.totalorder %s23, 1
    %p146 = scmp.ne.s32.totalorder %s141, %s143
    %p147 = scmp.eq.s32.totalorder %s23, 0
    %p148 = por %p146, %p147
    %p149 = scmp.ne.s32.totalorder %s141, %s143
    %p150 = scmp.eq.s32.totalorder %s28, 1
    %p151 = por %p149, %p150
    %p152 = scmp.ne.s32.totalorder %s143, %s144
    %p153 = scmp.eq.s32.totalorder %s28, 0
    %p154 = por %p152, %p153
    %p155 = scmp.ne.s32.totalorder %s143, %s144
    %p156 = scmp.eq.s32.totalorder %s29, 1
    %p157 = por %p155, %p156
    %p159 = scmp.ne.s32.totalorder %s144, %s158
    %p160 = scmp.eq.s32.totalorder %s29, 0
    %p161 = por %p159, %p160
    %s163 = sadd.s32 %s162, 1
    %p166 = scmp.eq.s32.totalorder %s23, 1
    %p167 = scmp.ne.s32.totalorder %s162, %s164
    %p168 = scmp.eq.s32.totalorder %s23, 0
    %p169 = por %p167, %p168
    %p170 = scmp.ne.s32.totalorder %s162, %s164
    %p171 = scmp.eq.s32.totalorder %s28, 1
    %p172 = por %p170, %p171
    %p173 = scmp.ne.s32.totalorder %s164, %s165
    %p174 = scmp.eq.s32.totalorder %s28, 0
    %p175 = por %p173, %p174
    %p176 = scmp.ne.s32.totalorder %s164, %s165
    %p177 = scmp.eq.s32.totalorder %s29, 1
    %p178 = por %p176, %p177
    %p180 = scmp.ne.s32.totalorder %s165, %s179
    %p181 = scmp.eq.s32.totalorder %s29, 0
    %p182 = por %p180, %p181
    %s184 = sadd.s32 %s183, 1
    %p187 = scmp.eq.s32.totalorder %s23, 1
    %p188 = scmp.ne.s32.totalorder %s183, %s185
    %p189 = scmp.eq.s32.totalorder %s23, 0
    %p190 = por %p188, %p189
    %p191 = scmp.ne.s32.totalorder %s183, %s185
    %p192 = scmp.eq.s32.totalorder %s28, 1
    %p193 = por %p191, %p192
    %p194 = scmp.ne.s32.totalorder %s185, %s186
    %p195 = scmp.eq.s32.totalorder %s28, 0
    %p196 = por %p194, %p195
    %p197 = scmp.ne.s32.totalorder %s185, %s186
    %p198 = scmp.eq.s32.totalorder %s29, 1
    %p199 = por %p197, %p198
    %p201 = scmp.ne.s32.totalorder %s186, %s200
    %p202 = scmp.eq.s32.totalorder %s29, 0
    %p203 = por %p201, %p202
    %s205 = sadd.s32 %s204, 1
    %p208 = scmp.eq.s32.totalorder %s23, 1
    %p209 = scmp.ne.s32.totalorder %s204, %s206
    %p210 = scmp.eq.s32.totalorder %s23, 0
    %p211 = por %p209, %p210
    %p212 = scmp.ne.s32.totalorder %s204, %s206
    %p213 = scmp.eq.s32.totalorder %s28, 1
    %p214 = por %p212, %p213
    %p215 = scmp.ne.s32.totalorder %s206, %s207
    %p216 = scmp.eq.s32.totalorder %s28, 0
    %p217 = por %p215, %p216
    %p218 = scmp.ne.s32.totalorder %s206, %s207
    %p219 = scmp.eq.s32.totalorder %s29, 1
    %p220 = por %p218, %p219
    %p222 = scmp.ne.s32.totalorder %s207, %s221
    %p223 = scmp.eq.s32.totalorder %s29, 0
    %p224 = por %p222, %p223
    %s226 = sadd.s32 %s225, 1
    %p229 = scmp.eq.s32.totalorder %s23, 1
    %p230 = scmp.ne.s32.totalorder %s225, %s227
    %p231 = scmp.eq.s32.totalorder %s23, 0
    %p232 = por %p230, %p231
    %p233 = scmp.ne.s32.totalorder %s225, %s227
    %p234 = scmp.eq.s32.totalorder %s28, 1
    %p235 = por %p233, %p234
    %p236 = scmp.ne.s32.totalorder %s227, %s228
    %p237 = scmp.eq.s32.totalorder %s28, 0
    %p238 = por %p236, %p237
    %p239 = scmp.ne.s32.totalorder %s227, %s228
    %p240 = scmp.eq.s32.totalorder %s29, 1
    %p241 = por %p239, %p240
    %p243 = scmp.ne.s32.totalorder %s228, %s242
    %p244 = scmp.eq.s32.totalorder %s29, 0
    %p245 = por %p243, %p244
    %s247 = sadd.s32 %s246, 1
    %p250 = scmp.eq.s32.totalorder %s23, 1
    %p251 = scmp.ne.s32.totalorder %s246, %s248
    %p252 = scmp.eq.s32.totalorder %s23, 0
    %p253 = por %p251, %p252
    %p254 = scmp.ne.s32.totalorder %s246, %s248
    %p255 = scmp.eq.s32.totalorder %s28, 1
    %p256 = por %p254, %p255
    %p257 = scmp.ne.s32.totalorder %s248, %s249
    %p258 = scmp.eq.s32.totalorder %s28, 0
    %p259 = por %p257, %p258
    %p260 = scmp.ne.s32.totalorder %s248, %s249
    %p261 = scmp.eq.s32.totalorder %s29, 1
    %p262 = por %p260, %p261
    %p264 = scmp.ne.s32.totalorder %s249, %s263
    %p265 = scmp.eq.s32.totalorder %s29, 0
    %p266 = por %p264, %p265
    %s268 = sadd.s32 %s267, 1
    %p271 = scmp.eq.s32.totalorder %s23, 1
    %p272 = scmp.ne.s32.totalorder %s267, %s269
    %p273 = scmp.eq.s32.totalorder %s23, 0
    %p274 = por %p272, %p273
    %p275 = scmp.ne.s32.totalorder %s267, %s269
    %p276 = scmp.eq.s32.totalorder %s28, 1
    %p277 = por %p275, %p276
    %p278 = scmp.ne.s32.totalorder %s269, %s270
    %p279 = scmp.eq.s32.totalorder %s28, 0
    %p280 = por %p278, %p279
    %p281 = scmp.ne.s32.totalorder %s269, %s270
    %p282 = scmp.eq.s32.totalorder %s29, 1
    %p283 = por %p281, %p282
    %p285 = scmp.ne.s32.totalorder %s270, %s284
    %p286 = scmp.eq.s32.totalorder %s29, 0
    %p287 = por %p285, %p286
    %s289 = sadd.s32 %s288, 1
    %p292 = scmp.eq.s32.totalorder %s23, 1
    %p293 = scmp.ne.s32.totalorder %s288, %s290
    %p294 = scmp.eq.s32.totalorder %s23, 0
    %p295 = por %p293, %p294
    %p296 = scmp.ne.s32.totalorder %s288, %s290
    %p297 = scmp.eq.s32.totalorder %s28, 1
    %p298 = por %p296, %p297
    %p299 = scmp.ne.s32.totalorder %s290, %s291
    %p300 = scmp.eq.s32.totalorder %s28, 0
    %p301 = por %p299, %p300
    %p302 = scmp.ne.s32.totalorder %s290, %s291
    %p303 = scmp.eq.s32.totalorder %s29, 1
    %p304 = por %p302, %p303
    %p306 = scmp.ne.s32.totalorder %s291, %s305
    %p307 = scmp.eq.s32.totalorder %s29, 0
    %p308 = por %p306, %p307
    %s310 = sadd.s32 %s309, 1
    %p313 = scmp.eq.s32.totalorder %s23, 1
    %p314 = scmp.ne.s32.totalorder %s309, %s311
    %p315 = scmp.eq.s32.totalorder %s23, 0
    %p316 = por %p314, %p315
    %p317 = scmp.ne.s32.totalorder %s309, %s311
    %p318 = scmp.eq.s32.totalorder %s28, 1
    %p319 = por %p317, %p318
    %p320 = scmp.ne.s32.totalorder %s311, %s312
    %p321 = scmp.eq.s32.totalorder %s28, 0
    %p322 = por %p320, %p321
    %p323 = scmp.ne.s32.totalorder %s311, %s312
    %p324 = scmp.eq.s32.totalorder %s29, 1
    %p325 = por %p323, %p324
    %p327 = scmp.ne.s32.totalorder %s312, %s326
    %p328 = scmp.eq.s32.totalorder %s29, 0
    %p329 = por %p327, %p328
    %s331 = sadd.s32 %s330, 1
    %p334 = scmp.eq.s32.totalorder %s23, 1
    %p335 = scmp.ne.s32.totalorder %s330, %s332
    %p336 = scmp.eq.s32.totalorder %s23, 0
    %p337 = por %p335, %p336
    %p338 = scmp.ne.s32.totalorder %s330, %s332
    %p339 = scmp.eq.s32.totalorder %s28, 1
    %p340 = por %p338, %p339
    %p341 = scmp.ne.s32.totalorder %s332, %s333
    %p342 = scmp.eq.s32.totalorder %s28, 0
    %p343 = por %p341, %p342
    %p344 = scmp.ne.s32.totalorder %s332, %s333
    %p345 = scmp.eq.s32.totalorder %s29, 1
    %p346 = por %p344, %p345
    %p348 = scmp.ne.s32.totalorder %s333, %s347
    %p349 = scmp.eq.s32.totalorder %s29, 0
    %p350 = por %p348, %p349
    %s352 = sadd.s32 %s351, 1
    %p355 = scmp.eq.s32.totalorder %s23, 1
    %p356 = scmp.ne.s32.totalorder %s351, %s353
    %p357 = scmp.eq.s32.totalorder %s23, 0
    %p358 = por %p356, %p357
    %p359 = scmp.ne.s32.totalorder %s351, %s353
    %p360 = scmp.eq.s32.totalorder %s28, 1
    %p361 = por %p359, %p360
    %p362 = scmp.ne.s32.totalorder %s353, %s354
    %p363 = scmp.eq.s32.totalorder %s28, 0
    %p364 = por %p362, %p363
    %p365 = scmp.ne.s32.totalorder %s353, %s354
    %p366 = scmp.eq.s32.totalorder %s29, 1
    %p367 = por %p365, %p366
    %p369 = scmp.ne.s32.totalorder %s354, %s368
    %p370 = scmp.eq.s32.totalorder %s29, 0
    %p371 = por %p369, %p370
    %s373 = sadd.s32 %s372, 1
    %p376 = scmp.eq.s32.totalorder %s23, 1
    %p377 = scmp.ne.s32.totalorder %s372, %s374
    %p378 = scmp.eq.s32.totalorder %s23, 0
    %p379 = por %p377, %p378
    %p380 = scmp.ne.s32.totalorder %s372, %s374
    %p381 = scmp.eq.s32.totalorder %s28, 1
    %p382 = por %p380, %p381
    %p383 = scmp.ne.s32.totalorder %s374, %s375
    %p384 = scmp.eq.s32.totalorder %s28, 0
    %p385 = por %p383, %p384
    %p386 = scmp.ne.s32.totalorder %s374, %s375
    %p387 = scmp.eq.s32.totalorder %s29, 1
    %p388 = por %p386, %p387
    %p390 = scmp.ne.s32.totalorder %s375, %s389
    %p391 = scmp.eq.s32.totalorder %s29, 0
    %p392 = por %p390, %p391
    %s393 = ssub.s32 %s23, %s30
    %p394 = scmp.eq.s32.totalorder %s393, 0
    %s396 = sadd.s32 %s395, 1
    %s397 = scalar_select %p394, %s395, %s396
    %p400 = pneg %p394
    %p401 = scmp.eq.s32.totalorder %s23, 1
    %p402 = por %p400, %p401
    %p403 = scmp.ne.s32.totalorder %s395, %s398
    %p404 = scmp.eq.s32.totalorder %s23, 0
    %p405 = por %p403, %p404
    %p406 = scmp.ne.s32.totalorder %s395, %s398
    %p407 = scmp.eq.s32.totalorder %s28, 1
    %p408 = por %p406, %p407
    %p409 = scmp.ne.s32.totalorder %s398, %s399
    %p410 = scmp.eq.s32.totalorder %s28, 0
    %p411 = por %p409, %p410
    %p412 = scmp.ne.s32.totalorder %s398, %s399
    %p413 = scmp.eq.s32.totalorder %s29, 1
    %p414 = por %p412, %p413
    %p416 = scmp.ne.s32.totalorder %s399, %s415
    %p417 = scmp.eq.s32.totalorder %s29, 0
    %p418 = por %p416, %p417
    %p419 = scmp.le.s32.totalorder 1, %s23
    %p420 = scmp.lt.s32.totalorder %s23, 3
    %p421 = pnand %p419, %p420
    %p422 = pneg %p421
    // Predicated region
    $region9: #{_lambda_.27} parent=5 // pred_check
      _
    $region10: #{_lambda_.27} parent=5 // pred_check_branch
      %424 = sbr.rel (%p421) target = $region12
    $region11: #{_lambda_.27} parent=5 // pred_region
      %s425 = ssub.s32 %s23, 1
      // Predicated region
      $region13: #{_lambda_.27} parent=11 // pred_check
        %p426 = pneg %p70
      $region14: #{_lambda_.27} parent=11 // pred_check_branch
        %428 = sbr.rel (%p426) target = $region16
      $region15: #{_lambda_.27} parent=11 // pred_region
        _
      $region16: #{_lambda_.27} parent=11 // pred_fallthru
        _
      // Predicated region
      $region17: #{_lambda_.27} parent=11 // pred_check
        %p429 = pneg %p91
      $region18: #{_lambda_.27} parent=11 // pred_check_branch
        %431 = sbr.rel (%p429) target = $region20
      $region19: #{_lambda_.27} parent=11 // pred_region
        _
      $region20: #{_lambda_.27} parent=11 // pred_fallthru
        _
      // Predicated region
      $region21: #{_lambda_.27} parent=11 // pred_check
        %p432 = pneg %p112
      $region22: #{_lambda_.27} parent=11 // pred_check_branch
        %434 = sbr.rel (%p432) target = $region24
      $region23: #{_lambda_.27} parent=11 // pred_region
        _
      $region24: #{_lambda_.27} parent=11 // pred_fallthru
        _
      // Predicated region
      $region25: #{_lambda_.27} parent=11 // pred_check
        %p435 = pneg %p133
      $region26: #{_lambda_.27} parent=11 // pred_check_branch
        %437 = sbr.rel (%p435) target = $region28
      $region27: #{_lambda_.27} parent=11 // pred_region
        _
      $region28: #{_lambda_.27} parent=11 // pred_fallthru
        _
      // Predicated region
      $region29: #{_lambda_.27} parent=11 // pred_check
        %p438 = pneg %p154
      $region30: #{_lambda_.27} parent=11 // pred_check_branch
        %440 = sbr.rel (%p438) target = $region32
      $region31: #{_lambda_.27} parent=11 // pred_region
        _
      $region32: #{_lambda_.27} parent=11 // pred_fallthru
        _
      // Predicated region
      $region33: #{_lambda_.27} parent=11 // pred_check
        %p441 = pneg %p175
      $region34: #{_lambda_.27} parent=11 // pred_check_branch
        %443 = sbr.rel (%p441) target = $region36
      $region35: #{_lambda_.27} parent=11 // pred_region
        _
      $region36: #{_lambda_.27} parent=11 // pred_fallthru
        _
      // Predicated region
      $region37: #{_lambda_.27} parent=11 // pred_check
        %p444 = pneg %p196
      $region38: #{_lambda_.27} parent=11 // pred_check_branch
        %446 = sbr.rel (%p444) target = $region40
      $region39: #{_lambda_.27} parent=11 // pred_region
        _
      $region40: #{_lambda_.27} parent=11 // pred_fallthru
        _
      // Predicated region
      $region41: #{_lambda_.27} parent=11 // pred_check
        %p447 = pneg %p217
      $region42: #{_lambda_.27} parent=11 // pred_check_branch
        %449 = sbr.rel (%p447) target = $region44
      $region43: #{_lambda_.27} parent=11 // pred_region
        _
      $region44: #{_lambda_.27} parent=11 // pred_fallthru
        _
      // Predicated region
      $region45: #{_lambda_.27} parent=11 // pred_check
        %p450 = pneg %p238
      $region46: #{_lambda_.27} parent=11 // pred_check_branch
        %452 = sbr.rel (%p450) target = $region48
      $region47: #{_lambda_.27} parent=11 // pred_region
        _
      $region48: #{_lambda_.27} parent=11 // pred_fallthru
        _
      // Predicated region
      $region49: #{_lambda_.27} parent=11 // pred_check
        %p453 = pneg %p259
      $region50: #{_lambda_.27} parent=11 // pred_check_branch
        %455 = sbr.rel (%p453) target = $region52
      $region51: #{_lambda_.27} parent=11 // pred_region
        _
      $region52: #{_lambda_.27} parent=11 // pred_fallthru
        _
      // Predicated region
      $region53: #{_lambda_.27} parent=11 // pred_check
        %p456 = pneg %p280
      $region54: #{_lambda_.27} parent=11 // pred_check_branch
        %458 = sbr.rel (%p456) target = $region56
      $region55: #{_lambda_.27} parent=11 // pred_region
        _
      $region56: #{_lambda_.27} parent=11 // pred_fallthru
        _
      // Predicated region
      $region57: #{_lambda_.27} parent=11 // pred_check
        %p459 = pneg %p301
      $region58: #{_lambda_.27} parent=11 // pred_check_branch
        %461 = sbr.rel (%p459) target = $region60
      $region59: #{_lambda_.27} parent=11 // pred_region
        _
      $region60: #{_lambda_.27} parent=11 // pred_fallthru
        _
      // Predicated region
      $region61: #{_lambda_.27} parent=11 // pred_check
        %p462 = pneg %p322
      $region62: #{_lambda_.27} parent=11 // pred_check_branch
        %464 = sbr.rel (%p462) target = $region64
      $region63: #{_lambda_.27} parent=11 // pred_region
        _
      $region64: #{_lambda_.27} parent=11 // pred_fallthru
        _
      // Predicated region
      $region65: #{_lambda_.27} parent=11 // pred_check
        %p465 = pneg %p343
      $region66: #{_lambda_.27} parent=11 // pred_check_branch
        %467 = sbr.rel (%p465) target = $region68
      $region67: #{_lambda_.27} parent=11 // pred_region
        _
      $region68: #{_lambda_.27} parent=11 // pred_fallthru
        _
      // Predicated region
      $region69: #{_lambda_.27} parent=11 // pred_check
        %p468 = pneg %p364
      $region70: #{_lambda_.27} parent=11 // pred_check_branch
        %470 = sbr.rel (%p468) target = $region72
      $region71: #{_lambda_.27} parent=11 // pred_region
        _
      $region72: #{_lambda_.27} parent=11 // pred_fallthru
        _
      // Predicated region
      $region73: #{_lambda_.27} parent=11 // pred_check
        %p471 = pneg %p385
      $region74: #{_lambda_.27} parent=11 // pred_check_branch
        %473 = sbr.rel (%p471) target = $region76
      $region75: #{_lambda_.27} parent=11 // pred_region
        _
      $region76: #{_lambda_.27} parent=11 // pred_fallthru
        _
    $region12: #{_lambda_.27} parent=5 // pred_fallthru
      _
    %p474 = scmp.lt.s32.totalorder %s23, 2
    // Predicated region
    $region77: #{_lambda_.27} parent=5 // pred_check
      %p475 = pneg %p474
    $region78: #{_lambda_.27} parent=5 // pred_check_branch
      %477 = sbr.rel (%p475) target = $region80
    $region79: #{_lambda_.27} parent=5 // pred_region
      // Predicated region
      $region81: #{_lambda_.27} parent=79 // pred_check
        %p478 = pneg %p43
      $region82: #{_lambda_.27} parent=79 // pred_check_branch
        %480 = sbr.rel (%p478) target = $region84
      $region83: #{_lambda_.27} parent=79 // pred_region
        %p481 = scmp.lt.s32.totalorder %s23, 1
        %s482 = scalar_select %p481, %s23, 1
        %s483 = smul.addr %s482, 4
        %s484 = smul.addr %s483, 8
        %s485 = scalar_lea.vmem %s0, %s484
      $region84: #{_lambda_.27} parent=79 // pred_fallthru
        _
    $region80: #{_lambda_.27} parent=5 // pred_fallthru
      _
    %p486 = scmp.le.s32.totalorder 1, %s23
    %p487 = scmp.lt.s32.totalorder %s23, 3
    %p488 = pnand %p486, %p487
    %p489 = pneg %p488
    // Predicated region
    $region85: #{_lambda_.27} parent=5 // pred_check
      _
    $region86: #{_lambda_.27} parent=5 // pred_check_branch
      %491 = sbr.rel (%p488) target = $region88
    $region87: #{_lambda_.27} parent=5 // pred_region
      %s492 = ssub.s32 %s23, 1
      %p493 = scmp.lt.s32.totalorder %s28, 1
      %s494 = scalar_select %p493, %s28, 1
      %s495 = smul.addr %s494, 4
      %s496 = smul.addr %s495, 8
      %s497 = scalar_lea.vmem %s0, %s496
      %p498 = pneg %p49
      %p499 = pneg %p46
      %p500 = pneg %p70
      %p501 = pneg %p67
      %p502 = pneg %p91
      %p503 = pneg %p88
      %p504 = pneg %p112
      %p505 = pneg %p109
      %p506 = pneg %p133
      %p507 = pneg %p130
      %p508 = pneg %p154
      %p509 = pneg %p151
      %p510 = pneg %p175
      %p511 = pneg %p172
      %p512 = pneg %p196
      %p513 = pneg %p193
      %p514 = pneg %p217
      %p515 = pneg %p214
      %p516 = pneg %p238
      %p517 = pneg %p235
      %p518 = pneg %p259
      %p519 = pneg %p256
      %p520 = pneg %p280
      %p521 = pneg %p277
      %p522 = pneg %p301
      %p523 = pneg %p298
      %p524 = pneg %p322
      %p525 = pneg %p319
      %p526 = pneg %p343
      %p527 = pneg %p340
      %p528 = pneg %p364
      %p529 = pneg %p361
      %p530 = pneg %p385
      %p531 = pneg %p382
      %p532 = pneg %p411
      %p533 = pneg %p408
      %p534 = scmp.lt.s32.totalorder %s28, 1
      %s535 = scalar_select %p534, %s28, 1
      %s536 = smul.addr %s535, 4
      %s537 = smul.addr %s536, 8
      %s538 = scalar_lea.vmem %s17, %s537
      %p539 = scmp.lt.s32.totalorder %s28, 1
      %s540 = scalar_select %p539, %s28, 1
      %s541 = smul.addr %s540, 4
      %s542 = smul.addr %s541, 8
      %s543 = scalar_lea.vmem %s0, %s542
      %p544 = scmp.lt.s32.totalorder %s28, 1
      %s545 = scalar_select %p544, %s28, 1
      %s546 = smul.addr %s545, 4
      %s547 = smul.addr %s546, 8
      %s548 = scalar_lea.vmem %s17, %s547
      %v550 = vld [vmem:[%s543] sm:$0xff]
      %v551 = vld [vmem:[%s543 + $0x8] sm:$0xff]
      %v552 = vld [vmem:[%s543 + $0x10] sm:$0xff]
      %v553 = vld [vmem:[%s543 + $0x18] sm:$0xff]
      %v554 = vpack.c.bf16 %v551, %v550
      %v555 = vpack.c.bf16 %v553, %v552
      %v556 = vld [vmem:[%s1] sm:$0xf]
      %v557 = vld [vmem:[%s1 + $0x4] sm:$0xf]
      %v558 = vld [vmem:[%s1 + $0x8] sm:$0xf]
      %v559 = vld [vmem:[%s1 + $0xc] sm:$0xf]
      %v560 = vld [vmem:[%s2] sm:$0x1]
      %v562 = vlaneseq
      %v563 = vshrl.u32 %v562, 7
      %v564 = vsub.s32 0, %v563
      %v565 = vrot.slane %v560, %v564
      %v571 = vunpack.c.l.b16 %v556
      %v572 = vunpack.c.l.b16 %v557
      %v573 = vunpack.c.l.b16 %v558
      %v574 = vunpack.c.l.b16 %v559
      %v575 = vpack.c.b16 %v572, %v571
      %v576 = vpack.c.b16 %v574, %v573
      %vm579 = vcmask 261120
      %v581 = vsel %vm579, %v554, 0
      %v584 = vsel %vm579, %v555, 0
      %586 = vmatprep.subr.bf16.mxu0 0
      %587 = vmatpush1.bf16.msra.mxu0 0
      %588 = vmatprep.subr.bf16.mxu0 0
      %589 = vmatpush1.bf16.msra.mxu0 0
      %590 = vmatprep.subr.bf16.mxu0 0
      %591 = vmatpush1.bf16.msra.mxu0 0
      %592 = vmatprep.subr.bf16.mxu0 0
      %593 = vmatpush1.bf16.msra.mxu0 0
      %594 = vmatprep.subr.bf16.mxu0 0
      %595 = vmatpush1.bf16.msra.mxu0 0
      %596 = vmatprep.subr.bf16.mxu0 0
      %597 = vmatpush1.bf16.msra.mxu0 0
      %598 = vmatprep.subr.bf16.mxu0 0
      %599 = vmatpush1.bf16.msra.mxu0 %v576
      %600 = vmatprep.subr.bf16.mxu0 0
      %601 = vmatpush1.bf16.msra.mxu0 %v575
      %602 = vmatprep.subr.bf16.mxu0 0
      %603 = vmatpush2.bf16.msra.mxu0 0
      %604 = vmatprep.subr.bf16.mxu0 0
      %605 = vmatpush2.bf16.msra.mxu0 0
      %606 = vmatprep.subr.bf16.mxu0 0
      %607 = vmatpush2.bf16.msra.mxu0 0
      %608 = vmatprep.subr.bf16.mxu0 0
      %609 = vmatpush2.bf16.msra.mxu0 0
      %610 = vmatprep.subr.bf16.mxu0 0
      %611 = vmatpush2.bf16.msra.mxu0 0
      %612 = vmatprep.subr.bf16.mxu0 0
      %613 = vmatpush2.bf16.msra.mxu0 0
      %614 = vmatprep.subr.bf16.mxu0 0
      %615 = vmatpush2.bf16.msra.mxu0 0
      %616 = vmatprep.subr.bf16.mxu0 0
      %617 = vmatpush2.bf16.msra.mxu0 0
      %618 = vmatprep.mubr.bf16.mxu0 0
      %619 = vmatmul.mubr.bf16.gmra.mxu0 %v581
      %v620 = vpop.f32.mrf.mxu0
      %v621 = vadd.f32 %v565, %v620
      %v622 = vpop.f32.mrf.mxu0
      %v623 = vpop.f32.mrf.mxu0
      %v624 = vadd.f32 %v565, %v623
      %v625 = vpop.f32.mrf.mxu0
      %626 = vmatprep.mubr.bf16.mxu0 0
      %627 = vmatmul.mubr.bf16.gmra.mxu0 %v584
      %v628 = vpop.f32.mrf.mxu0
      %v629 = vadd.f32 %v565, %v628
      %v630 = vpop.f32.mrf.mxu0
      %v631 = vpop.f32.mrf.mxu0
      %v632 = vadd.f32 %v565, %v631
      %v633 = vpop.f32.mrf.mxu0
      %634 = vdwg.mxu0
      %v635 = vld [vmem:[%s3] sm:$0xf]
      %v636 = vld [vmem:[%s3 + $0x4] sm:$0xf]
      %v637 = vld [vmem:[%s3 + $0x8] sm:$0xf]
      %v638 = vld [vmem:[%s3 + $0xc] sm:$0xf]
      %v639 = vld [vmem:[%s4] sm:$0x1]
      %v641 = vlaneseq
      %v642 = vshrl.u32 %v641, 7
      %v643 = vsub.s32 0, %v642
      %v644 = vrot.slane %v639, %v643
      %v650 = vunpack.c.l.b16 %v635
      %v651 = vunpack.c.l.b16 %v636
      %v652 = vunpack.c.l.b16 %v637
      %v653 = vunpack.c.l.b16 %v638
      %v654 = vpack.c.b16 %v651, %v650
      %v655 = vpack.c.b16 %v653, %v652
      %658 = vmatprep.subr.bf16.mxu0 0
      %659 = vmatpush1.bf16.msra.mxu0 0
      %660 = vmatprep.subr.bf16.mxu0 0
      %661 = vmatpush1.bf16.msra.mxu0 0
      %662 = vmatprep.subr.bf16.mxu0 0
      %663 = vmatpush1.bf16.msra.mxu0 0
      %664 = vmatprep.subr.bf16.mxu0 0
      %665 = vmatpush1.bf16.msra.mxu0 0
      %666 = vmatprep.subr.bf16.mxu0 0
      %667 = vmatpush1.bf16.msra.mxu0 0
      %668 = vmatprep.subr.bf16.mxu0 0
      %669 = vmatpush1.bf16.msra.mxu0 0
      %670 = vmatprep.subr.bf16.mxu0 0
      %671 = vmatpush1.bf16.msra.mxu0 %v655
      %672 = vmatprep.subr.bf16.mxu0 0
      %673 = vmatpush1.bf16.msra.mxu0 %v654
      %674 = vmatprep.subr.bf16.mxu0 0
      %675 = vmatpush2.bf16.msra.mxu0 0
      %676 = vmatprep.subr.bf16.mxu0 0
      %677 = vmatpush2.bf16.msra.mxu0 0
      %678 = vmatprep.subr.bf16.mxu0 0
      %679 = vmatpush2.bf16.msra.mxu0 0
      %680 = vmatprep.subr.bf16.mxu0 0
      %681 = vmatpush2.bf16.msra.mxu0 0
      %682 = vmatprep.subr.bf16.mxu0 0
      %683 = vmatpush2.bf16.msra.mxu0 0
      %684 = vmatprep.subr.bf16.mxu0 0
      %685 = vmatpush2.bf16.msra.mxu0 0
      %686 = vmatprep.subr.bf16.mxu0 0
      %687 = vmatpush2.bf16.msra.mxu0 0
      %688 = vmatprep.subr.bf16.mxu0 0
      %689 = vmatpush2.bf16.msra.mxu0 0
      %690 = vmatprep.mubr.bf16.mxu0 0
      %691 = vmatmul.mubr.bf16.gmra.mxu0 %v581
      %v692 = vpop.f32.mrf.mxu0
      %v693 = vadd.f32 %v644, %v692
      %v694 = vpop.f32.mrf.mxu0
      %v695 = vpop.f32.mrf.mxu0
      %v696 = vadd.f32 %v644, %v695
      %v697 = vpop.f32.mrf.mxu0
      %698 = vmatprep.mubr.bf16.mxu0 0
      %699 = vmatmul.mubr.bf16.gmra.mxu0 %v584
      %v700 = vpop.f32.mrf.mxu0
      %v701 = vadd.f32 %v644, %v700
      %v702 = vpop.f32.mrf.mxu0
      %v703 = vpop.f32.mrf.mxu0
      %v704 = vadd.f32 %v644, %v703
      %v705 = vpop.f32.mrf.mxu0
      %706 = vdwg.mxu0
      %v707 = vld [vmem:[%s5] sm:$0xf]
      %v708 = vld [vmem:[%s5 + $0x4] sm:$0xf]
      %v709 = vld [vmem:[%s5 + $0x8] sm:$0xf]
      %v710 = vld [vmem:[%s5 + $0xc] sm:$0xf]
      %v711 = vld [vmem:[%s6] sm:$0x1]
      %v713 = vlaneseq
      %v714 = vshrl.u32 %v713, 7
      %v715 = vsub.s32 0, %v714
      %v716 = vrot.slane %v711, %v715
      %v722 = vunpack.c.l.b16 %v707
      %v723 = vunpack.c.l.b16 %v708
      %v724 = vunpack.c.l.b16 %v709
      %v725 = vunpack.c.l.b16 %v710
      %v726 = vpack.c.b16 %v723, %v722
      %v727 = vpack.c.b16 %v725, %v724
      %730 = vmatprep.subr.bf16.mxu0 0
      %731 = vmatpush1.bf16.msra.mxu0 0
      %732 = vmatprep.subr.bf16.mxu0 0
      %733 = vmatpush1.bf16.msra.mxu0 0
      %734 = vmatprep.subr.bf16.mxu0 0
      %735 = vmatpush1.bf16.msra.mxu0 0
      %736 = vmatprep.subr.bf16.mxu0 0
      %737 = vmatpush1.bf16.msra.mxu0 0
      %738 = vmatprep.subr.bf16.mxu0 0
      %739 = vmatpush1.bf16.msra.mxu0 0
      %740 = vmatprep.subr.bf16.mxu0 0
      %741 = vmatpush1.bf16.msra.mxu0 0
      %742 = vmatprep.subr.bf16.mxu0 0
      %743 = vmatpush1.bf16.msra.mxu0 %v727
      %744 = vmatprep.subr.bf16.mxu0 0
      %745 = vmatpush1.bf16.msra.mxu0 %v726
      %746 = vmatprep.subr.bf16.mxu0 0
      %747 = vmatpush2.bf16.msra.mxu0 0
      %748 = vmatprep.subr.bf16.mxu0 0
      %749 = vmatpush2.bf16.msra.mxu0 0
      %750 = vmatprep.subr.bf16.mxu0 0
      %751 = vmatpush2.bf16.msra.mxu0 0
      %752 = vmatprep.subr.bf16.mxu0 0
      %753 = vmatpush2.bf16.msra.mxu0 0
      %754 = vmatprep.subr.bf16.mxu0 0
      %755 = vmatpush2.bf16.msra.mxu0 0
      %756 = vmatprep.subr.bf16.mxu0 0
      %757 = vmatpush2.bf16.msra.mxu0 0
      %758 = vmatprep.subr.bf16.mxu0 0
      %759 = vmatpush2.bf16.msra.mxu0 0
      %760 = vmatprep.subr.bf16.mxu0 0
      %761 = vmatpush2.bf16.msra.mxu0 0
      %762 = vmatprep.mubr.bf16.mxu0 0
      %763 = vmatmul.mubr.bf16.gmra.mxu0 %v581
      %v764 = vpop.f32.mrf.mxu0
      %v765 = vadd.f32 %v716, %v764
      %v766 = vpop.f32.mrf.mxu0
      %v767 = vpop.f32.mrf.mxu0
      %v768 = vadd.f32 %v716, %v767
      %v769 = vpop.f32.mrf.mxu0
      %770 = vmatprep.mubr.bf16.mxu0 0
      %771 = vmatmul.mubr.bf16.gmra.mxu0 %v584
      %v772 = vpop.f32.mrf.mxu0
      %v773 = vadd.f32 %v716, %v772
      %v774 = vpop.f32.mrf.mxu0
      %v775 = vpop.f32.mrf.mxu0
      %v776 = vadd.f32 %v716, %v775
      %v777 = vpop.f32.mrf.mxu0
      %778 = vdwg.mxu0
      %v779 = vlaneseq
      %v780 = vand.u32 %v779, 127
      %v781 = vpack.c.bf16 %v696, %v693
      %v782 = vpack.c.bf16 %v704, %v701
      %vm783 = vcmp.ge.s32.totalorder %v780, 0
      %vm784 = vcmp.lt.s32.totalorder %v780, 8
      %vm785 = vmand %vm783, %vm784
      %v786 = vsel %vm785, 1, 0
      %v787 = vcvt.s32.f32 %v786
      %v788 = vmul.f32 %v621, %v787
      %v789 = vmul.f32 %v624, %v787
      %v790 = vmul.f32 %v629, %v787
      %v791 = vmul.f32 %v632, %v787
      %v792 = vpack.c.bf16 %v789, %v788
      %v793 = vpack.c.bf16 %v791, %v790
      %v795 = vsel %vm579, %v792, 0
      %v798 = vsel %vm579, %v793, 0
      %v801 = vsel %vm579, %v781, 0
      %v804 = vsel %vm579, %v782, 0
      %806 = vmatprep.subr.bf16.mxu0 0
      %807 = vmatpush1.bf16.xpose.msra.mxu0 0
      %808 = vmatprep.subr.bf16.mxu0 0
      %809 = vmatpush1.bf16.xpose.msra.mxu0 0
      %810 = vmatprep.subr.bf16.mxu0 0
      %811 = vmatpush1.bf16.xpose.msra.mxu0 0
      %812 = vmatprep.subr.bf16.mxu0 0
      %813 = vmatpush1.bf16.xpose.msra.mxu0 0
      %814 = vmatprep.subr.bf16.mxu0 0
      %815 = vmatpush1.bf16.xpose.msra.mxu0 0
      %816 = vmatprep.subr.bf16.mxu0 0
      %817 = vmatpush1.bf16.xpose.msra.mxu0 0
      %818 = vmatprep.subr.bf16.mxu0 0
      %819 = vmatpush1.bf16.xpose.msra.mxu0 %v804
      %820 = vmatprep.subr.bf16.mxu0 0
      %821 = vmatpush1.bf16.xpose.msra.mxu0 %v801
      %822 = vmatprep.subr.bf16.mxu0 0
      %823 = vmatpush2.bf16.xpose.msra.mxu0 0
      %824 = vmatprep.subr.bf16.mxu0 0
      %825 = vmatpush2.bf16.xpose.msra.mxu0 0
      %826 = vmatprep.subr.bf16.mxu0 0
      %827 = vmatpush2.bf16.xpose.msra.mxu0 0
      %828 = vmatprep.subr.bf16.mxu0 0
      %829 = vmatpush2.bf16.xpose.msra.mxu0 0
      %830 = vmatprep.subr.bf16.mxu0 0
      %831 = vmatpush2.bf16.xpose.msra.mxu0 0
      %832 = vmatprep.subr.bf16.mxu0 0
      %833 = vmatpush2.bf16.xpose.msra.mxu0 0
      %834 = vmatprep.subr.bf16.mxu0 0
      %835 = vmatpush2.bf16.xpose.msra.mxu0 0
      %836 = vmatprep.subr.bf16.mxu0 0
      %837 = vmatpush2.bf16.xpose.msra.mxu0 0
      %838 = vmatprep.mubr.bf16.mxu0 0
      %839 = vmatmul.mubr.bf16.gmra.mxu0 %v795
      %v840 = vpop.f32.mrf.mxu0
      %v841 = vadd.f32 0.0, %v840
      %v842 = vpop.f32.mrf.mxu0
      %v843 = vpop.f32.mrf.mxu0
      %v844 = vadd.f32 0.0, %v843
      %v845 = vpop.f32.mrf.mxu0
      %846 = vmatprep.mubr.bf16.mxu0 0
      %847 = vmatmul.mubr.bf16.gmra.mxu0 %v798
      %v848 = vpop.f32.mrf.mxu0
      %v849 = vadd.f32 0.0, %v848
      %v850 = vpop.f32.mrf.mxu0
      %v851 = vpop.f32.mrf.mxu0
      %v852 = vadd.f32 0.0, %v851
      %v853 = vpop.f32.mrf.mxu0
      %854 = vdwg.mxu0
      %v855 = vmul.f32 %v841, 0.35355338
      %v856 = vmul.f32 %v844, 0.35355338
      %v857 = vmul.f32 %v849, 0.35355338
      %v858 = vmul.f32 %v852, 0.35355338
      %v859 = vsel %vm579, %v855, -inf
      %860 = vmax.xlane.f32.xlu0 %v859
      %v861 = vpop.xlane.xlu0 %860
      %v862 = vsel %vm579, %v856, -inf
      %863 = vmax.xlane.f32.xlu0 %v862
      %v864 = vpop.xlane.xlu0 %863
      %v865 = vsel %vm579, %v857, -inf
      %866 = vmax.xlane.f32.xlu0 %v865
      %v867 = vpop.xlane.xlu0 %866
      %v868 = vsel %vm579, %v858, -inf
      %869 = vmax.xlane.f32.xlu0 %v868
      %v870 = vpop.xlane.xlu0 %869
      %v871 = vsub.f32 %v855, %v861
      %v872 = vsub.f32 %v856, %v864
      %v873 = vsub.f32 %v857, %v867
      %v874 = vsub.f32 %v858, %v870
      %v875 = vmul.f32 %v871, 1.442695
      %v876 = vpow.pop %v875
      %v877 = vmul.f32 %v872, 1.442695
      %v878 = vpow.pop %v877
      %v879 = vmul.f32 %v873, 1.442695
      %v880 = vpow.pop %v879
      %v881 = vmul.f32 %v874, 1.442695
      %v882 = vpow.pop %v881
      %v883 = vsel %vm579, %v876, 0.0
      %884 = vadd.xlane.f32.xlu0 %v883
      %v885 = vpop.xlane.xlu0 %884
      %v886 = vsel %vm579, %v878, 0.0
      %887 = vadd.xlane.f32.xlu0 %v886
      %v888 = vpop.xlane.xlu0 %887
      %v889 = vsel %vm579, %v880, 0.0
      %890 = vadd.xlane.f32.xlu0 %v889
      %v891 = vpop.xlane.xlu0 %890
      %v892 = vsel %vm579, %v882, 0.0
      %893 = vadd.xlane.f32.xlu0 %v892
      %v894 = vpop.xlane.xlu0 %893
      %v895 = vrcp.pop %v885
      %v896 = vrcp.pop %v888
      %v897 = vrcp.pop %v891
      %v898 = vrcp.pop %v894
      %v899 = vmul.f32 %v876, %v895
      %v900 = vmul.f32 %v878, %v896
      %v901 = vmul.f32 %v880, %v897
      %v902 = vmul.f32 %v882, %v898
      %v903 = vpack.c.bf16 %v900, %v899
      %v904 = vpack.c.bf16 %v902, %v901
      %v905 = vmul.f32 %v765, %v787
      %v906 = vmul.f32 %v768, %v787
      %v907 = vmul.f32 %v773, %v787
      %v908 = vmul.f32 %v776, %v787
      %v909 = vpack.c.bf16 %v906, %v905
      %v910 = vpack.c.bf16 %v908, %v907
      %vm911 = vcmp.ge.s32.totalorder %v780, 8
      %vm912 = vcmp.lt.s32.totalorder %v780, 16
      %vm913 = vmand %vm911, %vm912
      %v914 = vsel %vm913, 1, 0
      %v915 = vcvt.s32.f32 %v914
      %v916 = vmul.f32 %v621, %v915
      %v917 = vmul.f32 %v624, %v915
      %v918 = vmul.f32 %v629, %v915
      %v919 = vmul.f32 %v632, %v915
      %v920 = vpack.c.bf16 %v917, %v916
      %v921 = vpack.c.bf16 %v919, %v918
      %v923 = vsel %vm579, %v920, 0
      %v926 = vsel %vm579, %v921, 0
      %928 = vmatprep.subr.bf16.mxu0 0
      %929 = vmatpush1.bf16.xpose.msra.mxu0 0
      %930 = vmatprep.subr.bf16.mxu0 0
      %931 = vmatpush1.bf16.xpose.msra.mxu0 0
      %932 = vmatprep.subr.bf16.mxu0 0
      %933 = vmatpush1.bf16.xpose.msra.mxu0 0
      %934 = vmatprep.subr.bf16.mxu0 0
      %935 = vmatpush1.bf16.xpose.msra.mxu0 0
      %936 = vmatprep.subr.bf16.mxu0 0
      %937 = vmatpush1.bf16.xpose.msra.mxu0 0
      %938 = vmatprep.subr.bf16.mxu0 0
      %939 = vmatpush1.bf16.xpose.msra.mxu0 0
      %940 = vmatprep.subr.bf16.mxu0 0
      %941 = vmatpush1.bf16.xpose.msra.mxu0 %v804
      %942 = vmatprep.subr.bf16.mxu0 0
      %943 = vmatpush1.bf16.xpose.msra.mxu0 %v801
      %944 = vmatprep.subr.bf16.mxu0 0
      %945 = vmatpush2.bf16.xpose.msra.mxu0 0
      %946 = vmatprep.subr.bf16.mxu0 0
      %947 = vmatpush2.bf16.xpose.msra.mxu0 0
      %948 = vmatprep.subr.bf16.mxu0 0
      %949 = vmatpush2.bf16.xpose.msra.mxu0 0
      %950 = vmatprep.subr.bf16.mxu0 0
      %951 = vmatpush2.bf16.xpose.msra.mxu0 0
      %952 = vmatprep.subr.bf16.mxu0 0
      %953 = vmatpush2.bf16.xpose.msra.mxu0 0
      %954 = vmatprep.subr.bf16.mxu0 0
      %955 = vmatpush2.bf16.xpose.msra.mxu0 0
      %956 = vmatprep.subr.bf16.mxu0 0
      %957 = vmatpush2.bf16.xpose.msra.mxu0 0
      %958 = vmatprep.subr.bf16.mxu0 0
      %959 = vmatpush2.bf16.xpose.msra.mxu0 0
      %960 = vmatprep.mubr.bf16.mxu0 0
      %961 = vmatmul.mubr.bf16.gmra.mxu0 %v923
      %v962 = vpop.f32.mrf.mxu0
      %v963 = vadd.f32 0.0, %v962
      %v964 = vpop.f32.mrf.mxu0
      %v965 = vpop.f32.mrf.mxu0
      %v966 = vadd.f32 0.0, %v965
      %v967 = vpop.f32.mrf.mxu0
      %968 = vmatprep.mubr.bf16.mxu0 0
      %969 = vmatmul.mubr.bf16.gmra.mxu0 %v926
      %v970 = vpop.f32.mrf.mxu0
      %v971 = vadd.f32 0.0, %v970
      %v972 = vpop.f32.mrf.mxu0
      %v973 = vpop.f32.mrf.mxu0
      %v974 = vadd.f32 0.0, %v973
      %v975 = vpop.f32.mrf.mxu0
      %976 = vdwg.mxu0
      %v977 = vmul.f32 %v963, 0.35355338
      %v978 = vmul.f32 %v966, 0.35355338
      %v979 = vmul.f32 %v971, 0.35355338
      %v980 = vmul.f32 %v974, 0.35355338
      %v981 = vsel %vm579, %v977, -inf
      %982 = vmax.xlane.f32.xlu0 %v981
      %v983 = vpop.xlane.xlu0 %982
      %v984 = vsel %vm579, %v978, -inf
      %985 = vmax.xlane.f32.xlu0 %v984
      %v986 = vpop.xlane.xlu0 %985
      %v987 = vsel %vm579, %v979, -inf
      %988 = vmax.xlane.f32.xlu0 %v987
      %v989 = vpop.xlane.xlu0 %988
      %v990 = vsel %vm579, %v980, -inf
      %991 = vmax.xlane.f32.xlu0 %v990
      %v992 = vpop.xlane.xlu0 %991
      %v993 = vsub.f32 %v977, %v983
      %v994 = vsub.f32 %v978, %v986
      %v995 = vsub.f32 %v979, %v989
      %v996 = vsub.f32 %v980, %v992
      %v997 = vmul.f32 %v993, 1.442695
      %v998 = vpow.pop %v997
      %v999 = vmul.f32 %v994, 1.442695
      %v1000 = vpow.pop %v999
      %v1001 = vmul.f32 %v995, 1.442695
      %v1002 = vpow.pop %v1001
      %v1003 = vmul.f32 %v996, 1.442695
      %v1004 = vpow.pop %v1003
      %v1005 = vsel %vm579, %v998, 0.0
      %1006 = vadd.xlane.f32.xlu0 %v1005
      %v1007 = vpop.xlane.xlu0 %1006
      %v1008 = vsel %vm579, %v1000, 0.0
      %1009 = vadd.xlane.f32.xlu0 %v1008
      %v1010 = vpop.xlane.xlu0 %1009
      %v1011 = vsel %vm579, %v1002, 0.0
      %1012 = vadd.xlane.f32.xlu0 %v1011
      %v1013 = vpop.xlane.xlu0 %1012
      %v1014 = vsel %vm579, %v1004, 0.0
      %1015 = vadd.xlane.f32.xlu0 %v1014
      %v1016 = vpop.xlane.xlu0 %1015
      %v1017 = vrcp.pop %v1007
      %v1018 = vrcp.pop %v1010
      %v1019 = vrcp.pop %v1013
      %v1020 = vrcp.pop %v1016
      %v1021 = vmul.f32 %v998, %v1017
      %v1022 = vmul.f32 %v1000, %v1018
      %v1023 = vmul.f32 %v1002, %v1019
      %v1024 = vmul.f32 %v1004, %v1020
      %v1025 = vpack.c.bf16 %v1022, %v1021
      %v1026 = vpack.c.bf16 %v1024, %v1023
      %v1027 = vmul.f32 %v765, %v915
      %v1028 = vmul.f32 %v768, %v915
      %v1029 = vmul.f32 %v773, %v915
      %v1030 = vmul.f32 %v776, %v915
      %v1031 = vpack.c.bf16 %v1028, %v1027
      %v1032 = vpack.c.bf16 %v1030, %v1029
      %v1034 = vsel %vm579, %v1025, 0
      %v1037 = vsel %vm579, %v1026, 0
      %1039 = vmatprep.subr.bf16.mxu0 0
      %1040 = vmatpush1.bf16.msra.mxu0 0
      %1041 = vmatprep.subr.bf16.mxu0 0
      %1042 = vmatpush1.bf16.msra.mxu0 0
      %1043 = vmatprep.subr.bf16.mxu0 0
      %1044 = vmatpush1.bf16.msra.mxu0 0
      %1045 = vmatprep.subr.bf16.mxu0 0
      %1046 = vmatpush1.bf16.msra.mxu0 0
      %1047 = vmatprep.subr.bf16.mxu0 0
      %1048 = vmatpush1.bf16.msra.mxu0 0
      %1049 = vmatprep.subr.bf16.mxu0 0
      %1050 = vmatpush1.bf16.msra.mxu0 0
      %1051 = vmatprep.subr.bf16.mxu0 0
      %1052 = vmatpush1.bf16.msra.mxu0 %v1032
      %1053 = vmatprep.subr.bf16.mxu0 0
      %1054 = vmatpush1.bf16.msra.mxu0 %v1031
      %1055 = vmatprep.subr.bf16.mxu0 0
      %1056 = vmatpush2.bf16.msra.mxu0 0
      %1057 = vmatprep.subr.bf16.mxu0 0
      %1058 = vmatpush2.bf16.msra.mxu0 0
      %1059 = vmatprep.subr.bf16.mxu0 0
      %1060 = vmatpush2.bf16.msra.mxu0 0
      %1061 = vmatprep.subr.bf16.mxu0 0
      %1062 = vmatpush2.bf16.msra.mxu0 0
      %1063 = vmatprep.subr.bf16.mxu0 0
      %1064 = vmatpush2.bf16.msra.mxu0 0
      %1065 = vmatprep.subr.bf16.mxu0 0
      %1066 = vmatpush2.bf16.msra.mxu0 0
      %1067 = vmatprep.subr.bf16.mxu0 0
      %1068 = vmatpush2.bf16.msra.mxu0 0
      %1069 = vmatprep.subr.bf16.mxu0 0
      %1070 = vmatpush2.bf16.msra.mxu0 0
      %1071 = vmatprep.mubr.bf16.mxu0 0
      %1072 = vmatmul.mubr.bf16.gmra.mxu0 %v1034
      %v1073 = vpop.f32.mrf.mxu0
      %v1074 = vadd.f32 0.0, %v1073
      %v1075 = vpop.f32.mrf.mxu0
      %v1076 = vpop.f32.mrf.mxu0
      %v1077 = vadd.f32 0.0, %v1076
      %v1078 = vpop.f32.mrf.mxu0
      %1079 = vmatprep.mubr.bf16.mxu0 0
      %1080 = vmatmul.mubr.bf16.gmra.mxu0 %v1037
      %v1081 = vpop.f32.mrf.mxu0
      %v1082 = vadd.f32 0.0, %v1081
      %v1083 = vpop.f32.mrf.mxu0
      %v1084 = vpop.f32.mrf.mxu0
      %v1085 = vadd.f32 0.0, %v1084
      %v1086 = vpop.f32.mrf.mxu0
      %1087 = vdwg.mxu0
      %v1089 = vsel %vm579, %v903, 0
      %v1092 = vsel %vm579, %v904, 0
      %1094 = vmatprep.subr.bf16.mxu0 0
      %1095 = vmatpush1.bf16.msra.mxu0 0
      %1096 = vmatprep.subr.bf16.mxu0 0
      %1097 = vmatpush1.bf16.msra.mxu0 0
      %1098 = vmatprep.subr.bf16.mxu0 0
      %1099 = vmatpush1.bf16.msra.mxu0 0
      %1100 = vmatprep.subr.bf16.mxu0 0
      %1101 = vmatpush1.bf16.msra.mxu0 0
      %1102 = vmatprep.subr.bf16.mxu0 0
      %1103 = vmatpush1.bf16.msra.mxu0 0
      %1104 = vmatprep.subr.bf16.mxu0 0
      %1105 = vmatpush1.bf16.msra.mxu0 0
      %1106 = vmatprep.subr.bf16.mxu0 0
      %1107 = vmatpush1.bf16.msra.mxu0 %v910
      %1108 = vmatprep.subr.bf16.mxu0 0
      %1109 = vmatpush1.bf16.msra.mxu0 %v909
      %1110 = vmatprep.subr.bf16.mxu0 0
      %1111 = vmatpush2.bf16.msra.mxu0 0
      %1112 = vmatprep.subr.bf16.mxu0 0
      %1113 = vmatpush2.bf16.msra.mxu0 0
      %1114 = vmatprep.subr.bf16.mxu0 0
      %1115 = vmatpush2.bf16.msra.mxu0 0
      %1116 = vmatprep.subr.bf16.mxu0 0
      %1117 = vmatpush2.bf16.msra.mxu0 0
      %1118 = vmatprep.subr.bf16.mxu0 0
      %1119 = vmatpush2.bf16.msra.mxu0 0
      %1120 = vmatprep.subr.bf16.mxu0 0
      %1121 = vmatpush2.bf16.msra.mxu0 0
      %1122 = vmatprep.subr.bf16.mxu0 0
      %1123 = vmatpush2.bf16.msra.mxu0 0
      %1124 = vmatprep.subr.bf16.mxu0 0
      %1125 = vmatpush2.bf16.msra.mxu0 0
      %1126 = vmatprep.mubr.bf16.mxu0 0
      %1127 = vmatmul.mubr.bf16.gmra.mxu0 %v1089
      %v1128 = vpop.f32.mrf.mxu0
      %v1129 = vadd.f32 %v1074, %v1128
      %v1130 = vpop.f32.mrf.mxu0
      %v1131 = vpop.f32.mrf.mxu0
      %v1132 = vadd.f32 %v1077, %v1131
      %v1133 = vpop.f32.mrf.mxu0
      %1134 = vmatprep.mubr.bf16.mxu0 0
      %1135 = vmatmul.mubr.bf16.gmra.mxu0 %v1092
      %v1136 = vpop.f32.mrf.mxu0
      %v1137 = vadd.f32 %v1082, %v1136
      %v1138 = vpop.f32.mrf.mxu0
      %v1139 = vpop.f32.mrf.mxu0
      %v1140 = vadd.f32 %v1085, %v1139
      %v1141 = vpop.f32.mrf.mxu0
      %1142 = vdwg.mxu0
      %vm1143 = vcmp.ge.s32.totalorder %v780, 16
      %vm1144 = vcmp.lt.s32.totalorder %v780, 24
      %vm1145 = vmand %vm1143, %vm1144
      %v1146 = vsel %vm1145, 1, 0
      %v1147 = vcvt.s32.f32 %v1146
      %v1148 = vmul.f32 %v621, %v1147
      %v1149 = vmul.f32 %v624, %v1147
      %v1150 = vmul.f32 %v629, %v1147
      %v1151 = vmul.f32 %v632, %v1147
      %v1152 = vpack.c.bf16 %v1149, %v1148
      %v1153 = vpack.c.bf16 %v1151, %v1150
      %v1155 = vsel %vm579, %v1152, 0
      %v1158 = vsel %vm579, %v1153, 0
      %1160 = vmatprep.subr.bf16.mxu0 0
      %1161 = vmatpush1.bf16.xpose.msra.mxu0 0
      %1162 = vmatprep.subr.bf16.mxu0 0
      %1163 = vmatpush1.bf16.xpose.msra.mxu0 0
      %1164 = vmatprep.subr.bf16.mxu0 0
      %1165 = vmatpush1.bf16.xpose.msra.mxu0 0
      %1166 = vmatprep.subr.bf16.mxu0 0
      %1167 = vmatpush1.bf16.xpose.msra.mxu0 0
      %1168 = vmatprep.subr.bf16.mxu0 0
      %1169 = vmatpush1.bf16.xpose.msra.mxu0 0
      %1170 = vmatprep.subr.bf16.mxu0 0
      %1171 = vmatpush1.bf16.xpose.msra.mxu0 0
      %1172 = vmatprep.subr.bf16.mxu0 0
      %1173 = vmatpush1.bf16.xpose.msra.mxu0 %v804
      %1174 = vmatprep.subr.bf16.mxu0 0
      %1175 = vmatpush1.bf16.xpose.msra.mxu0 %v801
      %1176 = vmatprep.subr.bf16.mxu0 0
      %1177 = vmatpush2.bf16.xpose.msra.mxu0 0
      %1178 = vmatprep.subr.bf16.mxu0 0
      %1179 = vmatpush2.bf16.xpose.msra.mxu0 0
      %1180 = vmatprep.subr.bf16.mxu0 0
      %1181 = vmatpush2.bf16.xpose.msra.mxu0 0
      %1182 = vmatprep.subr.bf16.mxu0 0
      %1183 = vmatpush2.bf16.xpose.msra.mxu0 0
      %1184 = vmatprep.subr.bf16.mxu0 0
      %1185 = vmatpush2.bf16.xpose.msra.mxu0 0
      %1186 = vmatprep.subr.bf16.mxu0 0
      %1187 = vmatpush2.bf16.xpose.msra.mxu0 0
      %1188 = vmatprep.subr.bf16.mxu0 0
      %1189 = vmatpush2.bf16.xpose.msra.mxu0 0
      %1190 = vmatprep.subr.bf16.mxu0 0
      %1191 = vmatpush2.bf16.xpose.msra.mxu0 0
      %1192 = vmatprep.mubr.bf16.mxu0 0
      %1193 = vmatmul.mubr.bf16.gmra.mxu0 %v1155
      %v1194 = vpop.f32.mrf.mxu0
      %v1195 = vadd.f32 0.0, %v1194
      %v1196 = vpop.f32.mrf.mxu0
      %v1197 = vpop.f32.mrf.mxu0
      %v1198 = vadd.f32 0.0, %v1197
      %v1199 = vpop.f32.mrf.mxu0
      %1200 = vmatprep.mubr.bf16.mxu0 0
      %1201 = vmatmul.mubr.bf16.gmra.mxu0 %v1158
      %v1202 = vpop.f32.mrf.mxu0
      %v1203 = vadd.f32 0.0, %v1202
      %v1204 = vpop.f32.mrf.mxu0
      %v1205 = vpop.f32.mrf.mxu0
      %v1206 = vadd.f32 0.0, %v1205
      %v1207 = vpop.f32.mrf.mxu0
      %1208 = vdwg.mxu0
      %v1209 = vmul.f32 %v1195, 0.35355338
      %v1210 = vmul.f32 %v1198, 0.35355338
      %v1211 = vmul.f32 %v1203, 0.35355338
      %v1212 = vmul.f32 %v1206, 0.35355338
      %v1213 = vsel %vm579, %v1209, -inf
      %1214 = vmax.xlane.f32.xlu0 %v1213
      %v1215 = vpop.xlane.xlu0 %1214
      %v1216 = vsel %vm579, %v1210, -inf
      %1217 = vmax.xlane.f32.xlu0 %v1216
      %v1218 = vpop.xlane.xlu0 %1217
      %v1219 = vsel %vm579, %v1211, -inf
      %1220 = vmax.xlane.f32.xlu0 %v1219
      %v1221 = vpop.xlane.xlu0 %1220
      %v1222 = vsel %vm579, %v1212, -inf
      %1223 = vmax.xlane.f32.xlu0 %v1222
      %v1224 = vpop.xlane.xlu0 %1223
      %v1225 = vsub.f32 %v1209, %v1215
      %v1226 = vsub.f32 %v1210, %v1218
      %v1227 = vsub.f32 %v1211, %v1221
      %v1228 = vsub.f32 %v1212, %v1224
      %v1229 = vmul.f32 %v1225, 1.442695
      %v1230 = vpow.pop %v1229
      %v1231 = vmul.f32 %v1226, 1.442695
      %v1232 = vpow.pop %v1231
      %v1233 = vmul.f32 %v1227, 1.442695
      %v1234 = vpow.pop %v1233
      %v1235 = vmul.f32 %v1228, 1.442695
      %v1236 = vpow.pop %v1235
      %v1237 = vsel %vm579, %v1230, 0.0
      %1238 = vadd.xlane.f32.xlu0 %v1237
      %v1239 = vpop.xlane.xlu0 %1238
      %v1240 = vsel %vm579, %v1232, 0.0
      %1241 = vadd.xlane.f32.xlu0 %v1240
      %v1242 = vpop.xlane.xlu0 %1241
      %v1243 = vsel %vm579, %v1234, 0.0
      %1244 = vadd.xlane.f32.xlu0 %v1243
      %v1245 = vpop.xlane.xlu0 %1244
      %v1246 = vsel %vm579, %v1236, 0.0
      %1247 = vadd.xlane.f32.xlu0 %v1246
      %v1248 = vpop.xlane.xlu0 %1247
      %v1249 = vrcp.pop %v1239
      %v1250 = vrcp.pop %v1242
      %v1251 = vrcp.pop %v1245
      %v1252 = vrcp.pop %v1248
      %v1253 = vmul.f32 %v1230, %v1249
      %v1254 = vmul.f32 %v1232, %v1250
      %v1255 = vmul.f32 %v1234, %v1251
      %v1256 = vmul.f32 %v1236, %v1252
      %v1257 = vpack.c.bf16 %v1254, %v1253
      %v1258 = vpack.c.bf16 %v1256, %v1255
      %v1259 = vmul.f32 %v765, %v1147
      %v1260 = vmul.f32 %v768, %v1147
      %v1261 = vmul.f32 %v773, %v1147
      %v1262 = vmul.f32 %v776, %v1147
      %v1263 = vpack.c.bf16 %v1260, %v1259
      %v1264 = vpack.c.bf16 %v1262, %v1261
      %v1266 = vsel %vm579, %v1257, 0
      %v1269 = vsel %vm579, %v1258, 0
      %1271 = vmatprep.subr.bf16.mxu0 0
      %1272 = vmatpush1.bf16.msra.mxu0 0
      %1273 = vmatprep.subr.bf16.mxu0 0
      %1274 = vmatpush1.bf16.msra.mxu0 0
      %1275 = vmatprep.subr.bf16.mxu0 0
      %1276 = vmatpush1.bf16.msra.mxu0 0
      %1277 = vmatprep.subr.bf16.mxu0 0
      %1278 = vmatpush1.bf16.msra.mxu0 0
      %1279 = vmatprep.subr.bf16.mxu0 0
      %1280 = vmatpush1.bf16.msra.mxu0 0
      %1281 = vmatprep.subr.bf16.mxu0 0
      %1282 = vmatpush1.bf16.msra.mxu0 0
      %1283 = vmatprep.subr.bf16.mxu0 0
      %1284 = vmatpush1.bf16.msra.mxu0 %v1264
      %1285 = vmatprep.subr.bf16.mxu0 0
      %1286 = vmatpush1.bf16.msra.mxu0 %v1263
      %1287 = vmatprep.subr.bf16.mxu0 0
      %1288 = vmatpush2.bf16.msra.mxu0 0
      %1289 = vmatprep.subr.bf16.mxu0 0
      %1290 = vmatpush2.bf16.msra.mxu0 0
      %1291 = vmatprep.subr.bf16.mxu0 0
      %1292 = vmatpush2.bf16.msra.mxu0 0
      %1293 = vmatprep.subr.bf16.mxu0 0
      %1294 = vmatpush2.bf16.msra.mxu0 0
      %1295 = vmatprep.subr.bf16.mxu0 0
      %1296 = vmatpush2.bf16.msra.mxu0 0
      %1297 = vmatprep.subr.bf16.mxu0 0
      %1298 = vmatpush2.bf16.msra.mxu0 0
      %1299 = vmatprep.subr.bf16.mxu0 0
      %1300 = vmatpush2.bf16.msra.mxu0 0
      %1301 = vmatprep.subr.bf16.mxu0 0
      %1302 = vmatpush2.bf16.msra.mxu0 0
      %1303 = vmatprep.mubr.bf16.mxu0 0
      %1304 = vmatmul.mubr.bf16.gmra.mxu0 %v1266
      %v1305 = vpop.f32.mrf.mxu0
      %v1306 = vadd.f32 0.0, %v1305
      %v1307 = vpop.f32.mrf.mxu0
      %v1308 = vpop.f32.mrf.mxu0
      %v1309 = vadd.f32 0.0, %v1308
      %v1310 = vpop.f32.mrf.mxu0
      %1311 = vmatprep.mubr.bf16.mxu0 0
      %1312 = vmatmul.mubr.bf16.gmra.mxu0 %v1269
      %v1313 = vpop.f32.mrf.mxu0
      %v1314 = vadd.f32 0.0, %v1313
      %v1315 = vpop.f32.mrf.mxu0
      %v1316 = vpop.f32.mrf.mxu0
      %v1317 = vadd.f32 0.0, %v1316
      %v1318 = vpop.f32.mrf.mxu0
      %1319 = vdwg.mxu0
      %v1320 = vadd.f32 %v1129, %v1306
      %v1321 = vadd.f32 %v1132, %v1309
      %v1322 = vadd.f32 %v1137, %v1314
      %v1323 = vadd.f32 %v1140, %v1317
      %vm1324 = vcmp.ge.s32.totalorder %v780, 24
      %vm1325 = vcmp.lt.s32.totalorder %v780, 32
      %vm1326 = vmand %vm1324, %vm1325
      %v1327 = vsel %vm1326, 1, 0
      %v1328 = vcvt.s32.f32 %v1327
      %v1329 = vmul.f32 %v621, %v1328
      %v1330 = vmul.f32 %v624, %v1328
      %v1331 = vmul.f32 %v629, %v1328
      %v1332 = vmul.f32 %v632, %v1328
      %v1333 = vpack.c.bf16 %v1330, %v1329
      %v1334 = vpack.c.bf16 %v1332, %v1331
      %v1336 = vsel %vm579, %v1333, 0
      %v1339 = vsel %vm579, %v1334, 0
      %1341 = vmatprep.subr.bf16.mxu0 0
      %1342 = vmatpush1.bf16.xpose.msra.mxu0 0
      %1343 = vmatprep.subr.bf16.mxu0 0
      %1344 = vmatpush1.bf16.xpose.msra.mxu0 0
      %1345 = vmatprep.subr.bf16.mxu0 0
      %1346 = vmatpush1.bf16.xpose.msra.mxu0 0
      %1347 = vmatprep.subr.bf16.mxu0 0
      %1348 = vmatpush1.bf16.xpose.msra.mxu0 0
      %1349 = vmatprep.subr.bf16.mxu0 0
      %1350 = vmatpush1.bf16.xpose.msra.mxu0 0
      %1351 = vmatprep.subr.bf16.mxu0 0
      %1352 = vmatpush1.bf16.xpose.msra.mxu0 0
      %1353 = vmatprep.subr.bf16.mxu0 0
      %1354 = vmatpush1.bf16.xpose.msra.mxu0 %v804
      %1355 = vmatprep.subr.bf16.mxu0 0
      %1356 = vmatpush1.bf16.xpose.msra.mxu0 %v801
      %1357 = vmatprep.subr.bf16.mxu0 0
      %1358 = vmatpush2.bf16.xpose.msra.mxu0 0
      %1359 = vmatprep.subr.bf16.mxu0 0
      %1360 = vmatpush2.bf16.xpose.msra.mxu0 0
      %1361 = vmatprep.subr.bf16.mxu0 0
      %1362 = vmatpush2.bf16.xpose.msra.mxu0 0
      %1363 = vmatprep.subr.bf16.mxu0 0
      %1364 = vmatpush2.bf16.xpose.msra.mxu0 0
      %1365 = vmatprep.subr.bf16.mxu0 0
      %1366 = vmatpush2.bf16.xpose.msra.mxu0 0
      %1367 = vmatprep.subr.bf16.mxu0 0
      %1368 = vmatpush2.bf16.xpose.msra.mxu0 0
      %1369 = vmatprep.subr.bf16.mxu0 0
      %1370 = vmatpush2.bf16.xpose.msra.mxu0 0
      %1371 = vmatprep.subr.bf16.mxu0 0
      %1372 = vmatpush2.bf16.xpose.msra.mxu0 0
      %1373 = vmatprep.mubr.bf16.mxu0 0
      %1374 = vmatmul.mubr.bf16.gmra.mxu0 %v1336
      %v1375 = vpop.f32.mrf.mxu0
      %v1376 = vadd.f32 0.0, %v1375
      %v1377 = vpop.f32.mrf.mxu0
      %v1378 = vpop.f32.mrf.mxu0
      %v1379 = vadd.f32 0.0, %v1378
      %v1380 = vpop.f32.mrf.mxu0
      %1381 = vmatprep.mubr.bf16.mxu0 0
      %1382 = vmatmul.mubr.bf16.gmra.mxu0 %v1339
      %v1383 = vpop.f32.mrf.mxu0
      %v1384 = vadd.f32 0.0, %v1383
      %v1385 = vpop.f32.mrf.mxu0
      %v1386 = vpop.f32.mrf.mxu0
      %v1387 = vadd.f32 0.0, %v1386
      %v1388 = vpop.f32.mrf.mxu0
      %1389 = vdwg.mxu0
      %v1390 = vmul.f32 %v1376, 0.35355338
      %v1391 = vmul.f32 %v1379, 0.35355338
      %v1392 = vmul.f32 %v1384, 0.35355338
      %v1393 = vmul.f32 %v1387, 0.35355338
      %v1394 = vsel %vm579, %v1390, -inf
      %1395 = vmax.xlane.f32.xlu0 %v1394
      %v1396 = vpop.xlane.xlu0 %1395
      %v1397 = vsel %vm579, %v1391, -inf
      %1398 = vmax.xlane.f32.xlu0 %v1397
      %v1399 = vpop.xlane.xlu0 %1398
      %v1400 = vsel %vm579, %v1392, -inf
      %1401 = vmax.xlane.f32.xlu0 %v1400
      %v1402 = vpop.xlane.xlu0 %1401
      %v1403 = vsel %vm579, %v1393, -inf
      %1404 = vmax.xlane.f32.xlu0 %v1403
      %v1405 = vpop.xlane.xlu0 %1404
      %v1406 = vsub.f32 %v1390, %v1396
      %v1407 = vsub.f32 %v1391, %v1399
      %v1408 = vsub.f32 %v1392, %v1402
      %v1409 = vsub.f32 %v1393, %v1405
      %v1410 = vmul.f32 %v1406, 1.442695
      %v1411 = vpow.pop %v1410
      %v1412 = vmul.f32 %v1407, 1.442695
      %v1413 = vpow.pop %v1412
      %v1414 = vmul.f32 %v1408, 1.442695
      %v1415 = vpow.pop %v1414
      %v1416 = vmul.f32 %v1409, 1.442695
      %v1417 = vpow.pop %v1416
      %v1418 = vsel %vm579, %v1411, 0.0
      %1419 = vadd.xlane.f32.xlu0 %v1418
      %v1420 = vpop.xlane.xlu0 %1419
      %v1421 = vsel %vm579, %v1413, 0.0
      %1422 = vadd.xlane.f32.xlu0 %v1421
      %v1423 = vpop.xlane.xlu0 %1422
      %v1424 = vsel %vm579, %v1415, 0.0
      %1425 = vadd.xlane.f32.xlu0 %v1424
      %v1426 = vpop.xlane.xlu0 %1425
      %v1427 = vsel %vm579, %v1417, 0.0
      %1428 = vadd.xlane.f32.xlu0 %v1427
      %v1429 = vpop.xlane.xlu0 %1428
      %v1430 = vrcp.pop %v1420
      %v1431 = vrcp.pop %v1423
      %v1432 = vrcp.pop %v1426
      %v1433 = vrcp.pop %v1429
      %v1434 = vmul.f32 %v1411, %v1430
      %v1435 = vmul.f32 %v1413, %v1431
      %v1436 = vmul.f32 %v1415, %v1432
      %v1437 = vmul.f32 %v1417, %v1433
      %v1438 = vpack.c.bf16 %v1435, %v1434
      %v1439 = vpack.c.bf16 %v1437, %v1436
      %v1440 = vmul.f32 %v765, %v1328
      %v1441 = vmul.f32 %v768, %v1328
      %v1442 = vmul.f32 %v773, %v1328
      %v1443 = vmul.f32 %v776, %v1328
      %v1444 = vpack.c.bf16 %v1441, %v1440
      %v1445 = vpack.c.bf16 %v1443, %v1442
      %v1447 = vsel %vm579, %v1438, 0
      %v1450 = vsel %vm579, %v1439, 0
      %1452 = vmatprep.subr.bf16.mxu0 0
      %1453 = vmatpush1.bf16.msra.mxu0 0
      %1454 = vmatprep.subr.bf16.mxu0 0
      %1455 = vmatpush1.bf16.msra.mxu0 0
      %1456 = vmatprep.subr.bf16.mxu0 0
      %1457 = vmatpush1.bf16.msra.mxu0 0
      %1458 = vmatprep.subr.bf16.mxu0 0
      %1459 = vmatpush1.bf16.msra.mxu0 0
      %1460 = vmatprep.subr.bf16.mxu0 0
      %1461 = vmatpush1.bf16.msra.mxu0 0
      %1462 = vmatprep.subr.bf16.mxu0 0
      %1463 = vmatpush1.bf16.msra.mxu0 0
      %1464 = vmatprep.subr.bf16.mxu0 0
      %1465 = vmatpush1.bf16.msra.mxu0 %v1445
      %1466 = vmatprep.subr.bf16.mxu0 0
      %1467 = vmatpush1.bf16.msra.mxu0 %v1444
      %1468 = vmatprep.subr.bf16.mxu0 0
      %1469 = vmatpush2.bf16.msra.mxu0 0
      %1470 = vmatprep.subr.bf16.mxu0 0
      %1471 = vmatpush2.bf16.msra.mxu0 0
      %1472 = vmatprep.subr.bf16.mxu0 0
      %1473 = vmatpush2.bf16.msra.mxu0 0
      %1474 = vmatprep.subr.bf16.mxu0 0
      %1475 = vmatpush2.bf16.msra.mxu0 0
      %1476 = vmatprep.subr.bf16.mxu0 0
      %1477 = vmatpush2.bf16.msra.mxu0 0
      %1478 = vmatprep.subr.bf16.mxu0 0
      %1479 = vmatpush2.bf16.msra.mxu0 0
      %1480 = vmatprep.subr.bf16.mxu0 0
      %1481 = vmatpush2.bf16.msra.mxu0 0
      %1482 = vmatprep.subr.bf16.mxu0 0
      %1483 = vmatpush2.bf16.msra.mxu0 0
      %1484 = vmatprep.mubr.bf16.mxu0 0
      %1485 = vmatmul.mubr.bf16.gmra.mxu0 %v1447
      %v1486 = vpop.f32.mrf.mxu0
      %v1487 = vadd.f32 0.0, %v1486
      %v1488 = vpop.f32.mrf.mxu0
      %v1489 = vpop.f32.mrf.mxu0
      %v1490 = vadd.f32 0.0, %v1489
      %v1491 = vpop.f32.mrf.mxu0
      %1492 = vmatprep.mubr.bf16.mxu0 0
      %1493 = vmatmul.mubr.bf16.gmra.mxu0 %v1450
      %v1494 = vpop.f32.mrf.mxu0
      %v1495 = vadd.f32 0.0, %v1494
      %v1496 = vpop.f32.mrf.mxu0
      %v1497 = vpop.f32.mrf.mxu0
      %v1498 = vadd.f32 0.0, %v1497
      %v1499 = vpop.f32.mrf.mxu0
      %1500 = vdwg.mxu0
      %v1501 = vadd.f32 %v1320, %v1487
      %v1502 = vadd.f32 %v1321, %v1490
      %v1503 = vadd.f32 %v1322, %v1495
      %v1504 = vadd.f32 %v1323, %v1498
      %v1505 = vpack.c.bf16 %v1502, %v1501
      %v1506 = vpack.c.bf16 %v1504, %v1503
      %v1507 = vld [vmem:[%s7] sm:$0xf]
      %v1508 = vld [vmem:[%s7 + $0x4] sm:$0xf]
      %v1509 = vld [vmem:[%s7 + $0x8] sm:$0xf]
      %v1510 = vld [vmem:[%s7 + $0xc] sm:$0xf]
      %v1511 = vld [vmem:[%s8] sm:$0x1]
      %v1513 = vlaneseq
      %v1514 = vshrl.u32 %v1513, 7
      %v1515 = vsub.s32 0, %v1514
      %v1516 = vrot.slane %v1511, %v1515
      %v1522 = vunpack.c.l.b16 %v1507
      %v1523 = vunpack.c.l.b16 %v1508
      %v1524 = vunpack.c.l.b16 %v1509
      %v1525 = vunpack.c.l.b16 %v1510
      %v1526 = vpack.c.b16 %v1523, %v1522
      %v1527 = vpack.c.b16 %v1525, %v1524
      %v1531 = vsel %vm579, %v1505, 0
      %v1534 = vsel %vm579, %v1506, 0
      %1536 = vmatprep.subr.bf16.mxu0 0
      %1537 = vmatpush1.bf16.msra.mxu0 0
      %1538 = vmatprep.subr.bf16.mxu0 0
      %1539 = vmatpush1.bf16.msra.mxu0 0
      %1540 = vmatprep.subr.bf16.mxu0 0
      %1541 = vmatpush1.bf16.msra.mxu0 0
      %1542 = vmatprep.subr.bf16.mxu0 0
      %1543 = vmatpush1.bf16.msra.mxu0 0
      %1544 = vmatprep.subr.bf16.mxu0 0
      %1545 = vmatpush1.bf16.msra.mxu0 0
      %1546 = vmatprep.subr.bf16.mxu0 0
      %1547 = vmatpush1.bf16.msra.mxu0 0
      %1548 = vmatprep.subr.bf16.mxu0 0
      %1549 = vmatpush1.bf16.msra.mxu0 %v1527
      %1550 = vmatprep.subr.bf16.mxu0 0
      %1551 = vmatpush1.bf16.msra.mxu0 %v1526
      %1552 = vmatprep.subr.bf16.mxu0 0
      %1553 = vmatpush2.bf16.msra.mxu0 0
      %1554 = vmatprep.subr.bf16.mxu0 0
      %1555 = vmatpush2.bf16.msra.mxu0 0
      %1556 = vmatprep.subr.bf16.mxu0 0
      %1557 = vmatpush2.bf16.msra.mxu0 0
      %1558 = vmatprep.subr.bf16.mxu0 0
      %1559 = vmatpush2.bf16.msra.mxu0 0
      %1560 = vmatprep.subr.bf16.mxu0 0
      %1561 = vmatpush2.bf16.msra.mxu0 0
      %1562 = vmatprep.subr.bf16.mxu0 0
      %1563 = vmatpush2.bf16.msra.mxu0 0
      %1564 = vmatprep.subr.bf16.mxu0 0
      %1565 = vmatpush2.bf16.msra.mxu0 0
      %1566 = vmatprep.subr.bf16.mxu0 0
      %1567 = vmatpush2.bf16.msra.mxu0 0
      %1568 = vmatprep.mubr.bf16.mxu0 0
      %1569 = vmatmul.mubr.bf16.gmra.mxu0 %v1531
      %v1570 = vpop.f32.mrf.mxu0
      %v1571 = vadd.f32 %v1516, %v1570
      %v1572 = vpop.f32.mrf.mxu0
      %v1573 = vpop.f32.mrf.mxu0
      %v1574 = vadd.f32 %v1516, %v1573
      %v1575 = vpop.f32.mrf.mxu0
      %1576 = vmatprep.mubr.bf16.mxu0 0
      %1577 = vmatmul.mubr.bf16.gmra.mxu0 %v1534
      %v1578 = vpop.f32.mrf.mxu0
      %v1579 = vadd.f32 %v1516, %v1578
      %v1580 = vpop.f32.mrf.mxu0
      %v1581 = vpop.f32.mrf.mxu0
      %v1582 = vadd.f32 %v1516, %v1581
      %v1583 = vpop.f32.mrf.mxu0
      %1584 = vdwg.mxu0
      %v1585 = vadd.f32 %v550, %v1571
      %v1586 = vadd.f32 %v551, %v1574
      %v1587 = vadd.f32 %v552, %v1579
      %v1588 = vadd.f32 %v553, %v1582
      %v1589 = vld [vmem:[%s9] sm:$0x1]
      %v1590 = vld [vmem:[%s10] sm:$0x1]
      %v1591 = vsel %vm579, %v1585, 0.0
      %1592 = vadd.xlane.f32.xlu0 %v1591
      %v1593 = vpop.xlane.xlu0 %1592
      %v1594 = vsel %vm579, %v1586, 0.0
      %1595 = vadd.xlane.f32.xlu0 %v1594
      %v1596 = vpop.xlane.xlu0 %1595
      %v1597 = vsel %vm579, %v1587, 0.0
      %1598 = vadd.xlane.f32.xlu0 %v1597
      %v1599 = vpop.xlane.xlu0 %1598
      %v1600 = vsel %vm579, %v1588, 0.0
      %1601 = vadd.xlane.f32.xlu0 %v1600
      %v1602 = vpop.xlane.xlu0 %1601
      %v1603 = vrcp.pop 32.0
      %v1604 = vmul.f32 %v1593, %v1603
      %v1605 = vmul.f32 %v1596, %v1603
      %v1606 = vmul.f32 %v1599, %v1603
      %v1607 = vmul.f32 %v1602, %v1603
      %v1608 = vsub.f32 %v1585, %v1604
      %v1609 = vsub.f32 %v1586, %v1605
      %v1610 = vsub.f32 %v1587, %v1606
      %v1611 = vsub.f32 %v1588, %v1607
      %v1612 = vmul.f32 %v1608, %v1608
      %v1613 = vmul.f32 %v1609, %v1609
      %v1614 = vmul.f32 %v1610, %v1610
      %v1615 = vmul.f32 %v1611, %v1611
      %v1616 = vsel %vm579, %v1612, 0.0
      %1617 = vadd.xlane.f32.xlu0 %v1616
      %v1618 = vpop.xlane.xlu0 %1617
      %v1619 = vsel %vm579, %v1613, 0.0
      %1620 = vadd.xlane.f32.xlu0 %v1619
      %v1621 = vpop.xlane.xlu0 %1620
      %v1622 = vsel %vm579, %v1614, 0.0
      %1623 = vadd.xlane.f32.xlu0 %v1622
      %v1624 = vpop.xlane.xlu0 %1623
      %v1625 = vsel %vm579, %v1615, 0.0
      %1626 = vadd.xlane.f32.xlu0 %v1625
      %v1627 = vpop.xlane.xlu0 %1626
      %v1628 = vmul.f32 %v1618, %v1603
      %v1629 = vmul.f32 %v1621, %v1603
      %v1630 = vmul.f32 %v1624, %v1603
      %v1631 = vmul.f32 %v1627, %v1603
      %v1632 = vadd.f32 %v1628, 1e-12
      %v1633 = vadd.f32 %v1629, 1e-12
      %v1634 = vadd.f32 %v1630, 1e-12
      %v1635 = vadd.f32 %v1631, 1e-12
      %v1636 = vrsqrt.pop %v1632
      %v1637 = vrsqrt.pop %v1633
      %v1638 = vrsqrt.pop %v1634
      %v1639 = vrsqrt.pop %v1635
      %v1640 = vmul.f32 %v1608, %v1636
      %v1641 = vmul.f32 %v1609, %v1637
      %v1642 = vmul.f32 %v1610, %v1638
      %v1643 = vmul.f32 %v1611, %v1639
      %v1645 = vlaneseq
      %v1646 = vshrl.u32 %v1645, 7
      %v1647 = vsub.s32 0, %v1646
      %v1648 = vrot.slane %v1589, %v1647
      %v1650 = vmul.f32 %v1640, %v1648
      %v1651 = vmul.f32 %v1641, %v1648
      %v1652 = vmul.f32 %v1642, %v1648
      %v1653 = vmul.f32 %v1643, %v1648
      %v1655 = vlaneseq
      %v1656 = vshrl.u32 %v1655, 7
      %v1657 = vsub.s32 0, %v1656
      %v1658 = vrot.slane %v1590, %v1657
      %v1660 = vadd.f32 %v1650, %v1658
      %v1661 = vadd.f32 %v1651, %v1658
      %v1662 = vadd.f32 %v1652, %v1658
      %v1663 = vadd.f32 %v1653, %v1658
      %v1664 = vpack.c.bf16 %v1661, %v1660
      %v1665 = vpack.c.bf16 %v1663, %v1662
      %v1666 = vld [vmem:[%s11] sm:$0xf]
      %v1667 = vld [vmem:[%s11 + $0x4] sm:$0xf]
      %v1668 = vld [vmem:[%s11 + $0x8] sm:$0xf]
      %v1669 = vld [vmem:[%s11 + $0xc] sm:$0xf]
      %v1670 = vld [vmem:[%s12] sm:$0x1]
      %v1672 = vlaneseq
      %v1673 = vshrl.u32 %v1672, 7
      %v1674 = vsub.s32 0, %v1673
      %v1675 = vrot.slane %v1670, %v1674
      %v1681 = vunpack.c.l.b16 %v1666
      %v1682 = vunpack.c.l.b16 %v1667
      %v1683 = vunpack.c.l.b16 %v1668
      %v1684 = vunpack.c.l.b16 %v1669
      %v1685 = vpack.c.b16 %v1682, %v1681
      %v1686 = vpack.c.b16 %v1684, %v1683
      %v1690 = vsel %vm579, %v1664, 0
      %v1693 = vsel %vm579, %v1665, 0
      %1695 = vmatprep.subr.bf16.mxu0 0
      %1696 = vmatpush1.bf16.msra.mxu0 0
      %1697 = vmatprep.subr.bf16.mxu0 0
      %1698 = vmatpush1.bf16.msra.mxu0 0
      %1699 = vmatprep.subr.bf16.mxu0 0
      %1700 = vmatpush1.bf16.msra.mxu0 0
      %1701 = vmatprep.subr.bf16.mxu0 0
      %1702 = vmatpush1.bf16.msra.mxu0 0
      %1703 = vmatprep.subr.bf16.mxu0 0
      %1704 = vmatpush1.bf16.msra.mxu0 0
      %1705 = vmatprep.subr.bf16.mxu0 0
      %1706 = vmatpush1.bf16.msra.mxu0 0
      %1707 = vmatprep.subr.bf16.mxu0 0
      %1708 = vmatpush1.bf16.msra.mxu0 %v1686
      %1709 = vmatprep.subr.bf16.mxu0 0
      %1710 = vmatpush1.bf16.msra.mxu0 %v1685
      %1711 = vmatprep.subr.bf16.mxu0 0
      %1712 = vmatpush2.bf16.msra.mxu0 0
      %1713 = vmatprep.subr.bf16.mxu0 0
      %1714 = vmatpush2.bf16.msra.mxu0 0
      %1715 = vmatprep.subr.bf16.mxu0 0
      %1716 = vmatpush2.bf16.msra.mxu0 0
      %1717 = vmatprep.subr.bf16.mxu0 0
      %1718 = vmatpush2.bf16.msra.mxu0 0
      %1719 = vmatprep.subr.bf16.mxu0 0
      %1720 = vmatpush2.bf16.msra.mxu0 0
      %1721 = vmatprep.subr.bf16.mxu0 0
      %1722 = vmatpush2.bf16.msra.mxu0 0
      %1723 = vmatprep.subr.bf16.mxu0 0
      %1724 = vmatpush2.bf16.msra.mxu0 0
      %1725 = vmatprep.subr.bf16.mxu0 0
      %1726 = vmatpush2.bf16.msra.mxu0 0
      %1727 = vmatprep.mubr.bf16.mxu0 0
      %1728 = vmatmul.mubr.bf16.gmra.mxu0 %v1690
      %v1729 = vpop.f32.mrf.mxu0
      %v1730 = vadd.f32 %v1675, %v1729
      %v1731 = vpop.f32.mrf.mxu0
      %v1732 = vpop.f32.mrf.mxu0
      %v1733 = vadd.f32 %v1675, %v1732
      %v1734 = vpop.f32.mrf.mxu0
      %1735 = vmatprep.mubr.bf16.mxu0 0
      %1736 = vmatmul.mubr.bf16.gmra.mxu0 %v1693
      %v1737 = vpop.f32.mrf.mxu0
      %v1738 = vadd.f32 %v1675, %v1737
      %v1739 = vpop.f32.mrf.mxu0
      %v1740 = vpop.f32.mrf.mxu0
      %v1741 = vadd.f32 %v1675, %v1740
      %v1742 = vpop.f32.mrf.mxu0
      %1743 = vdwg.mxu0
      %v1744 = vmul.f32 %v1730, 0.5
      %v1745 = vmul.f32 %v1733, 0.5
      %v1746 = vmul.f32 %v1738, 0.5
      %v1747 = vmul.f32 %v1741, 0.5
      %v1748 = vmul.f32 %v1730, 0.044715
      %v1749 = vmul.f32 %v1733, 0.044715
      %v1750 = vmul.f32 %v1738, 0.044715
      %v1751 = vmul.f32 %v1741, 0.044715
      %v1752 = vmul.f32 %v1748, %v1730
      %v1753 = vmul.f32 %v1749, %v1733
      %v1754 = vmul.f32 %v1750, %v1738
      %v1755 = vmul.f32 %v1751, %v1741
      %v1756 = vmul.f32 %v1752, %v1730
      %v1757 = vmul.f32 %v1753, %v1733
      %v1758 = vmul.f32 %v1754, %v1738
      %v1759 = vmul.f32 %v1755, %v1741
      %v1760 = vadd.f32 %v1730, %v1756
      %v1761 = vadd.f32 %v1733, %v1757
      %v1762 = vadd.f32 %v1738, %v1758
      %v1763 = vadd.f32 %v1741, %v1759
      %v1764 = vmul.f32 %v1760, 0.7978846
      %v1765 = vmul.f32 %v1761, 0.7978846
      %v1766 = vmul.f32 %v1762, 0.7978846
      %v1767 = vmul.f32 %v1763, 0.7978846
      %v1768 = vtanh.pop %v1764
      %v1769 = vtanh.pop %v1765
      %v1770 = vtanh.pop %v1766
      %v1771 = vtanh.pop %v1767
      %v1772 = vadd.f32 %v1768, 1.0
      %v1773 = vadd.f32 %v1769, 1.0
      %v1774 = vadd.f32 %v1770, 1.0
      %v1775 = vadd.f32 %v1771, 1.0
      %v1776 = vmul.f32 %v1744, %v1772
      %v1777 = vmul.f32 %v1745, %v1773
      %v1778 = vmul.f32 %v1746, %v1774
      %v1779 = vmul.f32 %v1747, %v1775
      %v1780 = vpack.c.bf16 %v1777, %v1776
      %v1781 = vpack.c.bf16 %v1779, %v1778
      %v1782 = vld [vmem:[%s13] sm:$0xf]
      %v1783 = vld [vmem:[%s13 + $0x4] sm:$0xf]
      %v1784 = vld [vmem:[%s13 + $0x8] sm:$0xf]
      %v1785 = vld [vmem:[%s13 + $0xc] sm:$0xf]
      %v1786 = vld [vmem:[%s13 + $0x10] sm:$0xf]
      %v1787 = vld [vmem:[%s13 + $0x14] sm:$0xf]
      %v1788 = vld [vmem:[%s13 + $0x18] sm:$0xf]
      %v1789 = vld [vmem:[%s13 + $0x1c] sm:$0xf]
      %v1790 = vld [vmem:[%s13 + $0x20] sm:$0xf]
      %v1791 = vld [vmem:[%s13 + $0x24] sm:$0xf]
      %v1792 = vld [vmem:[%s13 + $0x28] sm:$0xf]
      %v1793 = vld [vmem:[%s13 + $0x2c] sm:$0xf]
      %v1794 = vld [vmem:[%s13 + $0x30] sm:$0xf]
      %v1795 = vld [vmem:[%s13 + $0x34] sm:$0xf]
      %v1796 = vld [vmem:[%s13 + $0x38] sm:$0xf]
      %v1797 = vld [vmem:[%s13 + $0x3c] sm:$0xf]
      %v1798 = vld [vmem:[%s14] sm:$0x1]
      %v1800 = vlaneseq
      %v1801 = vshrl.u32 %v1800, 7
      %v1802 = vsub.s32 0, %v1801
      %v1803 = vrot.slane %v1798, %v1802
      %v1821 = vunpack.c.l.b16 %v1782
      %v1822 = vunpack.c.l.b16 %v1783
      %v1823 = vunpack.c.l.b16 %v1784
      %v1824 = vunpack.c.l.b16 %v1785
      %v1825 = vunpack.c.l.b16 %v1786
      %v1826 = vunpack.c.l.b16 %v1787
      %v1827 = vunpack.c.l.b16 %v1788
      %v1828 = vunpack.c.l.b16 %v1789
      %v1829 = vunpack.c.l.b16 %v1790
      %v1830 = vunpack.c.l.b16 %v1791
      %v1831 = vunpack.c.l.b16 %v1792
      %v1832 = vunpack.c.l.b16 %v1793
      %v1833 = vunpack.c.l.b16 %v1794
      %v1834 = vunpack.c.l.b16 %v1795
      %v1835 = vunpack.c.l.b16 %v1796
      %v1836 = vunpack.c.l.b16 %v1797
      %v1837 = vpack.c.b16 %v1822, %v1821
      %v1838 = vpack.c.b16 %v1824, %v1823
      %v1839 = vpack.c.b16 %v1826, %v1825
      %v1840 = vpack.c.b16 %v1828, %v1827
      %v1841 = vpack.c.b16 %v1830, %v1829
      %v1842 = vpack.c.b16 %v1832, %v1831
      %v1843 = vpack.c.b16 %v1834, %v1833
      %v1844 = vpack.c.b16 %v1836, %v1835
      %1853 = vmatprep.subr.bf16.mxu0 0
      %1854 = vmatpush1.bf16.msra.mxu0 %v1844
      %1855 = vmatprep.subr.bf16.mxu0 0
      %1856 = vmatpush1.bf16.msra.mxu0 %v1843
      %1857 = vmatprep.subr.bf16.mxu0 0
      %1858 = vmatpush1.bf16.msra.mxu0 %v1842
      %1859 = vmatprep.subr.bf16.mxu0 0
      %1860 = vmatpush1.bf16.msra.mxu0 %v1841
      %1861 = vmatprep.subr.bf16.mxu0 0
      %1862 = vmatpush1.bf16.msra.mxu0 %v1840
      %1863 = vmatprep.subr.bf16.mxu0 0
      %1864 = vmatpush1.bf16.msra.mxu0 %v1839
      %1865 = vmatprep.subr.bf16.mxu0 0
      %1866 = vmatpush1.bf16.msra.mxu0 %v1838
      %1867 = vmatprep.subr.bf16.mxu0 0
      %1868 = vmatpush1.bf16.msra.mxu0 %v1837
      %1869 = vmatprep.subr.bf16.mxu0 0
      %1870 = vmatpush2.bf16.msra.mxu0 0
      %1871 = vmatprep.subr.bf16.mxu0 0
      %1872 = vmatpush2.bf16.msra.mxu0 0
      %1873 = vmatprep.subr.bf16.mxu0 0
      %1874 = vmatpush2.bf16.msra.mxu0 0
      %1875 = vmatprep.subr.bf16.mxu0 0
      %1876 = vmatpush2.bf16.msra.mxu0 0
      %1877 = vmatprep.subr.bf16.mxu0 0
      %1878 = vmatpush2.bf16.msra.mxu0 0
      %1879 = vmatprep.subr.bf16.mxu0 0
      %1880 = vmatpush2.bf16.msra.mxu0 0
      %1881 = vmatprep.subr.bf16.mxu0 0
      %1882 = vmatpush2.bf16.msra.mxu0 0
      %1883 = vmatprep.subr.bf16.mxu0 0
      %1884 = vmatpush2.bf16.msra.mxu0 0
      %1885 = vmatprep.mubr.bf16.mxu0 0
      %1886 = vmatmul.mubr.bf16.gmra.mxu0 %v1780
      %v1887 = vpop.f32.mrf.mxu0
      %v1888 = vadd.f32 %v1803, %v1887
      %v1889 = vpop.f32.mrf.mxu0
      %v1890 = vpop.f32.mrf.mxu0
      %v1891 = vadd.f32 %v1803, %v1890
      %v1892 = vpop.f32.mrf.mxu0
      %1893 = vmatprep.mubr.bf16.mxu0 0
      %1894 = vmatmul.mubr.bf16.gmra.mxu0 %v1781
      %v1895 = vpop.f32.mrf.mxu0
      %v1896 = vadd.f32 %v1803, %v1895
      %v1897 = vpop.f32.mrf.mxu0
      %v1898 = vpop.f32.mrf.mxu0
      %v1899 = vadd.f32 %v1803, %v1898
      %v1900 = vpop.f32.mrf.mxu0
      %1901 = vdwg.mxu0
      %v1902 = vadd.f32 %v1660, %v1888
      %v1903 = vadd.f32 %v1661, %v1891
      %v1904 = vadd.f32 %v1662, %v1896
      %v1905 = vadd.f32 %v1663, %v1899
      %v1906 = vld [vmem:[%s15] sm:$0x1]
      %v1907 = vld [vmem:[%s16] sm:$0x1]
      %v1908 = vsel %vm579, %v1902, 0.0
      %1909 = vadd.xlane.f32.xlu0 %v1908
      %v1910 = vpop.xlane.xlu0 %1909
      %v1911 = vsel %vm579, %v1903, 0.0
      %1912 = vadd.xlane.f32.xlu0 %v1911
      %v1913 = vpop.xlane.xlu0 %1912
      %v1914 = vsel %vm579, %v1904, 0.0
      %1915 = vadd.xlane.f32.xlu0 %v1914
      %v1916 = vpop.xlane.xlu0 %1915
      %v1917 = vsel %vm579, %v1905, 0.0
      %1918 = vadd.xlane.f32.xlu0 %v1917
      %v1919 = vpop.xlane.xlu0 %1918
      %v1920 = vmul.f32 %v1910, %v1603
      %v1921 = vmul.f32 %v1913, %v1603
      %v1922 = vmul.f32 %v1916, %v1603
      %v1923 = vmul.f32 %v1919, %v1603
      %v1924 = vsub.f32 %v1902, %v1920
      %v1925 = vsub.f32 %v1903, %v1921
      %v1926 = vsub.f32 %v1904, %v1922
      %v1927 = vsub.f32 %v1905, %v1923
      %v1928 = vmul.f32 %v1924, %v1924
      %v1929 = vmul.f32 %v1925, %v1925
      %v1930 = vmul.f32 %v1926, %v1926
      %v1931 = vmul.f32 %v1927, %v1927
      %v1932 = vsel %vm579, %v1928, 0.0
      %1933 = vadd.xlane.f32.xlu0 %v1932
      %v1934 = vpop.xlane.xlu0 %1933
      %v1935 = vsel %vm579, %v1929, 0.0
      %1936 = vadd.xlane.f32.xlu0 %v1935
      %v1937 = vpop.xlane.xlu0 %1936
      %v1938 = vsel %vm579, %v1930, 0.0
      %1939 = vadd.xlane.f32.xlu0 %v1938
      %v1940 = vpop.xlane.xlu0 %1939
      %v1941 = vsel %vm579, %v1931, 0.0
      %1942 = vadd.xlane.f32.xlu0 %v1941
      %v1943 = vpop.xlane.xlu0 %1942
      %v1944 = vmul.f32 %v1934, %v1603
      %v1945 = vmul.f32 %v1937, %v1603
      %v1946 = vmul.f32 %v1940, %v1603
      %v1947 = vmul.f32 %v1943, %v1603
      %v1948 = vadd.f32 %v1944, 1e-12
      %v1949 = vadd.f32 %v1945, 1e-12
      %v1950 = vadd.f32 %v1946, 1e-12
      %v1951 = vadd.f32 %v1947, 1e-12
      %v1952 = vrsqrt.pop %v1948
      %v1953 = vrsqrt.pop %v1949
      %v1954 = vrsqrt.pop %v1950
      %v1955 = vrsqrt.pop %v1951
      %v1956 = vmul.f32 %v1924, %v1952
      %v1957 = vmul.f32 %v1925, %v1953
      %v1958 = vmul.f32 %v1926, %v1954
      %v1959 = vmul.f32 %v1927, %v1955
      %v1961 = vlaneseq
      %v1962 = vshrl.u32 %v1961, 7
      %v1963 = vsub.s32 0, %v1962
      %v1964 = vrot.slane %v1906, %v1963
      %v1966 = vmul.f32 %v1956, %v1964
      %v1967 = vmul.f32 %v1957, %v1964
      %v1968 = vmul.f32 %v1958, %v1964
      %v1969 = vmul.f32 %v1959, %v1964
      %v1971 = vlaneseq
      %v1972 = vshrl.u32 %v1971, 7
      %v1973 = vsub.s32 0, %v1972
      %v1974 = vrot.slane %v1907, %v1973
      %v1976 = vadd.f32 %v1966, %v1974
      %v1977 = vadd.f32 %v1967, %v1974
      %v1978 = vadd.f32 %v1968, %v1974
      %v1979 = vadd.f32 %v1969, %v1974
      %1980 = vst.msk [vmem:[%s548] sm:$0xff] %vm579, %v1976
      %1981 = vst.msk [vmem:[%s548 + $0x8] sm:$0xff] %vm579, %v1977
      %1982 = vst.msk [vmem:[%s548 + $0x10] sm:$0xff] %vm579, %v1978
      %1983 = vst.msk [vmem:[%s548 + $0x18] sm:$0xff] %vm579, %v1979
      %p1984 = scmp.lt.s32.totalorder %s28, 1
      %s1985 = scalar_select %p1984, %s28, 1
      %s1986 = smul.addr %s1985, 4
      %s1987 = smul.addr %s1986, 8
      %s1988 = scalar_lea.vmem %s17, %s1987
      // Predicated region
      $region89: #{_lambda_.27} parent=87 // pred_check
        %p1989 = pneg %p408
      $region90: #{_lambda_.27} parent=87 // pred_check_branch
        %1991 = sbr.rel (%p1989) target = $region92
      $region91: #{_lambda_.27} parent=87 // pred_region
        _
      $region92: #{_lambda_.27} parent=87 // pred_fallthru
        _
    $region88: #{_lambda_.27} parent=5 // pred_fallthru
      _
    %p1992 = scmp.le.s32.totalorder 2, %s23
    // Predicated region
    $region93: #{_lambda_.27} parent=5 // pred_check
      %p1993 = pneg %p1992
    $region94: #{_lambda_.27} parent=5 // pred_check_branch
      %1995 = sbr.rel (%p1993) target = $region96
    $region95: #{_lambda_.27} parent=5 // pred_region
      %s1996 = ssub.s32 %s23, 2
      // Predicated region
      $region97: #{_lambda_.27} parent=95 // pred_check
        %p1997 = pneg %p414
      $region98: #{_lambda_.27} parent=95 // pred_check_branch
        %1999 = sbr.rel (%p1997) target = $region100
      $region99: #{_lambda_.27} parent=95 // pred_region
        %p2000 = scmp.lt.s32.totalorder %s29, 1
        %s2001 = scalar_select %p2000, %s29, 1
        %s2002 = smul.addr %s2001, 4
        %s2003 = smul.addr %s2002, 8
        %s2004 = scalar_lea.vmem %s17, %s2003
      $region100: #{_lambda_.27} parent=95 // pred_fallthru
        _
    $region96: #{_lambda_.27} parent=5 // pred_fallthru
      _
  $region6: #{_lambda_.27} parent=0 // loop_footer
    %s27 = sadd.s32 1, %s23
  $region7: #{_lambda_.27} parent=0 // loop_footer_branch
    %22 = sbr.rel target = $region3
  $region8: #{_lambda_.27} parent=0 // loop_exit
    _

// kernel: _lambda_.29
$region0: #{_lambda_.29}
  #allocation0 [shape = 'u32[]', space=smem, size = 0x4, offset = 0x4, fixed_abs, tag = 'smem constant byte address 0x4 - core index']
  #allocation1 [shape = 'u32[144,128]{1,0:T(1,128)}', space=vmem, size = 0x12000, scoped, tag = 'internal scratch']
  %s0 = inlined_call_operand.vmem [shape: f32[2,32,32], index: 0, kind: input, shape index: {}]
  %s1 = inlined_call_operand.vmem [shape: bf16[32,16], index: 1, kind: input, shape index: {}]
  %s2 = inlined_call_operand.vmem [shape: f32[1,16], index: 2, kind: input, shape index: {}]
  %s3 = inlined_call_operand.vmem [shape: s32[2,32,1], index: 3, kind: input, shape index: {}]
  %s4 = inlined_call_operand.vmem [shape: f32[2,32,1], index: 4, kind: input, shape index: {}]
  %s5 = inlined_call_operand.vmem [shape: f32[2,32,16], index: 5, kind: output, shape index: {0}]
  %s6 = inlined_call_operand.vmem [shape: f32[2,32,1], index: 6, kind: output, shape index: {1}]
  %7 = xla_tuple %s5, %s6
  %s8 = sld [smem:[#allocation0]]
  $region61: #{_lambda_.29} parent=0
    _
  %s10 = ssub.s32 1, %s8
  %s11 = scalar_select 0, %s10, %s8
  loop: start=0, step=1, limit=4
  $region2: #{_lambda_.29} parent=0 // loop_pre_header
    _
  $region3: #{_lambda_.29} parent=0 // loop_header
    %s13 = sphi 0, %s17
    %p14 = scmp.ge.s32.totalorder %s13, 4
    %s23 = sphi 0, %s25
    %s26 = sphi 0, %s23
    %s27 = sphi 0, %s26
    %s43 = sphi 0, %s27
    %s47 = sphi 0, %s47
    %s49 = sphi 0, %s47
    %s50 = sphi 0, %s49
    %s64 = sphi 0, %s50
    %s68 = sphi 0, %s68
    %s70 = sphi 0, %s68
    %s71 = sphi 0, %s70
    %s85 = sphi 0, %s71
    %s91 = sphi 0, %s93
    %s94 = sphi 0, %s91
    %s95 = sphi 0, %s94
    %s111 = sphi 0, %s95
    %s117 = sphi 0, %s119
    %s120 = sphi 0, %s117
    %s121 = sphi 0, %s120
    %s137 = sphi 0, %s121
    %s143 = sphi 0, %s145
    %s146 = sphi 0, %s143
    %s147 = sphi 0, %s146
    %s163 = sphi 0, %s147
    %s169 = sphi 0, %s171
    %s172 = sphi 0, %s169
    %s173 = sphi 0, %s172
    %s189 = sphi 0, %s173
  $region4: #{_lambda_.29} parent=0 // loop_header_branch
    %16 = sbr.rel (%p14) target = $region8
  $region5: #{_lambda_.29} parent=0 // loop_body
    %s18 = ssub.s32 %s13, 1
    %s19 = ssub.s32 %s13, 2
    %s20 = sadd.s32 %s13, 1
    %s21 = ssub.s32 %s13, %s20
    %p22 = scmp.eq.s32.totalorder %s21, 0
    %s24 = sadd.s32 %s23, 1
    %s25 = scalar_select %p22, %s23, %s24
    %p28 = pneg %p22
    %p29 = scmp.eq.s32.totalorder %s13, 1
    %p30 = por %p28, %p29
    %p31 = scmp.ne.s32.totalorder %s23, %s26
    %p32 = scmp.eq.s32.totalorder %s13, 0
    %p33 = por %p31, %p32
    %p34 = scmp.ne.s32.totalorder %s23, %s26
    %p35 = scmp.eq.s32.totalorder %s18, 1
    %p36 = por %p34, %p35
    %p37 = scmp.ne.s32.totalorder %s26, %s27
    %p38 = scmp.eq.s32.totalorder %s18, 0
    %p39 = por %p37, %p38
    %p40 = scmp.ne.s32.totalorder %s26, %s27
    %p41 = scmp.eq.s32.totalorder %s19, 1
    %p42 = por %p40, %p41
    %p44 = scmp.ne.s32.totalorder %s27, %s43
    %p45 = scmp.eq.s32.totalorder %s19, 0
    %p46 = por %p44, %p45
    %s48 = sadd.s32 %s47, 1
    %p51 = scmp.eq.s32.totalorder %s13, 1
    %p52 = scmp.ne.s32.totalorder %s47, %s49
    %p53 = scmp.eq.s32.totalorder %s13, 0
    %p54 = por %p52, %p53
    %p55 = scmp.ne.s32.totalorder %s47, %s49
    %p56 = scmp.eq.s32.totalorder %s18, 1
    %p57 = por %p55, %p56
    %p58 = scmp.ne.s32.totalorder %s49, %s50
    %p59 = scmp.eq.s32.totalorder %s18, 0
    %p60 = por %p58, %p59
    %p61 = scmp.ne.s32.totalorder %s49, %s50
    %p62 = scmp.eq.s32.totalorder %s19, 1
    %p63 = por %p61, %p62
    %p65 = scmp.ne.s32.totalorder %s50, %s64
    %p66 = scmp.eq.s32.totalorder %s19, 0
    %p67 = por %p65, %p66
    %s69 = sadd.s32 %s68, 1
    %p72 = scmp.eq.s32.totalorder %s13, 1
    %p73 = scmp.ne.s32.totalorder %s68, %s70
    %p74 = scmp.eq.s32.totalorder %s13, 0
    %p75 = por %p73, %p74
    %p76 = scmp.ne.s32.totalorder %s68, %s70
    %p77 = scmp.eq.s32.totalorder %s18, 1
    %p78 = por %p76, %p77
    %p79 = scmp.ne.s32.totalorder %s70, %s71
    %p80 = scmp.eq.s32.totalorder %s18, 0
    %p81 = por %p79, %p80
    %p82 = scmp.ne.s32.totalorder %s70, %s71
    %p83 = scmp.eq.s32.totalorder %s19, 1
    %p84 = por %p82, %p83
    %p86 = scmp.ne.s32.totalorder %s71, %s85
    %p87 = scmp.eq.s32.totalorder %s19, 0
    %p88 = por %p86, %p87
    %s89 = ssub.s32 %s13, %s20
    %p90 = scmp.eq.s32.totalorder %s89, 0
    %s92 = sadd.s32 %s91, 1
    %s93 = scalar_select %p90, %s91, %s92
    %p96 = pneg %p90
    %p97 = scmp.eq.s32.totalorder %s13, 1
    %p98 = por %p96, %p97
    %p99 = scmp.ne.s32.totalorder %s91, %s94
    %p100 = scmp.eq.s32.totalorder %s13, 0
    %p101 = por %p99, %p100
    %p102 = scmp.ne.s32.totalorder %s91, %s94
    %p103 = scmp.eq.s32.totalorder %s18, 1
    %p104 = por %p102, %p103
    %p105 = scmp.ne.s32.totalorder %s94, %s95
    %p106 = scmp.eq.s32.totalorder %s18, 0
    %p107 = por %p105, %p106
    %p108 = scmp.ne.s32.totalorder %s94, %s95
    %p109 = scmp.eq.s32.totalorder %s19, 1
    %p110 = por %p108, %p109
    %p112 = scmp.ne.s32.totalorder %s95, %s111
    %p113 = scmp.eq.s32.totalorder %s19, 0
    %p114 = por %p112, %p113
    %s115 = ssub.s32 %s13, %s20
    %p116 = scmp.eq.s32.totalorder %s115, 0
    %s118 = sadd.s32 %s117, 1
    %s119 = scalar_select %p116, %s117, %s118
    %p122 = pneg %p116
    %p123 = scmp.eq.s32.totalorder %s13, 1
    %p124 = por %p122, %p123
    %p125 = scmp.ne.s32.totalorder %s117, %s120
    %p126 = scmp.eq.s32.totalorder %s13, 0
    %p127 = por %p125, %p126
    %p128 = scmp.ne.s32.totalorder %s117, %s120
    %p129 = scmp.eq.s32.totalorder %s18, 1
    %p130 = por %p128, %p129
    %p131 = scmp.ne.s32.totalorder %s120, %s121
    %p132 = scmp.eq.s32.totalorder %s18, 0
    %p133 = por %p131, %p132
    %p134 = scmp.ne.s32.totalorder %s120, %s121
    %p135 = scmp.eq.s32.totalorder %s19, 1
    %p136 = por %p134, %p135
    %p138 = scmp.ne.s32.totalorder %s121, %s137
    %p139 = scmp.eq.s32.totalorder %s19, 0
    %p140 = por %p138, %p139
    %s141 = ssub.s32 %s13, %s20
    %p142 = scmp.eq.s32.totalorder %s141, 0
    %s144 = sadd.s32 %s143, 1
    %s145 = scalar_select %p142, %s143, %s144
    %p148 = pneg %p142
    %p149 = scmp.eq.s32.totalorder %s13, 1
    %p150 = por %p148, %p149
    %p151 = scmp.ne.s32.totalorder %s143, %s146
    %p152 = scmp.eq.s32.totalorder %s13, 0
    %p153 = por %p151, %p152
    %p154 = scmp.ne.s32.totalorder %s143, %s146
    %p155 = scmp.eq.s32.totalorder %s18, 1
    %p156 = por %p154, %p155
    %p157 = scmp.ne.s32.totalorder %s146, %s147
    %p158 = scmp.eq.s32.totalorder %s18, 0
    %p159 = por %p157, %p158
    %p160 = scmp.ne.s32.totalorder %s146, %s147
    %p161 = scmp.eq.s32.totalorder %s19, 1
    %p162 = por %p160, %p161
    %p164 = scmp.ne.s32.totalorder %s147, %s163
    %p165 = scmp.eq.s32.totalorder %s19, 0
    %p166 = por %p164, %p165
    %s167 = ssub.s32 %s13, %s20
    %p168 = scmp.eq.s32.totalorder %s167, 0
    %s170 = sadd.s32 %s169, 1
    %s171 = scalar_select %p168, %s169, %s170
    %p174 = pneg %p168
    %p175 = scmp.eq.s32.totalorder %s13, 1
    %p176 = por %p174, %p175
    %p177 = scmp.ne.s32.totalorder %s169, %s172
    %p178 = scmp.eq.s32.totalorder %s13, 0
    %p179 = por %p177, %p178
    %p180 = scmp.ne.s32.totalorder %s169, %s172
    %p181 = scmp.eq.s32.totalorder %s18, 1
    %p182 = por %p180, %p181
    %p183 = scmp.ne.s32.totalorder %s172, %s173
    %p184 = scmp.eq.s32.totalorder %s18, 0
    %p185 = por %p183, %p184
    %p186 = scmp.ne.s32.totalorder %s172, %s173
    %p187 = scmp.eq.s32.totalorder %s19, 1
    %p188 = por %p186, %p187
    %p190 = scmp.ne.s32.totalorder %s173, %s189
    %p191 = scmp.eq.s32.totalorder %s19, 0
    %p192 = por %p190, %p191
    %p193 = scmp.le.s32.totalorder 1, %s13
    %p194 = scmp.lt.s32.totalorder %s13, 3
    %p195 = pnand %p193, %p194
    %p196 = pneg %p195
    // Predicated region
    $region9: #{_lambda_.29} parent=5 // pred_check
      _
    $region10: #{_lambda_.29} parent=5 // pred_check_branch
      %198 = sbr.rel (%p195) target = $region12
    $region11: #{_lambda_.29} parent=5 // pred_region
      %s199 = ssub.s32 %s13, 1
      // Predicated region
      $region13: #{_lambda_.29} parent=11 // pred_check
        %p200 = pneg %p60
      $region14: #{_lambda_.29} parent=11 // pred_check_branch
        %202 = sbr.rel (%p200) target = $region16
      $region15: #{_lambda_.29} parent=11 // pred_region
        _
      $region16: #{_lambda_.29} parent=11 // pred_fallthru
        _
      // Predicated region
      $region17: #{_lambda_.29} parent=11 // pred_check
        %p203 = pneg %p81
      $region18: #{_lambda_.29} parent=11 // pred_check_branch
        %205 = sbr.rel (%p203) target = $region20
      $region19: #{_lambda_.29} parent=11 // pred_region
        _
      $region20: #{_lambda_.29} parent=11 // pred_fallthru
        _
    $region12: #{_lambda_.29} parent=5 // pred_fallthru
      _
    %p206 = scmp.lt.s32.totalorder %s13, 2
    // Predicated region
    $region21: #{_lambda_.29} parent=5 // pred_check
      %p207 = pneg %p206
    $region22: #{_lambda_.29} parent=5 // pred_check_branch
      %209 = sbr.rel (%p207) target = $region24
    $region23: #{_lambda_.29} parent=5 // pred_region
      // Predicated region
      $region25: #{_lambda_.29} parent=23 // pred_check
        %p210 = pneg %p33
      $region26: #{_lambda_.29} parent=23 // pred_check_branch
        %212 = sbr.rel (%p210) target = $region28
      $region27: #{_lambda_.29} parent=23 // pred_region
        %p213 = scmp.lt.s32.totalorder %s13, 1
        %s214 = scalar_select %p213, %s13, 1
        %s215 = smul.addr %s214, 4
        %s216 = smul.addr %s215, 8
        %s217 = scalar_lea.vmem %s0, %s216
      $region28: #{_lambda_.29} parent=23 // pred_fallthru
        _
      // Predicated region
      $region29: #{_lambda_.29} parent=23 // pred_check
        %p218 = pneg %p101
      $region30: #{_lambda_.29} parent=23 // pred_check_branch
        %220 = sbr.rel (%p218) target = $region32
      $region31: #{_lambda_.29} parent=23 // pred_region
        %p221 = scmp.lt.s32.totalorder %s13, 1
        %s222 = scalar_select %p221, %s13, 1
        %s223 = smul.addr %s222, 4
        %s224 = smul.addr %s223, 8
        %s225 = scalar_lea.vmem %s3, %s224
      $region32: #{_lambda_.29} parent=23 // pred_fallthru
        _
      // Predicated region
      $region33: #{_lambda_.29} parent=23 // pred_check
        %p226 = pneg %p127
      $region34: #{_lambda_.29} parent=23 // pred_check_branch
        %228 = sbr.rel (%p226) target = $region36
      $region35: #{_lambda_.29} parent=23 // pred_region
        %p229 = scmp.lt.s32.totalorder %s13, 1
        %s230 = scalar_select %p229, %s13, 1
        %s231 = smul.addr %s230, 4
        %s232 = smul.addr %s231, 8
        %s233 = scalar_lea.vmem %s4, %s232
      $region36: #{_lambda_.29} parent=23 // pred_fallthru
        _
    $region24: #{_lambda_.29} parent=5 // pred_fallthru
      _
    %p234 = scmp.le.s32.totalorder 1, %s13
    %p235 = scmp.lt.s32.totalorder %s13, 3
    %p236 = pnand %p234, %p235
    %p237 = pneg %p236
    // Predicated region
    $region37: #{_lambda_.29} parent=5 // pred_check
      _
    $region38: #{_lambda_.29} parent=5 // pred_check_branch
      %239 = sbr.rel (%p236) target = $region40
    $region39: #{_lambda_.29} parent=5 // pred_region
      %s240 = ssub.s32 %s13, 1
      %p241 = scmp.lt.s32.totalorder %s18, 1
      %s242 = scalar_select %p241, %s18, 1
      %s243 = smul.addr %s242, 4
      %s244 = smul.addr %s243, 8
      %s245 = scalar_lea.vmem %s0, %s244
      %p246 = pneg %p39
      %p247 = pneg %p36
      %p248 = pneg %p60
      %p249 = pneg %p57
      %p250 = pneg %p81
      %p251 = pneg %p78
      %p252 = scmp.lt.s32.totalorder %s18, 1
      %s253 = scalar_select %p252, %s18, 1
      %s254 = smul.addr %s253, 4
      %s255 = smul.addr %s254, 8
      %s256 = scalar_lea.vmem %s3, %s255
      %p257 = pneg %p107
      %p258 = pneg %p104
      %p259 = scmp.lt.s32.totalorder %s18, 1
      %s260 = scalar_select %p259, %s18, 1
      %s261 = smul.addr %s260, 4
      %s262 = smul.addr %s261, 8
      %s263 = scalar_lea.vmem %s4, %s262
      %p264 = pneg %p133
      %p265 = pneg %p130
      %p266 = pneg %p159
      %p267 = pneg %p156
      %p268 = scmp.lt.s32.totalorder %s18, 1
      %s269 = scalar_select %p268, %s18, 1
      %s270 = smul.addr %s269, 4
      %s271 = smul.addr %s270, 8
      %s272 = scalar_lea.vmem %s5, %s271
      %p273 = pneg %p185
      %p274 = pneg %p182
      %p275 = scmp.lt.s32.totalorder %s18, 1
      %s276 = scalar_select %p275, %s18, 1
      %s277 = smul.addr %s276, 4
      %s278 = smul.addr %s277, 8
      %s279 = scalar_lea.vmem %s6, %s278
      %p280 = scmp.lt.s32.totalorder %s18, 1
      %s281 = scalar_select %p280, %s18, 1
      %s282 = smul.addr %s281, 4
      %s283 = smul.addr %s282, 8
      %s284 = scalar_lea.vmem %s0, %s283
      %p285 = scmp.lt.s32.totalorder %s18, 1
      %s286 = scalar_select %p285, %s18, 1
      %s287 = smul.addr %s286, 4
      %s288 = smul.addr %s287, 8
      %s289 = scalar_lea.vmem %s3, %s288
      %p290 = scmp.lt.s32.totalorder %s18, 1
      %s291 = scalar_select %p290, %s18, 1
      %s292 = smul.addr %s291, 4
      %s293 = smul.addr %s292, 8
      %s294 = scalar_lea.vmem %s4, %s293
      %p295 = scmp.lt.s32.totalorder %s18, 1
      %s296 = scalar_select %p295, %s18, 1
      %s297 = smul.addr %s296, 4
      %s298 = smul.addr %s297, 8
      %s299 = scalar_lea.vmem %s5, %s298
      %p300 = scmp.lt.s32.totalorder %s18, 1
      %s301 = scalar_select %p300, %s18, 1
      %s302 = smul.addr %s301, 4
      %s303 = smul.addr %s302, 8
      %s304 = scalar_lea.vmem %s6, %s303
      %v306 = vld [vmem:[%s284] sm:$0xff]
      %v307 = vld [vmem:[%s284 + $0x8] sm:$0xff]
      %v308 = vld [vmem:[%s284 + $0x10] sm:$0xff]
      %v309 = vld [vmem:[%s284 + $0x18] sm:$0xff]
      %v310 = vpack.c.bf16 %v307, %v306
      %v311 = vpack.c.bf16 %v309, %v308
      %v312 = vld [vmem:[%s1] sm:$0xf]
      %v313 = vld [vmem:[%s1 + $0x4] sm:$0xf]
      %v314 = vld [vmem:[%s1 + $0x8] sm:$0xf]
      %v315 = vld [vmem:[%s1 + $0xc] sm:$0xf]
      %v316 = vld [vmem:[%s2] sm:$0x1]
      %v318 = vlaneseq
      %v319 = vshrl.u32 %v318, 7
      %v320 = vsub.s32 0, %v319
      %v321 = vrot.slane %v316, %v320
      %v327 = vunpack.c.l.b16 %v312
      %v328 = vunpack.c.l.b16 %v313
      %v329 = vunpack.c.l.b16 %v314
      %v330 = vunpack.c.l.b16 %v315
      %v331 = vpack.c.b16 %v328, %v327
      %v332 = vpack.c.b16 %v330, %v329
      %vm335 = vcmask 261120
      %v337 = vsel %vm335, %v310, 0
      %v340 = vsel %vm335, %v311, 0
      %342 = vmatprep.subr.bf16.mxu0 0
      %343 = vmatpush1.bf16.msra.mxu0 0
      %344 = vmatprep.subr.bf16.mxu0 0
      %345 = vmatpush1.bf16.msra.mxu0 0
      %346 = vmatprep.subr.bf16.mxu0 0
      %347 = vmatpush1.bf16.msra.mxu0 0
      %348 = vmatprep.subr.bf16.mxu0 0
      %349 = vmatpush1.bf16.msra.mxu0 0
      %350 = vmatprep.subr.bf16.mxu0 0
      %351 = vmatpush1.bf16.msra.mxu0 0
      %352 = vmatprep.subr.bf16.mxu0 0
      %353 = vmatpush1.bf16.msra.mxu0 0
      %354 = vmatprep.subr.bf16.mxu0 0
      %355 = vmatpush1.bf16.msra.mxu0 %v332
      %356 = vmatprep.subr.bf16.mxu0 0
      %357 = vmatpush1.bf16.msra.mxu0 %v331
      %358 = vmatprep.subr.bf16.mxu0 0
      %359 = vmatpush2.bf16.msra.mxu0 0
      %360 = vmatprep.subr.bf16.mxu0 0
      %361 = vmatpush2.bf16.msra.mxu0 0
      %362 = vmatprep.subr.bf16.mxu0 0
      %363 = vmatpush2.bf16.msra.mxu0 0
      %364 = vmatprep.subr.bf16.mxu0 0
      %365 = vmatpush2.bf16.msra.mxu0 0
      %366 = vmatprep.subr.bf16.mxu0 0
      %367 = vmatpush2.bf16.msra.mxu0 0
      %368 = vmatprep.subr.bf16.mxu0 0
      %369 = vmatpush2.bf16.msra.mxu0 0
      %370 = vmatprep.subr.bf16.mxu0 0
      %371 = vmatpush2.bf16.msra.mxu0 0
      %372 = vmatprep.subr.bf16.mxu0 0
      %373 = vmatpush2.bf16.msra.mxu0 0
      %374 = vmatprep.mubr.bf16.mxu0 0
      %375 = vmatmul.mubr.bf16.gmra.mxu0 %v337
      %v376 = vpop.f32.mrf.mxu0
      %v377 = vadd.f32 %v321, %v376
      %v378 = vpop.f32.mrf.mxu0
      %v379 = vpop.f32.mrf.mxu0
      %v380 = vadd.f32 %v321, %v379
      %v381 = vpop.f32.mrf.mxu0
      %382 = vmatprep.mubr.bf16.mxu0 0
      %383 = vmatmul.mubr.bf16.gmra.mxu0 %v340
      %v384 = vpop.f32.mrf.mxu0
      %v385 = vadd.f32 %v321, %v384
      %v386 = vpop.f32.mrf.mxu0
      %v387 = vpop.f32.mrf.mxu0
      %v388 = vadd.f32 %v321, %v387
      %v389 = vpop.f32.mrf.mxu0
      %390 = vdwg.mxu0
      %vm391 = vcmask 130048
      %392 = vst.msk [vmem:[%s299] sm:$0xff] %vm391, %v377
      %393 = vst.msk [vmem:[%s299 + $0x8] sm:$0xff] %vm391, %v380
      %394 = vst.msk [vmem:[%s299 + $0x10] sm:$0xff] %vm391, %v385
      %395 = vst.msk [vmem:[%s299 + $0x18] sm:$0xff] %vm391, %v388
      %v396 = vsel %vm391, %v377, -inf
      %397 = vmax.xlane.f32.xlu0 %v396
      %v398 = vpop.xlane.xlu0 %397
      %v399 = vsel %vm391, %v380, -inf
      %400 = vmax.xlane.f32.xlu0 %v399
      %v401 = vpop.xlane.xlu0 %400
      %v402 = vsel %vm391, %v385, -inf
      %403 = vmax.xlane.f32.xlu0 %v402
      %v404 = vpop.xlane.xlu0 %403
      %v405 = vsel %vm391, %v388, -inf
      %406 = vmax.xlane.f32.xlu0 %v405
      %v407 = vpop.xlane.xlu0 %406
      %v408 = vsub.f32 %v377, %v398
      %v409 = vsub.f32 %v380, %v401
      %v410 = vsub.f32 %v385, %v404
      %v411 = vsub.f32 %v388, %v407
      %v412 = vmul.f32 %v408, 1.442695
      %v413 = vpow.pop %v412
      %v414 = vmul.f32 %v409, 1.442695
      %v415 = vpow.pop %v414
      %v416 = vmul.f32 %v410, 1.442695
      %v417 = vpow.pop %v416
      %v418 = vmul.f32 %v411, 1.442695
      %v419 = vpow.pop %v418
      %v420 = vsel %vm391, %v413, 0.0
      %421 = vadd.xlane.f32.xlu0 %v420
      %v422 = vpop.xlane.xlu0 %421
      %v423 = vsel %vm391, %v415, 0.0
      %424 = vadd.xlane.f32.xlu0 %v423
      %v425 = vpop.xlane.xlu0 %424
      %v426 = vsel %vm391, %v417, 0.0
      %427 = vadd.xlane.f32.xlu0 %v426
      %v428 = vpop.xlane.xlu0 %427
      %v429 = vsel %vm391, %v419, 0.0
      %430 = vadd.xlane.f32.xlu0 %v429
      %v431 = vpop.xlane.xlu0 %430
      %v432 = vlog2.pop %v422
      %v433 = vmul.f32 %v432, 0.6931472
      %v434 = vlog2.pop %v425
      %v435 = vmul.f32 %v434, 0.6931472
      %v436 = vlog2.pop %v428
      %v437 = vmul.f32 %v436, 0.6931472
      %v438 = vlog2.pop %v431
      %v439 = vmul.f32 %v438, 0.6931472
      %v440 = vsub.f32 %v408, %v433
      %v441 = vsub.f32 %v409, %v435
      %v442 = vsub.f32 %v410, %v437
      %v443 = vsub.f32 %v411, %v439
      %v444 = vlaneseq
      %v445 = vand.u32 %v444, 127
      %v446 = vld [vmem:[%s289] sm:$0xff]
      %v447 = vld [vmem:[%s289 + $0x8] sm:$0xff]
      %v448 = vld [vmem:[%s289 + $0x10] sm:$0xff]
      %v449 = vld [vmem:[%s289 + $0x18] sm:$0xff]
      %450 = vset.pattern.permute.xlu0 0
      %451 = vperm.xlu0 %450, %v446
      %v452 = vpop.permute.xlu0 %451
      %453 = vset.pattern.permute.xlu0 0
      %454 = vperm.xlu0 %453, %v447
      %v455 = vpop.permute.xlu0 %454
      %456 = vset.pattern.permute.xlu0 0
      %457 = vperm.xlu0 %456, %v448
      %v458 = vpop.permute.xlu0 %457
      %459 = vset.pattern.permute.xlu0 0
      %460 = vperm.xlu0 %459, %v449
      %v461 = vpop.permute.xlu0 %460
      %vm462 = vcmp.eq.s32.totalorder %v445, %v452
      %vm463 = vcmp.eq.s32.totalorder %v445, %v455
      %vm464 = vcmp.eq.s32.totalorder %v445, %v458
      %vm465 = vcmp.eq.s32.totalorder %v445, %v461
      %v466 = vsel %vm462, 1, 0
      %v467 = vsel %vm463, 1, 0
      %v468 = vsel %vm464, 1, 0
      %v469 = vsel %vm465, 1, 0
      %v470 = vcvt.s32.f32 %v466
      %v471 = vcvt.s32.f32 %v467
      %v472 = vcvt.s32.f32 %v468
      %v473 = vcvt.s32.f32 %v469
      %v474 = vmul.f32 %v470, %v440
      %v475 = vmul.f32 %v471, %v441
      %v476 = vmul.f32 %v472, %v442
      %v477 = vmul.f32 %v473, %v443
      %v478 = vsel %vm391, %v474, 0.0
      %479 = vadd.xlane.f32.xlu0 %v478
      %v480 = vpop.xlane.xlu0 %479
      %v481 = vsel %vm391, %v475, 0.0
      %482 = vadd.xlane.f32.xlu0 %v481
      %v483 = vpop.xlane.xlu0 %482
      %v484 = vsel %vm391, %v476, 0.0
      %485 = vadd.xlane.f32.xlu0 %v484
      %v486 = vpop.xlane.xlu0 %485
      %v487 = vsel %vm391, %v477, 0.0
      %488 = vadd.xlane.f32.xlu0 %v487
      %v489 = vpop.xlane.xlu0 %488
      %v490 = vsub.f32 0.0, %v480
      %v491 = vsub.f32 0.0, %v483
      %v492 = vsub.f32 0.0, %v486
      %v493 = vsub.f32 0.0, %v489
      %v494 = vld [vmem:[%s294] sm:$0xff]
      %v495 = vld [vmem:[%s294 + $0x8] sm:$0xff]
      %v496 = vld [vmem:[%s294 + $0x10] sm:$0xff]
      %v497 = vld [vmem:[%s294 + $0x18] sm:$0xff]
      %v498 = vmul.f32 %v494, %v490
      %v499 = vmul.f32 %v495, %v491
      %v500 = vmul.f32 %v496, %v492
      %v501 = vmul.f32 %v497, %v493
      %vm502 = vcmask 7168
      %503 = vst.msk [vmem:[%s304] sm:$0xff] %vm502, %v498
      %504 = vst.msk [vmem:[%s304 + $0x8] sm:$0xff] %vm502, %v499
      %505 = vst.msk [vmem:[%s304 + $0x10] sm:$0xff] %vm502, %v500
      %506 = vst.msk [vmem:[%s304 + $0x18] sm:$0xff] %vm502, %v501
      %p507 = scmp.lt.s32.totalorder %s18, 1
      %s508 = scalar_select %p507, %s18, 1
      %s509 = smul.addr %s508, 4
      %s510 = smul.addr %s509, 8
      %s511 = scalar_lea.vmem %s5, %s510
      %p512 = scmp.lt.s32.totalorder %s18, 1
      %s513 = scalar_select %p512, %s18, 1
      %s514 = smul.addr %s513, 4
      %s515 = smul.addr %s514, 8
      %s516 = scalar_lea.vmem %s6, %s515
      // Predicated region
      $region41: #{_lambda_.29} parent=39 // pred_check
        %p517 = pneg %p156
      $region42: #{_lambda_.29} parent=39 // pred_check_branch
        %519 = sbr.rel (%p517) target = $region44
      $region43: #{_lambda_.29} parent=39 // pred_region
        _
      $region44: #{_lambda_.29} parent=39 // pred_fallthru
        _
      // Predicated region
      $region45: #{_lambda_.29} parent=39 // pred_check
        %p520 = pneg %p182
      $region46: #{_lambda_.29} parent=39 // pred_check_branch
        %522 = sbr.rel (%p520) target = $region48
      $region47: #{_lambda_.29} parent=39 // pred_region
        _
      $region48: #{_lambda_.29} parent=39 // pred_fallthru
        _
    $region40: #{_lambda_.29} parent=5 // pred_fallthru
      _
    %p523 = scmp.le.s32.totalorder 2, %s13
    // Predicated region
    $region49: #{_lambda_.29} parent=5 // pred_check
      %p524 = pneg %p523
    $region50: #{_lambda_.29} parent=5 // pred_check_branch
      %526 = sbr.rel (%p524) target = $region52
    $region51: #{_lambda_.29} parent=5 // pred_region
      %s527 = ssub.s32 %s13, 2
      // Predicated region
      $region53: #{_lambda_.29} parent=51 // pred_check
        %p528 = pneg %p162
      $region54: #{_lambda_.29} parent=51 // pred_check_branch
        %530 = sbr.rel (%p528) target = $region56
      $region55: #{_lambda_.29} parent=51 // pred_region
        %p531 = scmp.lt.s32.totalorder %s19, 1
        %s532 = scalar_select %p531, %s19, 1
        %s533 = smul.addr %s532, 4
        %s534 = smul.addr %s533, 8
        %s535 = scalar_lea.vmem %s5, %s534
      $region56: #{_lambda_.29} parent=51 // pred_fallthru
        _
      // Predicated region
      $region57: #{_lambda_.29} parent=51 // pred_check
        %p536 = pneg %p188
      $region58: #{_lambda_.29} parent=51 // pred_check_branch
        %538 = sbr.rel (%p536) target = $region60
      $region59: #{_lambda_.29} parent=51 // pred_region
        %p539 = scmp.lt.s32.totalorder %s19, 1
        %s540 = scalar_select %p539, %s19, 1
        %s541 = smul.addr %s540, 4
        %s542 = smul.addr %s541, 8
        %s543 = scalar_lea.vmem %s6, %s542
      $region60: #{_lambda_.29} parent=51 // pred_fallthru
        _
    $region52: #{_lambda_.29} parent=5 // pred_fallthru
      _
  $region6: #{_lambda_.29} parent=0 // loop_footer
    %s17 = sadd.s32 1, %s13
  $region7: #{_lambda_.29} parent=0 // loop_footer_branch
    %12 = sbr.rel target = $region3
  $region8: #{_lambda_.29} parent=0 // loop_exit
    _

</llo_original>
